<compile_context>
chip_gen: v6e
topology: v6e:2x2x1
jax: 0.10.0
libtpu: 0.0.40
codegen_flags: <defaults>
</compile_context>

<pallas_src>
import functools

import jax
import jax.numpy as jnp
from jax.experimental import pallas as pl
from jax.experimental.pallas import tpu as pltpu

N_GROUP_NORM = 2
GN_EPS = 1e-5


# --------------------------------------------------------------------------------------
# Kernel helpers
# --------------------------------------------------------------------------------------
def _zero_halo(pad_ref, H, W):
    """Zero only the 1-pixel border strips of a (H+2, W+2, C) halo scratch."""
    C = pad_ref.shape[-1]
    dt = pad_ref.dtype
    row = jnp.zeros((1, W + 2, C), dt)
    col = jnp.zeros((H + 2, 1, C), dt)
    pad_ref[0:1, :, :] = row
    pad_ref[H + 1:H + 2, :, :] = row
    pad_ref[:, 0:1, :] = col
    pad_ref[:, W + 1:W + 2, :] = col


def _im2col(pad_ref, H, W):
    """Build the (H*W, 9*C) bf16 patch matrix from a padded (H+2, W+2, C) VMEM scratch."""
    C = pad_ref.shape[-1]
    cols = []
    for ky in range(3):
        for kx in range(3):
            # column block (ky*3 + kx)*C + c — matches w.reshape(9*C, Cout) row order (HWIO).
            cols.append(pad_ref[ky:ky + H, kx:kx + W, :].reshape(H * W, C))
    return jnp.concatenate(cols, axis=-1)


def _gn_relu_channels_last(x, gamma, beta, gmat, groups):
    """GroupNorm+ReLU; x: (H*W, C) f32, gamma/beta: (1, C), gmat: (C, C) block-diagonal."""
    hw, c = x.shape
    inv_n = 1.0 / float(hw * (c // groups))
    s = jnp.sum(x, axis=0, keepdims=True)                              # (1, C)
    ss = jnp.sum(x * x, axis=0, keepdims=True)                         # (1, C)
    s_g = jnp.dot(s, gmat, preferred_element_type=jnp.float32)         # per-channel group sums
    ss_g = jnp.dot(ss, gmat, preferred_element_type=jnp.float32)
    mean = s_g * inv_n
    var = ss_g * inv_n - mean * mean       # one-pass E[x^2]-E[x]^2 in f32 (mild cancellation only)
    inv = jax.lax.rsqrt(var + GN_EPS)
    return jnp.maximum((x - mean) * (inv * gamma) + beta, 0.0)


def _gn_relu_channels_first(x, gamma, beta, gmat, groups):
    """GroupNorm+ReLU on the lane-dense layout; x: (C, H*W) f32, gamma/beta: (C, 1)."""
    c, hw = x.shape
    inv_n = 1.0 / float(hw * (c // groups))
    s = jnp.sum(x, axis=1, keepdims=True)                              # (C, 1)
    ss = jnp.sum(x * x, axis=1, keepdims=True)
    s_g = jnp.dot(gmat, s, preferred_element_type=jnp.float32)
    ss_g = jnp.dot(gmat, ss, preferred_element_type=jnp.float32)
    mean = s_g * inv_n
    var = ss_g * inv_n - mean * mean
    inv = jax.lax.rsqrt(var + GN_EPS)
    return jnp.maximum((x - mean) * (inv * gamma) + beta, 0.0)


# --------------------------------------------------------------------------------------
# Kernel body (one batch sample per grid step)
# --------------------------------------------------------------------------------------
def _double_conv_kernel(x_ref, w1_ref, g1_ref, b1_ref, gm1_ref,
                        w2t_ref, g2_ref, b2_ref, gm2_ref, out_ref,
                        xpad_scr, midpad_scr, *, groups):
    _, H, W, _ = x_ref.shape

    # In-kernel 'same' padding: zero only the halo strips, write the interior (bf16 for the MXU).
    _zero_halo(xpad_scr, H, W)
    _zero_halo(midpad_scr, H, W)
    xpad_scr[1:1 + H, 1:1 + W, :] = x_ref[0].astype(jnp.bfloat16)

    # ---- conv1: single im2col bf16 matmul (f32 acc) -> GroupNorm -> ReLU ----
    patches1 = _im2col(xpad_scr, H, W)                                  # (HW, 9*Cin) bf16
    mid = jnp.dot(patches1, w1_ref[...],
                  preferred_element_type=jnp.float32)                   # (HW, Cmid) f32
    mid = _gn_relu_channels_last(mid, g1_ref[...], b1_ref[...], gm1_ref[...], groups)

    # Stage the intermediate activation into the second halo scratch (bf16).
    midpad_scr[1:1 + H, 1:1 + W, :] = mid.reshape(H, W, -1).astype(jnp.bfloat16)

    # ---- conv2, computed transposed so the result (Cout, HW) stores lane-dense ----
    patches2 = _im2col(midpad_scr, H, W)                                # (HW, 9*Cmid) bf16
    out_t = jax.lax.dot_general(                                        # (Cout, HW) f32
        w2t_ref[...], patches2,
        dimension_numbers=(((1,), (1,)), ((), ())),
        preferred_element_type=jnp.float32)
    out_t = _gn_relu_channels_first(out_t, g2_ref[...], b2_ref[...], gm2_ref[...], groups)

    out_ref[0] = out_t.astype(out_ref.dtype)


# --------------------------------------------------------------------------------------
# Wrapper
# --------------------------------------------------------------------------------------
def _group_matrix(C, groups):
    """(C, C) block-diagonal 0/1 matrix: gmat[i, j] = 1 iff channels i and j share a group."""
    cg = C // groups
    gid = jnp.arange(C) // cg
    return (gid[:, None] == gid[None, :]).astype(jnp.float32)


def double_conv(x_nchw, w1, g1, b1, w2, g2, b2, *, groups=N_GROUP_NORM):
    """x_nchw: [B, Cin, H, W]; w1/w2: HWIO [3,3,Cin,Cmid]/[3,3,Cmid,Cout]; g*/b*: per-channel."""
    B, Cin, H, W = x_nchw.shape
    Cmid = w1.shape[-1]
    Cout = w2.shape[-1]
    assert Cmid % groups == 0 and Cout % groups == 0, "channels must be divisible by groups"

    # Channels-last for the kernel (channels on lanes).
    # TODO(synk): keep the surrounding model NHWC end-to-end to drop this input transpose, and add
    #             a halo row-tiled grid with a two-pass GroupNorm for very large per-sample H*W.
    x = jnp.transpose(x_nchw, (0, 2, 3, 1))

    # Flatten 3x3 weights once into single-matmul operands; bf16 operands feed the MXU directly.
    w1f = w1.reshape(9 * Cin, Cmid).astype(jnp.bfloat16)                       # (9*Cin, Cmid)
    w2t = jnp.transpose(w2.reshape(9 * Cmid, Cout)).astype(jnp.bfloat16)       # (Cout, 9*Cmid)

    g1v = g1.reshape(1, Cmid).astype(jnp.float32)
    b1v = b1.reshape(1, Cmid).astype(jnp.float32)
    g2v = g2.reshape(Cout, 1).astype(jnp.float32)
    b2v = b2.reshape(Cout, 1).astype(jnp.float32)
    gm1 = _group_matrix(Cmid, groups)
    gm2 = _group_matrix(Cout, groups)

    kernel = functools.partial(_double_conv_kernel, groups=groups)
    out_flat = pl.pallas_call(
        kernel,
        # TODO(synk): emit bf16 here if the consumer tolerates it (halves HBM writeback).
        out_shape=jax.ShapeDtypeStruct((B, Cout, H * W), jnp.float32),
        grid=(B,),
        in_specs=[
            pl.BlockSpec((1, H, W, Cin), lambda b: (b, 0, 0, 0)),   # per-sample, auto-pipelined
            pl.BlockSpec((9 * Cin, Cmid), lambda b: (0, 0)),        # weights/params: fetched once
            pl.BlockSpec((1, Cmid), lambda b: (0, 0)),
            pl.BlockSpec((1, Cmid), lambda b: (0, 0)),
            pl.BlockSpec((Cmid, Cmid), lambda b: (0, 0)),
            pl.BlockSpec((Cout, 9 * Cmid), lambda b: (0, 0)),
            pl.BlockSpec((Cout, 1), lambda b: (0, 0)),
            pl.BlockSpec((Cout, 1), lambda b: (0, 0)),
            pl.BlockSpec((Cout, Cout), lambda b: (0, 0)),
        ],
        out_specs=pl.BlockSpec((1, Cout, H * W), lambda b: (b, 0, 0)),  # lane-dense output slab
        scratch_shapes=[
            pltpu.VMEM((H + 2, W + 2, Cin), jnp.bfloat16),   # halo buffer for conv1 input
            pltpu.VMEM((H + 2, W + 2, Cmid), jnp.bfloat16),  # halo buffer for conv2 input
        ],
        compiler_params=pltpu.CompilerParams(
            dimension_semantics=("parallel",),        # shard batch across v7x's 2 TensorCores
            vmem_limit_bytes=48 * 1024 * 1024,        # budget below v7x's 64 MiB VMEM
        ),
    )(x, w1f, g1v, b1v, gm1, w2t, g2v, b2v, gm2)

    # Output is already channels-first with pixels flattened on lanes -> pure reshape, no transpose.
    return out_flat.reshape(B, Cout, H, W)


# --------------------------------------------------------------------------------------
# Pure-JAX references (for correctness checks)
# --------------------------------------------------------------------------------------
def _ref_conv(x_nhwc, w, conv_dtype):
    return jax.lax.conv_general_dilated(
        x_nhwc.astype(conv_dtype), w.astype(conv_dtype),
        window_strides=(1, 1), padding="SAME",
        dimension_numbers=("NHWC", "HWIO", "NHWC"),
        preferred_element_type=jnp.float32)


def _ref_gn_relu(x, gamma, beta, groups):
    B, H, W, C = x.shape
    xg = x.reshape(B, H, W, groups, C // groups)
    mean = jnp.mean(xg, axis=(1, 2, 4), keepdims=True)
    var = jnp.mean(jnp.square(xg - mean), axis=(1, 2, 4), keepdims=True)
    xn = ((xg - mean) * jax.lax.rsqrt(var + GN_EPS)).reshape(B, H, W, C)
    return jnp.maximum(xn * gamma.reshape(1, 1, 1, C) + beta.reshape(1, 1, 1, C), 0.0)


def double_conv_ref(x_nchw, w1, g1, b1, w2, g2, b2, *, groups=N_GROUP_NORM,
                    conv_dtype=jnp.float32):
    x = jnp.transpose(x_nchw, (0, 2, 3, 1))
    x = _ref_gn_relu(_ref_conv(x, w1, conv_dtype), g1, b1, groups)
    x = _ref_gn_relu(_ref_conv(x, w2, conv_dtype), g2, b2, groups)
    return jnp.transpose(x, (0, 3, 1, 2))


if __name__ == "__main__":
    B, Cin, H, W = 2, 4, 16, 16
    Cmid, Cout = 8, 8   # mid_channels defaults to out_channels

    key = jax.random.PRNGKey(0)
    kx, k1, k2, k3, k4, k5, k6 = jax.random.split(key, 7)

    x = jax.random.normal(kx, (B, Cin, H, W), jnp.float32)
    # Conv weights in HWIO; no bias (bias=False in the PyTorch module).
    w1 = jax.random.normal(k1, (3, 3, Cin, Cmid), jnp.float32) * 0.1
    w2 = jax.random.normal(k2, (3, 3, Cmid, Cout), jnp.float32) * 0.1
    # GroupNorm affine params (deterministic, non-trivial).
    g1 = 1.0 + 0.1 * jax.random.normal(k3, (1, Cmid), jnp.float32)
    b1 = 0.1 * jax.random.normal(k4, (1, Cmid), jnp.float32)
    g2 = 1.0 + 0.1 * jax.random.normal(k5, (1, Cout), jnp.float32)
    b2 = 0.1 * jax.random.normal(k6, (1, Cout), jnp.float32)

    out = jax.block_until_ready(double_conv(x, w1, g1, b1, w2, g2, b2))
    assert out.shape == (B, Cout, H, W)

    # Tight check vs a reference using the kernel's mixed precision (bf16 matmul operands,
    # f32 accumulation, f32 GroupNorm): differences are only f32 reduction-order noise.
    ref_mp = jax.block_until_ready(
        double_conv_ref(x, w1, g1, b1, w2, g2, b2, conv_dtype=jnp.bfloat16))
    err_mp = jnp.max(jnp.abs(out - ref_mp))
    assert jnp.allclose(out, ref_mp, atol=5e-3, rtol=5e-3), f"max abs err vs bf16 ref {err_mp}"

    # Loose sanity check vs the pure-f32 module semantics (bf16 operand rounding only).
    ref_f32 = jax.block_until_ready(
        double_conv_ref(x, w1, g1, b1, w2, g2, b2, conv_dtype=jnp.float32))
    err_f32 = jnp.max(jnp.abs(out - ref_f32))
    assert jnp.allclose(out, ref_f32, atol=1e-1, rtol=1e-1), f"max abs err vs f32 ref {err_f32}"

    print("KERNEL_OK")
</pallas_src>

<mosaic_0001>
module attributes {stable_mosaic.version = 11 : i64} {
  func.func @_double_conv_kernel(%arg0: i32, %arg1: memref<1x16x16x4xf32, #tpu.memory_space<vmem>>, %arg2: memref<36x8xbf16, #tpu.memory_space<vmem>>, %arg3: memref<1x8xf32, #tpu.memory_space<vmem>>, %arg4: memref<1x8xf32, #tpu.memory_space<vmem>>, %arg5: memref<8x8xf32, #tpu.memory_space<vmem>>, %arg6: memref<8x72xbf16, #tpu.memory_space<vmem>>, %arg7: memref<8x1xf32, #tpu.memory_space<vmem>>, %arg8: memref<8x1xf32, #tpu.memory_space<vmem>>, %arg9: memref<8x8xf32, #tpu.memory_space<vmem>>, %arg10: memref<1x8x256xf32, #tpu.memory_space<vmem>>, %arg11: memref<18x18x4xbf16, #tpu.memory_space<vmem>>, %arg12: memref<18x18x8xbf16, #tpu.memory_space<vmem>>) attributes {dimension_semantics = [#tpu.dimension_semantics<parallel>], iteration_bounds = array<i64: 2>, scalar_prefetch = 0 : i64, scratch_operands = 2 : i64, tpu.core_type = #tpu.core_type<tc>, window_params = [{transform_indices = @transform_0, window_bounds = array<i64: 1, 16, 16, 4>}, {pipeline_mode = #tpu.pipeline_mode<synchronous>, transform_indices = @transform_1, window_bounds = array<i64: 36, 8>}, {pipeline_mode = #tpu.pipeline_mode<synchronous>, transform_indices = @transform_2, window_bounds = array<i64: 1, 8>}, {pipeline_mode = #tpu.pipeline_mode<synchronous>, transform_indices = @transform_3, window_bounds = array<i64: 1, 8>}, {pipeline_mode = #tpu.pipeline_mode<synchronous>, transform_indices = @transform_4, window_bounds = array<i64: 8, 8>}, {pipeline_mode = #tpu.pipeline_mode<synchronous>, transform_indices = @transform_5, window_bounds = array<i64: 8, 72>}, {pipeline_mode = #tpu.pipeline_mode<synchronous>, transform_indices = @transform_6, window_bounds = array<i64: 8, 1>}, {pipeline_mode = #tpu.pipeline_mode<synchronous>, transform_indices = @transform_7, window_bounds = array<i64: 8, 1>}, {pipeline_mode = #tpu.pipeline_mode<synchronous>, transform_indices = @transform_8, window_bounds = array<i64: 8, 8>}, {transform_indices = @transform_9, window_bounds = array<i64: 1, 8, 256>}]} {
    %cst = arith.constant 0.000000e+00 : bf16
    %0 = vector.broadcast %cst : bf16 to vector<1x18x4xbf16>
    %cst_0 = arith.constant 0.000000e+00 : bf16
    %1 = vector.broadcast %cst_0 : bf16 to vector<18x1x4xbf16>
    %c0 = arith.constant 0 : index
    %c0_1 = arith.constant 0 : index
    %c0_2 = arith.constant 0 : index
    %2 = vector.load %arg11[%c0, %c0_1, %c0_2] : memref<18x18x4xbf16, #tpu.memory_space<vmem>>, vector<1x18x4xbf16>
    tpu.vector_store %arg11[%c0, %c0_1, %c0_2], %0 {strides = array<i32>} : memref<18x18x4xbf16, #tpu.memory_space<vmem>>, vector<1x18x4xbf16>,
    %c17 = arith.constant 17 : index
    %c0_3 = arith.constant 0 : index
    %c0_4 = arith.constant 0 : index
    %3 = vector.load %arg11[%c17, %c0_3, %c0_4] : memref<18x18x4xbf16, #tpu.memory_space<vmem>>, vector<1x18x4xbf16>
    tpu.vector_store %arg11[%c17, %c0_3, %c0_4], %0 {strides = array<i32>} : memref<18x18x4xbf16, #tpu.memory_space<vmem>>, vector<1x18x4xbf16>,
    %c0_5 = arith.constant 0 : index
    %c0_6 = arith.constant 0 : index
    %c0_7 = arith.constant 0 : index
    %4 = vector.load %arg11[%c0_5, %c0_6, %c0_7] : memref<18x18x4xbf16, #tpu.memory_space<vmem>>, vector<18x1x4xbf16>
    tpu.vector_store %arg11[%c0_5, %c0_6, %c0_7], %1 {strides = array<i32>} : memref<18x18x4xbf16, #tpu.memory_space<vmem>>, vector<18x1x4xbf16>,
    %c0_8 = arith.constant 0 : index
    %c17_9 = arith.constant 17 : index
    %c0_10 = arith.constant 0 : index
    %5 = vector.load %arg11[%c0_8, %c17_9, %c0_10] : memref<18x18x4xbf16, #tpu.memory_space<vmem>>, vector<18x1x4xbf16>
    tpu.vector_store %arg11[%c0_8, %c17_9, %c0_10], %1 {strides = array<i32>} : memref<18x18x4xbf16, #tpu.memory_space<vmem>>, vector<18x1x4xbf16>,
    %cst_11 = arith.constant 0.000000e+00 : bf16
    %6 = vector.broadcast %cst_11 : bf16 to vector<1x18x8xbf16>
    %cst_12 = arith.constant 0.000000e+00 : bf16
    %7 = vector.broadcast %cst_12 : bf16 to vector<18x1x8xbf16>
    %c0_13 = arith.constant 0 : index
    %c0_14 = arith.constant 0 : index
    %c0_15 = arith.constant 0 : index
    %8 = vector.load %arg12[%c0_13, %c0_14, %c0_15] : memref<18x18x8xbf16, #tpu.memory_space<vmem>>, vector<1x18x8xbf16>
    tpu.vector_store %arg12[%c0_13, %c0_14, %c0_15], %6 {strides = array<i32>} : memref<18x18x8xbf16, #tpu.memory_space<vmem>>, vector<1x18x8xbf16>,
    %c17_16 = arith.constant 17 : index
    %c0_17 = arith.constant 0 : index
    %c0_18 = arith.constant 0 : index
    %9 = vector.load %arg12[%c17_16, %c0_17, %c0_18] : memref<18x18x8xbf16, #tpu.memory_space<vmem>>, vector<1x18x8xbf16>
    tpu.vector_store %arg12[%c17_16, %c0_17, %c0_18], %6 {strides = array<i32>} : memref<18x18x8xbf16, #tpu.memory_space<vmem>>, vector<1x18x8xbf16>,
    %c0_19 = arith.constant 0 : index
    %c0_20 = arith.constant 0 : index
    %c0_21 = arith.constant 0 : index
    %10 = vector.load %arg12[%c0_19, %c0_20, %c0_21] : memref<18x18x8xbf16, #tpu.memory_space<vmem>>, vector<18x1x8xbf16>
    tpu.vector_store %arg12[%c0_19, %c0_20, %c0_21], %7 {strides = array<i32>} : memref<18x18x8xbf16, #tpu.memory_space<vmem>>, vector<18x1x8xbf16>,
    %c0_22 = arith.constant 0 : index
    %c17_23 = arith.constant 17 : index
    %c0_24 = arith.constant 0 : index
    %11 = vector.load %arg12[%c0_22, %c17_23, %c0_24] : memref<18x18x8xbf16, #tpu.memory_space<vmem>>, vector<18x1x8xbf16>
    tpu.vector_store %arg12[%c0_22, %c17_23, %c0_24], %7 {strides = array<i32>} : memref<18x18x8xbf16, #tpu.memory_space<vmem>>, vector<18x1x8xbf16>,
    %c0_25 = arith.constant 0 : index
    %c0_26 = arith.constant 0 : index
    %c0_27 = arith.constant 0 : index
    %c0_28 = arith.constant 0 : index
    %12 = vector.load %arg1[%c0_25, %c0_26, %c0_27, %c0_28] : memref<1x16x16x4xf32, #tpu.memory_space<vmem>>, vector<1x16x16x4xf32>
    %13 = vector.shape_cast %12 : vector<1x16x16x4xf32> to vector<16x16x4xf32>
    %14 = arith.truncf %13 : vector<16x16x4xf32> to vector<16x16x4xbf16>
    %c1 = arith.constant 1 : index
    %c1_29 = arith.constant 1 : index
    %c0_30 = arith.constant 0 : index
    %15 = vector.load %arg11[%c1, %c1_29, %c0_30] : memref<18x18x4xbf16, #tpu.memory_space<vmem>>, vector<16x16x4xbf16>
    tpu.vector_store %arg11[%c1, %c1_29, %c0_30], %14 {strides = array<i32>} : memref<18x18x4xbf16, #tpu.memory_space<vmem>>, vector<16x16x4xbf16>,
    %c0_31 = arith.constant 0 : index
    %c0_32 = arith.constant 0 : index
    %c0_33 = arith.constant 0 : index
    %16 = vector.load %arg11[%c0_31, %c0_32, %c0_33] : memref<18x18x4xbf16, #tpu.memory_space<vmem>>, vector<16x16x4xbf16>
    %17 = vector.shape_cast %16 : vector<16x16x4xbf16> to vector<256x4xbf16>
    %c0_34 = arith.constant 0 : index
    %c1_35 = arith.constant 1 : index
    %c0_36 = arith.constant 0 : index
    %18 = vector.load %arg11[%c0_34, %c1_35, %c0_36] : memref<18x18x4xbf16, #tpu.memory_space<vmem>>, vector<16x16x4xbf16>
    %19 = vector.shape_cast %18 : vector<16x16x4xbf16> to vector<256x4xbf16>
    %c0_37 = arith.constant 0 : index
    %c2 = arith.constant 2 : index
    %c0_38 = arith.constant 0 : index
    %20 = vector.load %arg11[%c0_37, %c2, %c0_38] : memref<18x18x4xbf16, #tpu.memory_space<vmem>>, vector<16x16x4xbf16>
    %21 = vector.shape_cast %20 : vector<16x16x4xbf16> to vector<256x4xbf16>
    %c1_39 = arith.constant 1 : index
    %c0_40 = arith.constant 0 : index
    %c0_41 = arith.constant 0 : index
    %22 = vector.load %arg11[%c1_39, %c0_40, %c0_41] : memref<18x18x4xbf16, #tpu.memory_space<vmem>>, vector<16x16x4xbf16>
    %23 = vector.shape_cast %22 : vector<16x16x4xbf16> to vector<256x4xbf16>
    %c1_42 = arith.constant 1 : index
    %c1_43 = arith.constant 1 : index
    %c0_44 = arith.constant 0 : index
    %24 = vector.load %arg11[%c1_42, %c1_43, %c0_44] : memref<18x18x4xbf16, #tpu.memory_space<vmem>>, vector<16x16x4xbf16>
    %25 = vector.shape_cast %24 : vector<16x16x4xbf16> to vector<256x4xbf16>
    %c1_45 = arith.constant 1 : index
    %c2_46 = arith.constant 2 : index
    %c0_47 = arith.constant 0 : index
    %26 = vector.load %arg11[%c1_45, %c2_46, %c0_47] : memref<18x18x4xbf16, #tpu.memory_space<vmem>>, vector<16x16x4xbf16>
    %27 = vector.shape_cast %26 : vector<16x16x4xbf16> to vector<256x4xbf16>
    %c2_48 = arith.constant 2 : index
    %c0_49 = arith.constant 0 : index
    %c0_50 = arith.constant 0 : index
    %28 = vector.load %arg11[%c2_48, %c0_49, %c0_50] : memref<18x18x4xbf16, #tpu.memory_space<vmem>>, vector<16x16x4xbf16>
    %29 = vector.shape_cast %28 : vector<16x16x4xbf16> to vector<256x4xbf16>
    %c2_51 = arith.constant 2 : index
    %c1_52 = arith.constant 1 : index
    %c0_53 = arith.constant 0 : index
    %30 = vector.load %arg11[%c2_51, %c1_52, %c0_53] : memref<18x18x4xbf16, #tpu.memory_space<vmem>>, vector<16x16x4xbf16>
    %31 = vector.shape_cast %30 : vector<16x16x4xbf16> to vector<256x4xbf16>
    %c2_54 = arith.constant 2 : index
    %c2_55 = arith.constant 2 : index
    %c0_56 = arith.constant 0 : index
    %32 = vector.load %arg11[%c2_54, %c2_55, %c0_56] : memref<18x18x4xbf16, #tpu.memory_space<vmem>>, vector<16x16x4xbf16>
    %33 = vector.shape_cast %32 : vector<16x16x4xbf16> to vector<256x4xbf16>
    %34 = tpu.concatenate %17, %19, %21, %23, %25, %27, %29, %31, %33 in 1 : vector<256x4xbf16>, vector<256x4xbf16>, vector<256x4xbf16>, vector<256x4xbf16>, vector<256x4xbf16>, vector<256x4xbf16>, vector<256x4xbf16>, vector<256x4xbf16>, vector<256x4xbf16> -> vector<256x36xbf16>
    %c0_57 = arith.constant 0 : index
    %c0_58 = arith.constant 0 : index
    %35 = vector.load %arg2[%c0_57, %c0_58] : memref<36x8xbf16, #tpu.memory_space<vmem>>, vector<36x8xbf16>
    %cst_59 = arith.constant dense<0.000000e+00> : vector<256x8xf32>
    %36 = tpu.matmul %34, %35, %cst_59 {dimension_numbers = #tpu.dot_dimension_numbers<[1], [0], [0], [1], [0, 0, 1, 1], [], []>} : vector<256x36xbf16>, vector<36x8xbf16>, vector<256x8xf32> -> vector<256x8xf32>
    %c0_60 = arith.constant 0 : index
    %c0_61 = arith.constant 0 : index
    %37 = vector.load %arg3[%c0_60, %c0_61] : memref<1x8xf32, #tpu.memory_space<vmem>>, vector<1x8xf32>
    %c0_62 = arith.constant 0 : index
    %c0_63 = arith.constant 0 : index
    %38 = vector.load %arg4[%c0_62, %c0_63] : memref<1x8xf32, #tpu.memory_space<vmem>>, vector<1x8xf32>
    %c0_64 = arith.constant 0 : index
    %c0_65 = arith.constant 0 : index
    %39 = vector.load %arg5[%c0_64, %c0_65] : memref<8x8xf32, #tpu.memory_space<vmem>>, vector<8x8xf32>
    %cst_66 = arith.constant dense<0.000000e+00> : vector<8xf32>
    %40 = vector.multi_reduction <add>, %36, %cst_66 [0] : vector<256x8xf32> to vector<8xf32>
    %41 = vector.shape_cast %40 : vector<8xf32> to vector<1x8xf32>
    %42 = arith.mulf %36, %36 : vector<256x8xf32>
    %cst_67 = arith.constant dense<0.000000e+00> : vector<8xf32>
    %43 = vector.multi_reduction <add>, %42, %cst_67 [0] : vector<256x8xf32> to vector<8xf32>
    %44 = vector.shape_cast %43 : vector<8xf32> to vector<1x8xf32>
    %cst_68 = arith.constant dense<0.000000e+00> : vector<1x8xf32>
    %45 = tpu.matmul %41, %39, %cst_68 {dimension_numbers = #tpu.dot_dimension_numbers<[1], [0], [0], [1], [0, 0, 1, 1], [], []>} : vector<1x8xf32>, vector<8x8xf32>, vector<1x8xf32> -> vector<1x8xf32>
    %cst_69 = arith.constant dense<0.000000e+00> : vector<1x8xf32>
    %46 = tpu.matmul %44, %39, %cst_69 {dimension_numbers = #tpu.dot_dimension_numbers<[1], [0], [0], [1], [0, 0, 1, 1], [], []>} : vector<1x8xf32>, vector<8x8xf32>, vector<1x8xf32> -> vector<1x8xf32>
    %cst_70 = arith.constant 9.765625E-4 : f32
    %47 = vector.broadcast %cst_70 : f32 to vector<1x8xf32>
    %48 = arith.mulf %45, %47 : vector<1x8xf32>
    %cst_71 = arith.constant 9.765625E-4 : f32
    %49 = vector.broadcast %cst_71 : f32 to vector<1x8xf32>
    %50 = arith.mulf %46, %49 : vector<1x8xf32>
    %51 = arith.mulf %48, %48 : vector<1x8xf32>
    %52 = arith.subf %50, %51 : vector<1x8xf32>
    %cst_72 = arith.constant 9.99999974E-6 : f32
    %53 = vector.broadcast %cst_72 : f32 to vector<1x8xf32>
    %54 = arith.addf %52, %53 : vector<1x8xf32>
    %55 = math.rsqrt %54 : vector<1x8xf32>
    %56 = vector.broadcast %48 : vector<1x8xf32> to vector<256x8xf32>
    %57 = arith.subf %36, %56 : vector<256x8xf32>
    %58 = arith.mulf %55, %37 : vector<1x8xf32>
    %59 = vector.broadcast %58 : vector<1x8xf32> to vector<256x8xf32>
    %60 = arith.mulf %57, %59 : vector<256x8xf32>
    %61 = vector.broadcast %38 : vector<1x8xf32> to vector<256x8xf32>
    %62 = arith.addf %60, %61 : vector<256x8xf32>
    %cst_73 = arith.constant 0.000000e+00 : f32
    %63 = vector.broadcast %cst_73 : f32 to vector<256x8xf32>
    %64 = arith.maximumf %62, %63 : vector<256x8xf32>
    %65 = vector.shape_cast %64 : vector<256x8xf32> to vector<16x16x8xf32>
    %66 = arith.truncf %65 : vector<16x16x8xf32> to vector<16x16x8xbf16>
    %c1_74 = arith.constant 1 : index
    %c1_75 = arith.constant 1 : index
    %c0_76 = arith.constant 0 : index
    %67 = vector.load %arg12[%c1_74, %c1_75, %c0_76] : memref<18x18x8xbf16, #tpu.memory_space<vmem>>, vector<16x16x8xbf16>
    tpu.vector_store %arg12[%c1_74, %c1_75, %c0_76], %66 {strides = array<i32>} : memref<18x18x8xbf16, #tpu.memory_space<vmem>>, vector<16x16x8xbf16>,
    %c0_77 = arith.constant 0 : index
    %c0_78 = arith.constant 0 : index
    %c0_79 = arith.constant 0 : index
    %68 = vector.load %arg12[%c0_77, %c0_78, %c0_79] : memref<18x18x8xbf16, #tpu.memory_space<vmem>>, vector<16x16x8xbf16>
    %69 = vector.shape_cast %68 : vector<16x16x8xbf16> to vector<256x8xbf16>
    %c0_80 = arith.constant 0 : index
    %c1_81 = arith.constant 1 : index
    %c0_82 = arith.constant 0 : index
    %70 = vector.load %arg12[%c0_80, %c1_81, %c0_82] : memref<18x18x8xbf16, #tpu.memory_space<vmem>>, vector<16x16x8xbf16>
    %71 = vector.shape_cast %70 : vector<16x16x8xbf16> to vector<256x8xbf16>
    %c0_83 = arith.constant 0 : index
    %c2_84 = arith.constant 2 : index
    %c0_85 = arith.constant 0 : index
    %72 = vector.load %arg12[%c0_83, %c2_84, %c0_85] : memref<18x18x8xbf16, #tpu.memory_space<vmem>>, vector<16x16x8xbf16>
    %73 = vector.shape_cast %72 : vector<16x16x8xbf16> to vector<256x8xbf16>
    %c1_86 = arith.constant 1 : index
    %c0_87 = arith.constant 0 : index
    %c0_88 = arith.constant 0 : index
    %74 = vector.load %arg12[%c1_86, %c0_87, %c0_88] : memref<18x18x8xbf16, #tpu.memory_space<vmem>>, vector<16x16x8xbf16>
    %75 = vector.shape_cast %74 : vector<16x16x8xbf16> to vector<256x8xbf16>
    %c1_89 = arith.constant 1 : index
    %c1_90 = arith.constant 1 : index
    %c0_91 = arith.constant 0 : index
    %76 = vector.load %arg12[%c1_89, %c1_90, %c0_91] : memref<18x18x8xbf16, #tpu.memory_space<vmem>>, vector<16x16x8xbf16>
    %77 = vector.shape_cast %76 : vector<16x16x8xbf16> to vector<256x8xbf16>
    %c1_92 = arith.constant 1 : index
    %c2_93 = arith.constant 2 : index
    %c0_94 = arith.constant 0 : index
    %78 = vector.load %arg12[%c1_92, %c2_93, %c0_94] : memref<18x18x8xbf16, #tpu.memory_space<vmem>>, vector<16x16x8xbf16>
    %79 = vector.shape_cast %78 : vector<16x16x8xbf16> to vector<256x8xbf16>
    %c2_95 = arith.constant 2 : index
    %c0_96 = arith.constant 0 : index
    %c0_97 = arith.constant 0 : index
    %80 = vector.load %arg12[%c2_95, %c0_96, %c0_97] : memref<18x18x8xbf16, #tpu.memory_space<vmem>>, vector<16x16x8xbf16>
    %81 = vector.shape_cast %80 : vector<16x16x8xbf16> to vector<256x8xbf16>
    %c2_98 = arith.constant 2 : index
    %c1_99 = arith.constant 1 : index
    %c0_100 = arith.constant 0 : index
    %82 = vector.load %arg12[%c2_98, %c1_99, %c0_100] : memref<18x18x8xbf16, #tpu.memory_space<vmem>>, vector<16x16x8xbf16>
    %83 = vector.shape_cast %82 : vector<16x16x8xbf16> to vector<256x8xbf16>
    %c2_101 = arith.constant 2 : index
    %c2_102 = arith.constant 2 : index
    %c0_103 = arith.constant 0 : index
    %84 = vector.load %arg12[%c2_101, %c2_102, %c0_103] : memref<18x18x8xbf16, #tpu.memory_space<vmem>>, vector<16x16x8xbf16>
    %85 = vector.shape_cast %84 : vector<16x16x8xbf16> to vector<256x8xbf16>
    %86 = tpu.concatenate %69, %71, %73, %75, %77, %79, %81, %83, %85 in 1 : vector<256x8xbf16>, vector<256x8xbf16>, vector<256x8xbf16>, vector<256x8xbf16>, vector<256x8xbf16>, vector<256x8xbf16>, vector<256x8xbf16>, vector<256x8xbf16>, vector<256x8xbf16> -> vector<256x72xbf16>
    %c0_104 = arith.constant 0 : index
    %c0_105 = arith.constant 0 : index
    %87 = vector.load %arg6[%c0_104, %c0_105] : memref<8x72xbf16, #tpu.memory_space<vmem>>, vector<8x72xbf16>
    %cst_106 = arith.constant dense<0.000000e+00> : vector<8x256xf32>
    %88 = tpu.matmul %87, %86, %cst_106 {dimension_numbers = #tpu.dot_dimension_numbers<[1], [1], [0], [0], [0, 0, 1, 0], [], []>} : vector<8x72xbf16>, vector<256x72xbf16>, vector<8x256xf32> -> vector<8x256xf32>
    %c0_107 = arith.constant 0 : index
    %c0_108 = arith.constant 0 : index
    %89 = vector.load %arg7[%c0_107, %c0_108] : memref<8x1xf32, #tpu.memory_space<vmem>>, vector<8x1xf32>
    %c0_109 = arith.constant 0 : index
    %c0_110 = arith.constant 0 : index
    %90 = vector.load %arg8[%c0_109, %c0_110] : memref<8x1xf32, #tpu.memory_space<vmem>>, vector<8x1xf32>
    %c0_111 = arith.constant 0 : index
    %c0_112 = arith.constant 0 : index
    %91 = vector.load %arg9[%c0_111, %c0_112] : memref<8x8xf32, #tpu.memory_space<vmem>>, vector<8x8xf32>
    %cst_113 = arith.constant dense<0.000000e+00> : vector<8xf32>
    %92 = vector.multi_reduction <add>, %88, %cst_113 [1] : vector<8x256xf32> to vector<8xf32>
    %93 = vector.shape_cast %92 : vector<8xf32> to vector<8x1xf32>
    %94 = arith.mulf %88, %88 : vector<8x256xf32>
    %cst_114 = arith.constant dense<0.000000e+00> : vector<8xf32>
    %95 = vector.multi_reduction <add>, %94, %cst_114 [1] : vector<8x256xf32> to vector<8xf32>
    %96 = vector.shape_cast %95 : vector<8xf32> to vector<8x1xf32>
    %cst_115 = arith.constant dense<0.000000e+00> : vector<8x1xf32>
    %97 = tpu.matmul %91, %93, %cst_115 {dimension_numbers = #tpu.dot_dimension_numbers<[1], [0], [0], [1], [0, 0, 1, 1], [], []>} : vector<8x8xf32>, vector<8x1xf32>, vector<8x1xf32> -> vector<8x1xf32>
    %cst_116 = arith.constant dense<0.000000e+00> : vector<8x1xf32>
    %98 = tpu.matmul %91, %96, %cst_116 {dimension_numbers = #tpu.dot_dimension_numbers<[1], [0], [0], [1], [0, 0, 1, 1], [], []>} : vector<8x8xf32>, vector<8x1xf32>, vector<8x1xf32> -> vector<8x1xf32>
    %cst_117 = arith.constant 9.765625E-4 : f32
    %99 = vector.broadcast %cst_117 : f32 to vector<8x1xf32>
    %100 = arith.mulf %97, %99 : vector<8x1xf32>
    %cst_118 = arith.constant 9.765625E-4 : f32
    %101 = vector.broadcast %cst_118 : f32 to vector<8x1xf32>
    %102 = arith.mulf %98, %101 : vector<8x1xf32>
    %103 = arith.mulf %100, %100 : vector<8x1xf32>
    %104 = arith.subf %102, %103 : vector<8x1xf32>
    %cst_119 = arith.constant 9.99999974E-6 : f32
    %105 = vector.broadcast %cst_119 : f32 to vector<8x1xf32>
    %106 = arith.addf %104, %105 : vector<8x1xf32>
    %107 = math.rsqrt %106 : vector<8x1xf32>
    %108 = vector.broadcast %100 : vector<8x1xf32> to vector<8x256xf32>
    %109 = arith.subf %88, %108 : vector<8x256xf32>
    %110 = arith.mulf %107, %89 : vector<8x1xf32>
    %111 = vector.broadcast %110 : vector<8x1xf32> to vector<8x256xf32>
    %112 = arith.mulf %109, %111 : vector<8x256xf32>
    %113 = vector.broadcast %90 : vector<8x1xf32> to vector<8x256xf32>
    %114 = arith.addf %112, %113 : vector<8x256xf32>
    %cst_120 = arith.constant 0.000000e+00 : f32
    %115 = vector.broadcast %cst_120 : f32 to vector<8x256xf32>
    %116 = arith.maximumf %114, %115 : vector<8x256xf32>
    %c0_121 = arith.constant 0 : index
    %c0_122 = arith.constant 0 : index
    %c0_123 = arith.constant 0 : index
    %117 = vector.load %arg10[%c0_121, %c0_122, %c0_123] : memref<1x8x256xf32, #tpu.memory_space<vmem>>, vector<1x8x256xf32>
    %118 = vector.shape_cast %117 : vector<1x8x256xf32> to vector<8x256xf32>
    %119 = vector.shape_cast %116 : vector<8x256xf32> to vector<1x8x256xf32>
    tpu.vector_store %arg10[%c0_121, %c0_122, %c0_123], %119 {strides = array<i32>} : memref<1x8x256xf32, #tpu.memory_space<vmem>>, vector<1x8x256xf32>,
    return
  }
  func.func @transform_0(%arg0: i32) -> (i32, i32, i32, i32) {
    %c0_i32 = arith.constant 0 : i32
    %c0_i32_0 = arith.constant 0 : i32
    %c0_i32_1 = arith.constant 0 : i32
    %c0_i32_2 = arith.constant 0 : i32
    return %arg0, %c0_i32, %c0_i32_0, %c0_i32_1 : i32, i32, i32, i32
  }
  func.func @transform_1(%arg0: i32) -> (i32, i32) {
    %c0_i32 = arith.constant 0 : i32
    %c0_i32_0 = arith.constant 0 : i32
    %c0_i32_1 = arith.constant 0 : i32
    return %c0_i32, %c0_i32_0 : i32, i32
  }
  func.func @transform_2(%arg0: i32) -> (i32, i32) {
    %c0_i32 = arith.constant 0 : i32
    %c0_i32_0 = arith.constant 0 : i32
    %c0_i32_1 = arith.constant 0 : i32
    return %c0_i32, %c0_i32_0 : i32, i32
  }
  func.func @transform_3(%arg0: i32) -> (i32, i32) {
    %c0_i32 = arith.constant 0 : i32
    %c0_i32_0 = arith.constant 0 : i32
    %c0_i32_1 = arith.constant 0 : i32
    return %c0_i32, %c0_i32_0 : i32, i32
  }
  func.func @transform_4(%arg0: i32) -> (i32, i32) {
    %c0_i32 = arith.constant 0 : i32
    %c0_i32_0 = arith.constant 0 : i32
    %c0_i32_1 = arith.constant 0 : i32
    return %c0_i32, %c0_i32_0 : i32, i32
  }
  func.func @transform_5(%arg0: i32) -> (i32, i32) {
    %c0_i32 = arith.constant 0 : i32
    %c0_i32_0 = arith.constant 0 : i32
    %c0_i32_1 = arith.constant 0 : i32
    return %c0_i32, %c0_i32_0 : i32, i32
  }
  func.func @transform_6(%arg0: i32) -> (i32, i32) {
    %c0_i32 = arith.constant 0 : i32
    %c0_i32_0 = arith.constant 0 : i32
    %c0_i32_1 = arith.constant 0 : i32
    return %c0_i32, %c0_i32_0 : i32, i32
  }
  func.func @transform_7(%arg0: i32) -> (i32, i32) {
    %c0_i32 = arith.constant 0 : i32
    %c0_i32_0 = arith.constant 0 : i32
    %c0_i32_1 = arith.constant 0 : i32
    return %c0_i32, %c0_i32_0 : i32, i32
  }
  func.func @transform_8(%arg0: i32) -> (i32, i32) {
    %c0_i32 = arith.constant 0 : i32
    %c0_i32_0 = arith.constant 0 : i32
    %c0_i32_1 = arith.constant 0 : i32
    return %c0_i32, %c0_i32_0 : i32, i32
  }
  func.func @transform_9(%arg0: i32) -> (i32, i32, i32) {
    %c0_i32 = arith.constant 0 : i32
    %c0_i32_0 = arith.constant 0 : i32
    %c0_i32_1 = arith.constant 0 : i32
    return %arg0, %c0_i32, %c0_i32_0 : i32, i32, i32
  }
}

</mosaic_0001>

<llo_original>
// kernel: tpu_custom_call.1
$region0: #{tpu_custom_call.1}
  #allocation0 [shape = 'u32[]', space=smem, size = 0x4, offset = 0x4, fixed_abs, tag = 'smem constant byte address 0x4 - core index']
  #allocation1 [shape = 'u32[144,128]{1,0:T(1,128)}', space=vmem, size = 0x12000, scoped, tag = 'internal scratch']
  #allocation2 [shape = 'bf16[18,18,4]{2,1,0:T(8,128)(2,1)}', space=vmem, size = 0x1b000, scoped, tag = 'scratch operand']
  #allocation3 [shape = 'bf16[18,18,8]{2,1,0:T(8,128)(2,1)}', space=vmem, size = 0x1b000, scoped, tag = 'scratch operand']
  %s0 = inlined_call_operand.vmem [shape: f32[2,16,16,4], index: 0, kind: input, shape index: {}]
  %s1 = inlined_call_operand.vmem [shape: bf16[36,8], index: 1, kind: input, shape index: {}]
  %s2 = inlined_call_operand.vmem [shape: f32[1,8], index: 2, kind: input, shape index: {}]
  %s3 = inlined_call_operand.vmem [shape: f32[1,8], index: 3, kind: input, shape index: {}]
  %s4 = inlined_call_operand.vmem [shape: f32[8,8], index: 4, kind: input, shape index: {}]
  %s5 = inlined_call_operand.vmem [shape: bf16[8,72], index: 5, kind: input, shape index: {}]
  %s6 = inlined_call_operand.vmem [shape: f32[8,1], index: 6, kind: input, shape index: {}]
  %s7 = inlined_call_operand.vmem [shape: f32[8,1], index: 7, kind: input, shape index: {}]
  %s8 = inlined_call_operand.vmem [shape: f32[8,8], index: 8, kind: input, shape index: {}]
  %s9 = inlined_call_operand.hbm [shape: f32[2,8,256], index: 9, kind: output, shape index: {}]
  %s10 = sld [smem:[#allocation0]]
  $region69: #{tpu_custom_call.1} parent=0
    _
  %s12 = ssub.s32 1, %s10
  %s13 = scalar_select 0, %s12, %s10
  $region1: #{tpu_custom_call.1} parent=0
    #allocation4 [shape = 'u8[16384]{0}', space=vmem, size = 0x4000, scoped, tag = 'output window, operand 0']
    #allocation5 [shape = 's32[2]{0}', space=sflag, size = 0x8, scoped, tag = 'scoped memory for tpu_custom_call.1']
    %14 = vsyncpa [#allocation5], 0
    %s15 = scalar_lea.sflag [#allocation5], 1
    %16 = vsyncpa %s15, 0
    loop: start=0, step=1, limit=4
    $region2: #{tpu_custom_call.1} parent=1 // loop_pre_header
      _
    $region3: #{tpu_custom_call.1} parent=1 // loop_header
      %s18 = sphi 0, %s22
      %p19 = scmp.ge.s32.totalorder %s18, 4
      %s28 = sphi 0, %s30
      %s31 = sphi 0, %s28
      %s32 = sphi 0, %s31
      %s48 = sphi 0, %s32
      %s52 = sphi 0, %s52
      %s54 = sphi 0, %s52
      %s55 = sphi 0, %s54
      %s69 = sphi 0, %s55
      %s73 = sphi 0, %s73
      %s75 = sphi 0, %s73
      %s76 = sphi 0, %s75
      %s90 = sphi 0, %s76
      %s94 = sphi 0, %s94
      %s96 = sphi 0, %s94
      %s97 = sphi 0, %s96
      %s111 = sphi 0, %s97
      %s115 = sphi 0, %s115
      %s117 = sphi 0, %s115
      %s118 = sphi 0, %s117
      %s132 = sphi 0, %s118
      %s136 = sphi 0, %s136
      %s138 = sphi 0, %s136
      %s139 = sphi 0, %s138
      %s153 = sphi 0, %s139
      %s157 = sphi 0, %s157
      %s159 = sphi 0, %s157
      %s160 = sphi 0, %s159
      %s174 = sphi 0, %s160
      %s178 = sphi 0, %s178
      %s180 = sphi 0, %s178
      %s181 = sphi 0, %s180
      %s195 = sphi 0, %s181
      %s199 = sphi 0, %s199
      %s201 = sphi 0, %s199
      %s202 = sphi 0, %s201
      %s216 = sphi 0, %s202
      %s222 = sphi 0, %s224
      %s225 = sphi 0, %s222
      %s226 = sphi 0, %s225
      %s242 = sphi 0, %s226
    $region4: #{tpu_custom_call.1} parent=1 // loop_header_branch
      %21 = sbr.rel (%p19) target = $region8
    $region5: #{tpu_custom_call.1} parent=1 // loop_body
      %s23 = ssub.s32 %s18, 1
      %s24 = ssub.s32 %s18, 2
      %s25 = sadd.s32 %s18, 1
      %s26 = ssub.s32 %s18, %s25
      %p27 = scmp.eq.s32.totalorder %s26, 0
      %s29 = sadd.s32 %s28, 1
      %s30 = scalar_select %p27, %s28, %s29
      %p33 = pneg %p27
      %p34 = scmp.eq.s32.totalorder %s18, 1
      %p35 = por %p33, %p34
      %p36 = scmp.ne.s32.totalorder %s28, %s31
      %p37 = scmp.eq.s32.totalorder %s18, 0
      %p38 = por %p36, %p37
      %p39 = scmp.ne.s32.totalorder %s28, %s31
      %p40 = scmp.eq.s32.totalorder %s23, 1
      %p41 = por %p39, %p40
      %p42 = scmp.ne.s32.totalorder %s31, %s32
      %p43 = scmp.eq.s32.totalorder %s23, 0
      %p44 = por %p42, %p43
      %p45 = scmp.ne.s32.totalorder %s31, %s32
      %p46 = scmp.eq.s32.totalorder %s24, 1
      %p47 = por %p45, %p46
      %p49 = scmp.ne.s32.totalorder %s32, %s48
      %p50 = scmp.eq.s32.totalorder %s24, 0
      %p51 = por %p49, %p50
      %s53 = sadd.s32 %s52, 1
      %p56 = scmp.eq.s32.totalorder %s18, 1
      %p57 = scmp.ne.s32.totalorder %s52, %s54
      %p58 = scmp.eq.s32.totalorder %s18, 0
      %p59 = por %p57, %p58
      %p60 = scmp.ne.s32.totalorder %s52, %s54
      %p61 = scmp.eq.s32.totalorder %s23, 1
      %p62 = por %p60, %p61
      %p63 = scmp.ne.s32.totalorder %s54, %s55
      %p64 = scmp.eq.s32.totalorder %s23, 0
      %p65 = por %p63, %p64
      %p66 = scmp.ne.s32.totalorder %s54, %s55
      %p67 = scmp.eq.s32.totalorder %s24, 1
      %p68 = por %p66, %p67
      %p70 = scmp.ne.s32.totalorder %s55, %s69
      %p71 = scmp.eq.s32.totalorder %s24, 0
      %p72 = por %p70, %p71
      %s74 = sadd.s32 %s73, 1
      %p77 = scmp.eq.s32.totalorder %s18, 1
      %p78 = scmp.ne.s32.totalorder %s73, %s75
      %p79 = scmp.eq.s32.totalorder %s18, 0
      %p80 = por %p78, %p79
      %p81 = scmp.ne.s32.totalorder %s73, %s75
      %p82 = scmp.eq.s32.totalorder %s23, 1
      %p83 = por %p81, %p82
      %p84 = scmp.ne.s32.totalorder %s75, %s76
      %p85 = scmp.eq.s32.totalorder %s23, 0
      %p86 = por %p84, %p85
      %p87 = scmp.ne.s32.totalorder %s75, %s76
      %p88 = scmp.eq.s32.totalorder %s24, 1
      %p89 = por %p87, %p88
      %p91 = scmp.ne.s32.totalorder %s76, %s90
      %p92 = scmp.eq.s32.totalorder %s24, 0
      %p93 = por %p91, %p92
      %s95 = sadd.s32 %s94, 1
      %p98 = scmp.eq.s32.totalorder %s18, 1
      %p99 = scmp.ne.s32.totalorder %s94, %s96
      %p100 = scmp.eq.s32.totalorder %s18, 0
      %p101 = por %p99, %p100
      %p102 = scmp.ne.s32.totalorder %s94, %s96
      %p103 = scmp.eq.s32.totalorder %s23, 1
      %p104 = por %p102, %p103
      %p105 = scmp.ne.s32.totalorder %s96, %s97
      %p106 = scmp.eq.s32.totalorder %s23, 0
      %p107 = por %p105, %p106
      %p108 = scmp.ne.s32.totalorder %s96, %s97
      %p109 = scmp.eq.s32.totalorder %s24, 1
      %p110 = por %p108, %p109
      %p112 = scmp.ne.s32.totalorder %s97, %s111
      %p113 = scmp.eq.s32.totalorder %s24, 0
      %p114 = por %p112, %p113
      %s116 = sadd.s32 %s115, 1
      %p119 = scmp.eq.s32.totalorder %s18, 1
      %p120 = scmp.ne.s32.totalorder %s115, %s117
      %p121 = scmp.eq.s32.totalorder %s18, 0
      %p122 = por %p120, %p121
      %p123 = scmp.ne.s32.totalorder %s115, %s117
      %p124 = scmp.eq.s32.totalorder %s23, 1
      %p125 = por %p123, %p124
      %p126 = scmp.ne.s32.totalorder %s117, %s118
      %p127 = scmp.eq.s32.totalorder %s23, 0
      %p128 = por %p126, %p127
      %p129 = scmp.ne.s32.totalorder %s117, %s118
      %p130 = scmp.eq.s32.totalorder %s24, 1
      %p131 = por %p129, %p130
      %p133 = scmp.ne.s32.totalorder %s118, %s132
      %p134 = scmp.eq.s32.totalorder %s24, 0
      %p135 = por %p133, %p134
      %s137 = sadd.s32 %s136, 1
      %p140 = scmp.eq.s32.totalorder %s18, 1
      %p141 = scmp.ne.s32.totalorder %s136, %s138
      %p142 = scmp.eq.s32.totalorder %s18, 0
      %p143 = por %p141, %p142
      %p144 = scmp.ne.s32.totalorder %s136, %s138
      %p145 = scmp.eq.s32.totalorder %s23, 1
      %p146 = por %p144, %p145
      %p147 = scmp.ne.s32.totalorder %s138, %s139
      %p148 = scmp.eq.s32.totalorder %s23, 0
      %p149 = por %p147, %p148
      %p150 = scmp.ne.s32.totalorder %s138, %s139
      %p151 = scmp.eq.s32.totalorder %s24, 1
      %p152 = por %p150, %p151
      %p154 = scmp.ne.s32.totalorder %s139, %s153
      %p155 = scmp.eq.s32.totalorder %s24, 0
      %p156 = por %p154, %p155
      %s158 = sadd.s32 %s157, 1
      %p161 = scmp.eq.s32.totalorder %s18, 1
      %p162 = scmp.ne.s32.totalorder %s157, %s159
      %p163 = scmp.eq.s32.totalorder %s18, 0
      %p164 = por %p162, %p163
      %p165 = scmp.ne.s32.totalorder %s157, %s159
      %p166 = scmp.eq.s32.totalorder %s23, 1
      %p167 = por %p165, %p166
      %p168 = scmp.ne.s32.totalorder %s159, %s160
      %p169 = scmp.eq.s32.totalorder %s23, 0
      %p170 = por %p168, %p169
      %p171 = scmp.ne.s32.totalorder %s159, %s160
      %p172 = scmp.eq.s32.totalorder %s24, 1
      %p173 = por %p171, %p172
      %p175 = scmp.ne.s32.totalorder %s160, %s174
      %p176 = scmp.eq.s32.totalorder %s24, 0
      %p177 = por %p175, %p176
      %s179 = sadd.s32 %s178, 1
      %p182 = scmp.eq.s32.totalorder %s18, 1
      %p183 = scmp.ne.s32.totalorder %s178, %s180
      %p184 = scmp.eq.s32.totalorder %s18, 0
      %p185 = por %p183, %p184
      %p186 = scmp.ne.s32.totalorder %s178, %s180
      %p187 = scmp.eq.s32.totalorder %s23, 1
      %p188 = por %p186, %p187
      %p189 = scmp.ne.s32.totalorder %s180, %s181
      %p190 = scmp.eq.s32.totalorder %s23, 0
      %p191 = por %p189, %p190
      %p192 = scmp.ne.s32.totalorder %s180, %s181
      %p193 = scmp.eq.s32.totalorder %s24, 1
      %p194 = por %p192, %p193
      %p196 = scmp.ne.s32.totalorder %s181, %s195
      %p197 = scmp.eq.s32.totalorder %s24, 0
      %p198 = por %p196, %p197
      %s200 = sadd.s32 %s199, 1
      %p203 = scmp.eq.s32.totalorder %s18, 1
      %p204 = scmp.ne.s32.totalorder %s199, %s201
      %p205 = scmp.eq.s32.totalorder %s18, 0
      %p206 = por %p204, %p205
      %p207 = scmp.ne.s32.totalorder %s199, %s201
      %p208 = scmp.eq.s32.totalorder %s23, 1
      %p209 = por %p207, %p208
      %p210 = scmp.ne.s32.totalorder %s201, %s202
      %p211 = scmp.eq.s32.totalorder %s23, 0
      %p212 = por %p210, %p211
      %p213 = scmp.ne.s32.totalorder %s201, %s202
      %p214 = scmp.eq.s32.totalorder %s24, 1
      %p215 = por %p213, %p214
      %p217 = scmp.ne.s32.totalorder %s202, %s216
      %p218 = scmp.eq.s32.totalorder %s24, 0
      %p219 = por %p217, %p218
      %s220 = ssub.s32 %s18, %s25
      %p221 = scmp.eq.s32.totalorder %s220, 0
      %s223 = sadd.s32 %s222, 1
      %s224 = scalar_select %p221, %s222, %s223
      %p227 = pneg %p221
      %p228 = scmp.eq.s32.totalorder %s18, 1
      %p229 = por %p227, %p228
      %p230 = scmp.ne.s32.totalorder %s222, %s225
      %p231 = scmp.eq.s32.totalorder %s18, 0
      %p232 = por %p230, %p231
      %p233 = scmp.ne.s32.totalorder %s222, %s225
      %p234 = scmp.eq.s32.totalorder %s23, 1
      %p235 = por %p233, %p234
      %p236 = scmp.ne.s32.totalorder %s225, %s226
      %p237 = scmp.eq.s32.totalorder %s23, 0
      %p238 = por %p236, %p237
      %p239 = scmp.ne.s32.totalorder %s225, %s226
      %p240 = scmp.eq.s32.totalorder %s24, 1
      %p241 = por %p239, %p240
      %p243 = scmp.ne.s32.totalorder %s226, %s242
      %p244 = scmp.eq.s32.totalorder %s24, 0
      %p245 = por %p243, %p244
      %p246 = scmp.le.s32.totalorder 1, %s18
      %p247 = scmp.lt.s32.totalorder %s18, 3
      %p248 = pnand %p246, %p247
      %p249 = pneg %p248
      // Predicated region
      $region9: #{tpu_custom_call.1} parent=5 // pred_check
        _
      $region10: #{tpu_custom_call.1} parent=5 // pred_check_branch
        %251 = sbr.rel (%p248) target = $region12
      $region11: #{tpu_custom_call.1} parent=5 // pred_region
        %s252 = ssub.s32 %s18, 1
        // Predicated region
        $region13: #{tpu_custom_call.1} parent=11 // pred_check
          %p253 = pneg %p65
        $region14: #{tpu_custom_call.1} parent=11 // pred_check_branch
          %255 = sbr.rel (%p253) target = $region16
        $region15: #{tpu_custom_call.1} parent=11 // pred_region
          _
        $region16: #{tpu_custom_call.1} parent=11 // pred_fallthru
          _
        // Predicated region
        $region17: #{tpu_custom_call.1} parent=11 // pred_check
          %p256 = pneg %p86
        $region18: #{tpu_custom_call.1} parent=11 // pred_check_branch
          %258 = sbr.rel (%p256) target = $region20
        $region19: #{tpu_custom_call.1} parent=11 // pred_region
          _
        $region20: #{tpu_custom_call.1} parent=11 // pred_fallthru
          _
        // Predicated region
        $region21: #{tpu_custom_call.1} parent=11 // pred_check
          %p259 = pneg %p107
        $region22: #{tpu_custom_call.1} parent=11 // pred_check_branch
          %261 = sbr.rel (%p259) target = $region24
        $region23: #{tpu_custom_call.1} parent=11 // pred_region
          _
        $region24: #{tpu_custom_call.1} parent=11 // pred_fallthru
          _
        // Predicated region
        $region25: #{tpu_custom_call.1} parent=11 // pred_check
          %p262 = pneg %p128
        $region26: #{tpu_custom_call.1} parent=11 // pred_check_branch
          %264 = sbr.rel (%p262) target = $region28
        $region27: #{tpu_custom_call.1} parent=11 // pred_region
          _
        $region28: #{tpu_custom_call.1} parent=11 // pred_fallthru
          _
        // Predicated region
        $region29: #{tpu_custom_call.1} parent=11 // pred_check
          %p265 = pneg %p149
        $region30: #{tpu_custom_call.1} parent=11 // pred_check_branch
          %267 = sbr.rel (%p265) target = $region32
        $region31: #{tpu_custom_call.1} parent=11 // pred_region
          _
        $region32: #{tpu_custom_call.1} parent=11 // pred_fallthru
          _
        // Predicated region
        $region33: #{tpu_custom_call.1} parent=11 // pred_check
          %p268 = pneg %p170
        $region34: #{tpu_custom_call.1} parent=11 // pred_check_branch
          %270 = sbr.rel (%p268) target = $region36
        $region35: #{tpu_custom_call.1} parent=11 // pred_region
          _
        $region36: #{tpu_custom_call.1} parent=11 // pred_fallthru
          _
        // Predicated region
        $region37: #{tpu_custom_call.1} parent=11 // pred_check
          %p271 = pneg %p191
        $region38: #{tpu_custom_call.1} parent=11 // pred_check_branch
          %273 = sbr.rel (%p271) target = $region40
        $region39: #{tpu_custom_call.1} parent=11 // pred_region
          _
        $region40: #{tpu_custom_call.1} parent=11 // pred_fallthru
          _
        // Predicated region
        $region41: #{tpu_custom_call.1} parent=11 // pred_check
          %p274 = pneg %p212
        $region42: #{tpu_custom_call.1} parent=11 // pred_check_branch
          %276 = sbr.rel (%p274) target = $region44
        $region43: #{tpu_custom_call.1} parent=11 // pred_region
          _
        $region44: #{tpu_custom_call.1} parent=11 // pred_fallthru
          _
      $region12: #{tpu_custom_call.1} parent=5 // pred_fallthru
        _
      %p277 = scmp.lt.s32.totalorder %s18, 2
      // Predicated region
      $region45: #{tpu_custom_call.1} parent=5 // pred_check
        %p278 = pneg %p277
      $region46: #{tpu_custom_call.1} parent=5 // pred_check_branch
        %280 = sbr.rel (%p278) target = $region48
      $region47: #{tpu_custom_call.1} parent=5 // pred_region
        // Predicated region
        $region49: #{tpu_custom_call.1} parent=47 // pred_check
          %p281 = pneg %p38
        $region50: #{tpu_custom_call.1} parent=47 // pred_check_branch
          %283 = sbr.rel (%p281) target = $region52
        $region51: #{tpu_custom_call.1} parent=47 // pred_region
          %p284 = scmp.lt.s32.totalorder %s18, 1
          %s285 = scalar_select %p284, %s18, 1
          %s286 = smul.addr %s285, 32
          %s287 = smul.addr %s286, 8
          %s288 = scalar_lea.vmem %s0, %s287
        $region52: #{tpu_custom_call.1} parent=47 // pred_fallthru
          _
      $region48: #{tpu_custom_call.1} parent=5 // pred_fallthru
        _
      %p289 = scmp.le.s32.totalorder 1, %s18
      %p290 = scmp.lt.s32.totalorder %s18, 3
      %p291 = pnand %p289, %p290
      %p292 = pneg %p291
      // Predicated region
      $region53: #{tpu_custom_call.1} parent=5 // pred_check
        _
      $region54: #{tpu_custom_call.1} parent=5 // pred_check_branch
        %294 = sbr.rel (%p291) target = $region56
      $region55: #{tpu_custom_call.1} parent=5 // pred_region
        %s295 = ssub.s32 %s18, 1
        %p296 = scmp.lt.s32.totalorder %s23, 1
        %s297 = scalar_select %p296, %s23, 1
        %s298 = smul.addr %s297, 32
        %s299 = smul.addr %s298, 8
        %s300 = scalar_lea.vmem %s0, %s299
        %p301 = pneg %p44
        %p302 = pneg %p41
        %p303 = pneg %p65
        %p304 = pneg %p62
        %p305 = pneg %p86
        %p306 = pneg %p83
        %p307 = pneg %p107
        %p308 = pneg %p104
        %p309 = pneg %p128
        %p310 = pneg %p125
        %p311 = pneg %p149
        %p312 = pneg %p146
        %p313 = pneg %p170
        %p314 = pneg %p167
        %p315 = pneg %p191
        %p316 = pneg %p188
        %p317 = pneg %p212
        %p318 = pneg %p209
        %p319 = pneg %p238
        %p320 = pneg %p235
        %s321 = sand.u32 %s225, 1
        %s322 = scalar_lea.sflag [#allocation5], %s321
        %s323 = sand.u32 %s225, 1
        %s324 = smul.addr %s323, 16
        %s325 = scalar_lea.vmem [#allocation4], %s324
        %p326 = scmp.lt.s32.totalorder %s23, 1
        %s327 = scalar_select %p326, %s23, 1
        %s328 = smul.addr %s327, 32
        %s329 = smul.addr %s328, 8
        %s330 = scalar_lea.vmem %s0, %s329
        %vm332 = vcmask 27648
        %333 = vst.msk [vmem:[#allocation2] sm:$0xf] %vm332, 0
        %334 = vst.msk [vmem:[#allocation2 + $0x4] sm:$0xf] %vm332, 0
        %vm335 = vcmask 24576
        %336 = vst.msk [vmem:[#allocation2 + $0x8] sm:$0x1] %vm335, 0
        %s337 = scalar_lea.vmem [#allocation2], 204
        %338 = vst.msk [vmem:[%s337] sm:$0xf] %vm332, 0
        %339 = vst.msk [vmem:[%s337 + $0x4] sm:$0xf] %vm332, 0
        %340 = vst.msk [vmem:[%s337 + $0x8] sm:$0x1] %vm335, 0
        %vm341 = vcmask 24576
        %vm342 = vsmask.f32 256
        %vm343 = vmand %vm341, %vm342
        %v344 = vld [vmem:[#allocation2] sm:$0x1]
        %v345 = vsel %vm343, 0, %v344
        %346 = vst [vmem:[#allocation2] sm:$0x1] %v345
        %v347 = vld [vmem:[#allocation2 + $0xc] sm:$0x1]
        %v348 = vsel %vm343, 0, %v347
        %349 = vst [vmem:[#allocation2 + $0xc] sm:$0x1] %v348
        %v350 = vld [vmem:[#allocation2 + $0x18] sm:$0x1]
        %v351 = vsel %vm343, 0, %v350
        %352 = vst [vmem:[#allocation2 + $0x18] sm:$0x1] %v351
        %v353 = vld [vmem:[#allocation2 + $0x24] sm:$0x1]
        %v354 = vsel %vm343, 0, %v353
        %355 = vst [vmem:[#allocation2 + $0x24] sm:$0x1] %v354
        %v356 = vld [vmem:[#allocation2 + $0x30] sm:$0x1]
        %v357 = vsel %vm343, 0, %v356
        %358 = vst [vmem:[#allocation2 + $0x30] sm:$0x1] %v357
        %v359 = vld [vmem:[#allocation2 + $0x3c] sm:$0x1]
        %v360 = vsel %vm343, 0, %v359
        %361 = vst [vmem:[#allocation2 + $0x3c] sm:$0x1] %v360
        %v362 = vld [vmem:[#allocation2 + $0x48] sm:$0x1]
        %v363 = vsel %vm343, 0, %v362
        %364 = vst [vmem:[#allocation2 + $0x48] sm:$0x1] %v363
        %v365 = vld [vmem:[#allocation2 + $0x54] sm:$0x1]
        %v366 = vsel %vm343, 0, %v365
        %367 = vst [vmem:[#allocation2 + $0x54] sm:$0x1] %v366
        %v368 = vld [vmem:[#allocation2 + $0x60] sm:$0x1]
        %v369 = vsel %vm343, 0, %v368
        %370 = vst [vmem:[#allocation2 + $0x60] sm:$0x1] %v369
        %v371 = vld [vmem:[#allocation2 + $0x6c] sm:$0x1]
        %v372 = vsel %vm343, 0, %v371
        %373 = vst [vmem:[#allocation2 + $0x6c] sm:$0x1] %v372
        %v374 = vld [vmem:[#allocation2 + $0x78] sm:$0x1]
        %v375 = vsel %vm343, 0, %v374
        %376 = vst [vmem:[#allocation2 + $0x78] sm:$0x1] %v375
        %v377 = vld [vmem:[#allocation2 + $0x84] sm:$0x1]
        %v378 = vsel %vm343, 0, %v377
        %379 = vst [vmem:[#allocation2 + $0x84] sm:$0x1] %v378
        %v380 = vld [vmem:[#allocation2 + $0x90] sm:$0x1]
        %v381 = vsel %vm343, 0, %v380
        %382 = vst [vmem:[#allocation2 + $0x90] sm:$0x1] %v381
        %v383 = vld [vmem:[#allocation2 + $0x9c] sm:$0x1]
        %v384 = vsel %vm343, 0, %v383
        %385 = vst [vmem:[#allocation2 + $0x9c] sm:$0x1] %v384
        %v386 = vld [vmem:[#allocation2 + $0xa8] sm:$0x1]
        %v387 = vsel %vm343, 0, %v386
        %388 = vst [vmem:[#allocation2 + $0xa8] sm:$0x1] %v387
        %v389 = vld [vmem:[#allocation2 + $0xb4] sm:$0x1]
        %v390 = vsel %vm343, 0, %v389
        %391 = vst [vmem:[#allocation2 + $0xb4] sm:$0x1] %v390
        %v392 = vld [vmem:[#allocation2 + $0xc0] sm:$0x1]
        %v393 = vsel %vm343, 0, %v392
        %394 = vst [vmem:[#allocation2 + $0xc0] sm:$0x1] %v393
        %v395 = vld [vmem:[#allocation2 + $0xcc] sm:$0x1]
        %v396 = vsel %vm343, 0, %v395
        %397 = vst [vmem:[#allocation2 + $0xcc] sm:$0x1] %v396
        %vm398 = vsmask.f32 7938
        %vm399 = vmand %vm341, %vm398
        %v400 = vld [vmem:[#allocation2 + $0x8] sm:$0x1]
        %v401 = vsel %vm399, 0, %v400
        %402 = vst [vmem:[#allocation2 + $0x8] sm:$0x1] %v401
        %v403 = vld [vmem:[#allocation2 + $0x14] sm:$0x1]
        %v404 = vsel %vm399, 0, %v403
        %405 = vst [vmem:[#allocation2 + $0x14] sm:$0x1] %v404
        %v406 = vld [vmem:[#allocation2 + $0x20] sm:$0x1]
        %v407 = vsel %vm399, 0, %v406
        %408 = vst [vmem:[#allocation2 + $0x20] sm:$0x1] %v407
        %v409 = vld [vmem:[#allocation2 + $0x2c] sm:$0x1]
        %v410 = vsel %vm399, 0, %v409
        %411 = vst [vmem:[#allocation2 + $0x2c] sm:$0x1] %v410
        %v412 = vld [vmem:[#allocation2 + $0x38] sm:$0x1]
        %v413 = vsel %vm399, 0, %v412
        %414 = vst [vmem:[#allocation2 + $0x38] sm:$0x1] %v413
        %v415 = vld [vmem:[#allocation2 + $0x44] sm:$0x1]
        %v416 = vsel %vm399, 0, %v415
        %417 = vst [vmem:[#allocation2 + $0x44] sm:$0x1] %v416
        %v418 = vld [vmem:[#allocation2 + $0x50] sm:$0x1]
        %v419 = vsel %vm399, 0, %v418
        %420 = vst [vmem:[#allocation2 + $0x50] sm:$0x1] %v419
        %v421 = vld [vmem:[#allocation2 + $0x5c] sm:$0x1]
        %v422 = vsel %vm399, 0, %v421
        %423 = vst [vmem:[#allocation2 + $0x5c] sm:$0x1] %v422
        %v424 = vld [vmem:[#allocation2 + $0x68] sm:$0x1]
        %v425 = vsel %vm399, 0, %v424
        %426 = vst [vmem:[#allocation2 + $0x68] sm:$0x1] %v425
        %v427 = vld [vmem:[#allocation2 + $0x74] sm:$0x1]
        %v428 = vsel %vm399, 0, %v427
        %429 = vst [vmem:[#allocation2 + $0x74] sm:$0x1] %v428
        %v430 = vld [vmem:[#allocation2 + $0x80] sm:$0x1]
        %v431 = vsel %vm399, 0, %v430
        %432 = vst [vmem:[#allocation2 + $0x80] sm:$0x1] %v431
        %v433 = vld [vmem:[#allocation2 + $0x8c] sm:$0x1]
        %v434 = vsel %vm399, 0, %v433
        %435 = vst [vmem:[#allocation2 + $0x8c] sm:$0x1] %v434
        %v436 = vld [vmem:[#allocation2 + $0x98] sm:$0x1]
        %v437 = vsel %vm399, 0, %v436
        %438 = vst [vmem:[#allocation2 + $0x98] sm:$0x1] %v437
        %v439 = vld [vmem:[#allocation2 + $0xa4] sm:$0x1]
        %v440 = vsel %vm399, 0, %v439
        %441 = vst [vmem:[#allocation2 + $0xa4] sm:$0x1] %v440
        %v442 = vld [vmem:[#allocation2 + $0xb0] sm:$0x1]
        %v443 = vsel %vm399, 0, %v442
        %444 = vst [vmem:[#allocation2 + $0xb0] sm:$0x1] %v443
        %v445 = vld [vmem:[#allocation2 + $0xbc] sm:$0x1]
        %v446 = vsel %vm399, 0, %v445
        %447 = vst [vmem:[#allocation2 + $0xbc] sm:$0x1] %v446
        %v448 = vld [vmem:[#allocation2 + $0xc8] sm:$0x1]
        %v449 = vsel %vm399, 0, %v448
        %450 = vst [vmem:[#allocation2 + $0xc8] sm:$0x1] %v449
        %v451 = vld [vmem:[#allocation2 + $0xd4] sm:$0x1]
        %v452 = vsel %vm399, 0, %v451
        %453 = vst [vmem:[#allocation2 + $0xd4] sm:$0x1] %v452
        %vm454 = vcmask 60416
        %455 = vst.msk [vmem:[#allocation3] sm:$0xf] %vm454, 0
        %456 = vst.msk [vmem:[#allocation3 + $0x4] sm:$0xf] %vm454, 0
        %vm457 = vcmask 57344
        %458 = vst.msk [vmem:[#allocation3 + $0x8] sm:$0x1] %vm457, 0
        %s459 = scalar_lea.vmem [#allocation3], 204
        %460 = vst.msk [vmem:[%s459] sm:$0xf] %vm454, 0
        %461 = vst.msk [vmem:[%s459 + $0x4] sm:$0xf] %vm454, 0
        %462 = vst.msk [vmem:[%s459 + $0x8] sm:$0x1] %vm457, 0
        %vm463 = vcmask 57344
        %vm464 = vmand %vm463, %vm342
        %v465 = vld [vmem:[#allocation3] sm:$0x1]
        %v466 = vsel %vm464, 0, %v465
        %467 = vst [vmem:[#allocation3] sm:$0x1] %v466
        %v468 = vld [vmem:[#allocation3 + $0xc] sm:$0x1]
        %v469 = vsel %vm464, 0, %v468
        %470 = vst [vmem:[#allocation3 + $0xc] sm:$0x1] %v469
        %v471 = vld [vmem:[#allocation3 + $0x18] sm:$0x1]
        %v472 = vsel %vm464, 0, %v471
        %473 = vst [vmem:[#allocation3 + $0x18] sm:$0x1] %v472
        %v474 = vld [vmem:[#allocation3 + $0x24] sm:$0x1]
        %v475 = vsel %vm464, 0, %v474
        %476 = vst [vmem:[#allocation3 + $0x24] sm:$0x1] %v475
        %v477 = vld [vmem:[#allocation3 + $0x30] sm:$0x1]
        %v478 = vsel %vm464, 0, %v477
        %479 = vst [vmem:[#allocation3 + $0x30] sm:$0x1] %v478
        %v480 = vld [vmem:[#allocation3 + $0x3c] sm:$0x1]
        %v481 = vsel %vm464, 0, %v480
        %482 = vst [vmem:[#allocation3 + $0x3c] sm:$0x1] %v481
        %v483 = vld [vmem:[#allocation3 + $0x48] sm:$0x1]
        %v484 = vsel %vm464, 0, %v483
        %485 = vst [vmem:[#allocation3 + $0x48] sm:$0x1] %v484
        %v486 = vld [vmem:[#allocation3 + $0x54] sm:$0x1]
        %v487 = vsel %vm464, 0, %v486
        %488 = vst [vmem:[#allocation3 + $0x54] sm:$0x1] %v487
        %v489 = vld [vmem:[#allocation3 + $0x60] sm:$0x1]
        %v490 = vsel %vm464, 0, %v489
        %491 = vst [vmem:[#allocation3 + $0x60] sm:$0x1] %v490
        %v492 = vld [vmem:[#allocation3 + $0x6c] sm:$0x1]
        %v493 = vsel %vm464, 0, %v492
        %494 = vst [vmem:[#allocation3 + $0x6c] sm:$0x1] %v493
        %v495 = vld [vmem:[#allocation3 + $0x78] sm:$0x1]
        %v496 = vsel %vm464, 0, %v495
        %497 = vst [vmem:[#allocation3 + $0x78] sm:$0x1] %v496
        %v498 = vld [vmem:[#allocation3 + $0x84] sm:$0x1]
        %v499 = vsel %vm464, 0, %v498
        %500 = vst [vmem:[#allocation3 + $0x84] sm:$0x1] %v499
        %v501 = vld [vmem:[#allocation3 + $0x90] sm:$0x1]
        %v502 = vsel %vm464, 0, %v501
        %503 = vst [vmem:[#allocation3 + $0x90] sm:$0x1] %v502
        %v504 = vld [vmem:[#allocation3 + $0x9c] sm:$0x1]
        %v505 = vsel %vm464, 0, %v504
        %506 = vst [vmem:[#allocation3 + $0x9c] sm:$0x1] %v505
        %v507 = vld [vmem:[#allocation3 + $0xa8] sm:$0x1]
        %v508 = vsel %vm464, 0, %v507
        %509 = vst [vmem:[#allocation3 + $0xa8] sm:$0x1] %v508
        %v510 = vld [vmem:[#allocation3 + $0xb4] sm:$0x1]
        %v511 = vsel %vm464, 0, %v510
        %512 = vst [vmem:[#allocation3 + $0xb4] sm:$0x1] %v511
        %v513 = vld [vmem:[#allocation3 + $0xc0] sm:$0x1]
        %v514 = vsel %vm464, 0, %v513
        %515 = vst [vmem:[#allocation3 + $0xc0] sm:$0x1] %v514
        %v516 = vld [vmem:[#allocation3 + $0xcc] sm:$0x1]
        %v517 = vsel %vm464, 0, %v516
        %518 = vst [vmem:[#allocation3 + $0xcc] sm:$0x1] %v517
        %vm519 = vmand %vm463, %vm398
        %v520 = vld [vmem:[#allocation3 + $0x8] sm:$0x1]
        %v521 = vsel %vm519, 0, %v520
        %522 = vst [vmem:[#allocation3 + $0x8] sm:$0x1] %v521
        %v523 = vld [vmem:[#allocation3 + $0x14] sm:$0x1]
        %v524 = vsel %vm519, 0, %v523
        %525 = vst [vmem:[#allocation3 + $0x14] sm:$0x1] %v524
        %v526 = vld [vmem:[#allocation3 + $0x20] sm:$0x1]
        %v527 = vsel %vm519, 0, %v526
        %528 = vst [vmem:[#allocation3 + $0x20] sm:$0x1] %v527
        %v529 = vld [vmem:[#allocation3 + $0x2c] sm:$0x1]
        %v530 = vsel %vm519, 0, %v529
        %531 = vst [vmem:[#allocation3 + $0x2c] sm:$0x1] %v530
        %v532 = vld [vmem:[#allocation3 + $0x38] sm:$0x1]
        %v533 = vsel %vm519, 0, %v532
        %534 = vst [vmem:[#allocation3 + $0x38] sm:$0x1] %v533
        %v535 = vld [vmem:[#allocation3 + $0x44] sm:$0x1]
        %v536 = vsel %vm519, 0, %v535
        %537 = vst [vmem:[#allocation3 + $0x44] sm:$0x1] %v536
        %v538 = vld [vmem:[#allocation3 + $0x50] sm:$0x1]
        %v539 = vsel %vm519, 0, %v538
        %540 = vst [vmem:[#allocation3 + $0x50] sm:$0x1] %v539
        %v541 = vld [vmem:[#allocation3 + $0x5c] sm:$0x1]
        %v542 = vsel %vm519, 0, %v541
        %543 = vst [vmem:[#allocation3 + $0x5c] sm:$0x1] %v542
        %v544 = vld [vmem:[#allocation3 + $0x68] sm:$0x1]
        %v545 = vsel %vm519, 0, %v544
        %546 = vst [vmem:[#allocation3 + $0x68] sm:$0x1] %v545
        %v547 = vld [vmem:[#allocation3 + $0x74] sm:$0x1]
        %v548 = vsel %vm519, 0, %v547
        %549 = vst [vmem:[#allocation3 + $0x74] sm:$0x1] %v548
        %v550 = vld [vmem:[#allocation3 + $0x80] sm:$0x1]
        %v551 = vsel %vm519, 0, %v550
        %552 = vst [vmem:[#allocation3 + $0x80] sm:$0x1] %v551
        %v553 = vld [vmem:[#allocation3 + $0x8c] sm:$0x1]
        %v554 = vsel %vm519, 0, %v553
        %555 = vst [vmem:[#allocation3 + $0x8c] sm:$0x1] %v554
        %v556 = vld [vmem:[#allocation3 + $0x98] sm:$0x1]
        %v557 = vsel %vm519, 0, %v556
        %558 = vst [vmem:[#allocation3 + $0x98] sm:$0x1] %v557
        %v559 = vld [vmem:[#allocation3 + $0xa4] sm:$0x1]
        %v560 = vsel %vm519, 0, %v559
        %561 = vst [vmem:[#allocation3 + $0xa4] sm:$0x1] %v560
        %v562 = vld [vmem:[#allocation3 + $0xb0] sm:$0x1]
        %v563 = vsel %vm519, 0, %v562
        %564 = vst [vmem:[#allocation3 + $0xb0] sm:$0x1] %v563
        %v565 = vld [vmem:[#allocation3 + $0xbc] sm:$0x1]
        %v566 = vsel %vm519, 0, %v565
        %567 = vst [vmem:[#allocation3 + $0xbc] sm:$0x1] %v566
        %v568 = vld [vmem:[#allocation3 + $0xc8] sm:$0x1]
        %v569 = vsel %vm519, 0, %v568
        %570 = vst [vmem:[#allocation3 + $0xc8] sm:$0x1] %v569
        %v571 = vld [vmem:[#allocation3 + $0xd4] sm:$0x1]
        %v572 = vsel %vm519, 0, %v571
        %573 = vst [vmem:[#allocation3 + $0xd4] sm:$0x1] %v572
        %v574 = vld [vmem:[%s330] sm:$0xff]
        %v575 = vld [vmem:[%s330 + $0x8] sm:$0xff]
        %v576 = vld [vmem:[%s330 + $0x10] sm:$0xff]
        %v577 = vld [vmem:[%s330 + $0x18] sm:$0xff]
        %v578 = vld [vmem:[%s330 + $0x20] sm:$0xff]
        %v579 = vld [vmem:[%s330 + $0x28] sm:$0xff]
        %v580 = vld [vmem:[%s330 + $0x30] sm:$0xff]
        %v581 = vld [vmem:[%s330 + $0x38] sm:$0xff]
        %v582 = vld [vmem:[%s330 + $0x40] sm:$0xff]
        %v583 = vld [vmem:[%s330 + $0x48] sm:$0xff]
        %v584 = vld [vmem:[%s330 + $0x50] sm:$0xff]
        %v585 = vld [vmem:[%s330 + $0x58] sm:$0xff]
        %v586 = vld [vmem:[%s330 + $0x60] sm:$0xff]
        %v587 = vld [vmem:[%s330 + $0x68] sm:$0xff]
        %v588 = vld [vmem:[%s330 + $0x70] sm:$0xff]
        %v589 = vld [vmem:[%s330 + $0x78] sm:$0xff]
        %v590 = vld [vmem:[%s330 + $0x80] sm:$0xff]
        %v591 = vld [vmem:[%s330 + $0x88] sm:$0xff]
        %v592 = vld [vmem:[%s330 + $0x90] sm:$0xff]
        %v593 = vld [vmem:[%s330 + $0x98] sm:$0xff]
        %v594 = vld [vmem:[%s330 + $0xa0] sm:$0xff]
        %v595 = vld [vmem:[%s330 + $0xa8] sm:$0xff]
        %v596 = vld [vmem:[%s330 + $0xb0] sm:$0xff]
        %v597 = vld [vmem:[%s330 + $0xb8] sm:$0xff]
        %v598 = vld [vmem:[%s330 + $0xc0] sm:$0xff]
        %v599 = vld [vmem:[%s330 + $0xc8] sm:$0xff]
        %v600 = vld [vmem:[%s330 + $0xd0] sm:$0xff]
        %v601 = vld [vmem:[%s330 + $0xd8] sm:$0xff]
        %v602 = vld [vmem:[%s330 + $0xe0] sm:$0xff]
        %v603 = vld [vmem:[%s330 + $0xe8] sm:$0xff]
        %v604 = vld [vmem:[%s330 + $0xf0] sm:$0xff]
        %v605 = vld [vmem:[%s330 + $0xf8] sm:$0xff]
        %v606 = vpack.c.bf16 %v575, %v574
        %v607 = vpack.c.bf16 %v577, %v576
        %v608 = vpack.c.bf16 %v579, %v578
        %v609 = vpack.c.bf16 %v581, %v580
        %v610 = vpack.c.bf16 %v583, %v582
        %v611 = vpack.c.bf16 %v585, %v584
        %v612 = vpack.c.bf16 %v587, %v586
        %v613 = vpack.c.bf16 %v589, %v588
        %v614 = vpack.c.bf16 %v591, %v590
        %v615 = vpack.c.bf16 %v593, %v592
        %v616 = vpack.c.bf16 %v595, %v594
        %v617 = vpack.c.bf16 %v597, %v596
        %v618 = vpack.c.bf16 %v599, %v598
        %v619 = vpack.c.bf16 %v601, %v600
        %v620 = vpack.c.bf16 %v603, %v602
        %v621 = vpack.c.bf16 %v605, %v604
        %v638 = vunpack.c.l.b16 %v606
        %v639 = vunpack.c.h.b16 %v606
        %v640 = vunpack.c.l.b16 %v607
        %v641 = vunpack.c.h.b16 %v607
        %v642 = vunpack.c.l.b16 %v608
        %v643 = vunpack.c.h.b16 %v608
        %v644 = vunpack.c.l.b16 %v609
        %v645 = vunpack.c.h.b16 %v609
        %v646 = vunpack.c.l.b16 %v610
        %v647 = vunpack.c.h.b16 %v610
        %v648 = vunpack.c.l.b16 %v611
        %v649 = vunpack.c.h.b16 %v611
        %v650 = vunpack.c.l.b16 %v612
        %v651 = vunpack.c.h.b16 %v612
        %v652 = vunpack.c.l.b16 %v613
        %v653 = vunpack.c.h.b16 %v613
        %v654 = vunpack.c.l.b16 %v614
        %v655 = vunpack.c.h.b16 %v614
        %v656 = vunpack.c.l.b16 %v615
        %v657 = vunpack.c.h.b16 %v615
        %v658 = vunpack.c.l.b16 %v616
        %v659 = vunpack.c.h.b16 %v616
        %v660 = vunpack.c.l.b16 %v617
        %v661 = vunpack.c.h.b16 %v617
        %v662 = vunpack.c.l.b16 %v618
        %v663 = vunpack.c.h.b16 %v618
        %v664 = vunpack.c.l.b16 %v619
        %v665 = vunpack.c.h.b16 %v619
        %v666 = vunpack.c.l.b16 %v620
        %v667 = vunpack.c.h.b16 %v620
        %v668 = vunpack.c.l.b16 %v621
        %v669 = vunpack.c.h.b16 %v621
        %v670 = vpack.c.b16 %v638, %v638
        %v671 = vpack.c.b16 %v639, %v639
        %v672 = vpack.c.b16 %v640, %v640
        %v673 = vpack.c.b16 %v641, %v641
        %v674 = vpack.c.b16 %v642, %v642
        %v675 = vpack.c.b16 %v643, %v643
        %v676 = vpack.c.b16 %v644, %v644
        %v677 = vpack.c.b16 %v645, %v645
        %v678 = vpack.c.b16 %v646, %v646
        %v679 = vpack.c.b16 %v647, %v647
        %v680 = vpack.c.b16 %v648, %v648
        %v681 = vpack.c.b16 %v649, %v649
        %v682 = vpack.c.b16 %v650, %v650
        %v683 = vpack.c.b16 %v651, %v651
        %v684 = vpack.c.b16 %v652, %v652
        %v685 = vpack.c.b16 %v653, %v653
        %v686 = vpack.c.b16 %v654, %v654
        %v687 = vpack.c.b16 %v655, %v655
        %v688 = vpack.c.b16 %v656, %v656
        %v689 = vpack.c.b16 %v657, %v657
        %v690 = vpack.c.b16 %v658, %v658
        %v691 = vpack.c.b16 %v659, %v659
        %v692 = vpack.c.b16 %v660, %v660
        %v693 = vpack.c.b16 %v661, %v661
        %v694 = vpack.c.b16 %v662, %v662
        %v695 = vpack.c.b16 %v663, %v663
        %v696 = vpack.c.b16 %v664, %v664
        %v697 = vpack.c.b16 %v665, %v665
        %v698 = vpack.c.b16 %v666, %v666
        %v699 = vpack.c.b16 %v667, %v667
        %v700 = vpack.c.b16 %v668, %v668
        %v701 = vpack.c.b16 %v669, %v669
        %vm702 = vsmask.f32 4368
        %vm703 = vmor %vm342, %vm702
        %v705 = vshrl.u32 %v670, 16
        %v707 = vrot.slane %v705, 7
        %v708 = vshll.u32 %v670, 16
        %v710 = vor.u32 %v707, %v708
        %v711 = vrot.slane %v707, 4
        %v713 = vshrl.u32 %v671, 16
        %v715 = vrot.slane %v713, 7
        %v716 = vshll.u32 %v671, 16
        %v718 = vor.u32 %v715, %v716
        %v719 = vsel %vm703, %v711, %v718
        %v720 = vrot.slane %v715, 4
        %v722 = vshrl.u32 %v672, 16
        %v724 = vrot.slane %v722, 7
        %v725 = vshll.u32 %v672, 16
        %v727 = vor.u32 %v724, %v725
        %v728 = vrot.slane %v724, 4
        %v730 = vshrl.u32 %v673, 16
        %v732 = vrot.slane %v730, 7
        %v733 = vshll.u32 %v673, 16
        %v735 = vor.u32 %v732, %v733
        %v736 = vsel %vm703, %v728, %v735
        %v737 = vrot.slane %v732, 4
        %v739 = vshrl.u32 %v674, 16
        %v741 = vrot.slane %v739, 7
        %v742 = vshll.u32 %v674, 16
        %v744 = vor.u32 %v741, %v742
        %v745 = vrot.slane %v741, 4
        %v747 = vshrl.u32 %v675, 16
        %v749 = vrot.slane %v747, 7
        %v750 = vshll.u32 %v675, 16
        %v752 = vor.u32 %v749, %v750
        %v753 = vsel %vm703, %v745, %v752
        %v754 = vrot.slane %v749, 4
        %v756 = vshrl.u32 %v676, 16
        %v758 = vrot.slane %v756, 7
        %v759 = vshll.u32 %v676, 16
        %v761 = vor.u32 %v758, %v759
        %v762 = vrot.slane %v758, 4
        %v764 = vshrl.u32 %v677, 16
        %v766 = vrot.slane %v764, 7
        %v767 = vshll.u32 %v677, 16
        %v769 = vor.u32 %v766, %v767
        %v770 = vsel %vm703, %v762, %v769
        %v771 = vrot.slane %v766, 4
        %v773 = vshrl.u32 %v678, 16
        %v775 = vrot.slane %v773, 7
        %v776 = vshll.u32 %v678, 16
        %v778 = vor.u32 %v775, %v776
        %v779 = vrot.slane %v775, 4
        %v781 = vshrl.u32 %v679, 16
        %v783 = vrot.slane %v781, 7
        %v784 = vshll.u32 %v679, 16
        %v786 = vor.u32 %v783, %v784
        %v787 = vsel %vm703, %v779, %v786
        %v788 = vrot.slane %v783, 4
        %v790 = vshrl.u32 %v680, 16
        %v792 = vrot.slane %v790, 7
        %v793 = vshll.u32 %v680, 16
        %v795 = vor.u32 %v792, %v793
        %v796 = vrot.slane %v792, 4
        %v798 = vshrl.u32 %v681, 16
        %v800 = vrot.slane %v798, 7
        %v801 = vshll.u32 %v681, 16
        %v803 = vor.u32 %v800, %v801
        %v804 = vsel %vm703, %v796, %v803
        %v805 = vrot.slane %v800, 4
        %v807 = vshrl.u32 %v682, 16
        %v809 = vrot.slane %v807, 7
        %v810 = vshll.u32 %v682, 16
        %v812 = vor.u32 %v809, %v810
        %v813 = vrot.slane %v809, 4
        %v815 = vshrl.u32 %v683, 16
        %v817 = vrot.slane %v815, 7
        %v818 = vshll.u32 %v683, 16
        %v820 = vor.u32 %v817, %v818
        %v821 = vsel %vm703, %v813, %v820
        %v822 = vrot.slane %v817, 4
        %v824 = vshrl.u32 %v684, 16
        %v826 = vrot.slane %v824, 7
        %v827 = vshll.u32 %v684, 16
        %v829 = vor.u32 %v826, %v827
        %v830 = vrot.slane %v826, 4
        %v832 = vshrl.u32 %v685, 16
        %v834 = vrot.slane %v832, 7
        %v835 = vshll.u32 %v685, 16
        %v837 = vor.u32 %v834, %v835
        %v838 = vsel %vm703, %v830, %v837
        %v839 = vrot.slane %v834, 4
        %v841 = vshrl.u32 %v686, 16
        %v843 = vrot.slane %v841, 7
        %v844 = vshll.u32 %v686, 16
        %v846 = vor.u32 %v843, %v844
        %v847 = vrot.slane %v843, 4
        %v849 = vshrl.u32 %v687, 16
        %v851 = vrot.slane %v849, 7
        %v852 = vshll.u32 %v687, 16
        %v854 = vor.u32 %v851, %v852
        %v855 = vsel %vm703, %v847, %v854
        %v856 = vrot.slane %v851, 4
        %v858 = vshrl.u32 %v688, 16
        %v860 = vrot.slane %v858, 7
        %v861 = vshll.u32 %v688, 16
        %v863 = vor.u32 %v860, %v861
        %v864 = vrot.slane %v860, 4
        %v866 = vshrl.u32 %v689, 16
        %v868 = vrot.slane %v866, 7
        %v869 = vshll.u32 %v689, 16
        %v871 = vor.u32 %v868, %v869
        %v872 = vsel %vm703, %v864, %v871
        %v873 = vrot.slane %v868, 4
        %v875 = vshrl.u32 %v690, 16
        %v877 = vrot.slane %v875, 7
        %v878 = vshll.u32 %v690, 16
        %v880 = vor.u32 %v877, %v878
        %v881 = vrot.slane %v877, 4
        %v883 = vshrl.u32 %v691, 16
        %v885 = vrot.slane %v883, 7
        %v886 = vshll.u32 %v691, 16
        %v888 = vor.u32 %v885, %v886
        %v889 = vsel %vm703, %v881, %v888
        %v890 = vrot.slane %v885, 4
        %v892 = vshrl.u32 %v692, 16
        %v894 = vrot.slane %v892, 7
        %v895 = vshll.u32 %v692, 16
        %v897 = vor.u32 %v894, %v895
        %v898 = vrot.slane %v894, 4
        %v900 = vshrl.u32 %v693, 16
        %v902 = vrot.slane %v900, 7
        %v903 = vshll.u32 %v693, 16
        %v905 = vor.u32 %v902, %v903
        %v906 = vsel %vm703, %v898, %v905
        %v907 = vrot.slane %v902, 4
        %v909 = vshrl.u32 %v694, 16
        %v911 = vrot.slane %v909, 7
        %v912 = vshll.u32 %v694, 16
        %v914 = vor.u32 %v911, %v912
        %v915 = vrot.slane %v911, 4
        %v917 = vshrl.u32 %v695, 16
        %v919 = vrot.slane %v917, 7
        %v920 = vshll.u32 %v695, 16
        %v922 = vor.u32 %v919, %v920
        %v923 = vsel %vm703, %v915, %v922
        %v924 = vrot.slane %v919, 4
        %v926 = vshrl.u32 %v696, 16
        %v928 = vrot.slane %v926, 7
        %v929 = vshll.u32 %v696, 16
        %v931 = vor.u32 %v928, %v929
        %v932 = vrot.slane %v928, 4
        %v934 = vshrl.u32 %v697, 16
        %v936 = vrot.slane %v934, 7
        %v937 = vshll.u32 %v697, 16
        %v939 = vor.u32 %v936, %v937
        %v940 = vsel %vm703, %v932, %v939
        %v941 = vrot.slane %v936, 4
        %v943 = vshrl.u32 %v698, 16
        %v945 = vrot.slane %v943, 7
        %v946 = vshll.u32 %v698, 16
        %v948 = vor.u32 %v945, %v946
        %v949 = vrot.slane %v945, 4
        %v951 = vshrl.u32 %v699, 16
        %v953 = vrot.slane %v951, 7
        %v954 = vshll.u32 %v699, 16
        %v956 = vor.u32 %v953, %v954
        %v957 = vsel %vm703, %v949, %v956
        %v958 = vrot.slane %v953, 4
        %v960 = vshrl.u32 %v700, 16
        %v962 = vrot.slane %v960, 7
        %v963 = vshll.u32 %v700, 16
        %v965 = vor.u32 %v962, %v963
        %v966 = vrot.slane %v962, 4
        %v968 = vshrl.u32 %v701, 16
        %v970 = vrot.slane %v968, 7
        %v971 = vshll.u32 %v701, 16
        %v973 = vor.u32 %v970, %v971
        %v974 = vsel %vm703, %v966, %v973
        %v975 = vrot.slane %v970, 4
        %s1024 = scalar_lea.vmem [#allocation2], 12
        %vm1025 = vcmask 27648
        %vm1026 = vmand %vm1025, %vm398
        %v1027 = vld [vmem:[%s1024] sm:$0xf]
        %v1028 = vsel %vm1026, %v710, %v1027
        %1029 = vst [vmem:[%s1024] sm:$0xf] %v1028
        %1030 = vst.msk [vmem:[%s1024 + $0x4] sm:$0xf] %vm332, %v719
        %v1031 = vld [vmem:[%s1024 + $0x8] sm:$0x1]
        %v1032 = vsel %vm343, %v720, %v1031
        %1033 = vst [vmem:[%s1024 + $0x8] sm:$0x1] %v1032
        %v1034 = vld [vmem:[%s1024 + $0xc] sm:$0xf]
        %v1035 = vsel %vm1026, %v727, %v1034
        %1036 = vst [vmem:[%s1024 + $0xc] sm:$0xf] %v1035
        %1037 = vst.msk [vmem:[%s1024 + $0x10] sm:$0xf] %vm332, %v736
        %v1038 = vld [vmem:[%s1024 + $0x14] sm:$0x1]
        %v1039 = vsel %vm343, %v737, %v1038
        %1040 = vst [vmem:[%s1024 + $0x14] sm:$0x1] %v1039
        %v1041 = vld [vmem:[%s1024 + $0x18] sm:$0xf]
        %v1042 = vsel %vm1026, %v744, %v1041
        %1043 = vst [vmem:[%s1024 + $0x18] sm:$0xf] %v1042
        %1044 = vst.msk [vmem:[%s1024 + $0x1c] sm:$0xf] %vm332, %v753
        %v1045 = vld [vmem:[%s1024 + $0x20] sm:$0x1]
        %v1046 = vsel %vm343, %v754, %v1045
        %1047 = vst [vmem:[%s1024 + $0x20] sm:$0x1] %v1046
        %v1048 = vld [vmem:[%s1024 + $0x24] sm:$0xf]
        %v1049 = vsel %vm1026, %v761, %v1048
        %1050 = vst [vmem:[%s1024 + $0x24] sm:$0xf] %v1049
        %1051 = vst.msk [vmem:[%s1024 + $0x28] sm:$0xf] %vm332, %v770
        %v1052 = vld [vmem:[%s1024 + $0x2c] sm:$0x1]
        %v1053 = vsel %vm343, %v771, %v1052
        %1054 = vst [vmem:[%s1024 + $0x2c] sm:$0x1] %v1053
        %v1055 = vld [vmem:[%s1024 + $0x30] sm:$0xf]
        %v1056 = vsel %vm1026, %v778, %v1055
        %1057 = vst [vmem:[%s1024 + $0x30] sm:$0xf] %v1056
        %1058 = vst.msk [vmem:[%s1024 + $0x34] sm:$0xf] %vm332, %v787
        %v1059 = vld [vmem:[%s1024 + $0x38] sm:$0x1]
        %v1060 = vsel %vm343, %v788, %v1059
        %1061 = vst [vmem:[%s1024 + $0x38] sm:$0x1] %v1060
        %v1062 = vld [vmem:[%s1024 + $0x3c] sm:$0xf]
        %v1063 = vsel %vm1026, %v795, %v1062
        %1064 = vst [vmem:[%s1024 + $0x3c] sm:$0xf] %v1063
        %1065 = vst.msk [vmem:[%s1024 + $0x40] sm:$0xf] %vm332, %v804
        %v1066 = vld [vmem:[%s1024 + $0x44] sm:$0x1]
        %v1067 = vsel %vm343, %v805, %v1066
        %1068 = vst [vmem:[%s1024 + $0x44] sm:$0x1] %v1067
        %v1069 = vld [vmem:[%s1024 + $0x48] sm:$0xf]
        %v1070 = vsel %vm1026, %v812, %v1069
        %1071 = vst [vmem:[%s1024 + $0x48] sm:$0xf] %v1070
        %1072 = vst.msk [vmem:[%s1024 + $0x4c] sm:$0xf] %vm332, %v821
        %v1073 = vld [vmem:[%s1024 + $0x50] sm:$0x1]
        %v1074 = vsel %vm343, %v822, %v1073
        %1075 = vst [vmem:[%s1024 + $0x50] sm:$0x1] %v1074
        %v1076 = vld [vmem:[%s1024 + $0x54] sm:$0xf]
        %v1077 = vsel %vm1026, %v829, %v1076
        %1078 = vst [vmem:[%s1024 + $0x54] sm:$0xf] %v1077
        %1079 = vst.msk [vmem:[%s1024 + $0x58] sm:$0xf] %vm332, %v838
        %v1080 = vld [vmem:[%s1024 + $0x5c] sm:$0x1]
        %v1081 = vsel %vm343, %v839, %v1080
        %1082 = vst [vmem:[%s1024 + $0x5c] sm:$0x1] %v1081
        %v1083 = vld [vmem:[%s1024 + $0x60] sm:$0xf]
        %v1084 = vsel %vm1026, %v846, %v1083
        %1085 = vst [vmem:[%s1024 + $0x60] sm:$0xf] %v1084
        %1086 = vst.msk [vmem:[%s1024 + $0x64] sm:$0xf] %vm332, %v855
        %v1087 = vld [vmem:[%s1024 + $0x68] sm:$0x1]
        %v1088 = vsel %vm343, %v856, %v1087
        %1089 = vst [vmem:[%s1024 + $0x68] sm:$0x1] %v1088
        %v1090 = vld [vmem:[%s1024 + $0x6c] sm:$0xf]
        %v1091 = vsel %vm1026, %v863, %v1090
        %1092 = vst [vmem:[%s1024 + $0x6c] sm:$0xf] %v1091
        %1093 = vst.msk [vmem:[%s1024 + $0x70] sm:$0xf] %vm332, %v872
        %v1094 = vld [vmem:[%s1024 + $0x74] sm:$0x1]
        %v1095 = vsel %vm343, %v873, %v1094
        %1096 = vst [vmem:[%s1024 + $0x74] sm:$0x1] %v1095
        %v1097 = vld [vmem:[%s1024 + $0x78] sm:$0xf]
        %v1098 = vsel %vm1026, %v880, %v1097
        %1099 = vst [vmem:[%s1024 + $0x78] sm:$0xf] %v1098
        %1100 = vst.msk [vmem:[%s1024 + $0x7c] sm:$0xf] %vm332, %v889
        %v1101 = vld [vmem:[%s1024 + $0x80] sm:$0x1]
        %v1102 = vsel %vm343, %v890, %v1101
        %1103 = vst [vmem:[%s1024 + $0x80] sm:$0x1] %v1102
        %v1104 = vld [vmem:[%s1024 + $0x84] sm:$0xf]
        %v1105 = vsel %vm1026, %v897, %v1104
        %1106 = vst [vmem:[%s1024 + $0x84] sm:$0xf] %v1105
        %1107 = vst.msk [vmem:[%s1024 + $0x88] sm:$0xf] %vm332, %v906
        %v1108 = vld [vmem:[%s1024 + $0x8c] sm:$0x1]
        %v1109 = vsel %vm343, %v907, %v1108
        %1110 = vst [vmem:[%s1024 + $0x8c] sm:$0x1] %v1109
        %v1111 = vld [vmem:[%s1024 + $0x90] sm:$0xf]
        %v1112 = vsel %vm1026, %v914, %v1111
        %1113 = vst [vmem:[%s1024 + $0x90] sm:$0xf] %v1112
        %1114 = vst.msk [vmem:[%s1024 + $0x94] sm:$0xf] %vm332, %v923
        %v1115 = vld [vmem:[%s1024 + $0x98] sm:$0x1]
        %v1116 = vsel %vm343, %v924, %v1115
        %1117 = vst [vmem:[%s1024 + $0x98] sm:$0x1] %v1116
        %v1118 = vld [vmem:[%s1024 + $0x9c] sm:$0xf]
        %v1119 = vsel %vm1026, %v931, %v1118
        %1120 = vst [vmem:[%s1024 + $0x9c] sm:$0xf] %v1119
        %1121 = vst.msk [vmem:[%s1024 + $0xa0] sm:$0xf] %vm332, %v940
        %v1122 = vld [vmem:[%s1024 + $0xa4] sm:$0x1]
        %v1123 = vsel %vm343, %v941, %v1122
        %1124 = vst [vmem:[%s1024 + $0xa4] sm:$0x1] %v1123
        %v1125 = vld [vmem:[%s1024 + $0xa8] sm:$0xf]
        %v1126 = vsel %vm1026, %v948, %v1125
        %1127 = vst [vmem:[%s1024 + $0xa8] sm:$0xf] %v1126
        %1128 = vst.msk [vmem:[%s1024 + $0xac] sm:$0xf] %vm332, %v957
        %v1129 = vld [vmem:[%s1024 + $0xb0] sm:$0x1]
        %v1130 = vsel %vm343, %v958, %v1129
        %1131 = vst [vmem:[%s1024 + $0xb0] sm:$0x1] %v1130
        %v1132 = vld [vmem:[%s1024 + $0xb4] sm:$0xf]
        %v1133 = vsel %vm1026, %v965, %v1132
        %1134 = vst [vmem:[%s1024 + $0xb4] sm:$0xf] %v1133
        %1135 = vst.msk [vmem:[%s1024 + $0xb8] sm:$0xf] %vm332, %v974
        %v1136 = vld [vmem:[%s1024 + $0xbc] sm:$0x1]
        %v1137 = vsel %vm343, %v975, %v1136
        %1138 = vst [vmem:[%s1024 + $0xbc] sm:$0x1] %v1137
        %v1139 = vld [vmem:[#allocation2] sm:$0xf]
        %v1140 = vld [vmem:[#allocation2 + $0x4] sm:$0xf]
        %v1141 = vld [vmem:[#allocation2 + $0xc] sm:$0xf]
        %v1142 = vld [vmem:[#allocation2 + $0x10] sm:$0xf]
        %v1143 = vld [vmem:[#allocation2 + $0x18] sm:$0xf]
        %v1144 = vld [vmem:[#allocation2 + $0x1c] sm:$0xf]
        %v1145 = vld [vmem:[#allocation2 + $0x24] sm:$0xf]
        %v1146 = vld [vmem:[#allocation2 + $0x28] sm:$0xf]
        %v1147 = vld [vmem:[#allocation2 + $0x30] sm:$0xf]
        %v1148 = vld [vmem:[#allocation2 + $0x34] sm:$0xf]
        %v1149 = vld [vmem:[#allocation2 + $0x3c] sm:$0xf]
        %v1150 = vld [vmem:[#allocation2 + $0x40] sm:$0xf]
        %v1151 = vld [vmem:[#allocation2 + $0x48] sm:$0xf]
        %v1152 = vld [vmem:[#allocation2 + $0x4c] sm:$0xf]
        %v1153 = vld [vmem:[#allocation2 + $0x54] sm:$0xf]
        %v1154 = vld [vmem:[#allocation2 + $0x58] sm:$0xf]
        %v1155 = vld [vmem:[#allocation2 + $0x60] sm:$0xf]
        %v1156 = vld [vmem:[#allocation2 + $0x64] sm:$0xf]
        %v1157 = vld [vmem:[#allocation2 + $0x6c] sm:$0xf]
        %v1158 = vld [vmem:[#allocation2 + $0x70] sm:$0xf]
        %v1159 = vld [vmem:[#allocation2 + $0x78] sm:$0xf]
        %v1160 = vld [vmem:[#allocation2 + $0x7c] sm:$0xf]
        %v1161 = vld [vmem:[#allocation2 + $0x84] sm:$0xf]
        %v1162 = vld [vmem:[#allocation2 + $0x88] sm:$0xf]
        %v1163 = vld [vmem:[#allocation2 + $0x90] sm:$0xf]
        %v1164 = vld [vmem:[#allocation2 + $0x94] sm:$0xf]
        %v1165 = vld [vmem:[#allocation2 + $0x9c] sm:$0xf]
        %v1166 = vld [vmem:[#allocation2 + $0xa0] sm:$0xf]
        %v1167 = vld [vmem:[#allocation2 + $0xa8] sm:$0xf]
        %v1168 = vld [vmem:[#allocation2 + $0xac] sm:$0xf]
        %v1169 = vld [vmem:[#allocation2 + $0xb4] sm:$0xf]
        %v1170 = vld [vmem:[#allocation2 + $0xb8] sm:$0xf]
        %v1171 = vld [vmem:[#allocation2 + $0x8] sm:$0x1]
        %v1172 = vld [vmem:[#allocation2 + $0x14] sm:$0x1]
        %v1173 = vld [vmem:[#allocation2 + $0x20] sm:$0x1]
        %v1174 = vld [vmem:[#allocation2 + $0x2c] sm:$0x1]
        %v1175 = vld [vmem:[#allocation2 + $0x38] sm:$0x1]
        %v1176 = vld [vmem:[#allocation2 + $0x44] sm:$0x1]
        %v1177 = vld [vmem:[#allocation2 + $0x50] sm:$0x1]
        %v1178 = vld [vmem:[#allocation2 + $0x5c] sm:$0x1]
        %v1179 = vld [vmem:[#allocation2 + $0x68] sm:$0x1]
        %v1180 = vld [vmem:[#allocation2 + $0x74] sm:$0x1]
        %v1181 = vld [vmem:[#allocation2 + $0x80] sm:$0x1]
        %v1182 = vld [vmem:[#allocation2 + $0x8c] sm:$0x1]
        %v1183 = vld [vmem:[#allocation2 + $0x98] sm:$0x1]
        %v1184 = vld [vmem:[#allocation2 + $0xa4] sm:$0x1]
        %v1185 = vld [vmem:[#allocation2 + $0xb0] sm:$0x1]
        %v1186 = vld [vmem:[#allocation2 + $0xbc] sm:$0x1]
        %vm1187 = vsmask.f32 3328
        %vm1188 = vsmask.f32 7440
        %vm1189 = vmor %vm1187, %vm1188
        %v1191 = vshrl.u32 %v1139, 16
        %v1193 = vrot.slane %v1191, 4
        %v1194 = vshll.u32 %v1139, 16
        %v1196 = vrot.slane %v1194, 5
        %v1197 = vor.u32 %v1193, %v1196
        %v1198 = vrot.slane %v1197, 4
        %v1200 = vshll.u32 %v1140, 16
        %v1202 = vrot.slane %v1200, 5
        %v1203 = vsel %vm1189, %v1198, %v1202
        %v1204 = vshrl.u32 %v1140, 16
        %v1206 = vrot.slane %v1204, 4
        %v1207 = vor.u32 %v1206, %v1202
        %v1208 = vrot.slane %v1207, 4
        %v1210 = vshll.u32 %v1171, 16
        %v1212 = vrot.slane %v1210, 5
        %v1213 = vsel %vm1189, %v1208, %v1212
        %v1215 = vshrl.u32 %v1141, 16
        %v1217 = vrot.slane %v1215, 4
        %v1218 = vshll.u32 %v1141, 16
        %v1220 = vrot.slane %v1218, 5
        %v1221 = vor.u32 %v1217, %v1220
        %v1222 = vrot.slane %v1221, 4
        %v1224 = vshll.u32 %v1142, 16
        %v1226 = vrot.slane %v1224, 5
        %v1227 = vsel %vm1189, %v1222, %v1226
        %v1228 = vshrl.u32 %v1142, 16
        %v1230 = vrot.slane %v1228, 4
        %v1231 = vor.u32 %v1230, %v1226
        %v1232 = vrot.slane %v1231, 4
        %v1234 = vshll.u32 %v1172, 16
        %v1236 = vrot.slane %v1234, 5
        %v1237 = vsel %vm1189, %v1232, %v1236
        %v1239 = vshrl.u32 %v1143, 16
        %v1241 = vrot.slane %v1239, 4
        %v1242 = vshll.u32 %v1143, 16
        %v1244 = vrot.slane %v1242, 5
        %v1245 = vor.u32 %v1241, %v1244
        %v1246 = vrot.slane %v1245, 4
        %v1248 = vshll.u32 %v1144, 16
        %v1250 = vrot.slane %v1248, 5
        %v1251 = vsel %vm1189, %v1246, %v1250
        %v1252 = vshrl.u32 %v1144, 16
        %v1254 = vrot.slane %v1252, 4
        %v1255 = vor.u32 %v1254, %v1250
        %v1256 = vrot.slane %v1255, 4
        %v1258 = vshll.u32 %v1173, 16
        %v1260 = vrot.slane %v1258, 5
        %v1261 = vsel %vm1189, %v1256, %v1260
        %v1263 = vshrl.u32 %v1145, 16
        %v1265 = vrot.slane %v1263, 4
        %v1266 = vshll.u32 %v1145, 16
        %v1268 = vrot.slane %v1266, 5
        %v1269 = vor.u32 %v1265, %v1268
        %v1270 = vrot.slane %v1269, 4
        %v1272 = vshll.u32 %v1146, 16
        %v1274 = vrot.slane %v1272, 5
        %v1275 = vsel %vm1189, %v1270, %v1274
        %v1276 = vshrl.u32 %v1146, 16
        %v1278 = vrot.slane %v1276, 4
        %v1279 = vor.u32 %v1278, %v1274
        %v1280 = vrot.slane %v1279, 4
        %v1282 = vshll.u32 %v1174, 16
        %v1284 = vrot.slane %v1282, 5
        %v1285 = vsel %vm1189, %v1280, %v1284
        %v1287 = vshrl.u32 %v1147, 16
        %v1289 = vrot.slane %v1287, 4
        %v1290 = vshll.u32 %v1147, 16
        %v1292 = vrot.slane %v1290, 5
        %v1293 = vor.u32 %v1289, %v1292
        %v1294 = vrot.slane %v1293, 4
        %v1296 = vshll.u32 %v1148, 16
        %v1298 = vrot.slane %v1296, 5
        %v1299 = vsel %vm1189, %v1294, %v1298
        %v1300 = vshrl.u32 %v1148, 16
        %v1302 = vrot.slane %v1300, 4
        %v1303 = vor.u32 %v1302, %v1298
        %v1304 = vrot.slane %v1303, 4
        %v1306 = vshll.u32 %v1175, 16
        %v1308 = vrot.slane %v1306, 5
        %v1309 = vsel %vm1189, %v1304, %v1308
        %v1311 = vshrl.u32 %v1149, 16
        %v1313 = vrot.slane %v1311, 4
        %v1314 = vshll.u32 %v1149, 16
        %v1316 = vrot.slane %v1314, 5
        %v1317 = vor.u32 %v1313, %v1316
        %v1318 = vrot.slane %v1317, 4
        %v1320 = vshll.u32 %v1150, 16
        %v1322 = vrot.slane %v1320, 5
        %v1323 = vsel %vm1189, %v1318, %v1322
        %v1324 = vshrl.u32 %v1150, 16
        %v1326 = vrot.slane %v1324, 4
        %v1327 = vor.u32 %v1326, %v1322
        %v1328 = vrot.slane %v1327, 4
        %v1330 = vshll.u32 %v1176, 16
        %v1332 = vrot.slane %v1330, 5
        %v1333 = vsel %vm1189, %v1328, %v1332
        %v1335 = vshrl.u32 %v1151, 16
        %v1337 = vrot.slane %v1335, 4
        %v1338 = vshll.u32 %v1151, 16
        %v1340 = vrot.slane %v1338, 5
        %v1341 = vor.u32 %v1337, %v1340
        %v1342 = vrot.slane %v1341, 4
        %v1344 = vshll.u32 %v1152, 16
        %v1346 = vrot.slane %v1344, 5
        %v1347 = vsel %vm1189, %v1342, %v1346
        %v1348 = vshrl.u32 %v1152, 16
        %v1350 = vrot.slane %v1348, 4
        %v1351 = vor.u32 %v1350, %v1346
        %v1352 = vrot.slane %v1351, 4
        %v1354 = vshll.u32 %v1177, 16
        %v1356 = vrot.slane %v1354, 5
        %v1357 = vsel %vm1189, %v1352, %v1356
        %v1359 = vshrl.u32 %v1153, 16
        %v1361 = vrot.slane %v1359, 4
        %v1362 = vshll.u32 %v1153, 16
        %v1364 = vrot.slane %v1362, 5
        %v1365 = vor.u32 %v1361, %v1364
        %v1366 = vrot.slane %v1365, 4
        %v1368 = vshll.u32 %v1154, 16
        %v1370 = vrot.slane %v1368, 5
        %v1371 = vsel %vm1189, %v1366, %v1370
        %v1372 = vshrl.u32 %v1154, 16
        %v1374 = vrot.slane %v1372, 4
        %v1375 = vor.u32 %v1374, %v1370
        %v1376 = vrot.slane %v1375, 4
        %v1378 = vshll.u32 %v1178, 16
        %v1380 = vrot.slane %v1378, 5
        %v1381 = vsel %vm1189, %v1376, %v1380
        %v1383 = vshrl.u32 %v1155, 16
        %v1385 = vrot.slane %v1383, 4
        %v1386 = vshll.u32 %v1155, 16
        %v1388 = vrot.slane %v1386, 5
        %v1389 = vor.u32 %v1385, %v1388
        %v1390 = vrot.slane %v1389, 4
        %v1392 = vshll.u32 %v1156, 16
        %v1394 = vrot.slane %v1392, 5
        %v1395 = vsel %vm1189, %v1390, %v1394
        %v1396 = vshrl.u32 %v1156, 16
        %v1398 = vrot.slane %v1396, 4
        %v1399 = vor.u32 %v1398, %v1394
        %v1400 = vrot.slane %v1399, 4
        %v1402 = vshll.u32 %v1179, 16
        %v1404 = vrot.slane %v1402, 5
        %v1405 = vsel %vm1189, %v1400, %v1404
        %v1407 = vshrl.u32 %v1157, 16
        %v1409 = vrot.slane %v1407, 4
        %v1410 = vshll.u32 %v1157, 16
        %v1412 = vrot.slane %v1410, 5
        %v1413 = vor.u32 %v1409, %v1412
        %v1414 = vrot.slane %v1413, 4
        %v1416 = vshll.u32 %v1158, 16
        %v1418 = vrot.slane %v1416, 5
        %v1419 = vsel %vm1189, %v1414, %v1418
        %v1420 = vshrl.u32 %v1158, 16
        %v1422 = vrot.slane %v1420, 4
        %v1423 = vor.u32 %v1422, %v1418
        %v1424 = vrot.slane %v1423, 4
        %v1426 = vshll.u32 %v1180, 16
        %v1428 = vrot.slane %v1426, 5
        %v1429 = vsel %vm1189, %v1424, %v1428
        %v1431 = vshrl.u32 %v1159, 16
        %v1433 = vrot.slane %v1431, 4
        %v1434 = vshll.u32 %v1159, 16
        %v1436 = vrot.slane %v1434, 5
        %v1437 = vor.u32 %v1433, %v1436
        %v1438 = vrot.slane %v1437, 4
        %v1440 = vshll.u32 %v1160, 16
        %v1442 = vrot.slane %v1440, 5
        %v1443 = vsel %vm1189, %v1438, %v1442
        %v1444 = vshrl.u32 %v1160, 16
        %v1446 = vrot.slane %v1444, 4
        %v1447 = vor.u32 %v1446, %v1442
        %v1448 = vrot.slane %v1447, 4
        %v1450 = vshll.u32 %v1181, 16
        %v1452 = vrot.slane %v1450, 5
        %v1453 = vsel %vm1189, %v1448, %v1452
        %v1455 = vshrl.u32 %v1161, 16
        %v1457 = vrot.slane %v1455, 4
        %v1458 = vshll.u32 %v1161, 16
        %v1460 = vrot.slane %v1458, 5
        %v1461 = vor.u32 %v1457, %v1460
        %v1462 = vrot.slane %v1461, 4
        %v1464 = vshll.u32 %v1162, 16
        %v1466 = vrot.slane %v1464, 5
        %v1467 = vsel %vm1189, %v1462, %v1466
        %v1468 = vshrl.u32 %v1162, 16
        %v1470 = vrot.slane %v1468, 4
        %v1471 = vor.u32 %v1470, %v1466
        %v1472 = vrot.slane %v1471, 4
        %v1474 = vshll.u32 %v1182, 16
        %v1476 = vrot.slane %v1474, 5
        %v1477 = vsel %vm1189, %v1472, %v1476
        %v1479 = vshrl.u32 %v1163, 16
        %v1481 = vrot.slane %v1479, 4
        %v1482 = vshll.u32 %v1163, 16
        %v1484 = vrot.slane %v1482, 5
        %v1485 = vor.u32 %v1481, %v1484
        %v1486 = vrot.slane %v1485, 4
        %v1488 = vshll.u32 %v1164, 16
        %v1490 = vrot.slane %v1488, 5
        %v1491 = vsel %vm1189, %v1486, %v1490
        %v1492 = vshrl.u32 %v1164, 16
        %v1494 = vrot.slane %v1492, 4
        %v1495 = vor.u32 %v1494, %v1490
        %v1496 = vrot.slane %v1495, 4
        %v1498 = vshll.u32 %v1183, 16
        %v1500 = vrot.slane %v1498, 5
        %v1501 = vsel %vm1189, %v1496, %v1500
        %v1503 = vshrl.u32 %v1165, 16
        %v1505 = vrot.slane %v1503, 4
        %v1506 = vshll.u32 %v1165, 16
        %v1508 = vrot.slane %v1506, 5
        %v1509 = vor.u32 %v1505, %v1508
        %v1510 = vrot.slane %v1509, 4
        %v1512 = vshll.u32 %v1166, 16
        %v1514 = vrot.slane %v1512, 5
        %v1515 = vsel %vm1189, %v1510, %v1514
        %v1516 = vshrl.u32 %v1166, 16
        %v1518 = vrot.slane %v1516, 4
        %v1519 = vor.u32 %v1518, %v1514
        %v1520 = vrot.slane %v1519, 4
        %v1522 = vshll.u32 %v1184, 16
        %v1524 = vrot.slane %v1522, 5
        %v1525 = vsel %vm1189, %v1520, %v1524
        %v1527 = vshrl.u32 %v1167, 16
        %v1529 = vrot.slane %v1527, 4
        %v1530 = vshll.u32 %v1167, 16
        %v1532 = vrot.slane %v1530, 5
        %v1533 = vor.u32 %v1529, %v1532
        %v1534 = vrot.slane %v1533, 4
        %v1536 = vshll.u32 %v1168, 16
        %v1538 = vrot.slane %v1536, 5
        %v1539 = vsel %vm1189, %v1534, %v1538
        %v1540 = vshrl.u32 %v1168, 16
        %v1542 = vrot.slane %v1540, 4
        %v1543 = vor.u32 %v1542, %v1538
        %v1544 = vrot.slane %v1543, 4
        %v1546 = vshll.u32 %v1185, 16
        %v1548 = vrot.slane %v1546, 5
        %v1549 = vsel %vm1189, %v1544, %v1548
        %v1551 = vshrl.u32 %v1169, 16
        %v1553 = vrot.slane %v1551, 4
        %v1554 = vshll.u32 %v1169, 16
        %v1556 = vrot.slane %v1554, 5
        %v1557 = vor.u32 %v1553, %v1556
        %v1558 = vrot.slane %v1557, 4
        %v1560 = vshll.u32 %v1170, 16
        %v1562 = vrot.slane %v1560, 5
        %v1563 = vsel %vm1189, %v1558, %v1562
        %v1564 = vshrl.u32 %v1170, 16
        %v1566 = vrot.slane %v1564, 4
        %v1567 = vor.u32 %v1566, %v1562
        %v1568 = vrot.slane %v1567, 4
        %v1570 = vshll.u32 %v1186, 16
        %v1572 = vrot.slane %v1570, 5
        %v1573 = vsel %vm1189, %v1568, %v1572
        %v1574 = vld [vmem:[#allocation2] sm:$0xe]
        %v1575 = vld [vmem:[#allocation2 + $0xc] sm:$0xe]
        %v1576 = vld [vmem:[#allocation2 + $0x18] sm:$0xe]
        %v1577 = vld [vmem:[#allocation2 + $0x24] sm:$0xe]
        %v1578 = vld [vmem:[#allocation2 + $0x30] sm:$0xe]
        %v1579 = vld [vmem:[#allocation2 + $0x3c] sm:$0xe]
        %v1580 = vld [vmem:[#allocation2 + $0x48] sm:$0xe]
        %v1581 = vld [vmem:[#allocation2 + $0x54] sm:$0xe]
        %v1582 = vld [vmem:[#allocation2 + $0x60] sm:$0xe]
        %v1583 = vld [vmem:[#allocation2 + $0x6c] sm:$0xe]
        %v1584 = vld [vmem:[#allocation2 + $0x78] sm:$0xe]
        %v1585 = vld [vmem:[#allocation2 + $0x84] sm:$0xe]
        %v1586 = vld [vmem:[#allocation2 + $0x90] sm:$0xe]
        %v1587 = vld [vmem:[#allocation2 + $0x9c] sm:$0xe]
        %v1588 = vld [vmem:[#allocation2 + $0xa8] sm:$0xe]
        %v1589 = vld [vmem:[#allocation2 + $0xb4] sm:$0xe]
        %vm1638 = vcmask 1042432
        %vm1639 = vcmask 1046532
        %vm1640 = vmor %vm1638, %vm1639
        %v1641 = vrot.slane %v1574, 5
        %v1642 = vrot.slane %v1641, 4
        %v1643 = vrot.slane %v1140, 5
        %v1644 = vsel %vm1640, %v1642, %v1643
        %v1645 = vrot.slane %v1643, 4
        %v1646 = vrot.slane %v1171, 5
        %v1647 = vsel %vm1640, %v1645, %v1646
        %v1648 = vrot.slane %v1575, 5
        %v1649 = vrot.slane %v1648, 4
        %v1650 = vrot.slane %v1142, 5
        %v1651 = vsel %vm1640, %v1649, %v1650
        %v1652 = vrot.slane %v1650, 4
        %v1653 = vrot.slane %v1172, 5
        %v1654 = vsel %vm1640, %v1652, %v1653
        %v1655 = vrot.slane %v1576, 5
        %v1656 = vrot.slane %v1655, 4
        %v1657 = vrot.slane %v1144, 5
        %v1658 = vsel %vm1640, %v1656, %v1657
        %v1659 = vrot.slane %v1657, 4
        %v1660 = vrot.slane %v1173, 5
        %v1661 = vsel %vm1640, %v1659, %v1660
        %v1662 = vrot.slane %v1577, 5
        %v1663 = vrot.slane %v1662, 4
        %v1664 = vrot.slane %v1146, 5
        %v1665 = vsel %vm1640, %v1663, %v1664
        %v1666 = vrot.slane %v1664, 4
        %v1667 = vrot.slane %v1174, 5
        %v1668 = vsel %vm1640, %v1666, %v1667
        %v1669 = vrot.slane %v1578, 5
        %v1670 = vrot.slane %v1669, 4
        %v1671 = vrot.slane %v1148, 5
        %v1672 = vsel %vm1640, %v1670, %v1671
        %v1673 = vrot.slane %v1671, 4
        %v1674 = vrot.slane %v1175, 5
        %v1675 = vsel %vm1640, %v1673, %v1674
        %v1676 = vrot.slane %v1579, 5
        %v1677 = vrot.slane %v1676, 4
        %v1678 = vrot.slane %v1150, 5
        %v1679 = vsel %vm1640, %v1677, %v1678
        %v1680 = vrot.slane %v1678, 4
        %v1681 = vrot.slane %v1176, 5
        %v1682 = vsel %vm1640, %v1680, %v1681
        %v1683 = vrot.slane %v1580, 5
        %v1684 = vrot.slane %v1683, 4
        %v1685 = vrot.slane %v1152, 5
        %v1686 = vsel %vm1640, %v1684, %v1685
        %v1687 = vrot.slane %v1685, 4
        %v1688 = vrot.slane %v1177, 5
        %v1689 = vsel %vm1640, %v1687, %v1688
        %v1690 = vrot.slane %v1581, 5
        %v1691 = vrot.slane %v1690, 4
        %v1692 = vrot.slane %v1154, 5
        %v1693 = vsel %vm1640, %v1691, %v1692
        %v1694 = vrot.slane %v1692, 4
        %v1695 = vrot.slane %v1178, 5
        %v1696 = vsel %vm1640, %v1694, %v1695
        %v1697 = vrot.slane %v1582, 5
        %v1698 = vrot.slane %v1697, 4
        %v1699 = vrot.slane %v1156, 5
        %v1700 = vsel %vm1640, %v1698, %v1699
        %v1701 = vrot.slane %v1699, 4
        %v1702 = vrot.slane %v1179, 5
        %v1703 = vsel %vm1640, %v1701, %v1702
        %v1704 = vrot.slane %v1583, 5
        %v1705 = vrot.slane %v1704, 4
        %v1706 = vrot.slane %v1158, 5
        %v1707 = vsel %vm1640, %v1705, %v1706
        %v1708 = vrot.slane %v1706, 4
        %v1709 = vrot.slane %v1180, 5
        %v1710 = vsel %vm1640, %v1708, %v1709
        %v1711 = vrot.slane %v1584, 5
        %v1712 = vrot.slane %v1711, 4
        %v1713 = vrot.slane %v1160, 5
        %v1714 = vsel %vm1640, %v1712, %v1713
        %v1715 = vrot.slane %v1713, 4
        %v1716 = vrot.slane %v1181, 5
        %v1717 = vsel %vm1640, %v1715, %v1716
        %v1718 = vrot.slane %v1585, 5
        %v1719 = vrot.slane %v1718, 4
        %v1720 = vrot.slane %v1162, 5
        %v1721 = vsel %vm1640, %v1719, %v1720
        %v1722 = vrot.slane %v1720, 4
        %v1723 = vrot.slane %v1182, 5
        %v1724 = vsel %vm1640, %v1722, %v1723
        %v1725 = vrot.slane %v1586, 5
        %v1726 = vrot.slane %v1725, 4
        %v1727 = vrot.slane %v1164, 5
        %v1728 = vsel %vm1640, %v1726, %v1727
        %v1729 = vrot.slane %v1727, 4
        %v1730 = vrot.slane %v1183, 5
        %v1731 = vsel %vm1640, %v1729, %v1730
        %v1732 = vrot.slane %v1587, 5
        %v1733 = vrot.slane %v1732, 4
        %v1734 = vrot.slane %v1166, 5
        %v1735 = vsel %vm1640, %v1733, %v1734
        %v1736 = vrot.slane %v1734, 4
        %v1737 = vrot.slane %v1184, 5
        %v1738 = vsel %vm1640, %v1736, %v1737
        %v1739 = vrot.slane %v1588, 5
        %v1740 = vrot.slane %v1739, 4
        %v1741 = vrot.slane %v1168, 5
        %v1742 = vsel %vm1640, %v1740, %v1741
        %v1743 = vrot.slane %v1741, 4
        %v1744 = vrot.slane %v1185, 5
        %v1745 = vsel %vm1640, %v1743, %v1744
        %v1746 = vrot.slane %v1589, 5
        %v1747 = vrot.slane %v1746, 4
        %v1748 = vrot.slane %v1170, 5
        %v1749 = vsel %vm1640, %v1747, %v1748
        %v1750 = vrot.slane %v1748, 4
        %v1751 = vrot.slane %v1186, 5
        %v1752 = vsel %vm1640, %v1750, %v1751
        %v1753 = vld [vmem:[%s1024] sm:$0xf]
        %v1754 = vld [vmem:[%s1024 + $0x4] sm:$0xf]
        %v1755 = vld [vmem:[%s1024 + $0xc] sm:$0xf]
        %v1756 = vld [vmem:[%s1024 + $0x10] sm:$0xf]
        %v1757 = vld [vmem:[%s1024 + $0x18] sm:$0xf]
        %v1758 = vld [vmem:[%s1024 + $0x1c] sm:$0xf]
        %v1759 = vld [vmem:[%s1024 + $0x24] sm:$0xf]
        %v1760 = vld [vmem:[%s1024 + $0x28] sm:$0xf]
        %v1761 = vld [vmem:[%s1024 + $0x30] sm:$0xf]
        %v1762 = vld [vmem:[%s1024 + $0x34] sm:$0xf]
        %v1763 = vld [vmem:[%s1024 + $0x3c] sm:$0xf]
        %v1764 = vld [vmem:[%s1024 + $0x40] sm:$0xf]
        %v1765 = vld [vmem:[%s1024 + $0x48] sm:$0xf]
        %v1766 = vld [vmem:[%s1024 + $0x4c] sm:$0xf]
        %v1767 = vld [vmem:[%s1024 + $0x54] sm:$0xf]
        %v1768 = vld [vmem:[%s1024 + $0x58] sm:$0xf]
        %v1769 = vld [vmem:[%s1024 + $0x60] sm:$0xf]
        %v1770 = vld [vmem:[%s1024 + $0x64] sm:$0xf]
        %v1771 = vld [vmem:[%s1024 + $0x6c] sm:$0xf]
        %v1772 = vld [vmem:[%s1024 + $0x70] sm:$0xf]
        %v1773 = vld [vmem:[%s1024 + $0x78] sm:$0xf]
        %v1774 = vld [vmem:[%s1024 + $0x7c] sm:$0xf]
        %v1775 = vld [vmem:[%s1024 + $0x84] sm:$0xf]
        %v1776 = vld [vmem:[%s1024 + $0x88] sm:$0xf]
        %v1777 = vld [vmem:[%s1024 + $0x90] sm:$0xf]
        %v1778 = vld [vmem:[%s1024 + $0x94] sm:$0xf]
        %v1779 = vld [vmem:[%s1024 + $0x9c] sm:$0xf]
        %v1780 = vld [vmem:[%s1024 + $0xa0] sm:$0xf]
        %v1781 = vld [vmem:[%s1024 + $0xa8] sm:$0xf]
        %v1782 = vld [vmem:[%s1024 + $0xac] sm:$0xf]
        %v1783 = vld [vmem:[%s1024 + $0xb4] sm:$0xf]
        %v1784 = vld [vmem:[%s1024 + $0xb8] sm:$0xf]
        %v1785 = vld [vmem:[%s1024 + $0x8] sm:$0x1]
        %v1786 = vld [vmem:[%s1024 + $0x14] sm:$0x1]
        %v1787 = vld [vmem:[%s1024 + $0x20] sm:$0x1]
        %v1788 = vld [vmem:[%s1024 + $0x2c] sm:$0x1]
        %v1789 = vld [vmem:[%s1024 + $0x38] sm:$0x1]
        %v1790 = vld [vmem:[%s1024 + $0x44] sm:$0x1]
        %v1791 = vld [vmem:[%s1024 + $0x50] sm:$0x1]
        %v1792 = vld [vmem:[%s1024 + $0x5c] sm:$0x1]
        %v1793 = vld [vmem:[%s1024 + $0x68] sm:$0x1]
        %v1794 = vld [vmem:[%s1024 + $0x74] sm:$0x1]
        %v1795 = vld [vmem:[%s1024 + $0x80] sm:$0x1]
        %v1796 = vld [vmem:[%s1024 + $0x8c] sm:$0x1]
        %v1797 = vld [vmem:[%s1024 + $0x98] sm:$0x1]
        %v1798 = vld [vmem:[%s1024 + $0xa4] sm:$0x1]
        %v1799 = vld [vmem:[%s1024 + $0xb0] sm:$0x1]
        %v1800 = vld [vmem:[%s1024 + $0xbc] sm:$0x1]
        %v1802 = vshrl.u32 %v1753, 16
        %v1804 = vrot.slane %v1802, 4
        %v1805 = vshll.u32 %v1753, 16
        %v1807 = vrot.slane %v1805, 5
        %v1808 = vor.u32 %v1804, %v1807
        %v1809 = vrot.slane %v1808, 4
        %v1811 = vshll.u32 %v1754, 16
        %v1813 = vrot.slane %v1811, 5
        %v1814 = vsel %vm1189, %v1809, %v1813
        %v1815 = vshrl.u32 %v1754, 16
        %v1817 = vrot.slane %v1815, 4
        %v1818 = vor.u32 %v1817, %v1813
        %v1819 = vrot.slane %v1818, 4
        %v1821 = vshll.u32 %v1785, 16
        %v1823 = vrot.slane %v1821, 5
        %v1824 = vsel %vm1189, %v1819, %v1823
        %v1826 = vshrl.u32 %v1755, 16
        %v1828 = vrot.slane %v1826, 4
        %v1829 = vshll.u32 %v1755, 16
        %v1831 = vrot.slane %v1829, 5
        %v1832 = vor.u32 %v1828, %v1831
        %v1833 = vrot.slane %v1832, 4
        %v1835 = vshll.u32 %v1756, 16
        %v1837 = vrot.slane %v1835, 5
        %v1838 = vsel %vm1189, %v1833, %v1837
        %v1839 = vshrl.u32 %v1756, 16
        %v1841 = vrot.slane %v1839, 4
        %v1842 = vor.u32 %v1841, %v1837
        %v1843 = vrot.slane %v1842, 4
        %v1845 = vshll.u32 %v1786, 16
        %v1847 = vrot.slane %v1845, 5
        %v1848 = vsel %vm1189, %v1843, %v1847
        %v1850 = vshrl.u32 %v1757, 16
        %v1852 = vrot.slane %v1850, 4
        %v1853 = vshll.u32 %v1757, 16
        %v1855 = vrot.slane %v1853, 5
        %v1856 = vor.u32 %v1852, %v1855
        %v1857 = vrot.slane %v1856, 4
        %v1859 = vshll.u32 %v1758, 16
        %v1861 = vrot.slane %v1859, 5
        %v1862 = vsel %vm1189, %v1857, %v1861
        %v1863 = vshrl.u32 %v1758, 16
        %v1865 = vrot.slane %v1863, 4
        %v1866 = vor.u32 %v1865, %v1861
        %v1867 = vrot.slane %v1866, 4
        %v1869 = vshll.u32 %v1787, 16
        %v1871 = vrot.slane %v1869, 5
        %v1872 = vsel %vm1189, %v1867, %v1871
        %v1874 = vshrl.u32 %v1759, 16
        %v1876 = vrot.slane %v1874, 4
        %v1877 = vshll.u32 %v1759, 16
        %v1879 = vrot.slane %v1877, 5
        %v1880 = vor.u32 %v1876, %v1879
        %v1881 = vrot.slane %v1880, 4
        %v1883 = vshll.u32 %v1760, 16
        %v1885 = vrot.slane %v1883, 5
        %v1886 = vsel %vm1189, %v1881, %v1885
        %v1887 = vshrl.u32 %v1760, 16
        %v1889 = vrot.slane %v1887, 4
        %v1890 = vor.u32 %v1889, %v1885
        %v1891 = vrot.slane %v1890, 4
        %v1893 = vshll.u32 %v1788, 16
        %v1895 = vrot.slane %v1893, 5
        %v1896 = vsel %vm1189, %v1891, %v1895
        %v1898 = vshrl.u32 %v1761, 16
        %v1900 = vrot.slane %v1898, 4
        %v1901 = vshll.u32 %v1761, 16
        %v1903 = vrot.slane %v1901, 5
        %v1904 = vor.u32 %v1900, %v1903
        %v1905 = vrot.slane %v1904, 4
        %v1907 = vshll.u32 %v1762, 16
        %v1909 = vrot.slane %v1907, 5
        %v1910 = vsel %vm1189, %v1905, %v1909
        %v1911 = vshrl.u32 %v1762, 16
        %v1913 = vrot.slane %v1911, 4
        %v1914 = vor.u32 %v1913, %v1909
        %v1915 = vrot.slane %v1914, 4
        %v1917 = vshll.u32 %v1789, 16
        %v1919 = vrot.slane %v1917, 5
        %v1920 = vsel %vm1189, %v1915, %v1919
        %v1922 = vshrl.u32 %v1763, 16
        %v1924 = vrot.slane %v1922, 4
        %v1925 = vshll.u32 %v1763, 16
        %v1927 = vrot.slane %v1925, 5
        %v1928 = vor.u32 %v1924, %v1927
        %v1929 = vrot.slane %v1928, 4
        %v1931 = vshll.u32 %v1764, 16
        %v1933 = vrot.slane %v1931, 5
        %v1934 = vsel %vm1189, %v1929, %v1933
        %v1935 = vshrl.u32 %v1764, 16
        %v1937 = vrot.slane %v1935, 4
        %v1938 = vor.u32 %v1937, %v1933
        %v1939 = vrot.slane %v1938, 4
        %v1941 = vshll.u32 %v1790, 16
        %v1943 = vrot.slane %v1941, 5
        %v1944 = vsel %vm1189, %v1939, %v1943
        %v1946 = vshrl.u32 %v1765, 16
        %v1948 = vrot.slane %v1946, 4
        %v1949 = vshll.u32 %v1765, 16
        %v1951 = vrot.slane %v1949, 5
        %v1952 = vor.u32 %v1948, %v1951
        %v1953 = vrot.slane %v1952, 4
        %v1955 = vshll.u32 %v1766, 16
        %v1957 = vrot.slane %v1955, 5
        %v1958 = vsel %vm1189, %v1953, %v1957
        %v1959 = vshrl.u32 %v1766, 16
        %v1961 = vrot.slane %v1959, 4
        %v1962 = vor.u32 %v1961, %v1957
        %v1963 = vrot.slane %v1962, 4
        %v1965 = vshll.u32 %v1791, 16
        %v1967 = vrot.slane %v1965, 5
        %v1968 = vsel %vm1189, %v1963, %v1967
        %v1970 = vshrl.u32 %v1767, 16
        %v1972 = vrot.slane %v1970, 4
        %v1973 = vshll.u32 %v1767, 16
        %v1975 = vrot.slane %v1973, 5
        %v1976 = vor.u32 %v1972, %v1975
        %v1977 = vrot.slane %v1976, 4
        %v1979 = vshll.u32 %v1768, 16
        %v1981 = vrot.slane %v1979, 5
        %v1982 = vsel %vm1189, %v1977, %v1981
        %v1983 = vshrl.u32 %v1768, 16
        %v1985 = vrot.slane %v1983, 4
        %v1986 = vor.u32 %v1985, %v1981
        %v1987 = vrot.slane %v1986, 4
        %v1989 = vshll.u32 %v1792, 16
        %v1991 = vrot.slane %v1989, 5
        %v1992 = vsel %vm1189, %v1987, %v1991
        %v1994 = vshrl.u32 %v1769, 16
        %v1996 = vrot.slane %v1994, 4
        %v1997 = vshll.u32 %v1769, 16
        %v1999 = vrot.slane %v1997, 5
        %v2000 = vor.u32 %v1996, %v1999
        %v2001 = vrot.slane %v2000, 4
        %v2003 = vshll.u32 %v1770, 16
        %v2005 = vrot.slane %v2003, 5
        %v2006 = vsel %vm1189, %v2001, %v2005
        %v2007 = vshrl.u32 %v1770, 16
        %v2009 = vrot.slane %v2007, 4
        %v2010 = vor.u32 %v2009, %v2005
        %v2011 = vrot.slane %v2010, 4
        %v2013 = vshll.u32 %v1793, 16
        %v2015 = vrot.slane %v2013, 5
        %v2016 = vsel %vm1189, %v2011, %v2015
        %v2018 = vshrl.u32 %v1771, 16
        %v2020 = vrot.slane %v2018, 4
        %v2021 = vshll.u32 %v1771, 16
        %v2023 = vrot.slane %v2021, 5
        %v2024 = vor.u32 %v2020, %v2023
        %v2025 = vrot.slane %v2024, 4
        %v2027 = vshll.u32 %v1772, 16
        %v2029 = vrot.slane %v2027, 5
        %v2030 = vsel %vm1189, %v2025, %v2029
        %v2031 = vshrl.u32 %v1772, 16
        %v2033 = vrot.slane %v2031, 4
        %v2034 = vor.u32 %v2033, %v2029
        %v2035 = vrot.slane %v2034, 4
        %v2037 = vshll.u32 %v1794, 16
        %v2039 = vrot.slane %v2037, 5
        %v2040 = vsel %vm1189, %v2035, %v2039
        %v2042 = vshrl.u32 %v1773, 16
        %v2044 = vrot.slane %v2042, 4
        %v2045 = vshll.u32 %v1773, 16
        %v2047 = vrot.slane %v2045, 5
        %v2048 = vor.u32 %v2044, %v2047
        %v2049 = vrot.slane %v2048, 4
        %v2051 = vshll.u32 %v1774, 16
        %v2053 = vrot.slane %v2051, 5
        %v2054 = vsel %vm1189, %v2049, %v2053
        %v2055 = vshrl.u32 %v1774, 16
        %v2057 = vrot.slane %v2055, 4
        %v2058 = vor.u32 %v2057, %v2053
        %v2059 = vrot.slane %v2058, 4
        %v2061 = vshll.u32 %v1795, 16
        %v2063 = vrot.slane %v2061, 5
        %v2064 = vsel %vm1189, %v2059, %v2063
        %v2066 = vshrl.u32 %v1775, 16
        %v2068 = vrot.slane %v2066, 4
        %v2069 = vshll.u32 %v1775, 16
        %v2071 = vrot.slane %v2069, 5
        %v2072 = vor.u32 %v2068, %v2071
        %v2073 = vrot.slane %v2072, 4
        %v2075 = vshll.u32 %v1776, 16
        %v2077 = vrot.slane %v2075, 5
        %v2078 = vsel %vm1189, %v2073, %v2077
        %v2079 = vshrl.u32 %v1776, 16
        %v2081 = vrot.slane %v2079, 4
        %v2082 = vor.u32 %v2081, %v2077
        %v2083 = vrot.slane %v2082, 4
        %v2085 = vshll.u32 %v1796, 16
        %v2087 = vrot.slane %v2085, 5
        %v2088 = vsel %vm1189, %v2083, %v2087
        %v2090 = vshrl.u32 %v1777, 16
        %v2092 = vrot.slane %v2090, 4
        %v2093 = vshll.u32 %v1777, 16
        %v2095 = vrot.slane %v2093, 5
        %v2096 = vor.u32 %v2092, %v2095
        %v2097 = vrot.slane %v2096, 4
        %v2099 = vshll.u32 %v1778, 16
        %v2101 = vrot.slane %v2099, 5
        %v2102 = vsel %vm1189, %v2097, %v2101
        %v2103 = vshrl.u32 %v1778, 16
        %v2105 = vrot.slane %v2103, 4
        %v2106 = vor.u32 %v2105, %v2101
        %v2107 = vrot.slane %v2106, 4
        %v2109 = vshll.u32 %v1797, 16
        %v2111 = vrot.slane %v2109, 5
        %v2112 = vsel %vm1189, %v2107, %v2111
        %v2114 = vshrl.u32 %v1779, 16
        %v2116 = vrot.slane %v2114, 4
        %v2117 = vshll.u32 %v1779, 16
        %v2119 = vrot.slane %v2117, 5
        %v2120 = vor.u32 %v2116, %v2119
        %v2121 = vrot.slane %v2120, 4
        %v2123 = vshll.u32 %v1780, 16
        %v2125 = vrot.slane %v2123, 5
        %v2126 = vsel %vm1189, %v2121, %v2125
        %v2127 = vshrl.u32 %v1780, 16
        %v2129 = vrot.slane %v2127, 4
        %v2130 = vor.u32 %v2129, %v2125
        %v2131 = vrot.slane %v2130, 4
        %v2133 = vshll.u32 %v1798, 16
        %v2135 = vrot.slane %v2133, 5
        %v2136 = vsel %vm1189, %v2131, %v2135
        %v2138 = vshrl.u32 %v1781, 16
        %v2140 = vrot.slane %v2138, 4
        %v2141 = vshll.u32 %v1781, 16
        %v2143 = vrot.slane %v2141, 5
        %v2144 = vor.u32 %v2140, %v2143
        %v2145 = vrot.slane %v2144, 4
        %v2147 = vshll.u32 %v1782, 16
        %v2149 = vrot.slane %v2147, 5
        %v2150 = vsel %vm1189, %v2145, %v2149
        %v2151 = vshrl.u32 %v1782, 16
        %v2153 = vrot.slane %v2151, 4
        %v2154 = vor.u32 %v2153, %v2149
        %v2155 = vrot.slane %v2154, 4
        %v2157 = vshll.u32 %v1799, 16
        %v2159 = vrot.slane %v2157, 5
        %v2160 = vsel %vm1189, %v2155, %v2159
        %v2162 = vshrl.u32 %v1783, 16
        %v2164 = vrot.slane %v2162, 4
        %v2165 = vshll.u32 %v1783, 16
        %v2167 = vrot.slane %v2165, 5
        %v2168 = vor.u32 %v2164, %v2167
        %v2169 = vrot.slane %v2168, 4
        %v2171 = vshll.u32 %v1784, 16
        %v2173 = vrot.slane %v2171, 5
        %v2174 = vsel %vm1189, %v2169, %v2173
        %v2175 = vshrl.u32 %v1784, 16
        %v2177 = vrot.slane %v2175, 4
        %v2178 = vor.u32 %v2177, %v2173
        %v2179 = vrot.slane %v2178, 4
        %v2181 = vshll.u32 %v1800, 16
        %v2183 = vrot.slane %v2181, 5
        %v2184 = vsel %vm1189, %v2179, %v2183
        %v2185 = vld [vmem:[%s1024] sm:$0xe]
        %v2186 = vld [vmem:[%s1024 + $0xc] sm:$0xe]
        %v2187 = vld [vmem:[%s1024 + $0x18] sm:$0xe]
        %v2188 = vld [vmem:[%s1024 + $0x24] sm:$0xe]
        %v2189 = vld [vmem:[%s1024 + $0x30] sm:$0xe]
        %v2190 = vld [vmem:[%s1024 + $0x3c] sm:$0xe]
        %v2191 = vld [vmem:[%s1024 + $0x48] sm:$0xe]
        %v2192 = vld [vmem:[%s1024 + $0x54] sm:$0xe]
        %v2193 = vld [vmem:[%s1024 + $0x60] sm:$0xe]
        %v2194 = vld [vmem:[%s1024 + $0x6c] sm:$0xe]
        %v2195 = vld [vmem:[%s1024 + $0x78] sm:$0xe]
        %v2196 = vld [vmem:[%s1024 + $0x84] sm:$0xe]
        %v2197 = vld [vmem:[%s1024 + $0x90] sm:$0xe]
        %v2198 = vld [vmem:[%s1024 + $0x9c] sm:$0xe]
        %v2199 = vld [vmem:[%s1024 + $0xa8] sm:$0xe]
        %v2200 = vld [vmem:[%s1024 + $0xb4] sm:$0xe]
        %v2249 = vrot.slane %v2185, 5
        %v2250 = vrot.slane %v2249, 4
        %v2251 = vrot.slane %v1754, 5
        %v2252 = vsel %vm1640, %v2250, %v2251
        %v2253 = vrot.slane %v2251, 4
        %v2254 = vrot.slane %v1785, 5
        %v2255 = vsel %vm1640, %v2253, %v2254
        %v2256 = vrot.slane %v2186, 5
        %v2257 = vrot.slane %v2256, 4
        %v2258 = vrot.slane %v1756, 5
        %v2259 = vsel %vm1640, %v2257, %v2258
        %v2260 = vrot.slane %v2258, 4
        %v2261 = vrot.slane %v1786, 5
        %v2262 = vsel %vm1640, %v2260, %v2261
        %v2263 = vrot.slane %v2187, 5
        %v2264 = vrot.slane %v2263, 4
        %v2265 = vrot.slane %v1758, 5
        %v2266 = vsel %vm1640, %v2264, %v2265
        %v2267 = vrot.slane %v2265, 4
        %v2268 = vrot.slane %v1787, 5
        %v2269 = vsel %vm1640, %v2267, %v2268
        %v2270 = vrot.slane %v2188, 5
        %v2271 = vrot.slane %v2270, 4
        %v2272 = vrot.slane %v1760, 5
        %v2273 = vsel %vm1640, %v2271, %v2272
        %v2274 = vrot.slane %v2272, 4
        %v2275 = vrot.slane %v1788, 5
        %v2276 = vsel %vm1640, %v2274, %v2275
        %v2277 = vrot.slane %v2189, 5
        %v2278 = vrot.slane %v2277, 4
        %v2279 = vrot.slane %v1762, 5
        %v2280 = vsel %vm1640, %v2278, %v2279
        %v2281 = vrot.slane %v2279, 4
        %v2282 = vrot.slane %v1789, 5
        %v2283 = vsel %vm1640, %v2281, %v2282
        %v2284 = vrot.slane %v2190, 5
        %v2285 = vrot.slane %v2284, 4
        %v2286 = vrot.slane %v1764, 5
        %v2287 = vsel %vm1640, %v2285, %v2286
        %v2288 = vrot.slane %v2286, 4
        %v2289 = vrot.slane %v1790, 5
        %v2290 = vsel %vm1640, %v2288, %v2289
        %v2291 = vrot.slane %v2191, 5
        %v2292 = vrot.slane %v2291, 4
        %v2293 = vrot.slane %v1766, 5
        %v2294 = vsel %vm1640, %v2292, %v2293
        %v2295 = vrot.slane %v2293, 4
        %v2296 = vrot.slane %v1791, 5
        %v2297 = vsel %vm1640, %v2295, %v2296
        %v2298 = vrot.slane %v2192, 5
        %v2299 = vrot.slane %v2298, 4
        %v2300 = vrot.slane %v1768, 5
        %v2301 = vsel %vm1640, %v2299, %v2300
        %v2302 = vrot.slane %v2300, 4
        %v2303 = vrot.slane %v1792, 5
        %v2304 = vsel %vm1640, %v2302, %v2303
        %v2305 = vrot.slane %v2193, 5
        %v2306 = vrot.slane %v2305, 4
        %v2307 = vrot.slane %v1770, 5
        %v2308 = vsel %vm1640, %v2306, %v2307
        %v2309 = vrot.slane %v2307, 4
        %v2310 = vrot.slane %v1793, 5
        %v2311 = vsel %vm1640, %v2309, %v2310
        %v2312 = vrot.slane %v2194, 5
        %v2313 = vrot.slane %v2312, 4
        %v2314 = vrot.slane %v1772, 5
        %v2315 = vsel %vm1640, %v2313, %v2314
        %v2316 = vrot.slane %v2314, 4
        %v2317 = vrot.slane %v1794, 5
        %v2318 = vsel %vm1640, %v2316, %v2317
        %v2319 = vrot.slane %v2195, 5
        %v2320 = vrot.slane %v2319, 4
        %v2321 = vrot.slane %v1774, 5
        %v2322 = vsel %vm1640, %v2320, %v2321
        %v2323 = vrot.slane %v2321, 4
        %v2324 = vrot.slane %v1795, 5
        %v2325 = vsel %vm1640, %v2323, %v2324
        %v2326 = vrot.slane %v2196, 5
        %v2327 = vrot.slane %v2326, 4
        %v2328 = vrot.slane %v1776, 5
        %v2329 = vsel %vm1640, %v2327, %v2328
        %v2330 = vrot.slane %v2328, 4
        %v2331 = vrot.slane %v1796, 5
        %v2332 = vsel %vm1640, %v2330, %v2331
        %v2333 = vrot.slane %v2197, 5
        %v2334 = vrot.slane %v2333, 4
        %v2335 = vrot.slane %v1778, 5
        %v2336 = vsel %vm1640, %v2334, %v2335
        %v2337 = vrot.slane %v2335, 4
        %v2338 = vrot.slane %v1797, 5
        %v2339 = vsel %vm1640, %v2337, %v2338
        %v2340 = vrot.slane %v2198, 5
        %v2341 = vrot.slane %v2340, 4
        %v2342 = vrot.slane %v1780, 5
        %v2343 = vsel %vm1640, %v2341, %v2342
        %v2344 = vrot.slane %v2342, 4
        %v2345 = vrot.slane %v1798, 5
        %v2346 = vsel %vm1640, %v2344, %v2345
        %v2347 = vrot.slane %v2199, 5
        %v2348 = vrot.slane %v2347, 4
        %v2349 = vrot.slane %v1782, 5
        %v2350 = vsel %vm1640, %v2348, %v2349
        %v2351 = vrot.slane %v2349, 4
        %v2352 = vrot.slane %v1799, 5
        %v2353 = vsel %vm1640, %v2351, %v2352
        %v2354 = vrot.slane %v2200, 5
        %v2355 = vrot.slane %v2354, 4
        %v2356 = vrot.slane %v1784, 5
        %v2357 = vsel %vm1640, %v2355, %v2356
        %v2358 = vrot.slane %v2356, 4
        %v2359 = vrot.slane %v1800, 5
        %v2360 = vsel %vm1640, %v2358, %v2359
        %s2361 = scalar_lea.vmem [#allocation2], 24
        %v2362 = vld [vmem:[%s2361] sm:$0xf]
        %v2363 = vld [vmem:[%s2361 + $0x4] sm:$0xf]
        %v2364 = vld [vmem:[%s2361 + $0xc] sm:$0xf]
        %v2365 = vld [vmem:[%s2361 + $0x10] sm:$0xf]
        %v2366 = vld [vmem:[%s2361 + $0x18] sm:$0xf]
        %v2367 = vld [vmem:[%s2361 + $0x1c] sm:$0xf]
        %v2368 = vld [vmem:[%s2361 + $0x24] sm:$0xf]
        %v2369 = vld [vmem:[%s2361 + $0x28] sm:$0xf]
        %v2370 = vld [vmem:[%s2361 + $0x30] sm:$0xf]
        %v2371 = vld [vmem:[%s2361 + $0x34] sm:$0xf]
        %v2372 = vld [vmem:[%s2361 + $0x3c] sm:$0xf]
        %v2373 = vld [vmem:[%s2361 + $0x40] sm:$0xf]
        %v2374 = vld [vmem:[%s2361 + $0x48] sm:$0xf]
        %v2375 = vld [vmem:[%s2361 + $0x4c] sm:$0xf]
        %v2376 = vld [vmem:[%s2361 + $0x54] sm:$0xf]
        %v2377 = vld [vmem:[%s2361 + $0x58] sm:$0xf]
        %v2378 = vld [vmem:[%s2361 + $0x60] sm:$0xf]
        %v2379 = vld [vmem:[%s2361 + $0x64] sm:$0xf]
        %v2380 = vld [vmem:[%s2361 + $0x6c] sm:$0xf]
        %v2381 = vld [vmem:[%s2361 + $0x70] sm:$0xf]
        %v2382 = vld [vmem:[%s2361 + $0x78] sm:$0xf]
        %v2383 = vld [vmem:[%s2361 + $0x7c] sm:$0xf]
        %v2384 = vld [vmem:[%s2361 + $0x84] sm:$0xf]
        %v2385 = vld [vmem:[%s2361 + $0x88] sm:$0xf]
        %v2386 = vld [vmem:[%s2361 + $0x90] sm:$0xf]
        %v2387 = vld [vmem:[%s2361 + $0x94] sm:$0xf]
        %v2388 = vld [vmem:[%s2361 + $0x9c] sm:$0xf]
        %v2389 = vld [vmem:[%s2361 + $0xa0] sm:$0xf]
        %v2390 = vld [vmem:[%s2361 + $0xa8] sm:$0xf]
        %v2391 = vld [vmem:[%s2361 + $0xac] sm:$0xf]
        %v2392 = vld [vmem:[%s2361 + $0xb4] sm:$0xf]
        %v2393 = vld [vmem:[%s2361 + $0xb8] sm:$0xf]
        %v2394 = vld [vmem:[%s2361 + $0x8] sm:$0x1]
        %v2395 = vld [vmem:[%s2361 + $0x14] sm:$0x1]
        %v2396 = vld [vmem:[%s2361 + $0x20] sm:$0x1]
        %v2397 = vld [vmem:[%s2361 + $0x2c] sm:$0x1]
        %v2398 = vld [vmem:[%s2361 + $0x38] sm:$0x1]
        %v2399 = vld [vmem:[%s2361 + $0x44] sm:$0x1]
        %v2400 = vld [vmem:[%s2361 + $0x50] sm:$0x1]
        %v2401 = vld [vmem:[%s2361 + $0x5c] sm:$0x1]
        %v2402 = vld [vmem:[%s2361 + $0x68] sm:$0x1]
        %v2403 = vld [vmem:[%s2361 + $0x74] sm:$0x1]
        %v2404 = vld [vmem:[%s2361 + $0x80] sm:$0x1]
        %v2405 = vld [vmem:[%s2361 + $0x8c] sm:$0x1]
        %v2406 = vld [vmem:[%s2361 + $0x98] sm:$0x1]
        %v2407 = vld [vmem:[%s2361 + $0xa4] sm:$0x1]
        %v2408 = vld [vmem:[%s2361 + $0xb0] sm:$0x1]
        %v2409 = vld [vmem:[%s2361 + $0xbc] sm:$0x1]
        %v2411 = vshrl.u32 %v2362, 16
        %v2413 = vrot.slane %v2411, 4
        %v2414 = vshll.u32 %v2362, 16
        %v2416 = vrot.slane %v2414, 5
        %v2417 = vor.u32 %v2413, %v2416
        %v2418 = vrot.slane %v2417, 4
        %v2420 = vshll.u32 %v2363, 16
        %v2422 = vrot.slane %v2420, 5
        %v2423 = vsel %vm1189, %v2418, %v2422
        %v2424 = vshrl.u32 %v2363, 16
        %v2426 = vrot.slane %v2424, 4
        %v2427 = vor.u32 %v2426, %v2422
        %v2428 = vrot.slane %v2427, 4
        %v2430 = vshll.u32 %v2394, 16
        %v2432 = vrot.slane %v2430, 5
        %v2433 = vsel %vm1189, %v2428, %v2432
        %v2435 = vshrl.u32 %v2364, 16
        %v2437 = vrot.slane %v2435, 4
        %v2438 = vshll.u32 %v2364, 16
        %v2440 = vrot.slane %v2438, 5
        %v2441 = vor.u32 %v2437, %v2440
        %v2442 = vrot.slane %v2441, 4
        %v2444 = vshll.u32 %v2365, 16
        %v2446 = vrot.slane %v2444, 5
        %v2447 = vsel %vm1189, %v2442, %v2446
        %v2448 = vshrl.u32 %v2365, 16
        %v2450 = vrot.slane %v2448, 4
        %v2451 = vor.u32 %v2450, %v2446
        %v2452 = vrot.slane %v2451, 4
        %v2454 = vshll.u32 %v2395, 16
        %v2456 = vrot.slane %v2454, 5
        %v2457 = vsel %vm1189, %v2452, %v2456
        %v2459 = vshrl.u32 %v2366, 16
        %v2461 = vrot.slane %v2459, 4
        %v2462 = vshll.u32 %v2366, 16
        %v2464 = vrot.slane %v2462, 5
        %v2465 = vor.u32 %v2461, %v2464
        %v2466 = vrot.slane %v2465, 4
        %v2468 = vshll.u32 %v2367, 16
        %v2470 = vrot.slane %v2468, 5
        %v2471 = vsel %vm1189, %v2466, %v2470
        %v2472 = vshrl.u32 %v2367, 16
        %v2474 = vrot.slane %v2472, 4
        %v2475 = vor.u32 %v2474, %v2470
        %v2476 = vrot.slane %v2475, 4
        %v2478 = vshll.u32 %v2396, 16
        %v2480 = vrot.slane %v2478, 5
        %v2481 = vsel %vm1189, %v2476, %v2480
        %v2483 = vshrl.u32 %v2368, 16
        %v2485 = vrot.slane %v2483, 4
        %v2486 = vshll.u32 %v2368, 16
        %v2488 = vrot.slane %v2486, 5
        %v2489 = vor.u32 %v2485, %v2488
        %v2490 = vrot.slane %v2489, 4
        %v2492 = vshll.u32 %v2369, 16
        %v2494 = vrot.slane %v2492, 5
        %v2495 = vsel %vm1189, %v2490, %v2494
        %v2496 = vshrl.u32 %v2369, 16
        %v2498 = vrot.slane %v2496, 4
        %v2499 = vor.u32 %v2498, %v2494
        %v2500 = vrot.slane %v2499, 4
        %v2502 = vshll.u32 %v2397, 16
        %v2504 = vrot.slane %v2502, 5
        %v2505 = vsel %vm1189, %v2500, %v2504
        %v2507 = vshrl.u32 %v2370, 16
        %v2509 = vrot.slane %v2507, 4
        %v2510 = vshll.u32 %v2370, 16
        %v2512 = vrot.slane %v2510, 5
        %v2513 = vor.u32 %v2509, %v2512
        %v2514 = vrot.slane %v2513, 4
        %v2516 = vshll.u32 %v2371, 16
        %v2518 = vrot.slane %v2516, 5
        %v2519 = vsel %vm1189, %v2514, %v2518
        %v2520 = vshrl.u32 %v2371, 16
        %v2522 = vrot.slane %v2520, 4
        %v2523 = vor.u32 %v2522, %v2518
        %v2524 = vrot.slane %v2523, 4
        %v2526 = vshll.u32 %v2398, 16
        %v2528 = vrot.slane %v2526, 5
        %v2529 = vsel %vm1189, %v2524, %v2528
        %v2531 = vshrl.u32 %v2372, 16
        %v2533 = vrot.slane %v2531, 4
        %v2534 = vshll.u32 %v2372, 16
        %v2536 = vrot.slane %v2534, 5
        %v2537 = vor.u32 %v2533, %v2536
        %v2538 = vrot.slane %v2537, 4
        %v2540 = vshll.u32 %v2373, 16
        %v2542 = vrot.slane %v2540, 5
        %v2543 = vsel %vm1189, %v2538, %v2542
        %v2544 = vshrl.u32 %v2373, 16
        %v2546 = vrot.slane %v2544, 4
        %v2547 = vor.u32 %v2546, %v2542
        %v2548 = vrot.slane %v2547, 4
        %v2550 = vshll.u32 %v2399, 16
        %v2552 = vrot.slane %v2550, 5
        %v2553 = vsel %vm1189, %v2548, %v2552
        %v2555 = vshrl.u32 %v2374, 16
        %v2557 = vrot.slane %v2555, 4
        %v2558 = vshll.u32 %v2374, 16
        %v2560 = vrot.slane %v2558, 5
        %v2561 = vor.u32 %v2557, %v2560
        %v2562 = vrot.slane %v2561, 4
        %v2564 = vshll.u32 %v2375, 16
        %v2566 = vrot.slane %v2564, 5
        %v2567 = vsel %vm1189, %v2562, %v2566
        %v2568 = vshrl.u32 %v2375, 16
        %v2570 = vrot.slane %v2568, 4
        %v2571 = vor.u32 %v2570, %v2566
        %v2572 = vrot.slane %v2571, 4
        %v2574 = vshll.u32 %v2400, 16
        %v2576 = vrot.slane %v2574, 5
        %v2577 = vsel %vm1189, %v2572, %v2576
        %v2579 = vshrl.u32 %v2376, 16
        %v2581 = vrot.slane %v2579, 4
        %v2582 = vshll.u32 %v2376, 16
        %v2584 = vrot.slane %v2582, 5
        %v2585 = vor.u32 %v2581, %v2584
        %v2586 = vrot.slane %v2585, 4
        %v2588 = vshll.u32 %v2377, 16
        %v2590 = vrot.slane %v2588, 5
        %v2591 = vsel %vm1189, %v2586, %v2590
        %v2592 = vshrl.u32 %v2377, 16
        %v2594 = vrot.slane %v2592, 4
        %v2595 = vor.u32 %v2594, %v2590
        %v2596 = vrot.slane %v2595, 4
        %v2598 = vshll.u32 %v2401, 16
        %v2600 = vrot.slane %v2598, 5
        %v2601 = vsel %vm1189, %v2596, %v2600
        %v2603 = vshrl.u32 %v2378, 16
        %v2605 = vrot.slane %v2603, 4
        %v2606 = vshll.u32 %v2378, 16
        %v2608 = vrot.slane %v2606, 5
        %v2609 = vor.u32 %v2605, %v2608
        %v2610 = vrot.slane %v2609, 4
        %v2612 = vshll.u32 %v2379, 16
        %v2614 = vrot.slane %v2612, 5
        %v2615 = vsel %vm1189, %v2610, %v2614
        %v2616 = vshrl.u32 %v2379, 16
        %v2618 = vrot.slane %v2616, 4
        %v2619 = vor.u32 %v2618, %v2614
        %v2620 = vrot.slane %v2619, 4
        %v2622 = vshll.u32 %v2402, 16
        %v2624 = vrot.slane %v2622, 5
        %v2625 = vsel %vm1189, %v2620, %v2624
        %v2627 = vshrl.u32 %v2380, 16
        %v2629 = vrot.slane %v2627, 4
        %v2630 = vshll.u32 %v2380, 16
        %v2632 = vrot.slane %v2630, 5
        %v2633 = vor.u32 %v2629, %v2632
        %v2634 = vrot.slane %v2633, 4
        %v2636 = vshll.u32 %v2381, 16
        %v2638 = vrot.slane %v2636, 5
        %v2639 = vsel %vm1189, %v2634, %v2638
        %v2640 = vshrl.u32 %v2381, 16
        %v2642 = vrot.slane %v2640, 4
        %v2643 = vor.u32 %v2642, %v2638
        %v2644 = vrot.slane %v2643, 4
        %v2646 = vshll.u32 %v2403, 16
        %v2648 = vrot.slane %v2646, 5
        %v2649 = vsel %vm1189, %v2644, %v2648
        %v2651 = vshrl.u32 %v2382, 16
        %v2653 = vrot.slane %v2651, 4
        %v2654 = vshll.u32 %v2382, 16
        %v2656 = vrot.slane %v2654, 5
        %v2657 = vor.u32 %v2653, %v2656
        %v2658 = vrot.slane %v2657, 4
        %v2660 = vshll.u32 %v2383, 16
        %v2662 = vrot.slane %v2660, 5
        %v2663 = vsel %vm1189, %v2658, %v2662
        %v2664 = vshrl.u32 %v2383, 16
        %v2666 = vrot.slane %v2664, 4
        %v2667 = vor.u32 %v2666, %v2662
        %v2668 = vrot.slane %v2667, 4
        %v2670 = vshll.u32 %v2404, 16
        %v2672 = vrot.slane %v2670, 5
        %v2673 = vsel %vm1189, %v2668, %v2672
        %v2675 = vshrl.u32 %v2384, 16
        %v2677 = vrot.slane %v2675, 4
        %v2678 = vshll.u32 %v2384, 16
        %v2680 = vrot.slane %v2678, 5
        %v2681 = vor.u32 %v2677, %v2680
        %v2682 = vrot.slane %v2681, 4
        %v2684 = vshll.u32 %v2385, 16
        %v2686 = vrot.slane %v2684, 5
        %v2687 = vsel %vm1189, %v2682, %v2686
        %v2688 = vshrl.u32 %v2385, 16
        %v2690 = vrot.slane %v2688, 4
        %v2691 = vor.u32 %v2690, %v2686
        %v2692 = vrot.slane %v2691, 4
        %v2694 = vshll.u32 %v2405, 16
        %v2696 = vrot.slane %v2694, 5
        %v2697 = vsel %vm1189, %v2692, %v2696
        %v2699 = vshrl.u32 %v2386, 16
        %v2701 = vrot.slane %v2699, 4
        %v2702 = vshll.u32 %v2386, 16
        %v2704 = vrot.slane %v2702, 5
        %v2705 = vor.u32 %v2701, %v2704
        %v2706 = vrot.slane %v2705, 4
        %v2708 = vshll.u32 %v2387, 16
        %v2710 = vrot.slane %v2708, 5
        %v2711 = vsel %vm1189, %v2706, %v2710
        %v2712 = vshrl.u32 %v2387, 16
        %v2714 = vrot.slane %v2712, 4
        %v2715 = vor.u32 %v2714, %v2710
        %v2716 = vrot.slane %v2715, 4
        %v2718 = vshll.u32 %v2406, 16
        %v2720 = vrot.slane %v2718, 5
        %v2721 = vsel %vm1189, %v2716, %v2720
        %v2723 = vshrl.u32 %v2388, 16
        %v2725 = vrot.slane %v2723, 4
        %v2726 = vshll.u32 %v2388, 16
        %v2728 = vrot.slane %v2726, 5
        %v2729 = vor.u32 %v2725, %v2728
        %v2730 = vrot.slane %v2729, 4
        %v2732 = vshll.u32 %v2389, 16
        %v2734 = vrot.slane %v2732, 5
        %v2735 = vsel %vm1189, %v2730, %v2734
        %v2736 = vshrl.u32 %v2389, 16
        %v2738 = vrot.slane %v2736, 4
        %v2739 = vor.u32 %v2738, %v2734
        %v2740 = vrot.slane %v2739, 4
        %v2742 = vshll.u32 %v2407, 16
        %v2744 = vrot.slane %v2742, 5
        %v2745 = vsel %vm1189, %v2740, %v2744
        %v2747 = vshrl.u32 %v2390, 16
        %v2749 = vrot.slane %v2747, 4
        %v2750 = vshll.u32 %v2390, 16
        %v2752 = vrot.slane %v2750, 5
        %v2753 = vor.u32 %v2749, %v2752
        %v2754 = vrot.slane %v2753, 4
        %v2756 = vshll.u32 %v2391, 16
        %v2758 = vrot.slane %v2756, 5
        %v2759 = vsel %vm1189, %v2754, %v2758
        %v2760 = vshrl.u32 %v2391, 16
        %v2762 = vrot.slane %v2760, 4
        %v2763 = vor.u32 %v2762, %v2758
        %v2764 = vrot.slane %v2763, 4
        %v2766 = vshll.u32 %v2408, 16
        %v2768 = vrot.slane %v2766, 5
        %v2769 = vsel %vm1189, %v2764, %v2768
        %v2771 = vshrl.u32 %v2392, 16
        %v2773 = vrot.slane %v2771, 4
        %v2774 = vshll.u32 %v2392, 16
        %v2776 = vrot.slane %v2774, 5
        %v2777 = vor.u32 %v2773, %v2776
        %v2778 = vrot.slane %v2777, 4
        %v2780 = vshll.u32 %v2393, 16
        %v2782 = vrot.slane %v2780, 5
        %v2783 = vsel %vm1189, %v2778, %v2782
        %v2784 = vshrl.u32 %v2393, 16
        %v2786 = vrot.slane %v2784, 4
        %v2787 = vor.u32 %v2786, %v2782
        %v2788 = vrot.slane %v2787, 4
        %v2790 = vshll.u32 %v2409, 16
        %v2792 = vrot.slane %v2790, 5
        %v2793 = vsel %vm1189, %v2788, %v2792
        %v2794 = vld [vmem:[%s2361] sm:$0xe]
        %v2795 = vld [vmem:[%s2361 + $0xc] sm:$0xe]
        %v2796 = vld [vmem:[%s2361 + $0x18] sm:$0xe]
        %v2797 = vld [vmem:[%s2361 + $0x24] sm:$0xe]
        %v2798 = vld [vmem:[%s2361 + $0x30] sm:$0xe]
        %v2799 = vld [vmem:[%s2361 + $0x3c] sm:$0xe]
        %v2800 = vld [vmem:[%s2361 + $0x48] sm:$0xe]
        %v2801 = vld [vmem:[%s2361 + $0x54] sm:$0xe]
        %v2802 = vld [vmem:[%s2361 + $0x60] sm:$0xe]
        %v2803 = vld [vmem:[%s2361 + $0x6c] sm:$0xe]
        %v2804 = vld [vmem:[%s2361 + $0x78] sm:$0xe]
        %v2805 = vld [vmem:[%s2361 + $0x84] sm:$0xe]
        %v2806 = vld [vmem:[%s2361 + $0x90] sm:$0xe]
        %v2807 = vld [vmem:[%s2361 + $0x9c] sm:$0xe]
        %v2808 = vld [vmem:[%s2361 + $0xa8] sm:$0xe]
        %v2809 = vld [vmem:[%s2361 + $0xb4] sm:$0xe]
        %v2858 = vrot.slane %v2794, 5
        %v2859 = vrot.slane %v2858, 4
        %v2860 = vrot.slane %v2363, 5
        %v2861 = vsel %vm1640, %v2859, %v2860
        %v2862 = vrot.slane %v2860, 4
        %v2863 = vrot.slane %v2394, 5
        %v2864 = vsel %vm1640, %v2862, %v2863
        %v2865 = vrot.slane %v2795, 5
        %v2866 = vrot.slane %v2865, 4
        %v2867 = vrot.slane %v2365, 5
        %v2868 = vsel %vm1640, %v2866, %v2867
        %v2869 = vrot.slane %v2867, 4
        %v2870 = vrot.slane %v2395, 5
        %v2871 = vsel %vm1640, %v2869, %v2870
        %v2872 = vrot.slane %v2796, 5
        %v2873 = vrot.slane %v2872, 4
        %v2874 = vrot.slane %v2367, 5
        %v2875 = vsel %vm1640, %v2873, %v2874
        %v2876 = vrot.slane %v2874, 4
        %v2877 = vrot.slane %v2396, 5
        %v2878 = vsel %vm1640, %v2876, %v2877
        %v2879 = vrot.slane %v2797, 5
        %v2880 = vrot.slane %v2879, 4
        %v2881 = vrot.slane %v2369, 5
        %v2882 = vsel %vm1640, %v2880, %v2881
        %v2883 = vrot.slane %v2881, 4
        %v2884 = vrot.slane %v2397, 5
        %v2885 = vsel %vm1640, %v2883, %v2884
        %v2886 = vrot.slane %v2798, 5
        %v2887 = vrot.slane %v2886, 4
        %v2888 = vrot.slane %v2371, 5
        %v2889 = vsel %vm1640, %v2887, %v2888
        %v2890 = vrot.slane %v2888, 4
        %v2891 = vrot.slane %v2398, 5
        %v2892 = vsel %vm1640, %v2890, %v2891
        %v2893 = vrot.slane %v2799, 5
        %v2894 = vrot.slane %v2893, 4
        %v2895 = vrot.slane %v2373, 5
        %v2896 = vsel %vm1640, %v2894, %v2895
        %v2897 = vrot.slane %v2895, 4
        %v2898 = vrot.slane %v2399, 5
        %v2899 = vsel %vm1640, %v2897, %v2898
        %v2900 = vrot.slane %v2800, 5
        %v2901 = vrot.slane %v2900, 4
        %v2902 = vrot.slane %v2375, 5
        %v2903 = vsel %vm1640, %v2901, %v2902
        %v2904 = vrot.slane %v2902, 4
        %v2905 = vrot.slane %v2400, 5
        %v2906 = vsel %vm1640, %v2904, %v2905
        %v2907 = vrot.slane %v2801, 5
        %v2908 = vrot.slane %v2907, 4
        %v2909 = vrot.slane %v2377, 5
        %v2910 = vsel %vm1640, %v2908, %v2909
        %v2911 = vrot.slane %v2909, 4
        %v2912 = vrot.slane %v2401, 5
        %v2913 = vsel %vm1640, %v2911, %v2912
        %v2914 = vrot.slane %v2802, 5
        %v2915 = vrot.slane %v2914, 4
        %v2916 = vrot.slane %v2379, 5
        %v2917 = vsel %vm1640, %v2915, %v2916
        %v2918 = vrot.slane %v2916, 4
        %v2919 = vrot.slane %v2402, 5
        %v2920 = vsel %vm1640, %v2918, %v2919
        %v2921 = vrot.slane %v2803, 5
        %v2922 = vrot.slane %v2921, 4
        %v2923 = vrot.slane %v2381, 5
        %v2924 = vsel %vm1640, %v2922, %v2923
        %v2925 = vrot.slane %v2923, 4
        %v2926 = vrot.slane %v2403, 5
        %v2927 = vsel %vm1640, %v2925, %v2926
        %v2928 = vrot.slane %v2804, 5
        %v2929 = vrot.slane %v2928, 4
        %v2930 = vrot.slane %v2383, 5
        %v2931 = vsel %vm1640, %v2929, %v2930
        %v2932 = vrot.slane %v2930, 4
        %v2933 = vrot.slane %v2404, 5
        %v2934 = vsel %vm1640, %v2932, %v2933
        %v2935 = vrot.slane %v2805, 5
        %v2936 = vrot.slane %v2935, 4
        %v2937 = vrot.slane %v2385, 5
        %v2938 = vsel %vm1640, %v2936, %v2937
        %v2939 = vrot.slane %v2937, 4
        %v2940 = vrot.slane %v2405, 5
        %v2941 = vsel %vm1640, %v2939, %v2940
        %v2942 = vrot.slane %v2806, 5
        %v2943 = vrot.slane %v2942, 4
        %v2944 = vrot.slane %v2387, 5
        %v2945 = vsel %vm1640, %v2943, %v2944
        %v2946 = vrot.slane %v2944, 4
        %v2947 = vrot.slane %v2406, 5
        %v2948 = vsel %vm1640, %v2946, %v2947
        %v2949 = vrot.slane %v2807, 5
        %v2950 = vrot.slane %v2949, 4
        %v2951 = vrot.slane %v2389, 5
        %v2952 = vsel %vm1640, %v2950, %v2951
        %v2953 = vrot.slane %v2951, 4
        %v2954 = vrot.slane %v2407, 5
        %v2955 = vsel %vm1640, %v2953, %v2954
        %v2956 = vrot.slane %v2808, 5
        %v2957 = vrot.slane %v2956, 4
        %v2958 = vrot.slane %v2391, 5
        %v2959 = vsel %vm1640, %v2957, %v2958
        %v2960 = vrot.slane %v2958, 4
        %v2961 = vrot.slane %v2408, 5
        %v2962 = vsel %vm1640, %v2960, %v2961
        %v2963 = vrot.slane %v2809, 5
        %v2964 = vrot.slane %v2963, 4
        %v2965 = vrot.slane %v2393, 5
        %v2966 = vsel %vm1640, %v2964, %v2965
        %v2967 = vrot.slane %v2965, 4
        %v2968 = vrot.slane %v2409, 5
        %v2969 = vsel %vm1640, %v2967, %v2968
        %v2986 = vunpack.c.l.b16 %v1139
        %v2987 = vunpack.c.l.b16 %v1140
        %v2988 = vunpack.c.l.b16 %v1141
        %v2989 = vunpack.c.l.b16 %v1142
        %v2990 = vunpack.c.l.b16 %v1143
        %v2991 = vunpack.c.l.b16 %v1144
        %v2992 = vunpack.c.l.b16 %v1145
        %v2993 = vunpack.c.l.b16 %v1146
        %v2994 = vunpack.c.l.b16 %v1147
        %v2995 = vunpack.c.l.b16 %v1148
        %v2996 = vunpack.c.l.b16 %v1149
        %v2997 = vunpack.c.l.b16 %v1150
        %v2998 = vunpack.c.l.b16 %v1151
        %v2999 = vunpack.c.l.b16 %v1152
        %v3000 = vunpack.c.l.b16 %v1153
        %v3001 = vunpack.c.l.b16 %v1154
        %v3002 = vunpack.c.l.b16 %v1155
        %v3003 = vunpack.c.l.b16 %v1156
        %v3004 = vunpack.c.l.b16 %v1157
        %v3005 = vunpack.c.l.b16 %v1158
        %v3006 = vunpack.c.l.b16 %v1159
        %v3007 = vunpack.c.l.b16 %v1160
        %v3008 = vunpack.c.l.b16 %v1161
        %v3009 = vunpack.c.l.b16 %v1162
        %v3010 = vunpack.c.l.b16 %v1163
        %v3011 = vunpack.c.l.b16 %v1164
        %v3012 = vunpack.c.l.b16 %v1165
        %v3013 = vunpack.c.l.b16 %v1166
        %v3014 = vunpack.c.l.b16 %v1167
        %v3015 = vunpack.c.l.b16 %v1168
        %v3016 = vunpack.c.l.b16 %v1169
        %v3017 = vunpack.c.l.b16 %v1170
        %v3018 = vpack.c.b16 %v2987, %v2986
        %v3019 = vpack.c.b16 %v2989, %v2988
        %v3020 = vpack.c.b16 %v2991, %v2990
        %v3021 = vpack.c.b16 %v2993, %v2992
        %v3022 = vpack.c.b16 %v2995, %v2994
        %v3023 = vpack.c.b16 %v2997, %v2996
        %v3024 = vpack.c.b16 %v2999, %v2998
        %v3025 = vpack.c.b16 %v3001, %v3000
        %v3026 = vpack.c.b16 %v3003, %v3002
        %v3027 = vpack.c.b16 %v3005, %v3004
        %v3028 = vpack.c.b16 %v3007, %v3006
        %v3029 = vpack.c.b16 %v3009, %v3008
        %v3030 = vpack.c.b16 %v3011, %v3010
        %v3031 = vpack.c.b16 %v3013, %v3012
        %v3032 = vpack.c.b16 %v3015, %v3014
        %v3033 = vpack.c.b16 %v3017, %v3016
        %v3034 = vunpack.c.l.b16 %v1203
        %v3035 = vunpack.c.l.b16 %v1213
        %v3036 = vunpack.c.l.b16 %v1227
        %v3037 = vunpack.c.l.b16 %v1237
        %v3038 = vunpack.c.l.b16 %v1251
        %v3039 = vunpack.c.l.b16 %v1261
        %v3040 = vunpack.c.l.b16 %v1275
        %v3041 = vunpack.c.l.b16 %v1285
        %v3042 = vunpack.c.l.b16 %v1299
        %v3043 = vunpack.c.l.b16 %v1309
        %v3044 = vunpack.c.l.b16 %v1323
        %v3045 = vunpack.c.l.b16 %v1333
        %v3046 = vunpack.c.l.b16 %v1347
        %v3047 = vunpack.c.l.b16 %v1357
        %v3048 = vunpack.c.l.b16 %v1371
        %v3049 = vunpack.c.l.b16 %v1381
        %v3050 = vunpack.c.l.b16 %v1395
        %v3051 = vunpack.c.l.b16 %v1405
        %v3052 = vunpack.c.l.b16 %v1419
        %v3053 = vunpack.c.l.b16 %v1429
        %v3054 = vunpack.c.l.b16 %v1443
        %v3055 = vunpack.c.l.b16 %v1453
        %v3056 = vunpack.c.l.b16 %v1467
        %v3057 = vunpack.c.l.b16 %v1477
        %v3058 = vunpack.c.l.b16 %v1491
        %v3059 = vunpack.c.l.b16 %v1501
        %v3060 = vunpack.c.l.b16 %v1515
        %v3061 = vunpack.c.l.b16 %v1525
        %v3062 = vunpack.c.l.b16 %v1539
        %v3063 = vunpack.c.l.b16 %v1549
        %v3064 = vunpack.c.l.b16 %v1563
        %v3065 = vunpack.c.l.b16 %v1573
        %v3066 = vpack.c.b16 %v3035, %v3034
        %v3067 = vpack.c.b16 %v3037, %v3036
        %v3068 = vpack.c.b16 %v3039, %v3038
        %v3069 = vpack.c.b16 %v3041, %v3040
        %v3070 = vpack.c.b16 %v3043, %v3042
        %v3071 = vpack.c.b16 %v3045, %v3044
        %v3072 = vpack.c.b16 %v3047, %v3046
        %v3073 = vpack.c.b16 %v3049, %v3048
        %v3074 = vpack.c.b16 %v3051, %v3050
        %v3075 = vpack.c.b16 %v3053, %v3052
        %v3076 = vpack.c.b16 %v3055, %v3054
        %v3077 = vpack.c.b16 %v3057, %v3056
        %v3078 = vpack.c.b16 %v3059, %v3058
        %v3079 = vpack.c.b16 %v3061, %v3060
        %v3080 = vpack.c.b16 %v3063, %v3062
        %v3081 = vpack.c.b16 %v3065, %v3064
        %3082 = vrot.lane.b32.xlu0 %v3066, 4
        %v3083 = vpop.permute.xlu0 %3082
        %3084 = vrot.lane.b32.xlu0 %v3067, 4
        %v3085 = vpop.permute.xlu0 %3084
        %3086 = vrot.lane.b32.xlu0 %v3068, 4
        %v3087 = vpop.permute.xlu0 %3086
        %3088 = vrot.lane.b32.xlu0 %v3069, 4
        %v3089 = vpop.permute.xlu0 %3088
        %3090 = vrot.lane.b32.xlu0 %v3070, 4
        %v3091 = vpop.permute.xlu0 %3090
        %3092 = vrot.lane.b32.xlu0 %v3071, 4
        %v3093 = vpop.permute.xlu0 %3092
        %3094 = vrot.lane.b32.xlu0 %v3072, 4
        %v3095 = vpop.permute.xlu0 %3094
        %3096 = vrot.lane.b32.xlu0 %v3073, 4
        %v3097 = vpop.permute.xlu0 %3096
        %3098 = vrot.lane.b32.xlu0 %v3074, 4
        %v3099 = vpop.permute.xlu0 %3098
        %3100 = vrot.lane.b32.xlu0 %v3075, 4
        %v3101 = vpop.permute.xlu0 %3100
        %3102 = vrot.lane.b32.xlu0 %v3076, 4
        %v3103 = vpop.permute.xlu0 %3102
        %3104 = vrot.lane.b32.xlu0 %v3077, 4
        %v3105 = vpop.permute.xlu0 %3104
        %3106 = vrot.lane.b32.xlu0 %v3078, 4
        %v3107 = vpop.permute.xlu0 %3106
        %3108 = vrot.lane.b32.xlu0 %v3079, 4
        %v3109 = vpop.permute.xlu0 %3108
        %3110 = vrot.lane.b32.xlu0 %v3080, 4
        %v3111 = vpop.permute.xlu0 %3110
        %3112 = vrot.lane.b32.xlu0 %v3081, 4
        %v3113 = vpop.permute.xlu0 %3112
        %v3114 = vunpack.c.l.b16 %v1644
        %v3115 = vunpack.c.l.b16 %v1647
        %v3116 = vunpack.c.l.b16 %v1651
        %v3117 = vunpack.c.l.b16 %v1654
        %v3118 = vunpack.c.l.b16 %v1658
        %v3119 = vunpack.c.l.b16 %v1661
        %v3120 = vunpack.c.l.b16 %v1665
        %v3121 = vunpack.c.l.b16 %v1668
        %v3122 = vunpack.c.l.b16 %v1672
        %v3123 = vunpack.c.l.b16 %v1675
        %v3124 = vunpack.c.l.b16 %v1679
        %v3125 = vunpack.c.l.b16 %v1682
        %v3126 = vunpack.c.l.b16 %v1686
        %v3127 = vunpack.c.l.b16 %v1689
        %v3128 = vunpack.c.l.b16 %v1693
        %v3129 = vunpack.c.l.b16 %v1696
        %v3130 = vunpack.c.l.b16 %v1700
        %v3131 = vunpack.c.l.b16 %v1703
        %v3132 = vunpack.c.l.b16 %v1707
        %v3133 = vunpack.c.l.b16 %v1710
        %v3134 = vunpack.c.l.b16 %v1714
        %v3135 = vunpack.c.l.b16 %v1717
        %v3136 = vunpack.c.l.b16 %v1721
        %v3137 = vunpack.c.l.b16 %v1724
        %v3138 = vunpack.c.l.b16 %v1728
        %v3139 = vunpack.c.l.b16 %v1731
        %v3140 = vunpack.c.l.b16 %v1735
        %v3141 = vunpack.c.l.b16 %v1738
        %v3142 = vunpack.c.l.b16 %v1742
        %v3143 = vunpack.c.l.b16 %v1745
        %v3144 = vunpack.c.l.b16 %v1749
        %v3145 = vunpack.c.l.b16 %v1752
        %v3146 = vpack.c.b16 %v3115, %v3114
        %v3147 = vpack.c.b16 %v3117, %v3116
        %v3148 = vpack.c.b16 %v3119, %v3118
        %v3149 = vpack.c.b16 %v3121, %v3120
        %v3150 = vpack.c.b16 %v3123, %v3122
        %v3151 = vpack.c.b16 %v3125, %v3124
        %v3152 = vpack.c.b16 %v3127, %v3126
        %v3153 = vpack.c.b16 %v3129, %v3128
        %v3154 = vpack.c.b16 %v3131, %v3130
        %v3155 = vpack.c.b16 %v3133, %v3132
        %v3156 = vpack.c.b16 %v3135, %v3134
        %v3157 = vpack.c.b16 %v3137, %v3136
        %v3158 = vpack.c.b16 %v3139, %v3138
        %v3159 = vpack.c.b16 %v3141, %v3140
        %v3160 = vpack.c.b16 %v3143, %v3142
        %v3161 = vpack.c.b16 %v3145, %v3144
        %3162 = vrot.lane.b32.xlu0 %v3146, 8
        %v3163 = vpop.permute.xlu0 %3162
        %3164 = vrot.lane.b32.xlu0 %v3147, 8
        %v3165 = vpop.permute.xlu0 %3164
        %3166 = vrot.lane.b32.xlu0 %v3148, 8
        %v3167 = vpop.permute.xlu0 %3166
        %3168 = vrot.lane.b32.xlu0 %v3149, 8
        %v3169 = vpop.permute.xlu0 %3168
        %3170 = vrot.lane.b32.xlu0 %v3150, 8
        %v3171 = vpop.permute.xlu0 %3170
        %3172 = vrot.lane.b32.xlu0 %v3151, 8
        %v3173 = vpop.permute.xlu0 %3172
        %3174 = vrot.lane.b32.xlu0 %v3152, 8
        %v3175 = vpop.permute.xlu0 %3174
        %3176 = vrot.lane.b32.xlu0 %v3153, 8
        %v3177 = vpop.permute.xlu0 %3176
        %3178 = vrot.lane.b32.xlu0 %v3154, 8
        %v3179 = vpop.permute.xlu0 %3178
        %3180 = vrot.lane.b32.xlu0 %v3155, 8
        %v3181 = vpop.permute.xlu0 %3180
        %3182 = vrot.lane.b32.xlu0 %v3156, 8
        %v3183 = vpop.permute.xlu0 %3182
        %3184 = vrot.lane.b32.xlu0 %v3157, 8
        %v3185 = vpop.permute.xlu0 %3184
        %3186 = vrot.lane.b32.xlu0 %v3158, 8
        %v3187 = vpop.permute.xlu0 %3186
        %3188 = vrot.lane.b32.xlu0 %v3159, 8
        %v3189 = vpop.permute.xlu0 %3188
        %3190 = vrot.lane.b32.xlu0 %v3160, 8
        %v3191 = vpop.permute.xlu0 %3190
        %3192 = vrot.lane.b32.xlu0 %v3161, 8
        %v3193 = vpop.permute.xlu0 %3192
        %v3210 = vunpack.c.l.b16 %v1753
        %v3211 = vunpack.c.l.b16 %v1754
        %v3212 = vunpack.c.l.b16 %v1755
        %v3213 = vunpack.c.l.b16 %v1756
        %v3214 = vunpack.c.l.b16 %v1757
        %v3215 = vunpack.c.l.b16 %v1758
        %v3216 = vunpack.c.l.b16 %v1759
        %v3217 = vunpack.c.l.b16 %v1760
        %v3218 = vunpack.c.l.b16 %v1761
        %v3219 = vunpack.c.l.b16 %v1762
        %v3220 = vunpack.c.l.b16 %v1763
        %v3221 = vunpack.c.l.b16 %v1764
        %v3222 = vunpack.c.l.b16 %v1765
        %v3223 = vunpack.c.l.b16 %v1766
        %v3224 = vunpack.c.l.b16 %v1767
        %v3225 = vunpack.c.l.b16 %v1768
        %v3226 = vunpack.c.l.b16 %v1769
        %v3227 = vunpack.c.l.b16 %v1770
        %v3228 = vunpack.c.l.b16 %v1771
        %v3229 = vunpack.c.l.b16 %v1772
        %v3230 = vunpack.c.l.b16 %v1773
        %v3231 = vunpack.c.l.b16 %v1774
        %v3232 = vunpack.c.l.b16 %v1775
        %v3233 = vunpack.c.l.b16 %v1776
        %v3234 = vunpack.c.l.b16 %v1777
        %v3235 = vunpack.c.l.b16 %v1778
        %v3236 = vunpack.c.l.b16 %v1779
        %v3237 = vunpack.c.l.b16 %v1780
        %v3238 = vunpack.c.l.b16 %v1781
        %v3239 = vunpack.c.l.b16 %v1782
        %v3240 = vunpack.c.l.b16 %v1783
        %v3241 = vunpack.c.l.b16 %v1784
        %v3242 = vpack.c.b16 %v3211, %v3210
        %v3243 = vpack.c.b16 %v3213, %v3212
        %v3244 = vpack.c.b16 %v3215, %v3214
        %v3245 = vpack.c.b16 %v3217, %v3216
        %v3246 = vpack.c.b16 %v3219, %v3218
        %v3247 = vpack.c.b16 %v3221, %v3220
        %v3248 = vpack.c.b16 %v3223, %v3222
        %v3249 = vpack.c.b16 %v3225, %v3224
        %v3250 = vpack.c.b16 %v3227, %v3226
        %v3251 = vpack.c.b16 %v3229, %v3228
        %v3252 = vpack.c.b16 %v3231, %v3230
        %v3253 = vpack.c.b16 %v3233, %v3232
        %v3254 = vpack.c.b16 %v3235, %v3234
        %v3255 = vpack.c.b16 %v3237, %v3236
        %v3256 = vpack.c.b16 %v3239, %v3238
        %v3257 = vpack.c.b16 %v3241, %v3240
        %3258 = vrot.lane.b32.xlu0 %v3242, 12
        %v3259 = vpop.permute.xlu0 %3258
        %3260 = vrot.lane.b32.xlu0 %v3243, 12
        %v3261 = vpop.permute.xlu0 %3260
        %3262 = vrot.lane.b32.xlu0 %v3244, 12
        %v3263 = vpop.permute.xlu0 %3262
        %3264 = vrot.lane.b32.xlu0 %v3245, 12
        %v3265 = vpop.permute.xlu0 %3264
        %3266 = vrot.lane.b32.xlu0 %v3246, 12
        %v3267 = vpop.permute.xlu0 %3266
        %3268 = vrot.lane.b32.xlu0 %v3247, 12
        %v3269 = vpop.permute.xlu0 %3268
        %3270 = vrot.lane.b32.xlu0 %v3248, 12
        %v3271 = vpop.permute.xlu0 %3270
        %3272 = vrot.lane.b32.xlu0 %v3249, 12
        %v3273 = vpop.permute.xlu0 %3272
        %3274 = vrot.lane.b32.xlu0 %v3250, 12
        %v3275 = vpop.permute.xlu0 %3274
        %3276 = vrot.lane.b32.xlu0 %v3251, 12
        %v3277 = vpop.permute.xlu0 %3276
        %3278 = vrot.lane.b32.xlu0 %v3252, 12
        %v3279 = vpop.permute.xlu0 %3278
        %3280 = vrot.lane.b32.xlu0 %v3253, 12
        %v3281 = vpop.permute.xlu0 %3280
        %3282 = vrot.lane.b32.xlu0 %v3254, 12
        %v3283 = vpop.permute.xlu0 %3282
        %3284 = vrot.lane.b32.xlu0 %v3255, 12
        %v3285 = vpop.permute.xlu0 %3284
        %3286 = vrot.lane.b32.xlu0 %v3256, 12
        %v3287 = vpop.permute.xlu0 %3286
        %3288 = vrot.lane.b32.xlu0 %v3257, 12
        %v3289 = vpop.permute.xlu0 %3288
        %v3290 = vunpack.c.l.b16 %v1814
        %v3291 = vunpack.c.l.b16 %v1824
        %v3292 = vunpack.c.l.b16 %v1838
        %v3293 = vunpack.c.l.b16 %v1848
        %v3294 = vunpack.c.l.b16 %v1862
        %v3295 = vunpack.c.l.b16 %v1872
        %v3296 = vunpack.c.l.b16 %v1886
        %v3297 = vunpack.c.l.b16 %v1896
        %v3298 = vunpack.c.l.b16 %v1910
        %v3299 = vunpack.c.l.b16 %v1920
        %v3300 = vunpack.c.l.b16 %v1934
        %v3301 = vunpack.c.l.b16 %v1944
        %v3302 = vunpack.c.l.b16 %v1958
        %v3303 = vunpack.c.l.b16 %v1968
        %v3304 = vunpack.c.l.b16 %v1982
        %v3305 = vunpack.c.l.b16 %v1992
        %v3306 = vunpack.c.l.b16 %v2006
        %v3307 = vunpack.c.l.b16 %v2016
        %v3308 = vunpack.c.l.b16 %v2030
        %v3309 = vunpack.c.l.b16 %v2040
        %v3310 = vunpack.c.l.b16 %v2054
        %v3311 = vunpack.c.l.b16 %v2064
        %v3312 = vunpack.c.l.b16 %v2078
        %v3313 = vunpack.c.l.b16 %v2088
        %v3314 = vunpack.c.l.b16 %v2102
        %v3315 = vunpack.c.l.b16 %v2112
        %v3316 = vunpack.c.l.b16 %v2126
        %v3317 = vunpack.c.l.b16 %v2136
        %v3318 = vunpack.c.l.b16 %v2150
        %v3319 = vunpack.c.l.b16 %v2160
        %v3320 = vunpack.c.l.b16 %v2174
        %v3321 = vunpack.c.l.b16 %v2184
        %v3322 = vpack.c.b16 %v3291, %v3290
        %v3323 = vpack.c.b16 %v3293, %v3292
        %v3324 = vpack.c.b16 %v3295, %v3294
        %v3325 = vpack.c.b16 %v3297, %v3296
        %v3326 = vpack.c.b16 %v3299, %v3298
        %v3327 = vpack.c.b16 %v3301, %v3300
        %v3328 = vpack.c.b16 %v3303, %v3302
        %v3329 = vpack.c.b16 %v3305, %v3304
        %v3330 = vpack.c.b16 %v3307, %v3306
        %v3331 = vpack.c.b16 %v3309, %v3308
        %v3332 = vpack.c.b16 %v3311, %v3310
        %v3333 = vpack.c.b16 %v3313, %v3312
        %v3334 = vpack.c.b16 %v3315, %v3314
        %v3335 = vpack.c.b16 %v3317, %v3316
        %v3336 = vpack.c.b16 %v3319, %v3318
        %v3337 = vpack.c.b16 %v3321, %v3320
        %3338 = vrot.lane.b32.xlu0 %v3322, 16
        %v3339 = vpop.permute.xlu0 %3338
        %3340 = vrot.lane.b32.xlu0 %v3323, 16
        %v3341 = vpop.permute.xlu0 %3340
        %3342 = vrot.lane.b32.xlu0 %v3324, 16
        %v3343 = vpop.permute.xlu0 %3342
        %3344 = vrot.lane.b32.xlu0 %v3325, 16
        %v3345 = vpop.permute.xlu0 %3344
        %3346 = vrot.lane.b32.xlu0 %v3326, 16
        %v3347 = vpop.permute.xlu0 %3346
        %3348 = vrot.lane.b32.xlu0 %v3327, 16
        %v3349 = vpop.permute.xlu0 %3348
        %3350 = vrot.lane.b32.xlu0 %v3328, 16
        %v3351 = vpop.permute.xlu0 %3350
        %3352 = vrot.lane.b32.xlu0 %v3329, 16
        %v3353 = vpop.permute.xlu0 %3352
        %3354 = vrot.lane.b32.xlu0 %v3330, 16
        %v3355 = vpop.permute.xlu0 %3354
        %3356 = vrot.lane.b32.xlu0 %v3331, 16
        %v3357 = vpop.permute.xlu0 %3356
        %3358 = vrot.lane.b32.xlu0 %v3332, 16
        %v3359 = vpop.permute.xlu0 %3358
        %3360 = vrot.lane.b32.xlu0 %v3333, 16
        %v3361 = vpop.permute.xlu0 %3360
        %3362 = vrot.lane.b32.xlu0 %v3334, 16
        %v3363 = vpop.permute.xlu0 %3362
        %3364 = vrot.lane.b32.xlu0 %v3335, 16
        %v3365 = vpop.permute.xlu0 %3364
        %3366 = vrot.lane.b32.xlu0 %v3336, 16
        %v3367 = vpop.permute.xlu0 %3366
        %3368 = vrot.lane.b32.xlu0 %v3337, 16
        %v3369 = vpop.permute.xlu0 %3368
        %v3370 = vunpack.c.l.b16 %v2252
        %v3371 = vunpack.c.l.b16 %v2255
        %v3372 = vunpack.c.l.b16 %v2259
        %v3373 = vunpack.c.l.b16 %v2262
        %v3374 = vunpack.c.l.b16 %v2266
        %v3375 = vunpack.c.l.b16 %v2269
        %v3376 = vunpack.c.l.b16 %v2273
        %v3377 = vunpack.c.l.b16 %v2276
        %v3378 = vunpack.c.l.b16 %v2280
        %v3379 = vunpack.c.l.b16 %v2283
        %v3380 = vunpack.c.l.b16 %v2287
        %v3381 = vunpack.c.l.b16 %v2290
        %v3382 = vunpack.c.l.b16 %v2294
        %v3383 = vunpack.c.l.b16 %v2297
        %v3384 = vunpack.c.l.b16 %v2301
        %v3385 = vunpack.c.l.b16 %v2304
        %v3386 = vunpack.c.l.b16 %v2308
        %v3387 = vunpack.c.l.b16 %v2311
        %v3388 = vunpack.c.l.b16 %v2315
        %v3389 = vunpack.c.l.b16 %v2318
        %v3390 = vunpack.c.l.b16 %v2322
        %v3391 = vunpack.c.l.b16 %v2325
        %v3392 = vunpack.c.l.b16 %v2329
        %v3393 = vunpack.c.l.b16 %v2332
        %v3394 = vunpack.c.l.b16 %v2336
        %v3395 = vunpack.c.l.b16 %v2339
        %v3396 = vunpack.c.l.b16 %v2343
        %v3397 = vunpack.c.l.b16 %v2346
        %v3398 = vunpack.c.l.b16 %v2350
        %v3399 = vunpack.c.l.b16 %v2353
        %v3400 = vunpack.c.l.b16 %v2357
        %v3401 = vunpack.c.l.b16 %v2360
        %v3402 = vpack.c.b16 %v3371, %v3370
        %v3403 = vpack.c.b16 %v3373, %v3372
        %v3404 = vpack.c.b16 %v3375, %v3374
        %v3405 = vpack.c.b16 %v3377, %v3376
        %v3406 = vpack.c.b16 %v3379, %v3378
        %v3407 = vpack.c.b16 %v3381, %v3380
        %v3408 = vpack.c.b16 %v3383, %v3382
        %v3409 = vpack.c.b16 %v3385, %v3384
        %v3410 = vpack.c.b16 %v3387, %v3386
        %v3411 = vpack.c.b16 %v3389, %v3388
        %v3412 = vpack.c.b16 %v3391, %v3390
        %v3413 = vpack.c.b16 %v3393, %v3392
        %v3414 = vpack.c.b16 %v3395, %v3394
        %v3415 = vpack.c.b16 %v3397, %v3396
        %v3416 = vpack.c.b16 %v3399, %v3398
        %v3417 = vpack.c.b16 %v3401, %v3400
        %3418 = vrot.lane.b32.xlu0 %v3402, 20
        %v3419 = vpop.permute.xlu0 %3418
        %3420 = vrot.lane.b32.xlu0 %v3403, 20
        %v3421 = vpop.permute.xlu0 %3420
        %3422 = vrot.lane.b32.xlu0 %v3404, 20
        %v3423 = vpop.permute.xlu0 %3422
        %3424 = vrot.lane.b32.xlu0 %v3405, 20
        %v3425 = vpop.permute.xlu0 %3424
        %3426 = vrot.lane.b32.xlu0 %v3406, 20
        %v3427 = vpop.permute.xlu0 %3426
        %3428 = vrot.lane.b32.xlu0 %v3407, 20
        %v3429 = vpop.permute.xlu0 %3428
        %3430 = vrot.lane.b32.xlu0 %v3408, 20
        %v3431 = vpop.permute.xlu0 %3430
        %3432 = vrot.lane.b32.xlu0 %v3409, 20
        %v3433 = vpop.permute.xlu0 %3432
        %3434 = vrot.lane.b32.xlu0 %v3410, 20
        %v3435 = vpop.permute.xlu0 %3434
        %3436 = vrot.lane.b32.xlu0 %v3411, 20
        %v3437 = vpop.permute.xlu0 %3436
        %3438 = vrot.lane.b32.xlu0 %v3412, 20
        %v3439 = vpop.permute.xlu0 %3438
        %3440 = vrot.lane.b32.xlu0 %v3413, 20
        %v3441 = vpop.permute.xlu0 %3440
        %3442 = vrot.lane.b32.xlu0 %v3414, 20
        %v3443 = vpop.permute.xlu0 %3442
        %3444 = vrot.lane.b32.xlu0 %v3415, 20
        %v3445 = vpop.permute.xlu0 %3444
        %3446 = vrot.lane.b32.xlu0 %v3416, 20
        %v3447 = vpop.permute.xlu0 %3446
        %3448 = vrot.lane.b32.xlu0 %v3417, 20
        %v3449 = vpop.permute.xlu0 %3448
        %v3466 = vunpack.c.l.b16 %v2362
        %v3467 = vunpack.c.l.b16 %v2363
        %v3468 = vunpack.c.l.b16 %v2364
        %v3469 = vunpack.c.l.b16 %v2365
        %v3470 = vunpack.c.l.b16 %v2366
        %v3471 = vunpack.c.l.b16 %v2367
        %v3472 = vunpack.c.l.b16 %v2368
        %v3473 = vunpack.c.l.b16 %v2369
        %v3474 = vunpack.c.l.b16 %v2370
        %v3475 = vunpack.c.l.b16 %v2371
        %v3476 = vunpack.c.l.b16 %v2372
        %v3477 = vunpack.c.l.b16 %v2373
        %v3478 = vunpack.c.l.b16 %v2374
        %v3479 = vunpack.c.l.b16 %v2375
        %v3480 = vunpack.c.l.b16 %v2376
        %v3481 = vunpack.c.l.b16 %v2377
        %v3482 = vunpack.c.l.b16 %v2378
        %v3483 = vunpack.c.l.b16 %v2379
        %v3484 = vunpack.c.l.b16 %v2380
        %v3485 = vunpack.c.l.b16 %v2381
        %v3486 = vunpack.c.l.b16 %v2382
        %v3487 = vunpack.c.l.b16 %v2383
        %v3488 = vunpack.c.l.b16 %v2384
        %v3489 = vunpack.c.l.b16 %v2385
        %v3490 = vunpack.c.l.b16 %v2386
        %v3491 = vunpack.c.l.b16 %v2387
        %v3492 = vunpack.c.l.b16 %v2388
        %v3493 = vunpack.c.l.b16 %v2389
        %v3494 = vunpack.c.l.b16 %v2390
        %v3495 = vunpack.c.l.b16 %v2391
        %v3496 = vunpack.c.l.b16 %v2392
        %v3497 = vunpack.c.l.b16 %v2393
        %v3498 = vpack.c.b16 %v3467, %v3466
        %v3499 = vpack.c.b16 %v3469, %v3468
        %v3500 = vpack.c.b16 %v3471, %v3470
        %v3501 = vpack.c.b16 %v3473, %v3472
        %v3502 = vpack.c.b16 %v3475, %v3474
        %v3503 = vpack.c.b16 %v3477, %v3476
        %v3504 = vpack.c.b16 %v3479, %v3478
        %v3505 = vpack.c.b16 %v3481, %v3480
        %v3506 = vpack.c.b16 %v3483, %v3482
        %v3507 = vpack.c.b16 %v3485, %v3484
        %v3508 = vpack.c.b16 %v3487, %v3486
        %v3509 = vpack.c.b16 %v3489, %v3488
        %v3510 = vpack.c.b16 %v3491, %v3490
        %v3511 = vpack.c.b16 %v3493, %v3492
        %v3512 = vpack.c.b16 %v3495, %v3494
        %v3513 = vpack.c.b16 %v3497, %v3496
        %3514 = vrot.lane.b32.xlu0 %v3498, 24
        %v3515 = vpop.permute.xlu0 %3514
        %3516 = vrot.lane.b32.xlu0 %v3499, 24
        %v3517 = vpop.permute.xlu0 %3516
        %3518 = vrot.lane.b32.xlu0 %v3500, 24
        %v3519 = vpop.permute.xlu0 %3518
        %3520 = vrot.lane.b32.xlu0 %v3501, 24
        %v3521 = vpop.permute.xlu0 %3520
        %3522 = vrot.lane.b32.xlu0 %v3502, 24
        %v3523 = vpop.permute.xlu0 %3522
        %3524 = vrot.lane.b32.xlu0 %v3503, 24
        %v3525 = vpop.permute.xlu0 %3524
        %3526 = vrot.lane.b32.xlu0 %v3504, 24
        %v3527 = vpop.permute.xlu0 %3526
        %3528 = vrot.lane.b32.xlu0 %v3505, 24
        %v3529 = vpop.permute.xlu0 %3528
        %3530 = vrot.lane.b32.xlu0 %v3506, 24
        %v3531 = vpop.permute.xlu0 %3530
        %3532 = vrot.lane.b32.xlu0 %v3507, 24
        %v3533 = vpop.permute.xlu0 %3532
        %3534 = vrot.lane.b32.xlu0 %v3508, 24
        %v3535 = vpop.permute.xlu0 %3534
        %3536 = vrot.lane.b32.xlu0 %v3509, 24
        %v3537 = vpop.permute.xlu0 %3536
        %3538 = vrot.lane.b32.xlu0 %v3510, 24
        %v3539 = vpop.permute.xlu0 %3538
        %3540 = vrot.lane.b32.xlu0 %v3511, 24
        %v3541 = vpop.permute.xlu0 %3540
        %3542 = vrot.lane.b32.xlu0 %v3512, 24
        %v3543 = vpop.permute.xlu0 %3542
        %3544 = vrot.lane.b32.xlu0 %v3513, 24
        %v3545 = vpop.permute.xlu0 %3544
        %v3546 = vunpack.c.l.b16 %v2423
        %v3547 = vunpack.c.l.b16 %v2433
        %v3548 = vunpack.c.l.b16 %v2447
        %v3549 = vunpack.c.l.b16 %v2457
        %v3550 = vunpack.c.l.b16 %v2471
        %v3551 = vunpack.c.l.b16 %v2481
        %v3552 = vunpack.c.l.b16 %v2495
        %v3553 = vunpack.c.l.b16 %v2505
        %v3554 = vunpack.c.l.b16 %v2519
        %v3555 = vunpack.c.l.b16 %v2529
        %v3556 = vunpack.c.l.b16 %v2543
        %v3557 = vunpack.c.l.b16 %v2553
        %v3558 = vunpack.c.l.b16 %v2567
        %v3559 = vunpack.c.l.b16 %v2577
        %v3560 = vunpack.c.l.b16 %v2591
        %v3561 = vunpack.c.l.b16 %v2601
        %v3562 = vunpack.c.l.b16 %v2615
        %v3563 = vunpack.c.l.b16 %v2625
        %v3564 = vunpack.c.l.b16 %v2639
        %v3565 = vunpack.c.l.b16 %v2649
        %v3566 = vunpack.c.l.b16 %v2663
        %v3567 = vunpack.c.l.b16 %v2673
        %v3568 = vunpack.c.l.b16 %v2687
        %v3569 = vunpack.c.l.b16 %v2697
        %v3570 = vunpack.c.l.b16 %v2711
        %v3571 = vunpack.c.l.b16 %v2721
        %v3572 = vunpack.c.l.b16 %v2735
        %v3573 = vunpack.c.l.b16 %v2745
        %v3574 = vunpack.c.l.b16 %v2759
        %v3575 = vunpack.c.l.b16 %v2769
        %v3576 = vunpack.c.l.b16 %v2783
        %v3577 = vunpack.c.l.b16 %v2793
        %v3578 = vpack.c.b16 %v3547, %v3546
        %v3579 = vpack.c.b16 %v3549, %v3548
        %v3580 = vpack.c.b16 %v3551, %v3550
        %v3581 = vpack.c.b16 %v3553, %v3552
        %v3582 = vpack.c.b16 %v3555, %v3554
        %v3583 = vpack.c.b16 %v3557, %v3556
        %v3584 = vpack.c.b16 %v3559, %v3558
        %v3585 = vpack.c.b16 %v3561, %v3560
        %v3586 = vpack.c.b16 %v3563, %v3562
        %v3587 = vpack.c.b16 %v3565, %v3564
        %v3588 = vpack.c.b16 %v3567, %v3566
        %v3589 = vpack.c.b16 %v3569, %v3568
        %v3590 = vpack.c.b16 %v3571, %v3570
        %v3591 = vpack.c.b16 %v3573, %v3572
        %v3592 = vpack.c.b16 %v3575, %v3574
        %v3593 = vpack.c.b16 %v3577, %v3576
        %3594 = vrot.lane.b32.xlu0 %v3578, 28
        %v3595 = vpop.permute.xlu0 %3594
        %3596 = vrot.lane.b32.xlu0 %v3579, 28
        %v3597 = vpop.permute.xlu0 %3596
        %3598 = vrot.lane.b32.xlu0 %v3580, 28
        %v3599 = vpop.permute.xlu0 %3598
        %3600 = vrot.lane.b32.xlu0 %v3581, 28
        %v3601 = vpop.permute.xlu0 %3600
        %3602 = vrot.lane.b32.xlu0 %v3582, 28
        %v3603 = vpop.permute.xlu0 %3602
        %3604 = vrot.lane.b32.xlu0 %v3583, 28
        %v3605 = vpop.permute.xlu0 %3604
        %3606 = vrot.lane.b32.xlu0 %v3584, 28
        %v3607 = vpop.permute.xlu0 %3606
        %3608 = vrot.lane.b32.xlu0 %v3585, 28
        %v3609 = vpop.permute.xlu0 %3608
        %3610 = vrot.lane.b32.xlu0 %v3586, 28
        %v3611 = vpop.permute.xlu0 %3610
        %3612 = vrot.lane.b32.xlu0 %v3587, 28
        %v3613 = vpop.permute.xlu0 %3612
        %3614 = vrot.lane.b32.xlu0 %v3588, 28
        %v3615 = vpop.permute.xlu0 %3614
        %3616 = vrot.lane.b32.xlu0 %v3589, 28
        %v3617 = vpop.permute.xlu0 %3616
        %3618 = vrot.lane.b32.xlu0 %v3590, 28
        %v3619 = vpop.permute.xlu0 %3618
        %3620 = vrot.lane.b32.xlu0 %v3591, 28
        %v3621 = vpop.permute.xlu0 %3620
        %3622 = vrot.lane.b32.xlu0 %v3592, 28
        %v3623 = vpop.permute.xlu0 %3622
        %3624 = vrot.lane.b32.xlu0 %v3593, 28
        %v3625 = vpop.permute.xlu0 %3624
        %v3626 = vunpack.c.l.b16 %v2861
        %v3627 = vunpack.c.l.b16 %v2864
        %v3628 = vunpack.c.l.b16 %v2868
        %v3629 = vunpack.c.l.b16 %v2871
        %v3630 = vunpack.c.l.b16 %v2875
        %v3631 = vunpack.c.l.b16 %v2878
        %v3632 = vunpack.c.l.b16 %v2882
        %v3633 = vunpack.c.l.b16 %v2885
        %v3634 = vunpack.c.l.b16 %v2889
        %v3635 = vunpack.c.l.b16 %v2892
        %v3636 = vunpack.c.l.b16 %v2896
        %v3637 = vunpack.c.l.b16 %v2899
        %v3638 = vunpack.c.l.b16 %v2903
        %v3639 = vunpack.c.l.b16 %v2906
        %v3640 = vunpack.c.l.b16 %v2910
        %v3641 = vunpack.c.l.b16 %v2913
        %v3642 = vunpack.c.l.b16 %v2917
        %v3643 = vunpack.c.l.b16 %v2920
        %v3644 = vunpack.c.l.b16 %v2924
        %v3645 = vunpack.c.l.b16 %v2927
        %v3646 = vunpack.c.l.b16 %v2931
        %v3647 = vunpack.c.l.b16 %v2934
        %v3648 = vunpack.c.l.b16 %v2938
        %v3649 = vunpack.c.l.b16 %v2941
        %v3650 = vunpack.c.l.b16 %v2945
        %v3651 = vunpack.c.l.b16 %v2948
        %v3652 = vunpack.c.l.b16 %v2952
        %v3653 = vunpack.c.l.b16 %v2955
        %v3654 = vunpack.c.l.b16 %v2959
        %v3655 = vunpack.c.l.b16 %v2962
        %v3656 = vunpack.c.l.b16 %v2966
        %v3657 = vunpack.c.l.b16 %v2969
        %v3658 = vpack.c.b16 %v3627, %v3626
        %v3659 = vpack.c.b16 %v3629, %v3628
        %v3660 = vpack.c.b16 %v3631, %v3630
        %v3661 = vpack.c.b16 %v3633, %v3632
        %v3662 = vpack.c.b16 %v3635, %v3634
        %v3663 = vpack.c.b16 %v3637, %v3636
        %v3664 = vpack.c.b16 %v3639, %v3638
        %v3665 = vpack.c.b16 %v3641, %v3640
        %v3666 = vpack.c.b16 %v3643, %v3642
        %v3667 = vpack.c.b16 %v3645, %v3644
        %v3668 = vpack.c.b16 %v3647, %v3646
        %v3669 = vpack.c.b16 %v3649, %v3648
        %v3670 = vpack.c.b16 %v3651, %v3650
        %v3671 = vpack.c.b16 %v3653, %v3652
        %v3672 = vpack.c.b16 %v3655, %v3654
        %v3673 = vpack.c.b16 %v3657, %v3656
        %3674 = vrot.lane.b32.xlu0 %v3658, 32
        %v3675 = vpop.permute.xlu0 %3674
        %3676 = vrot.lane.b32.xlu0 %v3659, 32
        %v3677 = vpop.permute.xlu0 %3676
        %3678 = vrot.lane.b32.xlu0 %v3660, 32
        %v3679 = vpop.permute.xlu0 %3678
        %3680 = vrot.lane.b32.xlu0 %v3661, 32
        %v3681 = vpop.permute.xlu0 %3680
        %3682 = vrot.lane.b32.xlu0 %v3662, 32
        %v3683 = vpop.permute.xlu0 %3682
        %3684 = vrot.lane.b32.xlu0 %v3663, 32
        %v3685 = vpop.permute.xlu0 %3684
        %3686 = vrot.lane.b32.xlu0 %v3664, 32
        %v3687 = vpop.permute.xlu0 %3686
        %3688 = vrot.lane.b32.xlu0 %v3665, 32
        %v3689 = vpop.permute.xlu0 %3688
        %3690 = vrot.lane.b32.xlu0 %v3666, 32
        %v3691 = vpop.permute.xlu0 %3690
        %3692 = vrot.lane.b32.xlu0 %v3667, 32
        %v3693 = vpop.permute.xlu0 %3692
        %3694 = vrot.lane.b32.xlu0 %v3668, 32
        %v3695 = vpop.permute.xlu0 %3694
        %3696 = vrot.lane.b32.xlu0 %v3669, 32
        %v3697 = vpop.permute.xlu0 %3696
        %3698 = vrot.lane.b32.xlu0 %v3670, 32
        %v3699 = vpop.permute.xlu0 %3698
        %3700 = vrot.lane.b32.xlu0 %v3671, 32
        %v3701 = vpop.permute.xlu0 %3700
        %3702 = vrot.lane.b32.xlu0 %v3672, 32
        %v3703 = vpop.permute.xlu0 %3702
        %3704 = vrot.lane.b32.xlu0 %v3673, 32
        %v3705 = vpop.permute.xlu0 %3704
        %vm3706 = vcmask 31744
        %v3709 = vsel %vm3706, %v3018, %v3083
        %v3712 = vsel %vm3706, %v3019, %v3085
        %v3715 = vsel %vm3706, %v3020, %v3087
        %v3718 = vsel %vm3706, %v3021, %v3089
        %v3721 = vsel %vm3706, %v3022, %v3091
        %v3724 = vsel %vm3706, %v3023, %v3093
        %v3727 = vsel %vm3706, %v3024, %v3095
        %v3730 = vsel %vm3706, %v3025, %v3097
        %v3733 = vsel %vm3706, %v3026, %v3099
        %v3736 = vsel %vm3706, %v3027, %v3101
        %v3739 = vsel %vm3706, %v3028, %v3103
        %v3742 = vsel %vm3706, %v3029, %v3105
        %v3745 = vsel %vm3706, %v3030, %v3107
        %v3748 = vsel %vm3706, %v3031, %v3109
        %v3751 = vsel %vm3706, %v3032, %v3111
        %v3754 = vsel %vm3706, %v3033, %v3113
        %vm3755 = vcmask 64512
        %v3757 = vsel %vm3755, %v3709, %v3163
        %v3759 = vsel %vm3755, %v3712, %v3165
        %v3761 = vsel %vm3755, %v3715, %v3167
        %v3763 = vsel %vm3755, %v3718, %v3169
        %v3765 = vsel %vm3755, %v3721, %v3171
        %v3767 = vsel %vm3755, %v3724, %v3173
        %v3769 = vsel %vm3755, %v3727, %v3175
        %v3771 = vsel %vm3755, %v3730, %v3177
        %v3773 = vsel %vm3755, %v3733, %v3179
        %v3775 = vsel %vm3755, %v3736, %v3181
        %v3777 = vsel %vm3755, %v3739, %v3183
        %v3779 = vsel %vm3755, %v3742, %v3185
        %v3781 = vsel %vm3755, %v3745, %v3187
        %v3783 = vsel %vm3755, %v3748, %v3189
        %v3785 = vsel %vm3755, %v3751, %v3191
        %v3787 = vsel %vm3755, %v3754, %v3193
        %vm3788 = vcmask 97280
        %v3790 = vsel %vm3788, %v3757, %v3259
        %v3792 = vsel %vm3788, %v3759, %v3261
        %v3794 = vsel %vm3788, %v3761, %v3263
        %v3796 = vsel %vm3788, %v3763, %v3265
        %v3798 = vsel %vm3788, %v3765, %v3267
        %v3800 = vsel %vm3788, %v3767, %v3269
        %v3802 = vsel %vm3788, %v3769, %v3271
        %v3804 = vsel %vm3788, %v3771, %v3273
        %v3806 = vsel %vm3788, %v3773, %v3275
        %v3808 = vsel %vm3788, %v3775, %v3277
        %v3810 = vsel %vm3788, %v3777, %v3279
        %v3812 = vsel %vm3788, %v3779, %v3281
        %v3814 = vsel %vm3788, %v3781, %v3283
        %v3816 = vsel %vm3788, %v3783, %v3285
        %v3818 = vsel %vm3788, %v3785, %v3287
        %v3820 = vsel %vm3788, %v3787, %v3289
        %vm3821 = vcmask 130048
        %v3823 = vsel %vm3821, %v3790, %v3339
        %v3825 = vsel %vm3821, %v3792, %v3341
        %v3827 = vsel %vm3821, %v3794, %v3343
        %v3829 = vsel %vm3821, %v3796, %v3345
        %v3831 = vsel %vm3821, %v3798, %v3347
        %v3833 = vsel %vm3821, %v3800, %v3349
        %v3835 = vsel %vm3821, %v3802, %v3351
        %v3837 = vsel %vm3821, %v3804, %v3353
        %v3839 = vsel %vm3821, %v3806, %v3355
        %v3841 = vsel %vm3821, %v3808, %v3357
        %v3843 = vsel %vm3821, %v3810, %v3359
        %v3845 = vsel %vm3821, %v3812, %v3361
        %v3847 = vsel %vm3821, %v3814, %v3363
        %v3849 = vsel %vm3821, %v3816, %v3365
        %v3851 = vsel %vm3821, %v3818, %v3367
        %v3853 = vsel %vm3821, %v3820, %v3369
        %vm3854 = vcmask 162816
        %v3856 = vsel %vm3854, %v3823, %v3419
        %v3858 = vsel %vm3854, %v3825, %v3421
        %v3860 = vsel %vm3854, %v3827, %v3423
        %v3862 = vsel %vm3854, %v3829, %v3425
        %v3864 = vsel %vm3854, %v3831, %v3427
        %v3866 = vsel %vm3854, %v3833, %v3429
        %v3868 = vsel %vm3854, %v3835, %v3431
        %v3870 = vsel %vm3854, %v3837, %v3433
        %v3872 = vsel %vm3854, %v3839, %v3435
        %v3874 = vsel %vm3854, %v3841, %v3437
        %v3876 = vsel %vm3854, %v3843, %v3439
        %v3878 = vsel %vm3854, %v3845, %v3441
        %v3880 = vsel %vm3854, %v3847, %v3443
        %v3882 = vsel %vm3854, %v3849, %v3445
        %v3884 = vsel %vm3854, %v3851, %v3447
        %v3886 = vsel %vm3854, %v3853, %v3449
        %vm3887 = vcmask 195584
        %v3889 = vsel %vm3887, %v3856, %v3515
        %v3891 = vsel %vm3887, %v3858, %v3517
        %v3893 = vsel %vm3887, %v3860, %v3519
        %v3895 = vsel %vm3887, %v3862, %v3521
        %v3897 = vsel %vm3887, %v3864, %v3523
        %v3899 = vsel %vm3887, %v3866, %v3525
        %v3901 = vsel %vm3887, %v3868, %v3527
        %v3903 = vsel %vm3887, %v3870, %v3529
        %v3905 = vsel %vm3887, %v3872, %v3531
        %v3907 = vsel %vm3887, %v3874, %v3533
        %v3909 = vsel %vm3887, %v3876, %v3535
        %v3911 = vsel %vm3887, %v3878, %v3537
        %v3913 = vsel %vm3887, %v3880, %v3539
        %v3915 = vsel %vm3887, %v3882, %v3541
        %v3917 = vsel %vm3887, %v3884, %v3543
        %v3919 = vsel %vm3887, %v3886, %v3545
        %vm3920 = vcmask 228352
        %v3922 = vsel %vm3920, %v3889, %v3595
        %v3924 = vsel %vm3920, %v3891, %v3597
        %v3926 = vsel %vm3920, %v3893, %v3599
        %v3928 = vsel %vm3920, %v3895, %v3601
        %v3930 = vsel %vm3920, %v3897, %v3603
        %v3932 = vsel %vm3920, %v3899, %v3605
        %v3934 = vsel %vm3920, %v3901, %v3607
        %v3936 = vsel %vm3920, %v3903, %v3609
        %v3938 = vsel %vm3920, %v3905, %v3611
        %v3940 = vsel %vm3920, %v3907, %v3613
        %v3942 = vsel %vm3920, %v3909, %v3615
        %v3944 = vsel %vm3920, %v3911, %v3617
        %v3946 = vsel %vm3920, %v3913, %v3619
        %v3948 = vsel %vm3920, %v3915, %v3621
        %v3950 = vsel %vm3920, %v3917, %v3623
        %v3952 = vsel %vm3920, %v3919, %v3625
        %vm3953 = vcmask 261120
        %v3955 = vsel %vm3953, %v3922, %v3675
        %v3957 = vsel %vm3953, %v3924, %v3677
        %v3959 = vsel %vm3953, %v3926, %v3679
        %v3961 = vsel %vm3953, %v3928, %v3681
        %v3963 = vsel %vm3953, %v3930, %v3683
        %v3965 = vsel %vm3953, %v3932, %v3685
        %v3967 = vsel %vm3953, %v3934, %v3687
        %v3969 = vsel %vm3953, %v3936, %v3689
        %v3971 = vsel %vm3953, %v3938, %v3691
        %v3973 = vsel %vm3953, %v3940, %v3693
        %v3975 = vsel %vm3953, %v3942, %v3695
        %v3977 = vsel %vm3953, %v3944, %v3697
        %v3979 = vsel %vm3953, %v3946, %v3699
        %v3981 = vsel %vm3953, %v3948, %v3701
        %v3983 = vsel %vm3953, %v3950, %v3703
        %v3985 = vsel %vm3953, %v3952, %v3705
        %v3986 = vld [vmem:[%s1] sm:$0xf]
        %v3987 = vld [vmem:[%s1 + $0x4] sm:$0xf]
        %v3988 = vld [vmem:[%s1 + $0x8] sm:$0xf]
        %v3989 = vld [vmem:[%s1 + $0xc] sm:$0xf]
        %v3990 = vld [vmem:[%s1 + $0x10] sm:$0x3]
        %v3996 = vunpack.c.l.b16 %v3986
        %v3997 = vunpack.c.l.b16 %v3987
        %v3998 = vunpack.c.l.b16 %v3988
        %v3999 = vunpack.c.l.b16 %v3989
        %v4000 = vunpack.c.l.b16 %v3990
        %v4001 = vpack.c.b16 %v3997, %v3996
        %v4002 = vpack.c.b16 %v3999, %v3998
        %v4003 = vpack.c.b16 %v4000, %v4000
        %vm4006 = vcmask 293888
        %v4007 = vsel %vm4006, %v3955, 0
        %v4009 = vsel %vm4006, %v3957, 0
        %v4011 = vsel %vm4006, %v3959, 0
        %v4013 = vsel %vm4006, %v3961, 0
        %v4015 = vsel %vm4006, %v3963, 0
        %v4017 = vsel %vm4006, %v3965, 0
        %v4019 = vsel %vm4006, %v3967, 0
        %v4021 = vsel %vm4006, %v3969, 0
        %v4023 = vsel %vm4006, %v3971, 0
        %v4025 = vsel %vm4006, %v3973, 0
        %v4027 = vsel %vm4006, %v3975, 0
        %v4029 = vsel %vm4006, %v3977, 0
        %v4031 = vsel %vm4006, %v3979, 0
        %v4033 = vsel %vm4006, %v3981, 0
        %v4035 = vsel %vm4006, %v3983, 0
        %v4037 = vsel %vm4006, %v3985, 0
        %vm4039 = vcmask 1041408
        %v4041 = vsel %vm4039, %v4003, 0
        %4043 = vmatprep.subr.bf16.mxu0 0
        %4044 = vmatpush1.bf16.msra.mxu0 0
        %4045 = vmatprep.subr.bf16.mxu0 0
        %4046 = vmatpush1.bf16.msra.mxu0 0
        %4047 = vmatprep.subr.bf16.mxu0 0
        %4048 = vmatpush1.bf16.msra.mxu0 0
        %4049 = vmatprep.subr.bf16.mxu0 0
        %4050 = vmatpush1.bf16.msra.mxu0 0
        %4051 = vmatprep.subr.bf16.mxu0 0
        %4052 = vmatpush1.bf16.msra.mxu0 0
        %4053 = vmatprep.subr.bf16.mxu0 0
        %4054 = vmatpush1.bf16.msra.mxu0 %v4041
        %4055 = vmatprep.subr.bf16.mxu0 0
        %4056 = vmatpush1.bf16.msra.mxu0 %v4002
        %4057 = vmatprep.subr.bf16.mxu0 0
        %4058 = vmatpush1.bf16.msra.mxu0 %v4001
        %4059 = vmatprep.subr.bf16.mxu0 0
        %4060 = vmatpush2.bf16.msra.mxu0 0
        %4061 = vmatprep.subr.bf16.mxu0 0
        %4062 = vmatpush2.bf16.msra.mxu0 0
        %4063 = vmatprep.subr.bf16.mxu0 0
        %4064 = vmatpush2.bf16.msra.mxu0 0
        %4065 = vmatprep.subr.bf16.mxu0 0
        %4066 = vmatpush2.bf16.msra.mxu0 0
        %4067 = vmatprep.subr.bf16.mxu0 0
        %4068 = vmatpush2.bf16.msra.mxu0 0
        %4069 = vmatprep.subr.bf16.mxu0 0
        %4070 = vmatpush2.bf16.msra.mxu0 0
        %4071 = vmatprep.subr.bf16.mxu0 0
        %4072 = vmatpush2.bf16.msra.mxu0 0
        %4073 = vmatprep.subr.bf16.mxu0 0
        %4074 = vmatpush2.bf16.msra.mxu0 0
        %4075 = vmatprep.mubr.bf16.mxu0 0
        %4076 = vmatmul.mubr.bf16.gmra.mxu0 %v4007
        %v4077 = vpop.f32.mrf.mxu0
        %v4078 = vadd.f32 0.0, %v4077
        %v4079 = vpop.f32.mrf.mxu0
        %v4080 = vpop.f32.mrf.mxu0
        %v4081 = vadd.f32 0.0, %v4080
        %v4082 = vpop.f32.mrf.mxu0
        %4083 = vmatprep.mubr.bf16.mxu0 0
        %4084 = vmatmul.mubr.bf16.gmra.mxu0 %v4009
        %v4085 = vpop.f32.mrf.mxu0
        %v4086 = vadd.f32 0.0, %v4085
        %v4087 = vpop.f32.mrf.mxu0
        %v4088 = vpop.f32.mrf.mxu0
        %v4089 = vadd.f32 0.0, %v4088
        %v4090 = vpop.f32.mrf.mxu0
        %4091 = vmatprep.mubr.bf16.mxu0 0
        %4092 = vmatmul.mubr.bf16.gmra.mxu0 %v4011
        %v4093 = vpop.f32.mrf.mxu0
        %v4094 = vadd.f32 0.0, %v4093
        %v4095 = vpop.f32.mrf.mxu0
        %v4096 = vpop.f32.mrf.mxu0
        %v4097 = vadd.f32 0.0, %v4096
        %v4098 = vpop.f32.mrf.mxu0
        %4099 = vmatprep.mubr.bf16.mxu0 0
        %4100 = vmatmul.mubr.bf16.gmra.mxu0 %v4013
        %v4101 = vpop.f32.mrf.mxu0
        %v4102 = vadd.f32 0.0, %v4101
        %v4103 = vpop.f32.mrf.mxu0
        %v4104 = vpop.f32.mrf.mxu0
        %v4105 = vadd.f32 0.0, %v4104
        %v4106 = vpop.f32.mrf.mxu0
        %4107 = vmatprep.mubr.bf16.mxu0 0
        %4108 = vmatmul.mubr.bf16.gmra.mxu0 %v4015
        %v4109 = vpop.f32.mrf.mxu0
        %v4110 = vadd.f32 0.0, %v4109
        %v4111 = vpop.f32.mrf.mxu0
        %v4112 = vpop.f32.mrf.mxu0
        %v4113 = vadd.f32 0.0, %v4112
        %v4114 = vpop.f32.mrf.mxu0
        %4115 = vmatprep.mubr.bf16.mxu0 0
        %4116 = vmatmul.mubr.bf16.gmra.mxu0 %v4017
        %v4117 = vpop.f32.mrf.mxu0
        %v4118 = vadd.f32 0.0, %v4117
        %v4119 = vpop.f32.mrf.mxu0
        %v4120 = vpop.f32.mrf.mxu0
        %v4121 = vadd.f32 0.0, %v4120
        %v4122 = vpop.f32.mrf.mxu0
        %4123 = vmatprep.mubr.bf16.mxu0 0
        %4124 = vmatmul.mubr.bf16.gmra.mxu0 %v4019
        %v4125 = vpop.f32.mrf.mxu0
        %v4126 = vadd.f32 0.0, %v4125
        %v4127 = vpop.f32.mrf.mxu0
        %v4128 = vpop.f32.mrf.mxu0
        %v4129 = vadd.f32 0.0, %v4128
        %v4130 = vpop.f32.mrf.mxu0
        %4131 = vmatprep.mubr.bf16.mxu0 0
        %4132 = vmatmul.mubr.bf16.gmra.mxu0 %v4021
        %v4133 = vpop.f32.mrf.mxu0
        %v4134 = vadd.f32 0.0, %v4133
        %v4135 = vpop.f32.mrf.mxu0
        %v4136 = vpop.f32.mrf.mxu0
        %v4137 = vadd.f32 0.0, %v4136
        %v4138 = vpop.f32.mrf.mxu0
        %4139 = vmatprep.mubr.bf16.mxu0 0
        %4140 = vmatmul.mubr.bf16.gmra.mxu0 %v4023
        %v4141 = vpop.f32.mrf.mxu0
        %v4142 = vadd.f32 0.0, %v4141
        %v4143 = vpop.f32.mrf.mxu0
        %v4144 = vpop.f32.mrf.mxu0
        %v4145 = vadd.f32 0.0, %v4144
        %v4146 = vpop.f32.mrf.mxu0
        %4147 = vmatprep.mubr.bf16.mxu0 0
        %4148 = vmatmul.mubr.bf16.gmra.mxu0 %v4025
        %v4149 = vpop.f32.mrf.mxu0
        %v4150 = vadd.f32 0.0, %v4149
        %v4151 = vpop.f32.mrf.mxu0
        %v4152 = vpop.f32.mrf.mxu0
        %v4153 = vadd.f32 0.0, %v4152
        %v4154 = vpop.f32.mrf.mxu0
        %4155 = vmatprep.mubr.bf16.mxu0 0
        %4156 = vmatmul.mubr.bf16.gmra.mxu0 %v4027
        %v4157 = vpop.f32.mrf.mxu0
        %v4158 = vadd.f32 0.0, %v4157
        %v4159 = vpop.f32.mrf.mxu0
        %v4160 = vpop.f32.mrf.mxu0
        %v4161 = vadd.f32 0.0, %v4160
        %v4162 = vpop.f32.mrf.mxu0
        %4163 = vmatprep.mubr.bf16.mxu0 0
        %4164 = vmatmul.mubr.bf16.gmra.mxu0 %v4029
        %v4165 = vpop.f32.mrf.mxu0
        %v4166 = vadd.f32 0.0, %v4165
        %v4167 = vpop.f32.mrf.mxu0
        %v4168 = vpop.f32.mrf.mxu0
        %v4169 = vadd.f32 0.0, %v4168
        %v4170 = vpop.f32.mrf.mxu0
        %4171 = vmatprep.mubr.bf16.mxu0 0
        %4172 = vmatmul.mubr.bf16.gmra.mxu0 %v4031
        %v4173 = vpop.f32.mrf.mxu0
        %v4174 = vadd.f32 0.0, %v4173
        %v4175 = vpop.f32.mrf.mxu0
        %v4176 = vpop.f32.mrf.mxu0
        %v4177 = vadd.f32 0.0, %v4176
        %v4178 = vpop.f32.mrf.mxu0
        %4179 = vmatprep.mubr.bf16.mxu0 0
        %4180 = vmatmul.mubr.bf16.gmra.mxu0 %v4033
        %v4181 = vpop.f32.mrf.mxu0
        %v4182 = vadd.f32 0.0, %v4181
        %v4183 = vpop.f32.mrf.mxu0
        %v4184 = vpop.f32.mrf.mxu0
        %v4185 = vadd.f32 0.0, %v4184
        %v4186 = vpop.f32.mrf.mxu0
        %4187 = vmatprep.mubr.bf16.mxu0 0
        %4188 = vmatmul.mubr.bf16.gmra.mxu0 %v4035
        %v4189 = vpop.f32.mrf.mxu0
        %v4190 = vadd.f32 0.0, %v4189
        %v4191 = vpop.f32.mrf.mxu0
        %v4192 = vpop.f32.mrf.mxu0
        %v4193 = vadd.f32 0.0, %v4192
        %v4194 = vpop.f32.mrf.mxu0
        %4195 = vmatprep.mubr.bf16.mxu0 0
        %4196 = vmatmul.mubr.bf16.gmra.mxu0 %v4037
        %v4197 = vpop.f32.mrf.mxu0
        %v4198 = vadd.f32 0.0, %v4197
        %v4199 = vpop.f32.mrf.mxu0
        %v4200 = vpop.f32.mrf.mxu0
        %v4201 = vadd.f32 0.0, %v4200
        %v4202 = vpop.f32.mrf.mxu0
        %4203 = vdwg.mxu0
        %v4204 = vld [vmem:[%s2] sm:$0x1]
        %v4205 = vld [vmem:[%s3] sm:$0x1]
        %v4206 = vld [vmem:[%s4] sm:$0xff]
        %v4207 = vsel %vm3755, %v4078, 0.0
        %v4208 = vsel %vm3755, %v4081, 0.0
        %v4209 = vadd.f32 %v4207, %v4208
        %v4210 = vsel %vm3755, %v4086, 0.0
        %v4211 = vadd.f32 %v4209, %v4210
        %v4212 = vsel %vm3755, %v4089, 0.0
        %v4213 = vadd.f32 %v4211, %v4212
        %v4214 = vsel %vm3755, %v4094, 0.0
        %v4215 = vadd.f32 %v4213, %v4214
        %v4216 = vsel %vm3755, %v4097, 0.0
        %v4217 = vadd.f32 %v4215, %v4216
        %v4218 = vsel %vm3755, %v4102, 0.0
        %v4219 = vadd.f32 %v4217, %v4218
        %v4220 = vsel %vm3755, %v4105, 0.0
        %v4221 = vadd.f32 %v4219, %v4220
        %v4222 = vsel %vm3755, %v4110, 0.0
        %v4223 = vadd.f32 %v4221, %v4222
        %v4224 = vsel %vm3755, %v4113, 0.0
        %v4225 = vadd.f32 %v4223, %v4224
        %v4226 = vsel %vm3755, %v4118, 0.0
        %v4227 = vadd.f32 %v4225, %v4226
        %v4228 = vsel %vm3755, %v4121, 0.0
        %v4229 = vadd.f32 %v4227, %v4228
        %v4230 = vsel %vm3755, %v4126, 0.0
        %v4231 = vadd.f32 %v4229, %v4230
        %v4232 = vsel %vm3755, %v4129, 0.0
        %v4233 = vadd.f32 %v4231, %v4232
        %v4234 = vsel %vm3755, %v4134, 0.0
        %v4235 = vadd.f32 %v4233, %v4234
        %v4236 = vsel %vm3755, %v4137, 0.0
        %v4237 = vadd.f32 %v4235, %v4236
        %v4238 = vsel %vm3755, %v4142, 0.0
        %v4239 = vadd.f32 %v4237, %v4238
        %v4240 = vsel %vm3755, %v4145, 0.0
        %v4241 = vadd.f32 %v4239, %v4240
        %v4242 = vsel %vm3755, %v4150, 0.0
        %v4243 = vadd.f32 %v4241, %v4242
        %v4244 = vsel %vm3755, %v4153, 0.0
        %v4245 = vadd.f32 %v4243, %v4244
        %v4246 = vsel %vm3755, %v4158, 0.0
        %v4247 = vadd.f32 %v4245, %v4246
        %v4248 = vsel %vm3755, %v4161, 0.0
        %v4249 = vadd.f32 %v4247, %v4248
        %v4250 = vsel %vm3755, %v4166, 0.0
        %v4251 = vadd.f32 %v4249, %v4250
        %v4252 = vsel %vm3755, %v4169, 0.0
        %v4253 = vadd.f32 %v4251, %v4252
        %v4254 = vsel %vm3755, %v4174, 0.0
        %v4255 = vadd.f32 %v4253, %v4254
        %v4256 = vsel %vm3755, %v4177, 0.0
        %v4257 = vadd.f32 %v4255, %v4256
        %v4258 = vsel %vm3755, %v4182, 0.0
        %v4259 = vadd.f32 %v4257, %v4258
        %v4260 = vsel %vm3755, %v4185, 0.0
        %v4261 = vadd.f32 %v4259, %v4260
        %v4262 = vsel %vm3755, %v4190, 0.0
        %v4263 = vadd.f32 %v4261, %v4262
        %v4264 = vsel %vm3755, %v4193, 0.0
        %v4265 = vadd.f32 %v4263, %v4264
        %v4266 = vsel %vm3755, %v4198, 0.0
        %v4267 = vadd.f32 %v4265, %v4266
        %v4268 = vsel %vm3755, %v4201, 0.0
        %v4269 = vadd.f32 %v4267, %v4268
        %v4270 = vrot.slane %v4269, 4
        %v4271 = vadd.f32 %v4269, %v4270
        %v4272 = vrot.slane %v4271, 2
        %v4273 = vadd.f32 %v4271, %v4272
        %v4274 = vrot.slane %v4273, 1
        %v4275 = vadd.f32 %v4273, %v4274
        %v4276 = vmul.f32 %v4078, %v4078
        %v4277 = vmul.f32 %v4081, %v4081
        %v4278 = vmul.f32 %v4086, %v4086
        %v4279 = vmul.f32 %v4089, %v4089
        %v4280 = vmul.f32 %v4094, %v4094
        %v4281 = vmul.f32 %v4097, %v4097
        %v4282 = vmul.f32 %v4102, %v4102
        %v4283 = vmul.f32 %v4105, %v4105
        %v4284 = vmul.f32 %v4110, %v4110
        %v4285 = vmul.f32 %v4113, %v4113
        %v4286 = vmul.f32 %v4118, %v4118
        %v4287 = vmul.f32 %v4121, %v4121
        %v4288 = vmul.f32 %v4126, %v4126
        %v4289 = vmul.f32 %v4129, %v4129
        %v4290 = vmul.f32 %v4134, %v4134
        %v4291 = vmul.f32 %v4137, %v4137
        %v4292 = vmul.f32 %v4142, %v4142
        %v4293 = vmul.f32 %v4145, %v4145
        %v4294 = vmul.f32 %v4150, %v4150
        %v4295 = vmul.f32 %v4153, %v4153
        %v4296 = vmul.f32 %v4158, %v4158
        %v4297 = vmul.f32 %v4161, %v4161
        %v4298 = vmul.f32 %v4166, %v4166
        %v4299 = vmul.f32 %v4169, %v4169
        %v4300 = vmul.f32 %v4174, %v4174
        %v4301 = vmul.f32 %v4177, %v4177
        %v4302 = vmul.f32 %v4182, %v4182
        %v4303 = vmul.f32 %v4185, %v4185
        %v4304 = vmul.f32 %v4190, %v4190
        %v4305 = vmul.f32 %v4193, %v4193
        %v4306 = vmul.f32 %v4198, %v4198
        %v4307 = vmul.f32 %v4201, %v4201
        %v4308 = vsel %vm3755, %v4276, 0.0
        %v4309 = vsel %vm3755, %v4277, 0.0
        %v4310 = vadd.f32 %v4308, %v4309
        %v4311 = vsel %vm3755, %v4278, 0.0
        %v4312 = vadd.f32 %v4310, %v4311
        %v4313 = vsel %vm3755, %v4279, 0.0
        %v4314 = vadd.f32 %v4312, %v4313
        %v4315 = vsel %vm3755, %v4280, 0.0
        %v4316 = vadd.f32 %v4314, %v4315
        %v4317 = vsel %vm3755, %v4281, 0.0
        %v4318 = vadd.f32 %v4316, %v4317
        %v4319 = vsel %vm3755, %v4282, 0.0
        %v4320 = vadd.f32 %v4318, %v4319
        %v4321 = vsel %vm3755, %v4283, 0.0
        %v4322 = vadd.f32 %v4320, %v4321
        %v4323 = vsel %vm3755, %v4284, 0.0
        %v4324 = vadd.f32 %v4322, %v4323
        %v4325 = vsel %vm3755, %v4285, 0.0
        %v4326 = vadd.f32 %v4324, %v4325
        %v4327 = vsel %vm3755, %v4286, 0.0
        %v4328 = vadd.f32 %v4326, %v4327
        %v4329 = vsel %vm3755, %v4287, 0.0
        %v4330 = vadd.f32 %v4328, %v4329
        %v4331 = vsel %vm3755, %v4288, 0.0
        %v4332 = vadd.f32 %v4330, %v4331
        %v4333 = vsel %vm3755, %v4289, 0.0
        %v4334 = vadd.f32 %v4332, %v4333
        %v4335 = vsel %vm3755, %v4290, 0.0
        %v4336 = vadd.f32 %v4334, %v4335
        %v4337 = vsel %vm3755, %v4291, 0.0
        %v4338 = vadd.f32 %v4336, %v4337
        %v4339 = vsel %vm3755, %v4292, 0.0
        %v4340 = vadd.f32 %v4338, %v4339
        %v4341 = vsel %vm3755, %v4293, 0.0
        %v4342 = vadd.f32 %v4340, %v4341
        %v4343 = vsel %vm3755, %v4294, 0.0
        %v4344 = vadd.f32 %v4342, %v4343
        %v4345 = vsel %vm3755, %v4295, 0.0
        %v4346 = vadd.f32 %v4344, %v4345
        %v4347 = vsel %vm3755, %v4296, 0.0
        %v4348 = vadd.f32 %v4346, %v4347
        %v4349 = vsel %vm3755, %v4297, 0.0
        %v4350 = vadd.f32 %v4348, %v4349
        %v4351 = vsel %vm3755, %v4298, 0.0
        %v4352 = vadd.f32 %v4350, %v4351
        %v4353 = vsel %vm3755, %v4299, 0.0
        %v4354 = vadd.f32 %v4352, %v4353
        %v4355 = vsel %vm3755, %v4300, 0.0
        %v4356 = vadd.f32 %v4354, %v4355
        %v4357 = vsel %vm3755, %v4301, 0.0
        %v4358 = vadd.f32 %v4356, %v4357
        %v4359 = vsel %vm3755, %v4302, 0.0
        %v4360 = vadd.f32 %v4358, %v4359
        %v4361 = vsel %vm3755, %v4303, 0.0
        %v4362 = vadd.f32 %v4360, %v4361
        %v4363 = vsel %vm3755, %v4304, 0.0
        %v4364 = vadd.f32 %v4362, %v4363
        %v4365 = vsel %vm3755, %v4305, 0.0
        %v4366 = vadd.f32 %v4364, %v4365
        %v4367 = vsel %vm3755, %v4306, 0.0
        %v4368 = vadd.f32 %v4366, %v4367
        %v4369 = vsel %vm3755, %v4307, 0.0
        %v4370 = vadd.f32 %v4368, %v4369
        %v4371 = vrot.slane %v4370, 4
        %v4372 = vadd.f32 %v4370, %v4371
        %v4373 = vrot.slane %v4372, 2
        %v4374 = vadd.f32 %v4372, %v4373
        %v4375 = vrot.slane %v4374, 1
        %v4376 = vadd.f32 %v4374, %v4375
        %v4378 = vsel %vm3755, %v4275, 0
        %4380 = vmatprep.subr.mxu0 0.0
        %4381 = vmatpush1.msra.mxu0 0.0
        %4382 = vmatprep.subr.mxu0 0.0
        %4383 = vmatpush1.msra.mxu0 0.0
        %4384 = vmatprep.subr.mxu0 0.0
        %4385 = vmatpush1.msra.mxu0 0.0
        %4386 = vmatprep.subr.mxu0 0.0
        %4387 = vmatpush1.msra.mxu0 0.0
        %4388 = vmatprep.subr.mxu0 0.0
        %4389 = vmatpush1.msra.mxu0 0.0
        %4390 = vmatprep.subr.mxu0 0.0
        %4391 = vmatpush1.msra.mxu0 0.0
        %4392 = vmatprep.subr.mxu0 0.0
        %4393 = vmatpush1.msra.mxu0 0.0
        %4394 = vmatprep.subr.mxu0 0.0
        %4395 = vmatpush1.msra.mxu0 0.0
        %4396 = vmatprep.subr.mxu0 0.0
        %4397 = vmatpush1.msra.mxu0 0.0
        %4398 = vmatprep.subr.mxu0 0.0
        %4399 = vmatpush1.msra.mxu0 0.0
        %4400 = vmatprep.subr.mxu0 0.0
        %4401 = vmatpush1.msra.mxu0 0.0
        %4402 = vmatprep.subr.mxu0 0.0
        %4403 = vmatpush1.msra.mxu0 0.0
        %4404 = vmatprep.subr.mxu0 0.0
        %4405 = vmatpush1.msra.mxu0 0.0
        %4406 = vmatprep.subr.mxu0 0.0
        %4407 = vmatpush1.msra.mxu0 0.0
        %4408 = vmatprep.subr.mxu0 0.0
        %4409 = vmatpush1.msra.mxu0 0.0
        %4410 = vmatprep.subr.mxu0 0.0
        %4411 = vmatpush1.msra.mxu0 %v4206
        %4412 = vmatprep.subr.mxu0 0.0
        %4413 = vmatpush2.msra.mxu0 0.0
        %4414 = vmatprep.subr.mxu0 0.0
        %4415 = vmatpush2.msra.mxu0 0.0
        %4416 = vmatprep.subr.mxu0 0.0
        %4417 = vmatpush2.msra.mxu0 0.0
        %4418 = vmatprep.subr.mxu0 0.0
        %4419 = vmatpush2.msra.mxu0 0.0
        %4420 = vmatprep.subr.mxu0 0.0
        %4421 = vmatpush2.msra.mxu0 0.0
        %4422 = vmatprep.subr.mxu0 0.0
        %4423 = vmatpush2.msra.mxu0 0.0
        %4424 = vmatprep.subr.mxu0 0.0
        %4425 = vmatpush2.msra.mxu0 0.0
        %4426 = vmatprep.subr.mxu0 0.0
        %4427 = vmatpush2.msra.mxu0 0.0
        %4428 = vmatprep.subr.mxu0 0.0
        %4429 = vmatpush2.msra.mxu0 0.0
        %4430 = vmatprep.subr.mxu0 0.0
        %4431 = vmatpush2.msra.mxu0 0.0
        %4432 = vmatprep.subr.mxu0 0.0
        %4433 = vmatpush2.msra.mxu0 0.0
        %4434 = vmatprep.subr.mxu0 0.0
        %4435 = vmatpush2.msra.mxu0 0.0
        %4436 = vmatprep.subr.mxu0 0.0
        %4437 = vmatpush2.msra.mxu0 0.0
        %4438 = vmatprep.subr.mxu0 0.0
        %4439 = vmatpush2.msra.mxu0 0.0
        %4440 = vmatprep.subr.mxu0 0.0
        %4441 = vmatpush2.msra.mxu0 0.0
        %4442 = vmatprep.subr.mxu0 0.0
        %4443 = vmatpush2.msra.mxu0 0.0
        %4444 = vmatprep.mubr.f32.mxu0 0.0
        %4445 = vmatmul.mubr.f32.gmra.mxu0 %v4378
        %v4446 = vpop.f32.mrf.mxu0
        %v4447 = vadd.f32 0.0, %v4446
        %v4448 = vpop.f32.mrf.mxu0
        %4449 = vdwg.mxu0
        %v4451 = vsel %vm3755, %v4376, 0
        %4453 = vmatprep.subr.mxu0 0.0
        %4454 = vmatpush1.msra.mxu0 0.0
        %4455 = vmatprep.subr.mxu0 0.0
        %4456 = vmatpush1.msra.mxu0 0.0
        %4457 = vmatprep.subr.mxu0 0.0
        %4458 = vmatpush1.msra.mxu0 0.0
        %4459 = vmatprep.subr.mxu0 0.0
        %4460 = vmatpush1.msra.mxu0 0.0
        %4461 = vmatprep.subr.mxu0 0.0
        %4462 = vmatpush1.msra.mxu0 0.0
        %4463 = vmatprep.subr.mxu0 0.0
        %4464 = vmatpush1.msra.mxu0 0.0
        %4465 = vmatprep.subr.mxu0 0.0
        %4466 = vmatpush1.msra.mxu0 0.0
        %4467 = vmatprep.subr.mxu0 0.0
        %4468 = vmatpush1.msra.mxu0 0.0
        %4469 = vmatprep.subr.mxu0 0.0
        %4470 = vmatpush1.msra.mxu0 0.0
        %4471 = vmatprep.subr.mxu0 0.0
        %4472 = vmatpush1.msra.mxu0 0.0
        %4473 = vmatprep.subr.mxu0 0.0
        %4474 = vmatpush1.msra.mxu0 0.0
        %4475 = vmatprep.subr.mxu0 0.0
        %4476 = vmatpush1.msra.mxu0 0.0
        %4477 = vmatprep.subr.mxu0 0.0
        %4478 = vmatpush1.msra.mxu0 0.0
        %4479 = vmatprep.subr.mxu0 0.0
        %4480 = vmatpush1.msra.mxu0 0.0
        %4481 = vmatprep.subr.mxu0 0.0
        %4482 = vmatpush1.msra.mxu0 0.0
        %4483 = vmatprep.subr.mxu0 0.0
        %4484 = vmatpush1.msra.mxu0 %v4206
        %4485 = vmatprep.subr.mxu0 0.0
        %4486 = vmatpush2.msra.mxu0 0.0
        %4487 = vmatprep.subr.mxu0 0.0
        %4488 = vmatpush2.msra.mxu0 0.0
        %4489 = vmatprep.subr.mxu0 0.0
        %4490 = vmatpush2.msra.mxu0 0.0
        %4491 = vmatprep.subr.mxu0 0.0
        %4492 = vmatpush2.msra.mxu0 0.0
        %4493 = vmatprep.subr.mxu0 0.0
        %4494 = vmatpush2.msra.mxu0 0.0
        %4495 = vmatprep.subr.mxu0 0.0
        %4496 = vmatpush2.msra.mxu0 0.0
        %4497 = vmatprep.subr.mxu0 0.0
        %4498 = vmatpush2.msra.mxu0 0.0
        %4499 = vmatprep.subr.mxu0 0.0
        %4500 = vmatpush2.msra.mxu0 0.0
        %4501 = vmatprep.subr.mxu0 0.0
        %4502 = vmatpush2.msra.mxu0 0.0
        %4503 = vmatprep.subr.mxu0 0.0
        %4504 = vmatpush2.msra.mxu0 0.0
        %4505 = vmatprep.subr.mxu0 0.0
        %4506 = vmatpush2.msra.mxu0 0.0
        %4507 = vmatprep.subr.mxu0 0.0
        %4508 = vmatpush2.msra.mxu0 0.0
        %4509 = vmatprep.subr.mxu0 0.0
        %4510 = vmatpush2.msra.mxu0 0.0
        %4511 = vmatprep.subr.mxu0 0.0
        %4512 = vmatpush2.msra.mxu0 0.0
        %4513 = vmatprep.subr.mxu0 0.0
        %4514 = vmatpush2.msra.mxu0 0.0
        %4515 = vmatprep.subr.mxu0 0.0
        %4516 = vmatpush2.msra.mxu0 0.0
        %4517 = vmatprep.mubr.f32.mxu0 0.0
        %4518 = vmatmul.mubr.f32.gmra.mxu0 %v4451
        %v4519 = vpop.f32.mrf.mxu0
        %v4520 = vadd.f32 0.0, %v4519
        %v4521 = vpop.f32.mrf.mxu0
        %4522 = vdwg.mxu0
        %v4523 = vmul.f32 %v4447, 0.0009765625
        %v4524 = vmul.f32 %v4520, 0.0009765625
        %v4525 = vmul.f32 %v4523, %v4523
        %v4526 = vsub.f32 %v4524, %v4525
        %v4527 = vadd.f32 %v4526, 1e-05
        %v4528 = vrsqrt.pop %v4527
        %v4529 = vlaneseq
        %v4530 = vshrl.u32 %v4529, 7
        %v4531 = vsub.s32 0, %v4530
        %v4532 = vrot.slane %v4523, %v4531
        %v4533 = vsub.f32 %v4078, %v4532
        %v4534 = vsub.f32 %v4081, %v4532
        %v4535 = vsub.f32 %v4086, %v4532
        %v4536 = vsub.f32 %v4089, %v4532
        %v4537 = vsub.f32 %v4094, %v4532
        %v4538 = vsub.f32 %v4097, %v4532
        %v4539 = vsub.f32 %v4102, %v4532
        %v4540 = vsub.f32 %v4105, %v4532
        %v4541 = vsub.f32 %v4110, %v4532
        %v4542 = vsub.f32 %v4113, %v4532
        %v4543 = vsub.f32 %v4118, %v4532
        %v4544 = vsub.f32 %v4121, %v4532
        %v4545 = vsub.f32 %v4126, %v4532
        %v4546 = vsub.f32 %v4129, %v4532
        %v4547 = vsub.f32 %v4134, %v4532
        %v4548 = vsub.f32 %v4137, %v4532
        %v4549 = vsub.f32 %v4142, %v4532
        %v4550 = vsub.f32 %v4145, %v4532
        %v4551 = vsub.f32 %v4150, %v4532
        %v4552 = vsub.f32 %v4153, %v4532
        %v4553 = vsub.f32 %v4158, %v4532
        %v4554 = vsub.f32 %v4161, %v4532
        %v4555 = vsub.f32 %v4166, %v4532
        %v4556 = vsub.f32 %v4169, %v4532
        %v4557 = vsub.f32 %v4174, %v4532
        %v4558 = vsub.f32 %v4177, %v4532
        %v4559 = vsub.f32 %v4182, %v4532
        %v4560 = vsub.f32 %v4185, %v4532
        %v4561 = vsub.f32 %v4190, %v4532
        %v4562 = vsub.f32 %v4193, %v4532
        %v4563 = vsub.f32 %v4198, %v4532
        %v4564 = vsub.f32 %v4201, %v4532
        %v4565 = vmul.f32 %v4528, %v4204
        %v4566 = vlaneseq
        %v4567 = vshrl.u32 %v4566, 7
        %v4568 = vsub.s32 0, %v4567
        %v4569 = vrot.slane %v4565, %v4568
        %v4570 = vmul.f32 %v4533, %v4569
        %v4571 = vmul.f32 %v4534, %v4569
        %v4572 = vmul.f32 %v4535, %v4569
        %v4573 = vmul.f32 %v4536, %v4569
        %v4574 = vmul.f32 %v4537, %v4569
        %v4575 = vmul.f32 %v4538, %v4569
        %v4576 = vmul.f32 %v4539, %v4569
        %v4577 = vmul.f32 %v4540, %v4569
        %v4578 = vmul.f32 %v4541, %v4569
        %v4579 = vmul.f32 %v4542, %v4569
        %v4580 = vmul.f32 %v4543, %v4569
        %v4581 = vmul.f32 %v4544, %v4569
        %v4582 = vmul.f32 %v4545, %v4569
        %v4583 = vmul.f32 %v4546, %v4569
        %v4584 = vmul.f32 %v4547, %v4569
        %v4585 = vmul.f32 %v4548, %v4569
        %v4586 = vmul.f32 %v4549, %v4569
        %v4587 = vmul.f32 %v4550, %v4569
        %v4588 = vmul.f32 %v4551, %v4569
        %v4589 = vmul.f32 %v4552, %v4569
        %v4590 = vmul.f32 %v4553, %v4569
        %v4591 = vmul.f32 %v4554, %v4569
        %v4592 = vmul.f32 %v4555, %v4569
        %v4593 = vmul.f32 %v4556, %v4569
        %v4594 = vmul.f32 %v4557, %v4569
        %v4595 = vmul.f32 %v4558, %v4569
        %v4596 = vmul.f32 %v4559, %v4569
        %v4597 = vmul.f32 %v4560, %v4569
        %v4598 = vmul.f32 %v4561, %v4569
        %v4599 = vmul.f32 %v4562, %v4569
        %v4600 = vmul.f32 %v4563, %v4569
        %v4601 = vmul.f32 %v4564, %v4569
        %v4603 = vlaneseq
        %v4604 = vshrl.u32 %v4603, 7
        %v4605 = vsub.s32 0, %v4604
        %v4606 = vrot.slane %v4205, %v4605
        %v4608 = vadd.f32 %v4570, %v4606
        %v4609 = vadd.f32 %v4571, %v4606
        %v4610 = vadd.f32 %v4572, %v4606
        %v4611 = vadd.f32 %v4573, %v4606
        %v4612 = vadd.f32 %v4574, %v4606
        %v4613 = vadd.f32 %v4575, %v4606
        %v4614 = vadd.f32 %v4576, %v4606
        %v4615 = vadd.f32 %v4577, %v4606
        %v4616 = vadd.f32 %v4578, %v4606
        %v4617 = vadd.f32 %v4579, %v4606
        %v4618 = vadd.f32 %v4580, %v4606
        %v4619 = vadd.f32 %v4581, %v4606
        %v4620 = vadd.f32 %v4582, %v4606
        %v4621 = vadd.f32 %v4583, %v4606
        %v4622 = vadd.f32 %v4584, %v4606
        %v4623 = vadd.f32 %v4585, %v4606
        %v4624 = vadd.f32 %v4586, %v4606
        %v4625 = vadd.f32 %v4587, %v4606
        %v4626 = vadd.f32 %v4588, %v4606
        %v4627 = vadd.f32 %v4589, %v4606
        %v4628 = vadd.f32 %v4590, %v4606
        %v4629 = vadd.f32 %v4591, %v4606
        %v4630 = vadd.f32 %v4592, %v4606
        %v4631 = vadd.f32 %v4593, %v4606
        %v4632 = vadd.f32 %v4594, %v4606
        %v4633 = vadd.f32 %v4595, %v4606
        %v4634 = vadd.f32 %v4596, %v4606
        %v4635 = vadd.f32 %v4597, %v4606
        %v4636 = vadd.f32 %v4598, %v4606
        %v4637 = vadd.f32 %v4599, %v4606
        %v4638 = vadd.f32 %v4600, %v4606
        %v4639 = vadd.f32 %v4601, %v4606
        %v4640 = vmax.f32 %v4608, 0.0
        %v4641 = vmax.f32 %v4609, 0.0
        %v4642 = vmax.f32 %v4610, 0.0
        %v4643 = vmax.f32 %v4611, 0.0
        %v4644 = vmax.f32 %v4612, 0.0
        %v4645 = vmax.f32 %v4613, 0.0
        %v4646 = vmax.f32 %v4614, 0.0
        %v4647 = vmax.f32 %v4615, 0.0
        %v4648 = vmax.f32 %v4616, 0.0
        %v4649 = vmax.f32 %v4617, 0.0
        %v4650 = vmax.f32 %v4618, 0.0
        %v4651 = vmax.f32 %v4619, 0.0
        %v4652 = vmax.f32 %v4620, 0.0
        %v4653 = vmax.f32 %v4621, 0.0
        %v4654 = vmax.f32 %v4622, 0.0
        %v4655 = vmax.f32 %v4623, 0.0
        %v4656 = vmax.f32 %v4624, 0.0
        %v4657 = vmax.f32 %v4625, 0.0
        %v4658 = vmax.f32 %v4626, 0.0
        %v4659 = vmax.f32 %v4627, 0.0
        %v4660 = vmax.f32 %v4628, 0.0
        %v4661 = vmax.f32 %v4629, 0.0
        %v4662 = vmax.f32 %v4630, 0.0
        %v4663 = vmax.f32 %v4631, 0.0
        %v4664 = vmax.f32 %v4632, 0.0
        %v4665 = vmax.f32 %v4633, 0.0
        %v4666 = vmax.f32 %v4634, 0.0
        %v4667 = vmax.f32 %v4635, 0.0
        %v4668 = vmax.f32 %v4636, 0.0
        %v4669 = vmax.f32 %v4637, 0.0
        %v4670 = vmax.f32 %v4638, 0.0
        %v4671 = vmax.f32 %v4639, 0.0
        %v4672 = vpack.c.bf16 %v4641, %v4640
        %v4673 = vpack.c.bf16 %v4643, %v4642
        %v4674 = vpack.c.bf16 %v4645, %v4644
        %v4675 = vpack.c.bf16 %v4647, %v4646
        %v4676 = vpack.c.bf16 %v4649, %v4648
        %v4677 = vpack.c.bf16 %v4651, %v4650
        %v4678 = vpack.c.bf16 %v4653, %v4652
        %v4679 = vpack.c.bf16 %v4655, %v4654
        %v4680 = vpack.c.bf16 %v4657, %v4656
        %v4681 = vpack.c.bf16 %v4659, %v4658
        %v4682 = vpack.c.bf16 %v4661, %v4660
        %v4683 = vpack.c.bf16 %v4663, %v4662
        %v4684 = vpack.c.bf16 %v4665, %v4664
        %v4685 = vpack.c.bf16 %v4667, %v4666
        %v4686 = vpack.c.bf16 %v4669, %v4668
        %v4687 = vpack.c.bf16 %v4671, %v4670
        %v4704 = vunpack.c.l.b16 %v4672
        %v4705 = vunpack.c.h.b16 %v4672
        %v4706 = vunpack.c.l.b16 %v4673
        %v4707 = vunpack.c.h.b16 %v4673
        %v4708 = vunpack.c.l.b16 %v4674
        %v4709 = vunpack.c.h.b16 %v4674
        %v4710 = vunpack.c.l.b16 %v4675
        %v4711 = vunpack.c.h.b16 %v4675
        %v4712 = vunpack.c.l.b16 %v4676
        %v4713 = vunpack.c.h.b16 %v4676
        %v4714 = vunpack.c.l.b16 %v4677
        %v4715 = vunpack.c.h.b16 %v4677
        %v4716 = vunpack.c.l.b16 %v4678
        %v4717 = vunpack.c.h.b16 %v4678
        %v4718 = vunpack.c.l.b16 %v4679
        %v4719 = vunpack.c.h.b16 %v4679
        %v4720 = vunpack.c.l.b16 %v4680
        %v4721 = vunpack.c.h.b16 %v4680
        %v4722 = vunpack.c.l.b16 %v4681
        %v4723 = vunpack.c.h.b16 %v4681
        %v4724 = vunpack.c.l.b16 %v4682
        %v4725 = vunpack.c.h.b16 %v4682
        %v4726 = vunpack.c.l.b16 %v4683
        %v4727 = vunpack.c.h.b16 %v4683
        %v4728 = vunpack.c.l.b16 %v4684
        %v4729 = vunpack.c.h.b16 %v4684
        %v4730 = vunpack.c.l.b16 %v4685
        %v4731 = vunpack.c.h.b16 %v4685
        %v4732 = vunpack.c.l.b16 %v4686
        %v4733 = vunpack.c.h.b16 %v4686
        %v4734 = vunpack.c.l.b16 %v4687
        %v4735 = vunpack.c.h.b16 %v4687
        %v4736 = vpack.c.b16 %v4704, %v4704
        %v4737 = vpack.c.b16 %v4705, %v4705
        %v4738 = vpack.c.b16 %v4706, %v4706
        %v4739 = vpack.c.b16 %v4707, %v4707
        %v4740 = vpack.c.b16 %v4708, %v4708
        %v4741 = vpack.c.b16 %v4709, %v4709
        %v4742 = vpack.c.b16 %v4710, %v4710
        %v4743 = vpack.c.b16 %v4711, %v4711
        %v4744 = vpack.c.b16 %v4712, %v4712
        %v4745 = vpack.c.b16 %v4713, %v4713
        %v4746 = vpack.c.b16 %v4714, %v4714
        %v4747 = vpack.c.b16 %v4715, %v4715
        %v4748 = vpack.c.b16 %v4716, %v4716
        %v4749 = vpack.c.b16 %v4717, %v4717
        %v4750 = vpack.c.b16 %v4718, %v4718
        %v4751 = vpack.c.b16 %v4719, %v4719
        %v4752 = vpack.c.b16 %v4720, %v4720
        %v4753 = vpack.c.b16 %v4721, %v4721
        %v4754 = vpack.c.b16 %v4722, %v4722
        %v4755 = vpack.c.b16 %v4723, %v4723
        %v4756 = vpack.c.b16 %v4724, %v4724
        %v4757 = vpack.c.b16 %v4725, %v4725
        %v4758 = vpack.c.b16 %v4726, %v4726
        %v4759 = vpack.c.b16 %v4727, %v4727
        %v4760 = vpack.c.b16 %v4728, %v4728
        %v4761 = vpack.c.b16 %v4729, %v4729
        %v4762 = vpack.c.b16 %v4730, %v4730
        %v4763 = vpack.c.b16 %v4731, %v4731
        %v4764 = vpack.c.b16 %v4732, %v4732
        %v4765 = vpack.c.b16 %v4733, %v4733
        %v4766 = vpack.c.b16 %v4734, %v4734
        %v4767 = vpack.c.b16 %v4735, %v4735
        %v4769 = vshrl.u32 %v4736, 16
        %v4771 = vrot.slane %v4769, 7
        %v4772 = vshll.u32 %v4736, 16
        %v4774 = vor.u32 %v4771, %v4772
        %v4775 = vrot.slane %v4771, 4
        %v4777 = vshrl.u32 %v4737, 16
        %v4779 = vrot.slane %v4777, 7
        %v4780 = vshll.u32 %v4737, 16
        %v4782 = vor.u32 %v4779, %v4780
        %v4783 = vsel %vm703, %v4775, %v4782
        %v4784 = vrot.slane %v4779, 4
        %v4786 = vshrl.u32 %v4738, 16
        %v4788 = vrot.slane %v4786, 7
        %v4789 = vshll.u32 %v4738, 16
        %v4791 = vor.u32 %v4788, %v4789
        %v4792 = vrot.slane %v4788, 4
        %v4794 = vshrl.u32 %v4739, 16
        %v4796 = vrot.slane %v4794, 7
        %v4797 = vshll.u32 %v4739, 16
        %v4799 = vor.u32 %v4796, %v4797
        %v4800 = vsel %vm703, %v4792, %v4799
        %v4801 = vrot.slane %v4796, 4
        %v4803 = vshrl.u32 %v4740, 16
        %v4805 = vrot.slane %v4803, 7
        %v4806 = vshll.u32 %v4740, 16
        %v4808 = vor.u32 %v4805, %v4806
        %v4809 = vrot.slane %v4805, 4
        %v4811 = vshrl.u32 %v4741, 16
        %v4813 = vrot.slane %v4811, 7
        %v4814 = vshll.u32 %v4741, 16
        %v4816 = vor.u32 %v4813, %v4814
        %v4817 = vsel %vm703, %v4809, %v4816
        %v4818 = vrot.slane %v4813, 4
        %v4820 = vshrl.u32 %v4742, 16
        %v4822 = vrot.slane %v4820, 7
        %v4823 = vshll.u32 %v4742, 16
        %v4825 = vor.u32 %v4822, %v4823
        %v4826 = vrot.slane %v4822, 4
        %v4828 = vshrl.u32 %v4743, 16
        %v4830 = vrot.slane %v4828, 7
        %v4831 = vshll.u32 %v4743, 16
        %v4833 = vor.u32 %v4830, %v4831
        %v4834 = vsel %vm703, %v4826, %v4833
        %v4835 = vrot.slane %v4830, 4
        %v4837 = vshrl.u32 %v4744, 16
        %v4839 = vrot.slane %v4837, 7
        %v4840 = vshll.u32 %v4744, 16
        %v4842 = vor.u32 %v4839, %v4840
        %v4843 = vrot.slane %v4839, 4
        %v4845 = vshrl.u32 %v4745, 16
        %v4847 = vrot.slane %v4845, 7
        %v4848 = vshll.u32 %v4745, 16
        %v4850 = vor.u32 %v4847, %v4848
        %v4851 = vsel %vm703, %v4843, %v4850
        %v4852 = vrot.slane %v4847, 4
        %v4854 = vshrl.u32 %v4746, 16
        %v4856 = vrot.slane %v4854, 7
        %v4857 = vshll.u32 %v4746, 16
        %v4859 = vor.u32 %v4856, %v4857
        %v4860 = vrot.slane %v4856, 4
        %v4862 = vshrl.u32 %v4747, 16
        %v4864 = vrot.slane %v4862, 7
        %v4865 = vshll.u32 %v4747, 16
        %v4867 = vor.u32 %v4864, %v4865
        %v4868 = vsel %vm703, %v4860, %v4867
        %v4869 = vrot.slane %v4864, 4
        %v4871 = vshrl.u32 %v4748, 16
        %v4873 = vrot.slane %v4871, 7
        %v4874 = vshll.u32 %v4748, 16
        %v4876 = vor.u32 %v4873, %v4874
        %v4877 = vrot.slane %v4873, 4
        %v4879 = vshrl.u32 %v4749, 16
        %v4881 = vrot.slane %v4879, 7
        %v4882 = vshll.u32 %v4749, 16
        %v4884 = vor.u32 %v4881, %v4882
        %v4885 = vsel %vm703, %v4877, %v4884
        %v4886 = vrot.slane %v4881, 4
        %v4888 = vshrl.u32 %v4750, 16
        %v4890 = vrot.slane %v4888, 7
        %v4891 = vshll.u32 %v4750, 16
        %v4893 = vor.u32 %v4890, %v4891
        %v4894 = vrot.slane %v4890, 4
        %v4896 = vshrl.u32 %v4751, 16
        %v4898 = vrot.slane %v4896, 7
        %v4899 = vshll.u32 %v4751, 16
        %v4901 = vor.u32 %v4898, %v4899
        %v4902 = vsel %vm703, %v4894, %v4901
        %v4903 = vrot.slane %v4898, 4
        %v4905 = vshrl.u32 %v4752, 16
        %v4907 = vrot.slane %v4905, 7
        %v4908 = vshll.u32 %v4752, 16
        %v4910 = vor.u32 %v4907, %v4908
        %v4911 = vrot.slane %v4907, 4
        %v4913 = vshrl.u32 %v4753, 16
        %v4915 = vrot.slane %v4913, 7
        %v4916 = vshll.u32 %v4753, 16
        %v4918 = vor.u32 %v4915, %v4916
        %v4919 = vsel %vm703, %v4911, %v4918
        %v4920 = vrot.slane %v4915, 4
        %v4922 = vshrl.u32 %v4754, 16
        %v4924 = vrot.slane %v4922, 7
        %v4925 = vshll.u32 %v4754, 16
        %v4927 = vor.u32 %v4924, %v4925
        %v4928 = vrot.slane %v4924, 4
        %v4930 = vshrl.u32 %v4755, 16
        %v4932 = vrot.slane %v4930, 7
        %v4933 = vshll.u32 %v4755, 16
        %v4935 = vor.u32 %v4932, %v4933
        %v4936 = vsel %vm703, %v4928, %v4935
        %v4937 = vrot.slane %v4932, 4
        %v4939 = vshrl.u32 %v4756, 16
        %v4941 = vrot.slane %v4939, 7
        %v4942 = vshll.u32 %v4756, 16
        %v4944 = vor.u32 %v4941, %v4942
        %v4945 = vrot.slane %v4941, 4
        %v4947 = vshrl.u32 %v4757, 16
        %v4949 = vrot.slane %v4947, 7
        %v4950 = vshll.u32 %v4757, 16
        %v4952 = vor.u32 %v4949, %v4950
        %v4953 = vsel %vm703, %v4945, %v4952
        %v4954 = vrot.slane %v4949, 4
        %v4956 = vshrl.u32 %v4758, 16
        %v4958 = vrot.slane %v4956, 7
        %v4959 = vshll.u32 %v4758, 16
        %v4961 = vor.u32 %v4958, %v4959
        %v4962 = vrot.slane %v4958, 4
        %v4964 = vshrl.u32 %v4759, 16
        %v4966 = vrot.slane %v4964, 7
        %v4967 = vshll.u32 %v4759, 16
        %v4969 = vor.u32 %v4966, %v4967
        %v4970 = vsel %vm703, %v4962, %v4969
        %v4971 = vrot.slane %v4966, 4
        %v4973 = vshrl.u32 %v4760, 16
        %v4975 = vrot.slane %v4973, 7
        %v4976 = vshll.u32 %v4760, 16
        %v4978 = vor.u32 %v4975, %v4976
        %v4979 = vrot.slane %v4975, 4
        %v4981 = vshrl.u32 %v4761, 16
        %v4983 = vrot.slane %v4981, 7
        %v4984 = vshll.u32 %v4761, 16
        %v4986 = vor.u32 %v4983, %v4984
        %v4987 = vsel %vm703, %v4979, %v4986
        %v4988 = vrot.slane %v4983, 4
        %v4990 = vshrl.u32 %v4762, 16
        %v4992 = vrot.slane %v4990, 7
        %v4993 = vshll.u32 %v4762, 16
        %v4995 = vor.u32 %v4992, %v4993
        %v4996 = vrot.slane %v4992, 4
        %v4998 = vshrl.u32 %v4763, 16
        %v5000 = vrot.slane %v4998, 7
        %v5001 = vshll.u32 %v4763, 16
        %v5003 = vor.u32 %v5000, %v5001
        %v5004 = vsel %vm703, %v4996, %v5003
        %v5005 = vrot.slane %v5000, 4
        %v5007 = vshrl.u32 %v4764, 16
        %v5009 = vrot.slane %v5007, 7
        %v5010 = vshll.u32 %v4764, 16
        %v5012 = vor.u32 %v5009, %v5010
        %v5013 = vrot.slane %v5009, 4
        %v5015 = vshrl.u32 %v4765, 16
        %v5017 = vrot.slane %v5015, 7
        %v5018 = vshll.u32 %v4765, 16
        %v5020 = vor.u32 %v5017, %v5018
        %v5021 = vsel %vm703, %v5013, %v5020
        %v5022 = vrot.slane %v5017, 4
        %v5024 = vshrl.u32 %v4766, 16
        %v5026 = vrot.slane %v5024, 7
        %v5027 = vshll.u32 %v4766, 16
        %v5029 = vor.u32 %v5026, %v5027
        %v5030 = vrot.slane %v5026, 4
        %v5032 = vshrl.u32 %v4767, 16
        %v5034 = vrot.slane %v5032, 7
        %v5035 = vshll.u32 %v4767, 16
        %v5037 = vor.u32 %v5034, %v5035
        %v5038 = vsel %vm703, %v5030, %v5037
        %v5039 = vrot.slane %v5034, 4
        %s5088 = scalar_lea.vmem [#allocation3], 12
        %vm5089 = vcmask 60416
        %vm5090 = vmand %vm5089, %vm398
        %v5091 = vld [vmem:[%s5088] sm:$0xf]
        %v5092 = vsel %vm5090, %v4774, %v5091
        %5093 = vst [vmem:[%s5088] sm:$0xf] %v5092
        %5094 = vst.msk [vmem:[%s5088 + $0x4] sm:$0xf] %vm454, %v4783
        %v5095 = vld [vmem:[%s5088 + $0x8] sm:$0x1]
        %v5096 = vsel %vm464, %v4784, %v5095
        %5097 = vst [vmem:[%s5088 + $0x8] sm:$0x1] %v5096
        %v5098 = vld [vmem:[%s5088 + $0xc] sm:$0xf]
        %v5099 = vsel %vm5090, %v4791, %v5098
        %5100 = vst [vmem:[%s5088 + $0xc] sm:$0xf] %v5099
        %5101 = vst.msk [vmem:[%s5088 + $0x10] sm:$0xf] %vm454, %v4800
        %v5102 = vld [vmem:[%s5088 + $0x14] sm:$0x1]
        %v5103 = vsel %vm464, %v4801, %v5102
        %5104 = vst [vmem:[%s5088 + $0x14] sm:$0x1] %v5103
        %v5105 = vld [vmem:[%s5088 + $0x18] sm:$0xf]
        %v5106 = vsel %vm5090, %v4808, %v5105
        %5107 = vst [vmem:[%s5088 + $0x18] sm:$0xf] %v5106
        %5108 = vst.msk [vmem:[%s5088 + $0x1c] sm:$0xf] %vm454, %v4817
        %v5109 = vld [vmem:[%s5088 + $0x20] sm:$0x1]
        %v5110 = vsel %vm464, %v4818, %v5109
        %5111 = vst [vmem:[%s5088 + $0x20] sm:$0x1] %v5110
        %v5112 = vld [vmem:[%s5088 + $0x24] sm:$0xf]
        %v5113 = vsel %vm5090, %v4825, %v5112
        %5114 = vst [vmem:[%s5088 + $0x24] sm:$0xf] %v5113
        %5115 = vst.msk [vmem:[%s5088 + $0x28] sm:$0xf] %vm454, %v4834
        %v5116 = vld [vmem:[%s5088 + $0x2c] sm:$0x1]
        %v5117 = vsel %vm464, %v4835, %v5116
        %5118 = vst [vmem:[%s5088 + $0x2c] sm:$0x1] %v5117
        %v5119 = vld [vmem:[%s5088 + $0x30] sm:$0xf]
        %v5120 = vsel %vm5090, %v4842, %v5119
        %5121 = vst [vmem:[%s5088 + $0x30] sm:$0xf] %v5120
        %5122 = vst.msk [vmem:[%s5088 + $0x34] sm:$0xf] %vm454, %v4851
        %v5123 = vld [vmem:[%s5088 + $0x38] sm:$0x1]
        %v5124 = vsel %vm464, %v4852, %v5123
        %5125 = vst [vmem:[%s5088 + $0x38] sm:$0x1] %v5124
        %v5126 = vld [vmem:[%s5088 + $0x3c] sm:$0xf]
        %v5127 = vsel %vm5090, %v4859, %v5126
        %5128 = vst [vmem:[%s5088 + $0x3c] sm:$0xf] %v5127
        %5129 = vst.msk [vmem:[%s5088 + $0x40] sm:$0xf] %vm454, %v4868
        %v5130 = vld [vmem:[%s5088 + $0x44] sm:$0x1]
        %v5131 = vsel %vm464, %v4869, %v5130
        %5132 = vst [vmem:[%s5088 + $0x44] sm:$0x1] %v5131
        %v5133 = vld [vmem:[%s5088 + $0x48] sm:$0xf]
        %v5134 = vsel %vm5090, %v4876, %v5133
        %5135 = vst [vmem:[%s5088 + $0x48] sm:$0xf] %v5134
        %5136 = vst.msk [vmem:[%s5088 + $0x4c] sm:$0xf] %vm454, %v4885
        %v5137 = vld [vmem:[%s5088 + $0x50] sm:$0x1]
        %v5138 = vsel %vm464, %v4886, %v5137
        %5139 = vst [vmem:[%s5088 + $0x50] sm:$0x1] %v5138
        %v5140 = vld [vmem:[%s5088 + $0x54] sm:$0xf]
        %v5141 = vsel %vm5090, %v4893, %v5140
        %5142 = vst [vmem:[%s5088 + $0x54] sm:$0xf] %v5141
        %5143 = vst.msk [vmem:[%s5088 + $0x58] sm:$0xf] %vm454, %v4902
        %v5144 = vld [vmem:[%s5088 + $0x5c] sm:$0x1]
        %v5145 = vsel %vm464, %v4903, %v5144
        %5146 = vst [vmem:[%s5088 + $0x5c] sm:$0x1] %v5145
        %v5147 = vld [vmem:[%s5088 + $0x60] sm:$0xf]
        %v5148 = vsel %vm5090, %v4910, %v5147
        %5149 = vst [vmem:[%s5088 + $0x60] sm:$0xf] %v5148
        %5150 = vst.msk [vmem:[%s5088 + $0x64] sm:$0xf] %vm454, %v4919
        %v5151 = vld [vmem:[%s5088 + $0x68] sm:$0x1]
        %v5152 = vsel %vm464, %v4920, %v5151
        %5153 = vst [vmem:[%s5088 + $0x68] sm:$0x1] %v5152
        %v5154 = vld [vmem:[%s5088 + $0x6c] sm:$0xf]
        %v5155 = vsel %vm5090, %v4927, %v5154
        %5156 = vst [vmem:[%s5088 + $0x6c] sm:$0xf] %v5155
        %5157 = vst.msk [vmem:[%s5088 + $0x70] sm:$0xf] %vm454, %v4936
        %v5158 = vld [vmem:[%s5088 + $0x74] sm:$0x1]
        %v5159 = vsel %vm464, %v4937, %v5158
        %5160 = vst [vmem:[%s5088 + $0x74] sm:$0x1] %v5159
        %v5161 = vld [vmem:[%s5088 + $0x78] sm:$0xf]
        %v5162 = vsel %vm5090, %v4944, %v5161
        %5163 = vst [vmem:[%s5088 + $0x78] sm:$0xf] %v5162
        %5164 = vst.msk [vmem:[%s5088 + $0x7c] sm:$0xf] %vm454, %v4953
        %v5165 = vld [vmem:[%s5088 + $0x80] sm:$0x1]
        %v5166 = vsel %vm464, %v4954, %v5165
        %5167 = vst [vmem:[%s5088 + $0x80] sm:$0x1] %v5166
        %v5168 = vld [vmem:[%s5088 + $0x84] sm:$0xf]
        %v5169 = vsel %vm5090, %v4961, %v5168
        %5170 = vst [vmem:[%s5088 + $0x84] sm:$0xf] %v5169
        %5171 = vst.msk [vmem:[%s5088 + $0x88] sm:$0xf] %vm454, %v4970
        %v5172 = vld [vmem:[%s5088 + $0x8c] sm:$0x1]
        %v5173 = vsel %vm464, %v4971, %v5172
        %5174 = vst [vmem:[%s5088 + $0x8c] sm:$0x1] %v5173
        %v5175 = vld [vmem:[%s5088 + $0x90] sm:$0xf]
        %v5176 = vsel %vm5090, %v4978, %v5175
        %5177 = vst [vmem:[%s5088 + $0x90] sm:$0xf] %v5176
        %5178 = vst.msk [vmem:[%s5088 + $0x94] sm:$0xf] %vm454, %v4987
        %v5179 = vld [vmem:[%s5088 + $0x98] sm:$0x1]
        %v5180 = vsel %vm464, %v4988, %v5179
        %5181 = vst [vmem:[%s5088 + $0x98] sm:$0x1] %v5180
        %v5182 = vld [vmem:[%s5088 + $0x9c] sm:$0xf]
        %v5183 = vsel %vm5090, %v4995, %v5182
        %5184 = vst [vmem:[%s5088 + $0x9c] sm:$0xf] %v5183
        %5185 = vst.msk [vmem:[%s5088 + $0xa0] sm:$0xf] %vm454, %v5004
        %v5186 = vld [vmem:[%s5088 + $0xa4] sm:$0x1]
        %v5187 = vsel %vm464, %v5005, %v5186
        %5188 = vst [vmem:[%s5088 + $0xa4] sm:$0x1] %v5187
        %v5189 = vld [vmem:[%s5088 + $0xa8] sm:$0xf]
        %v5190 = vsel %vm5090, %v5012, %v5189
        %5191 = vst [vmem:[%s5088 + $0xa8] sm:$0xf] %v5190
        %5192 = vst.msk [vmem:[%s5088 + $0xac] sm:$0xf] %vm454, %v5021
        %v5193 = vld [vmem:[%s5088 + $0xb0] sm:$0x1]
        %v5194 = vsel %vm464, %v5022, %v5193
        %5195 = vst [vmem:[%s5088 + $0xb0] sm:$0x1] %v5194
        %v5196 = vld [vmem:[%s5088 + $0xb4] sm:$0xf]
        %v5197 = vsel %vm5090, %v5029, %v5196
        %5198 = vst [vmem:[%s5088 + $0xb4] sm:$0xf] %v5197
        %5199 = vst.msk [vmem:[%s5088 + $0xb8] sm:$0xf] %vm454, %v5038
        %v5200 = vld [vmem:[%s5088 + $0xbc] sm:$0x1]
        %v5201 = vsel %vm464, %v5039, %v5200
        %5202 = vst [vmem:[%s5088 + $0xbc] sm:$0x1] %v5201
        %v5203 = vld [vmem:[#allocation3] sm:$0xf]
        %v5204 = vld [vmem:[#allocation3 + $0x4] sm:$0xf]
        %v5205 = vld [vmem:[#allocation3 + $0xc] sm:$0xf]
        %v5206 = vld [vmem:[#allocation3 + $0x10] sm:$0xf]
        %v5207 = vld [vmem:[#allocation3 + $0x18] sm:$0xf]
        %v5208 = vld [vmem:[#allocation3 + $0x1c] sm:$0xf]
        %v5209 = vld [vmem:[#allocation3 + $0x24] sm:$0xf]
        %v5210 = vld [vmem:[#allocation3 + $0x28] sm:$0xf]
        %v5211 = vld [vmem:[#allocation3 + $0x30] sm:$0xf]
        %v5212 = vld [vmem:[#allocation3 + $0x34] sm:$0xf]
        %v5213 = vld [vmem:[#allocation3 + $0x3c] sm:$0xf]
        %v5214 = vld [vmem:[#allocation3 + $0x40] sm:$0xf]
        %v5215 = vld [vmem:[#allocation3 + $0x48] sm:$0xf]
        %v5216 = vld [vmem:[#allocation3 + $0x4c] sm:$0xf]
        %v5217 = vld [vmem:[#allocation3 + $0x54] sm:$0xf]
        %v5218 = vld [vmem:[#allocation3 + $0x58] sm:$0xf]
        %v5219 = vld [vmem:[#allocation3 + $0x60] sm:$0xf]
        %v5220 = vld [vmem:[#allocation3 + $0x64] sm:$0xf]
        %v5221 = vld [vmem:[#allocation3 + $0x6c] sm:$0xf]
        %v5222 = vld [vmem:[#allocation3 + $0x70] sm:$0xf]
        %v5223 = vld [vmem:[#allocation3 + $0x78] sm:$0xf]
        %v5224 = vld [vmem:[#allocation3 + $0x7c] sm:$0xf]
        %v5225 = vld [vmem:[#allocation3 + $0x84] sm:$0xf]
        %v5226 = vld [vmem:[#allocation3 + $0x88] sm:$0xf]
        %v5227 = vld [vmem:[#allocation3 + $0x90] sm:$0xf]
        %v5228 = vld [vmem:[#allocation3 + $0x94] sm:$0xf]
        %v5229 = vld [vmem:[#allocation3 + $0x9c] sm:$0xf]
        %v5230 = vld [vmem:[#allocation3 + $0xa0] sm:$0xf]
        %v5231 = vld [vmem:[#allocation3 + $0xa8] sm:$0xf]
        %v5232 = vld [vmem:[#allocation3 + $0xac] sm:$0xf]
        %v5233 = vld [vmem:[#allocation3 + $0xb4] sm:$0xf]
        %v5234 = vld [vmem:[#allocation3 + $0xb8] sm:$0xf]
        %v5235 = vld [vmem:[#allocation3 + $0x8] sm:$0x1]
        %v5236 = vld [vmem:[#allocation3 + $0x14] sm:$0x1]
        %v5237 = vld [vmem:[#allocation3 + $0x20] sm:$0x1]
        %v5238 = vld [vmem:[#allocation3 + $0x2c] sm:$0x1]
        %v5239 = vld [vmem:[#allocation3 + $0x38] sm:$0x1]
        %v5240 = vld [vmem:[#allocation3 + $0x44] sm:$0x1]
        %v5241 = vld [vmem:[#allocation3 + $0x50] sm:$0x1]
        %v5242 = vld [vmem:[#allocation3 + $0x5c] sm:$0x1]
        %v5243 = vld [vmem:[#allocation3 + $0x68] sm:$0x1]
        %v5244 = vld [vmem:[#allocation3 + $0x74] sm:$0x1]
        %v5245 = vld [vmem:[#allocation3 + $0x80] sm:$0x1]
        %v5246 = vld [vmem:[#allocation3 + $0x8c] sm:$0x1]
        %v5247 = vld [vmem:[#allocation3 + $0x98] sm:$0x1]
        %v5248 = vld [vmem:[#allocation3 + $0xa4] sm:$0x1]
        %v5249 = vld [vmem:[#allocation3 + $0xb0] sm:$0x1]
        %v5250 = vld [vmem:[#allocation3 + $0xbc] sm:$0x1]
        %v5252 = vshrl.u32 %v5203, 16
        %v5254 = vrot.slane %v5252, 4
        %v5255 = vshll.u32 %v5203, 16
        %v5257 = vrot.slane %v5255, 5
        %v5258 = vor.u32 %v5254, %v5257
        %v5259 = vrot.slane %v5258, 4
        %v5261 = vshll.u32 %v5204, 16
        %v5263 = vrot.slane %v5261, 5
        %v5264 = vsel %vm1189, %v5259, %v5263
        %v5265 = vshrl.u32 %v5204, 16
        %v5267 = vrot.slane %v5265, 4
        %v5268 = vor.u32 %v5267, %v5263
        %v5269 = vrot.slane %v5268, 4
        %v5271 = vshll.u32 %v5235, 16
        %v5273 = vrot.slane %v5271, 5
        %v5274 = vsel %vm1189, %v5269, %v5273
        %v5276 = vshrl.u32 %v5205, 16
        %v5278 = vrot.slane %v5276, 4
        %v5279 = vshll.u32 %v5205, 16
        %v5281 = vrot.slane %v5279, 5
        %v5282 = vor.u32 %v5278, %v5281
        %v5283 = vrot.slane %v5282, 4
        %v5285 = vshll.u32 %v5206, 16
        %v5287 = vrot.slane %v5285, 5
        %v5288 = vsel %vm1189, %v5283, %v5287
        %v5289 = vshrl.u32 %v5206, 16
        %v5291 = vrot.slane %v5289, 4
        %v5292 = vor.u32 %v5291, %v5287
        %v5293 = vrot.slane %v5292, 4
        %v5295 = vshll.u32 %v5236, 16
        %v5297 = vrot.slane %v5295, 5
        %v5298 = vsel %vm1189, %v5293, %v5297
        %v5300 = vshrl.u32 %v5207, 16
        %v5302 = vrot.slane %v5300, 4
        %v5303 = vshll.u32 %v5207, 16
        %v5305 = vrot.slane %v5303, 5
        %v5306 = vor.u32 %v5302, %v5305
        %v5307 = vrot.slane %v5306, 4
        %v5309 = vshll.u32 %v5208, 16
        %v5311 = vrot.slane %v5309, 5
        %v5312 = vsel %vm1189, %v5307, %v5311
        %v5313 = vshrl.u32 %v5208, 16
        %v5315 = vrot.slane %v5313, 4
        %v5316 = vor.u32 %v5315, %v5311
        %v5317 = vrot.slane %v5316, 4
        %v5319 = vshll.u32 %v5237, 16
        %v5321 = vrot.slane %v5319, 5
        %v5322 = vsel %vm1189, %v5317, %v5321
        %v5324 = vshrl.u32 %v5209, 16
        %v5326 = vrot.slane %v5324, 4
        %v5327 = vshll.u32 %v5209, 16
        %v5329 = vrot.slane %v5327, 5
        %v5330 = vor.u32 %v5326, %v5329
        %v5331 = vrot.slane %v5330, 4
        %v5333 = vshll.u32 %v5210, 16
        %v5335 = vrot.slane %v5333, 5
        %v5336 = vsel %vm1189, %v5331, %v5335
        %v5337 = vshrl.u32 %v5210, 16
        %v5339 = vrot.slane %v5337, 4
        %v5340 = vor.u32 %v5339, %v5335
        %v5341 = vrot.slane %v5340, 4
        %v5343 = vshll.u32 %v5238, 16
        %v5345 = vrot.slane %v5343, 5
        %v5346 = vsel %vm1189, %v5341, %v5345
        %v5348 = vshrl.u32 %v5211, 16
        %v5350 = vrot.slane %v5348, 4
        %v5351 = vshll.u32 %v5211, 16
        %v5353 = vrot.slane %v5351, 5
        %v5354 = vor.u32 %v5350, %v5353
        %v5355 = vrot.slane %v5354, 4
        %v5357 = vshll.u32 %v5212, 16
        %v5359 = vrot.slane %v5357, 5
        %v5360 = vsel %vm1189, %v5355, %v5359
        %v5361 = vshrl.u32 %v5212, 16
        %v5363 = vrot.slane %v5361, 4
        %v5364 = vor.u32 %v5363, %v5359
        %v5365 = vrot.slane %v5364, 4
        %v5367 = vshll.u32 %v5239, 16
        %v5369 = vrot.slane %v5367, 5
        %v5370 = vsel %vm1189, %v5365, %v5369
        %v5372 = vshrl.u32 %v5213, 16
        %v5374 = vrot.slane %v5372, 4
        %v5375 = vshll.u32 %v5213, 16
        %v5377 = vrot.slane %v5375, 5
        %v5378 = vor.u32 %v5374, %v5377
        %v5379 = vrot.slane %v5378, 4
        %v5381 = vshll.u32 %v5214, 16
        %v5383 = vrot.slane %v5381, 5
        %v5384 = vsel %vm1189, %v5379, %v5383
        %v5385 = vshrl.u32 %v5214, 16
        %v5387 = vrot.slane %v5385, 4
        %v5388 = vor.u32 %v5387, %v5383
        %v5389 = vrot.slane %v5388, 4
        %v5391 = vshll.u32 %v5240, 16
        %v5393 = vrot.slane %v5391, 5
        %v5394 = vsel %vm1189, %v5389, %v5393
        %v5396 = vshrl.u32 %v5215, 16
        %v5398 = vrot.slane %v5396, 4
        %v5399 = vshll.u32 %v5215, 16
        %v5401 = vrot.slane %v5399, 5
        %v5402 = vor.u32 %v5398, %v5401
        %v5403 = vrot.slane %v5402, 4
        %v5405 = vshll.u32 %v5216, 16
        %v5407 = vrot.slane %v5405, 5
        %v5408 = vsel %vm1189, %v5403, %v5407
        %v5409 = vshrl.u32 %v5216, 16
        %v5411 = vrot.slane %v5409, 4
        %v5412 = vor.u32 %v5411, %v5407
        %v5413 = vrot.slane %v5412, 4
        %v5415 = vshll.u32 %v5241, 16
        %v5417 = vrot.slane %v5415, 5
        %v5418 = vsel %vm1189, %v5413, %v5417
        %v5420 = vshrl.u32 %v5217, 16
        %v5422 = vrot.slane %v5420, 4
        %v5423 = vshll.u32 %v5217, 16
        %v5425 = vrot.slane %v5423, 5
        %v5426 = vor.u32 %v5422, %v5425
        %v5427 = vrot.slane %v5426, 4
        %v5429 = vshll.u32 %v5218, 16
        %v5431 = vrot.slane %v5429, 5
        %v5432 = vsel %vm1189, %v5427, %v5431
        %v5433 = vshrl.u32 %v5218, 16
        %v5435 = vrot.slane %v5433, 4
        %v5436 = vor.u32 %v5435, %v5431
        %v5437 = vrot.slane %v5436, 4
        %v5439 = vshll.u32 %v5242, 16
        %v5441 = vrot.slane %v5439, 5
        %v5442 = vsel %vm1189, %v5437, %v5441
        %v5444 = vshrl.u32 %v5219, 16
        %v5446 = vrot.slane %v5444, 4
        %v5447 = vshll.u32 %v5219, 16
        %v5449 = vrot.slane %v5447, 5
        %v5450 = vor.u32 %v5446, %v5449
        %v5451 = vrot.slane %v5450, 4
        %v5453 = vshll.u32 %v5220, 16
        %v5455 = vrot.slane %v5453, 5
        %v5456 = vsel %vm1189, %v5451, %v5455
        %v5457 = vshrl.u32 %v5220, 16
        %v5459 = vrot.slane %v5457, 4
        %v5460 = vor.u32 %v5459, %v5455
        %v5461 = vrot.slane %v5460, 4
        %v5463 = vshll.u32 %v5243, 16
        %v5465 = vrot.slane %v5463, 5
        %v5466 = vsel %vm1189, %v5461, %v5465
        %v5468 = vshrl.u32 %v5221, 16
        %v5470 = vrot.slane %v5468, 4
        %v5471 = vshll.u32 %v5221, 16
        %v5473 = vrot.slane %v5471, 5
        %v5474 = vor.u32 %v5470, %v5473
        %v5475 = vrot.slane %v5474, 4
        %v5477 = vshll.u32 %v5222, 16
        %v5479 = vrot.slane %v5477, 5
        %v5480 = vsel %vm1189, %v5475, %v5479
        %v5481 = vshrl.u32 %v5222, 16
        %v5483 = vrot.slane %v5481, 4
        %v5484 = vor.u32 %v5483, %v5479
        %v5485 = vrot.slane %v5484, 4
        %v5487 = vshll.u32 %v5244, 16
        %v5489 = vrot.slane %v5487, 5
        %v5490 = vsel %vm1189, %v5485, %v5489
        %v5492 = vshrl.u32 %v5223, 16
        %v5494 = vrot.slane %v5492, 4
        %v5495 = vshll.u32 %v5223, 16
        %v5497 = vrot.slane %v5495, 5
        %v5498 = vor.u32 %v5494, %v5497
        %v5499 = vrot.slane %v5498, 4
        %v5501 = vshll.u32 %v5224, 16
        %v5503 = vrot.slane %v5501, 5
        %v5504 = vsel %vm1189, %v5499, %v5503
        %v5505 = vshrl.u32 %v5224, 16
        %v5507 = vrot.slane %v5505, 4
        %v5508 = vor.u32 %v5507, %v5503
        %v5509 = vrot.slane %v5508, 4
        %v5511 = vshll.u32 %v5245, 16
        %v5513 = vrot.slane %v5511, 5
        %v5514 = vsel %vm1189, %v5509, %v5513
        %v5516 = vshrl.u32 %v5225, 16
        %v5518 = vrot.slane %v5516, 4
        %v5519 = vshll.u32 %v5225, 16
        %v5521 = vrot.slane %v5519, 5
        %v5522 = vor.u32 %v5518, %v5521
        %v5523 = vrot.slane %v5522, 4
        %v5525 = vshll.u32 %v5226, 16
        %v5527 = vrot.slane %v5525, 5
        %v5528 = vsel %vm1189, %v5523, %v5527
        %v5529 = vshrl.u32 %v5226, 16
        %v5531 = vrot.slane %v5529, 4
        %v5532 = vor.u32 %v5531, %v5527
        %v5533 = vrot.slane %v5532, 4
        %v5535 = vshll.u32 %v5246, 16
        %v5537 = vrot.slane %v5535, 5
        %v5538 = vsel %vm1189, %v5533, %v5537
        %v5540 = vshrl.u32 %v5227, 16
        %v5542 = vrot.slane %v5540, 4
        %v5543 = vshll.u32 %v5227, 16
        %v5545 = vrot.slane %v5543, 5
        %v5546 = vor.u32 %v5542, %v5545
        %v5547 = vrot.slane %v5546, 4
        %v5549 = vshll.u32 %v5228, 16
        %v5551 = vrot.slane %v5549, 5
        %v5552 = vsel %vm1189, %v5547, %v5551
        %v5553 = vshrl.u32 %v5228, 16
        %v5555 = vrot.slane %v5553, 4
        %v5556 = vor.u32 %v5555, %v5551
        %v5557 = vrot.slane %v5556, 4
        %v5559 = vshll.u32 %v5247, 16
        %v5561 = vrot.slane %v5559, 5
        %v5562 = vsel %vm1189, %v5557, %v5561
        %v5564 = vshrl.u32 %v5229, 16
        %v5566 = vrot.slane %v5564, 4
        %v5567 = vshll.u32 %v5229, 16
        %v5569 = vrot.slane %v5567, 5
        %v5570 = vor.u32 %v5566, %v5569
        %v5571 = vrot.slane %v5570, 4
        %v5573 = vshll.u32 %v5230, 16
        %v5575 = vrot.slane %v5573, 5
        %v5576 = vsel %vm1189, %v5571, %v5575
        %v5577 = vshrl.u32 %v5230, 16
        %v5579 = vrot.slane %v5577, 4
        %v5580 = vor.u32 %v5579, %v5575
        %v5581 = vrot.slane %v5580, 4
        %v5583 = vshll.u32 %v5248, 16
        %v5585 = vrot.slane %v5583, 5
        %v5586 = vsel %vm1189, %v5581, %v5585
        %v5588 = vshrl.u32 %v5231, 16
        %v5590 = vrot.slane %v5588, 4
        %v5591 = vshll.u32 %v5231, 16
        %v5593 = vrot.slane %v5591, 5
        %v5594 = vor.u32 %v5590, %v5593
        %v5595 = vrot.slane %v5594, 4
        %v5597 = vshll.u32 %v5232, 16
        %v5599 = vrot.slane %v5597, 5
        %v5600 = vsel %vm1189, %v5595, %v5599
        %v5601 = vshrl.u32 %v5232, 16
        %v5603 = vrot.slane %v5601, 4
        %v5604 = vor.u32 %v5603, %v5599
        %v5605 = vrot.slane %v5604, 4
        %v5607 = vshll.u32 %v5249, 16
        %v5609 = vrot.slane %v5607, 5
        %v5610 = vsel %vm1189, %v5605, %v5609
        %v5612 = vshrl.u32 %v5233, 16
        %v5614 = vrot.slane %v5612, 4
        %v5615 = vshll.u32 %v5233, 16
        %v5617 = vrot.slane %v5615, 5
        %v5618 = vor.u32 %v5614, %v5617
        %v5619 = vrot.slane %v5618, 4
        %v5621 = vshll.u32 %v5234, 16
        %v5623 = vrot.slane %v5621, 5
        %v5624 = vsel %vm1189, %v5619, %v5623
        %v5625 = vshrl.u32 %v5234, 16
        %v5627 = vrot.slane %v5625, 4
        %v5628 = vor.u32 %v5627, %v5623
        %v5629 = vrot.slane %v5628, 4
        %v5631 = vshll.u32 %v5250, 16
        %v5633 = vrot.slane %v5631, 5
        %v5634 = vsel %vm1189, %v5629, %v5633
        %v5635 = vld [vmem:[#allocation3] sm:$0xe]
        %v5636 = vld [vmem:[#allocation3 + $0xc] sm:$0xe]
        %v5637 = vld [vmem:[#allocation3 + $0x18] sm:$0xe]
        %v5638 = vld [vmem:[#allocation3 + $0x24] sm:$0xe]
        %v5639 = vld [vmem:[#allocation3 + $0x30] sm:$0xe]
        %v5640 = vld [vmem:[#allocation3 + $0x3c] sm:$0xe]
        %v5641 = vld [vmem:[#allocation3 + $0x48] sm:$0xe]
        %v5642 = vld [vmem:[#allocation3 + $0x54] sm:$0xe]
        %v5643 = vld [vmem:[#allocation3 + $0x60] sm:$0xe]
        %v5644 = vld [vmem:[#allocation3 + $0x6c] sm:$0xe]
        %v5645 = vld [vmem:[#allocation3 + $0x78] sm:$0xe]
        %v5646 = vld [vmem:[#allocation3 + $0x84] sm:$0xe]
        %v5647 = vld [vmem:[#allocation3 + $0x90] sm:$0xe]
        %v5648 = vld [vmem:[#allocation3 + $0x9c] sm:$0xe]
        %v5649 = vld [vmem:[#allocation3 + $0xa8] sm:$0xe]
        %v5650 = vld [vmem:[#allocation3 + $0xb4] sm:$0xe]
        %v5699 = vrot.slane %v5635, 5
        %v5700 = vrot.slane %v5699, 4
        %v5701 = vrot.slane %v5204, 5
        %v5702 = vsel %vm1640, %v5700, %v5701
        %v5703 = vrot.slane %v5701, 4
        %v5704 = vrot.slane %v5235, 5
        %v5705 = vsel %vm1640, %v5703, %v5704
        %v5706 = vrot.slane %v5636, 5
        %v5707 = vrot.slane %v5706, 4
        %v5708 = vrot.slane %v5206, 5
        %v5709 = vsel %vm1640, %v5707, %v5708
        %v5710 = vrot.slane %v5708, 4
        %v5711 = vrot.slane %v5236, 5
        %v5712 = vsel %vm1640, %v5710, %v5711
        %v5713 = vrot.slane %v5637, 5
        %v5714 = vrot.slane %v5713, 4
        %v5715 = vrot.slane %v5208, 5
        %v5716 = vsel %vm1640, %v5714, %v5715
        %v5717 = vrot.slane %v5715, 4
        %v5718 = vrot.slane %v5237, 5
        %v5719 = vsel %vm1640, %v5717, %v5718
        %v5720 = vrot.slane %v5638, 5
        %v5721 = vrot.slane %v5720, 4
        %v5722 = vrot.slane %v5210, 5
        %v5723 = vsel %vm1640, %v5721, %v5722
        %v5724 = vrot.slane %v5722, 4
        %v5725 = vrot.slane %v5238, 5
        %v5726 = vsel %vm1640, %v5724, %v5725
        %v5727 = vrot.slane %v5639, 5
        %v5728 = vrot.slane %v5727, 4
        %v5729 = vrot.slane %v5212, 5
        %v5730 = vsel %vm1640, %v5728, %v5729
        %v5731 = vrot.slane %v5729, 4
        %v5732 = vrot.slane %v5239, 5
        %v5733 = vsel %vm1640, %v5731, %v5732
        %v5734 = vrot.slane %v5640, 5
        %v5735 = vrot.slane %v5734, 4
        %v5736 = vrot.slane %v5214, 5
        %v5737 = vsel %vm1640, %v5735, %v5736
        %v5738 = vrot.slane %v5736, 4
        %v5739 = vrot.slane %v5240, 5
        %v5740 = vsel %vm1640, %v5738, %v5739
        %v5741 = vrot.slane %v5641, 5
        %v5742 = vrot.slane %v5741, 4
        %v5743 = vrot.slane %v5216, 5
        %v5744 = vsel %vm1640, %v5742, %v5743
        %v5745 = vrot.slane %v5743, 4
        %v5746 = vrot.slane %v5241, 5
        %v5747 = vsel %vm1640, %v5745, %v5746
        %v5748 = vrot.slane %v5642, 5
        %v5749 = vrot.slane %v5748, 4
        %v5750 = vrot.slane %v5218, 5
        %v5751 = vsel %vm1640, %v5749, %v5750
        %v5752 = vrot.slane %v5750, 4
        %v5753 = vrot.slane %v5242, 5
        %v5754 = vsel %vm1640, %v5752, %v5753
        %v5755 = vrot.slane %v5643, 5
        %v5756 = vrot.slane %v5755, 4
        %v5757 = vrot.slane %v5220, 5
        %v5758 = vsel %vm1640, %v5756, %v5757
        %v5759 = vrot.slane %v5757, 4
        %v5760 = vrot.slane %v5243, 5
        %v5761 = vsel %vm1640, %v5759, %v5760
        %v5762 = vrot.slane %v5644, 5
        %v5763 = vrot.slane %v5762, 4
        %v5764 = vrot.slane %v5222, 5
        %v5765 = vsel %vm1640, %v5763, %v5764
        %v5766 = vrot.slane %v5764, 4
        %v5767 = vrot.slane %v5244, 5
        %v5768 = vsel %vm1640, %v5766, %v5767
        %v5769 = vrot.slane %v5645, 5
        %v5770 = vrot.slane %v5769, 4
        %v5771 = vrot.slane %v5224, 5
        %v5772 = vsel %vm1640, %v5770, %v5771
        %v5773 = vrot.slane %v5771, 4
        %v5774 = vrot.slane %v5245, 5
        %v5775 = vsel %vm1640, %v5773, %v5774
        %v5776 = vrot.slane %v5646, 5
        %v5777 = vrot.slane %v5776, 4
        %v5778 = vrot.slane %v5226, 5
        %v5779 = vsel %vm1640, %v5777, %v5778
        %v5780 = vrot.slane %v5778, 4
        %v5781 = vrot.slane %v5246, 5
        %v5782 = vsel %vm1640, %v5780, %v5781
        %v5783 = vrot.slane %v5647, 5
        %v5784 = vrot.slane %v5783, 4
        %v5785 = vrot.slane %v5228, 5
        %v5786 = vsel %vm1640, %v5784, %v5785
        %v5787 = vrot.slane %v5785, 4
        %v5788 = vrot.slane %v5247, 5
        %v5789 = vsel %vm1640, %v5787, %v5788
        %v5790 = vrot.slane %v5648, 5
        %v5791 = vrot.slane %v5790, 4
        %v5792 = vrot.slane %v5230, 5
        %v5793 = vsel %vm1640, %v5791, %v5792
        %v5794 = vrot.slane %v5792, 4
        %v5795 = vrot.slane %v5248, 5
        %v5796 = vsel %vm1640, %v5794, %v5795
        %v5797 = vrot.slane %v5649, 5
        %v5798 = vrot.slane %v5797, 4
        %v5799 = vrot.slane %v5232, 5
        %v5800 = vsel %vm1640, %v5798, %v5799
        %v5801 = vrot.slane %v5799, 4
        %v5802 = vrot.slane %v5249, 5
        %v5803 = vsel %vm1640, %v5801, %v5802
        %v5804 = vrot.slane %v5650, 5
        %v5805 = vrot.slane %v5804, 4
        %v5806 = vrot.slane %v5234, 5
        %v5807 = vsel %vm1640, %v5805, %v5806
        %v5808 = vrot.slane %v5806, 4
        %v5809 = vrot.slane %v5250, 5
        %v5810 = vsel %vm1640, %v5808, %v5809
        %v5811 = vld [vmem:[%s5088] sm:$0xf]
        %v5812 = vld [vmem:[%s5088 + $0x4] sm:$0xf]
        %v5813 = vld [vmem:[%s5088 + $0xc] sm:$0xf]
        %v5814 = vld [vmem:[%s5088 + $0x10] sm:$0xf]
        %v5815 = vld [vmem:[%s5088 + $0x18] sm:$0xf]
        %v5816 = vld [vmem:[%s5088 + $0x1c] sm:$0xf]
        %v5817 = vld [vmem:[%s5088 + $0x24] sm:$0xf]
        %v5818 = vld [vmem:[%s5088 + $0x28] sm:$0xf]
        %v5819 = vld [vmem:[%s5088 + $0x30] sm:$0xf]
        %v5820 = vld [vmem:[%s5088 + $0x34] sm:$0xf]
        %v5821 = vld [vmem:[%s5088 + $0x3c] sm:$0xf]
        %v5822 = vld [vmem:[%s5088 + $0x40] sm:$0xf]
        %v5823 = vld [vmem:[%s5088 + $0x48] sm:$0xf]
        %v5824 = vld [vmem:[%s5088 + $0x4c] sm:$0xf]
        %v5825 = vld [vmem:[%s5088 + $0x54] sm:$0xf]
        %v5826 = vld [vmem:[%s5088 + $0x58] sm:$0xf]
        %v5827 = vld [vmem:[%s5088 + $0x60] sm:$0xf]
        %v5828 = vld [vmem:[%s5088 + $0x64] sm:$0xf]
        %v5829 = vld [vmem:[%s5088 + $0x6c] sm:$0xf]
        %v5830 = vld [vmem:[%s5088 + $0x70] sm:$0xf]
        %v5831 = vld [vmem:[%s5088 + $0x78] sm:$0xf]
        %v5832 = vld [vmem:[%s5088 + $0x7c] sm:$0xf]
        %v5833 = vld [vmem:[%s5088 + $0x84] sm:$0xf]
        %v5834 = vld [vmem:[%s5088 + $0x88] sm:$0xf]
        %v5835 = vld [vmem:[%s5088 + $0x90] sm:$0xf]
        %v5836 = vld [vmem:[%s5088 + $0x94] sm:$0xf]
        %v5837 = vld [vmem:[%s5088 + $0x9c] sm:$0xf]
        %v5838 = vld [vmem:[%s5088 + $0xa0] sm:$0xf]
        %v5839 = vld [vmem:[%s5088 + $0xa8] sm:$0xf]
        %v5840 = vld [vmem:[%s5088 + $0xac] sm:$0xf]
        %v5841 = vld [vmem:[%s5088 + $0xb4] sm:$0xf]
        %v5842 = vld [vmem:[%s5088 + $0xb8] sm:$0xf]
        %v5843 = vld [vmem:[%s5088 + $0x8] sm:$0x1]
        %v5844 = vld [vmem:[%s5088 + $0x14] sm:$0x1]
        %v5845 = vld [vmem:[%s5088 + $0x20] sm:$0x1]
        %v5846 = vld [vmem:[%s5088 + $0x2c] sm:$0x1]
        %v5847 = vld [vmem:[%s5088 + $0x38] sm:$0x1]
        %v5848 = vld [vmem:[%s5088 + $0x44] sm:$0x1]
        %v5849 = vld [vmem:[%s5088 + $0x50] sm:$0x1]
        %v5850 = vld [vmem:[%s5088 + $0x5c] sm:$0x1]
        %v5851 = vld [vmem:[%s5088 + $0x68] sm:$0x1]
        %v5852 = vld [vmem:[%s5088 + $0x74] sm:$0x1]
        %v5853 = vld [vmem:[%s5088 + $0x80] sm:$0x1]
        %v5854 = vld [vmem:[%s5088 + $0x8c] sm:$0x1]
        %v5855 = vld [vmem:[%s5088 + $0x98] sm:$0x1]
        %v5856 = vld [vmem:[%s5088 + $0xa4] sm:$0x1]
        %v5857 = vld [vmem:[%s5088 + $0xb0] sm:$0x1]
        %v5858 = vld [vmem:[%s5088 + $0xbc] sm:$0x1]
        %v5860 = vshrl.u32 %v5811, 16
        %v5862 = vrot.slane %v5860, 4
        %v5863 = vshll.u32 %v5811, 16
        %v5865 = vrot.slane %v5863, 5
        %v5866 = vor.u32 %v5862, %v5865
        %v5867 = vrot.slane %v5866, 4
        %v5869 = vshll.u32 %v5812, 16
        %v5871 = vrot.slane %v5869, 5
        %v5872 = vsel %vm1189, %v5867, %v5871
        %v5873 = vshrl.u32 %v5812, 16
        %v5875 = vrot.slane %v5873, 4
        %v5876 = vor.u32 %v5875, %v5871
        %v5877 = vrot.slane %v5876, 4
        %v5879 = vshll.u32 %v5843, 16
        %v5881 = vrot.slane %v5879, 5
        %v5882 = vsel %vm1189, %v5877, %v5881
        %v5884 = vshrl.u32 %v5813, 16
        %v5886 = vrot.slane %v5884, 4
        %v5887 = vshll.u32 %v5813, 16
        %v5889 = vrot.slane %v5887, 5
        %v5890 = vor.u32 %v5886, %v5889
        %v5891 = vrot.slane %v5890, 4
        %v5893 = vshll.u32 %v5814, 16
        %v5895 = vrot.slane %v5893, 5
        %v5896 = vsel %vm1189, %v5891, %v5895
        %v5897 = vshrl.u32 %v5814, 16
        %v5899 = vrot.slane %v5897, 4
        %v5900 = vor.u32 %v5899, %v5895
        %v5901 = vrot.slane %v5900, 4
        %v5903 = vshll.u32 %v5844, 16
        %v5905 = vrot.slane %v5903, 5
        %v5906 = vsel %vm1189, %v5901, %v5905
        %v5908 = vshrl.u32 %v5815, 16
        %v5910 = vrot.slane %v5908, 4
        %v5911 = vshll.u32 %v5815, 16
        %v5913 = vrot.slane %v5911, 5
        %v5914 = vor.u32 %v5910, %v5913
        %v5915 = vrot.slane %v5914, 4
        %v5917 = vshll.u32 %v5816, 16
        %v5919 = vrot.slane %v5917, 5
        %v5920 = vsel %vm1189, %v5915, %v5919
        %v5921 = vshrl.u32 %v5816, 16
        %v5923 = vrot.slane %v5921, 4
        %v5924 = vor.u32 %v5923, %v5919
        %v5925 = vrot.slane %v5924, 4
        %v5927 = vshll.u32 %v5845, 16
        %v5929 = vrot.slane %v5927, 5
        %v5930 = vsel %vm1189, %v5925, %v5929
        %v5932 = vshrl.u32 %v5817, 16
        %v5934 = vrot.slane %v5932, 4
        %v5935 = vshll.u32 %v5817, 16
        %v5937 = vrot.slane %v5935, 5
        %v5938 = vor.u32 %v5934, %v5937
        %v5939 = vrot.slane %v5938, 4
        %v5941 = vshll.u32 %v5818, 16
        %v5943 = vrot.slane %v5941, 5
        %v5944 = vsel %vm1189, %v5939, %v5943
        %v5945 = vshrl.u32 %v5818, 16
        %v5947 = vrot.slane %v5945, 4
        %v5948 = vor.u32 %v5947, %v5943
        %v5949 = vrot.slane %v5948, 4
        %v5951 = vshll.u32 %v5846, 16
        %v5953 = vrot.slane %v5951, 5
        %v5954 = vsel %vm1189, %v5949, %v5953
        %v5956 = vshrl.u32 %v5819, 16
        %v5958 = vrot.slane %v5956, 4
        %v5959 = vshll.u32 %v5819, 16
        %v5961 = vrot.slane %v5959, 5
        %v5962 = vor.u32 %v5958, %v5961
        %v5963 = vrot.slane %v5962, 4
        %v5965 = vshll.u32 %v5820, 16
        %v5967 = vrot.slane %v5965, 5
        %v5968 = vsel %vm1189, %v5963, %v5967
        %v5969 = vshrl.u32 %v5820, 16
        %v5971 = vrot.slane %v5969, 4
        %v5972 = vor.u32 %v5971, %v5967
        %v5973 = vrot.slane %v5972, 4
        %v5975 = vshll.u32 %v5847, 16
        %v5977 = vrot.slane %v5975, 5
        %v5978 = vsel %vm1189, %v5973, %v5977
        %v5980 = vshrl.u32 %v5821, 16
        %v5982 = vrot.slane %v5980, 4
        %v5983 = vshll.u32 %v5821, 16
        %v5985 = vrot.slane %v5983, 5
        %v5986 = vor.u32 %v5982, %v5985
        %v5987 = vrot.slane %v5986, 4
        %v5989 = vshll.u32 %v5822, 16
        %v5991 = vrot.slane %v5989, 5
        %v5992 = vsel %vm1189, %v5987, %v5991
        %v5993 = vshrl.u32 %v5822, 16
        %v5995 = vrot.slane %v5993, 4
        %v5996 = vor.u32 %v5995, %v5991
        %v5997 = vrot.slane %v5996, 4
        %v5999 = vshll.u32 %v5848, 16
        %v6001 = vrot.slane %v5999, 5
        %v6002 = vsel %vm1189, %v5997, %v6001
        %v6004 = vshrl.u32 %v5823, 16
        %v6006 = vrot.slane %v6004, 4
        %v6007 = vshll.u32 %v5823, 16
        %v6009 = vrot.slane %v6007, 5
        %v6010 = vor.u32 %v6006, %v6009
        %v6011 = vrot.slane %v6010, 4
        %v6013 = vshll.u32 %v5824, 16
        %v6015 = vrot.slane %v6013, 5
        %v6016 = vsel %vm1189, %v6011, %v6015
        %v6017 = vshrl.u32 %v5824, 16
        %v6019 = vrot.slane %v6017, 4
        %v6020 = vor.u32 %v6019, %v6015
        %v6021 = vrot.slane %v6020, 4
        %v6023 = vshll.u32 %v5849, 16
        %v6025 = vrot.slane %v6023, 5
        %v6026 = vsel %vm1189, %v6021, %v6025
        %v6028 = vshrl.u32 %v5825, 16
        %v6030 = vrot.slane %v6028, 4
        %v6031 = vshll.u32 %v5825, 16
        %v6033 = vrot.slane %v6031, 5
        %v6034 = vor.u32 %v6030, %v6033
        %v6035 = vrot.slane %v6034, 4
        %v6037 = vshll.u32 %v5826, 16
        %v6039 = vrot.slane %v6037, 5
        %v6040 = vsel %vm1189, %v6035, %v6039
        %v6041 = vshrl.u32 %v5826, 16
        %v6043 = vrot.slane %v6041, 4
        %v6044 = vor.u32 %v6043, %v6039
        %v6045 = vrot.slane %v6044, 4
        %v6047 = vshll.u32 %v5850, 16
        %v6049 = vrot.slane %v6047, 5
        %v6050 = vsel %vm1189, %v6045, %v6049
        %v6052 = vshrl.u32 %v5827, 16
        %v6054 = vrot.slane %v6052, 4
        %v6055 = vshll.u32 %v5827, 16
        %v6057 = vrot.slane %v6055, 5
        %v6058 = vor.u32 %v6054, %v6057
        %v6059 = vrot.slane %v6058, 4
        %v6061 = vshll.u32 %v5828, 16
        %v6063 = vrot.slane %v6061, 5
        %v6064 = vsel %vm1189, %v6059, %v6063
        %v6065 = vshrl.u32 %v5828, 16
        %v6067 = vrot.slane %v6065, 4
        %v6068 = vor.u32 %v6067, %v6063
        %v6069 = vrot.slane %v6068, 4
        %v6071 = vshll.u32 %v5851, 16
        %v6073 = vrot.slane %v6071, 5
        %v6074 = vsel %vm1189, %v6069, %v6073
        %v6076 = vshrl.u32 %v5829, 16
        %v6078 = vrot.slane %v6076, 4
        %v6079 = vshll.u32 %v5829, 16
        %v6081 = vrot.slane %v6079, 5
        %v6082 = vor.u32 %v6078, %v6081
        %v6083 = vrot.slane %v6082, 4
        %v6085 = vshll.u32 %v5830, 16
        %v6087 = vrot.slane %v6085, 5
        %v6088 = vsel %vm1189, %v6083, %v6087
        %v6089 = vshrl.u32 %v5830, 16
        %v6091 = vrot.slane %v6089, 4
        %v6092 = vor.u32 %v6091, %v6087
        %v6093 = vrot.slane %v6092, 4
        %v6095 = vshll.u32 %v5852, 16
        %v6097 = vrot.slane %v6095, 5
        %v6098 = vsel %vm1189, %v6093, %v6097
        %v6100 = vshrl.u32 %v5831, 16
        %v6102 = vrot.slane %v6100, 4
        %v6103 = vshll.u32 %v5831, 16
        %v6105 = vrot.slane %v6103, 5
        %v6106 = vor.u32 %v6102, %v6105
        %v6107 = vrot.slane %v6106, 4
        %v6109 = vshll.u32 %v5832, 16
        %v6111 = vrot.slane %v6109, 5
        %v6112 = vsel %vm1189, %v6107, %v6111
        %v6113 = vshrl.u32 %v5832, 16
        %v6115 = vrot.slane %v6113, 4
        %v6116 = vor.u32 %v6115, %v6111
        %v6117 = vrot.slane %v6116, 4
        %v6119 = vshll.u32 %v5853, 16
        %v6121 = vrot.slane %v6119, 5
        %v6122 = vsel %vm1189, %v6117, %v6121
        %v6124 = vshrl.u32 %v5833, 16
        %v6126 = vrot.slane %v6124, 4
        %v6127 = vshll.u32 %v5833, 16
        %v6129 = vrot.slane %v6127, 5
        %v6130 = vor.u32 %v6126, %v6129
        %v6131 = vrot.slane %v6130, 4
        %v6133 = vshll.u32 %v5834, 16
        %v6135 = vrot.slane %v6133, 5
        %v6136 = vsel %vm1189, %v6131, %v6135
        %v6137 = vshrl.u32 %v5834, 16
        %v6139 = vrot.slane %v6137, 4
        %v6140 = vor.u32 %v6139, %v6135
        %v6141 = vrot.slane %v6140, 4
        %v6143 = vshll.u32 %v5854, 16
        %v6145 = vrot.slane %v6143, 5
        %v6146 = vsel %vm1189, %v6141, %v6145
        %v6148 = vshrl.u32 %v5835, 16
        %v6150 = vrot.slane %v6148, 4
        %v6151 = vshll.u32 %v5835, 16
        %v6153 = vrot.slane %v6151, 5
        %v6154 = vor.u32 %v6150, %v6153
        %v6155 = vrot.slane %v6154, 4
        %v6157 = vshll.u32 %v5836, 16
        %v6159 = vrot.slane %v6157, 5
        %v6160 = vsel %vm1189, %v6155, %v6159
        %v6161 = vshrl.u32 %v5836, 16
        %v6163 = vrot.slane %v6161, 4
        %v6164 = vor.u32 %v6163, %v6159
        %v6165 = vrot.slane %v6164, 4
        %v6167 = vshll.u32 %v5855, 16
        %v6169 = vrot.slane %v6167, 5
        %v6170 = vsel %vm1189, %v6165, %v6169
        %v6172 = vshrl.u32 %v5837, 16
        %v6174 = vrot.slane %v6172, 4
        %v6175 = vshll.u32 %v5837, 16
        %v6177 = vrot.slane %v6175, 5
        %v6178 = vor.u32 %v6174, %v6177
        %v6179 = vrot.slane %v6178, 4
        %v6181 = vshll.u32 %v5838, 16
        %v6183 = vrot.slane %v6181, 5
        %v6184 = vsel %vm1189, %v6179, %v6183
        %v6185 = vshrl.u32 %v5838, 16
        %v6187 = vrot.slane %v6185, 4
        %v6188 = vor.u32 %v6187, %v6183
        %v6189 = vrot.slane %v6188, 4
        %v6191 = vshll.u32 %v5856, 16
        %v6193 = vrot.slane %v6191, 5
        %v6194 = vsel %vm1189, %v6189, %v6193
        %v6196 = vshrl.u32 %v5839, 16
        %v6198 = vrot.slane %v6196, 4
        %v6199 = vshll.u32 %v5839, 16
        %v6201 = vrot.slane %v6199, 5
        %v6202 = vor.u32 %v6198, %v6201
        %v6203 = vrot.slane %v6202, 4
        %v6205 = vshll.u32 %v5840, 16
        %v6207 = vrot.slane %v6205, 5
        %v6208 = vsel %vm1189, %v6203, %v6207
        %v6209 = vshrl.u32 %v5840, 16
        %v6211 = vrot.slane %v6209, 4
        %v6212 = vor.u32 %v6211, %v6207
        %v6213 = vrot.slane %v6212, 4
        %v6215 = vshll.u32 %v5857, 16
        %v6217 = vrot.slane %v6215, 5
        %v6218 = vsel %vm1189, %v6213, %v6217
        %v6220 = vshrl.u32 %v5841, 16
        %v6222 = vrot.slane %v6220, 4
        %v6223 = vshll.u32 %v5841, 16
        %v6225 = vrot.slane %v6223, 5
        %v6226 = vor.u32 %v6222, %v6225
        %v6227 = vrot.slane %v6226, 4
        %v6229 = vshll.u32 %v5842, 16
        %v6231 = vrot.slane %v6229, 5
        %v6232 = vsel %vm1189, %v6227, %v6231
        %v6233 = vshrl.u32 %v5842, 16
        %v6235 = vrot.slane %v6233, 4
        %v6236 = vor.u32 %v6235, %v6231
        %v6237 = vrot.slane %v6236, 4
        %v6239 = vshll.u32 %v5858, 16
        %v6241 = vrot.slane %v6239, 5
        %v6242 = vsel %vm1189, %v6237, %v6241
        %v6243 = vld [vmem:[%s5088] sm:$0xe]
        %v6244 = vld [vmem:[%s5088 + $0xc] sm:$0xe]
        %v6245 = vld [vmem:[%s5088 + $0x18] sm:$0xe]
        %v6246 = vld [vmem:[%s5088 + $0x24] sm:$0xe]
        %v6247 = vld [vmem:[%s5088 + $0x30] sm:$0xe]
        %v6248 = vld [vmem:[%s5088 + $0x3c] sm:$0xe]
        %v6249 = vld [vmem:[%s5088 + $0x48] sm:$0xe]
        %v6250 = vld [vmem:[%s5088 + $0x54] sm:$0xe]
        %v6251 = vld [vmem:[%s5088 + $0x60] sm:$0xe]
        %v6252 = vld [vmem:[%s5088 + $0x6c] sm:$0xe]
        %v6253 = vld [vmem:[%s5088 + $0x78] sm:$0xe]
        %v6254 = vld [vmem:[%s5088 + $0x84] sm:$0xe]
        %v6255 = vld [vmem:[%s5088 + $0x90] sm:$0xe]
        %v6256 = vld [vmem:[%s5088 + $0x9c] sm:$0xe]
        %v6257 = vld [vmem:[%s5088 + $0xa8] sm:$0xe]
        %v6258 = vld [vmem:[%s5088 + $0xb4] sm:$0xe]
        %v6307 = vrot.slane %v6243, 5
        %v6308 = vrot.slane %v6307, 4
        %v6309 = vrot.slane %v5812, 5
        %v6310 = vsel %vm1640, %v6308, %v6309
        %v6311 = vrot.slane %v6309, 4
        %v6312 = vrot.slane %v5843, 5
        %v6313 = vsel %vm1640, %v6311, %v6312
        %v6314 = vrot.slane %v6244, 5
        %v6315 = vrot.slane %v6314, 4
        %v6316 = vrot.slane %v5814, 5
        %v6317 = vsel %vm1640, %v6315, %v6316
        %v6318 = vrot.slane %v6316, 4
        %v6319 = vrot.slane %v5844, 5
        %v6320 = vsel %vm1640, %v6318, %v6319
        %v6321 = vrot.slane %v6245, 5
        %v6322 = vrot.slane %v6321, 4
        %v6323 = vrot.slane %v5816, 5
        %v6324 = vsel %vm1640, %v6322, %v6323
        %v6325 = vrot.slane %v6323, 4
        %v6326 = vrot.slane %v5845, 5
        %v6327 = vsel %vm1640, %v6325, %v6326
        %v6328 = vrot.slane %v6246, 5
        %v6329 = vrot.slane %v6328, 4
        %v6330 = vrot.slane %v5818, 5
        %v6331 = vsel %vm1640, %v6329, %v6330
        %v6332 = vrot.slane %v6330, 4
        %v6333 = vrot.slane %v5846, 5
        %v6334 = vsel %vm1640, %v6332, %v6333
        %v6335 = vrot.slane %v6247, 5
        %v6336 = vrot.slane %v6335, 4
        %v6337 = vrot.slane %v5820, 5
        %v6338 = vsel %vm1640, %v6336, %v6337
        %v6339 = vrot.slane %v6337, 4
        %v6340 = vrot.slane %v5847, 5
        %v6341 = vsel %vm1640, %v6339, %v6340
        %v6342 = vrot.slane %v6248, 5
        %v6343 = vrot.slane %v6342, 4
        %v6344 = vrot.slane %v5822, 5
        %v6345 = vsel %vm1640, %v6343, %v6344
        %v6346 = vrot.slane %v6344, 4
        %v6347 = vrot.slane %v5848, 5
        %v6348 = vsel %vm1640, %v6346, %v6347
        %v6349 = vrot.slane %v6249, 5
        %v6350 = vrot.slane %v6349, 4
        %v6351 = vrot.slane %v5824, 5
        %v6352 = vsel %vm1640, %v6350, %v6351
        %v6353 = vrot.slane %v6351, 4
        %v6354 = vrot.slane %v5849, 5
        %v6355 = vsel %vm1640, %v6353, %v6354
        %v6356 = vrot.slane %v6250, 5
        %v6357 = vrot.slane %v6356, 4
        %v6358 = vrot.slane %v5826, 5
        %v6359 = vsel %vm1640, %v6357, %v6358
        %v6360 = vrot.slane %v6358, 4
        %v6361 = vrot.slane %v5850, 5
        %v6362 = vsel %vm1640, %v6360, %v6361
        %v6363 = vrot.slane %v6251, 5
        %v6364 = vrot.slane %v6363, 4
        %v6365 = vrot.slane %v5828, 5
        %v6366 = vsel %vm1640, %v6364, %v6365
        %v6367 = vrot.slane %v6365, 4
        %v6368 = vrot.slane %v5851, 5
        %v6369 = vsel %vm1640, %v6367, %v6368
        %v6370 = vrot.slane %v6252, 5
        %v6371 = vrot.slane %v6370, 4
        %v6372 = vrot.slane %v5830, 5
        %v6373 = vsel %vm1640, %v6371, %v6372
        %v6374 = vrot.slane %v6372, 4
        %v6375 = vrot.slane %v5852, 5
        %v6376 = vsel %vm1640, %v6374, %v6375
        %v6377 = vrot.slane %v6253, 5
        %v6378 = vrot.slane %v6377, 4
        %v6379 = vrot.slane %v5832, 5
        %v6380 = vsel %vm1640, %v6378, %v6379
        %v6381 = vrot.slane %v6379, 4
        %v6382 = vrot.slane %v5853, 5
        %v6383 = vsel %vm1640, %v6381, %v6382
        %v6384 = vrot.slane %v6254, 5
        %v6385 = vrot.slane %v6384, 4
        %v6386 = vrot.slane %v5834, 5
        %v6387 = vsel %vm1640, %v6385, %v6386
        %v6388 = vrot.slane %v6386, 4
        %v6389 = vrot.slane %v5854, 5
        %v6390 = vsel %vm1640, %v6388, %v6389
        %v6391 = vrot.slane %v6255, 5
        %v6392 = vrot.slane %v6391, 4
        %v6393 = vrot.slane %v5836, 5
        %v6394 = vsel %vm1640, %v6392, %v6393
        %v6395 = vrot.slane %v6393, 4
        %v6396 = vrot.slane %v5855, 5
        %v6397 = vsel %vm1640, %v6395, %v6396
        %v6398 = vrot.slane %v6256, 5
        %v6399 = vrot.slane %v6398, 4
        %v6400 = vrot.slane %v5838, 5
        %v6401 = vsel %vm1640, %v6399, %v6400
        %v6402 = vrot.slane %v6400, 4
        %v6403 = vrot.slane %v5856, 5
        %v6404 = vsel %vm1640, %v6402, %v6403
        %v6405 = vrot.slane %v6257, 5
        %v6406 = vrot.slane %v6405, 4
        %v6407 = vrot.slane %v5840, 5
        %v6408 = vsel %vm1640, %v6406, %v6407
        %v6409 = vrot.slane %v6407, 4
        %v6410 = vrot.slane %v5857, 5
        %v6411 = vsel %vm1640, %v6409, %v6410
        %v6412 = vrot.slane %v6258, 5
        %v6413 = vrot.slane %v6412, 4
        %v6414 = vrot.slane %v5842, 5
        %v6415 = vsel %vm1640, %v6413, %v6414
        %v6416 = vrot.slane %v6414, 4
        %v6417 = vrot.slane %v5858, 5
        %v6418 = vsel %vm1640, %v6416, %v6417
        %s6419 = scalar_lea.vmem [#allocation3], 24
        %v6420 = vld [vmem:[%s6419] sm:$0xf]
        %v6421 = vld [vmem:[%s6419 + $0x4] sm:$0xf]
        %v6422 = vld [vmem:[%s6419 + $0xc] sm:$0xf]
        %v6423 = vld [vmem:[%s6419 + $0x10] sm:$0xf]
        %v6424 = vld [vmem:[%s6419 + $0x18] sm:$0xf]
        %v6425 = vld [vmem:[%s6419 + $0x1c] sm:$0xf]
        %v6426 = vld [vmem:[%s6419 + $0x24] sm:$0xf]
        %v6427 = vld [vmem:[%s6419 + $0x28] sm:$0xf]
        %v6428 = vld [vmem:[%s6419 + $0x30] sm:$0xf]
        %v6429 = vld [vmem:[%s6419 + $0x34] sm:$0xf]
        %v6430 = vld [vmem:[%s6419 + $0x3c] sm:$0xf]
        %v6431 = vld [vmem:[%s6419 + $0x40] sm:$0xf]
        %v6432 = vld [vmem:[%s6419 + $0x48] sm:$0xf]
        %v6433 = vld [vmem:[%s6419 + $0x4c] sm:$0xf]
        %v6434 = vld [vmem:[%s6419 + $0x54] sm:$0xf]
        %v6435 = vld [vmem:[%s6419 + $0x58] sm:$0xf]
        %v6436 = vld [vmem:[%s6419 + $0x60] sm:$0xf]
        %v6437 = vld [vmem:[%s6419 + $0x64] sm:$0xf]
        %v6438 = vld [vmem:[%s6419 + $0x6c] sm:$0xf]
        %v6439 = vld [vmem:[%s6419 + $0x70] sm:$0xf]
        %v6440 = vld [vmem:[%s6419 + $0x78] sm:$0xf]
        %v6441 = vld [vmem:[%s6419 + $0x7c] sm:$0xf]
        %v6442 = vld [vmem:[%s6419 + $0x84] sm:$0xf]
        %v6443 = vld [vmem:[%s6419 + $0x88] sm:$0xf]
        %v6444 = vld [vmem:[%s6419 + $0x90] sm:$0xf]
        %v6445 = vld [vmem:[%s6419 + $0x94] sm:$0xf]
        %v6446 = vld [vmem:[%s6419 + $0x9c] sm:$0xf]
        %v6447 = vld [vmem:[%s6419 + $0xa0] sm:$0xf]
        %v6448 = vld [vmem:[%s6419 + $0xa8] sm:$0xf]
        %v6449 = vld [vmem:[%s6419 + $0xac] sm:$0xf]
        %v6450 = vld [vmem:[%s6419 + $0xb4] sm:$0xf]
        %v6451 = vld [vmem:[%s6419 + $0xb8] sm:$0xf]
        %v6452 = vld [vmem:[%s6419 + $0x8] sm:$0x1]
        %v6453 = vld [vmem:[%s6419 + $0x14] sm:$0x1]
        %v6454 = vld [vmem:[%s6419 + $0x20] sm:$0x1]
        %v6455 = vld [vmem:[%s6419 + $0x2c] sm:$0x1]
        %v6456 = vld [vmem:[%s6419 + $0x38] sm:$0x1]
        %v6457 = vld [vmem:[%s6419 + $0x44] sm:$0x1]
        %v6458 = vld [vmem:[%s6419 + $0x50] sm:$0x1]
        %v6459 = vld [vmem:[%s6419 + $0x5c] sm:$0x1]
        %v6460 = vld [vmem:[%s6419 + $0x68] sm:$0x1]
        %v6461 = vld [vmem:[%s6419 + $0x74] sm:$0x1]
        %v6462 = vld [vmem:[%s6419 + $0x80] sm:$0x1]
        %v6463 = vld [vmem:[%s6419 + $0x8c] sm:$0x1]
        %v6464 = vld [vmem:[%s6419 + $0x98] sm:$0x1]
        %v6465 = vld [vmem:[%s6419 + $0xa4] sm:$0x1]
        %v6466 = vld [vmem:[%s6419 + $0xb0] sm:$0x1]
        %v6467 = vld [vmem:[%s6419 + $0xbc] sm:$0x1]
        %v6469 = vshrl.u32 %v6420, 16
        %v6471 = vrot.slane %v6469, 4
        %v6472 = vshll.u32 %v6420, 16
        %v6474 = vrot.slane %v6472, 5
        %v6475 = vor.u32 %v6471, %v6474
        %v6476 = vrot.slane %v6475, 4
        %v6478 = vshll.u32 %v6421, 16
        %v6480 = vrot.slane %v6478, 5
        %v6481 = vsel %vm1189, %v6476, %v6480
        %v6482 = vshrl.u32 %v6421, 16
        %v6484 = vrot.slane %v6482, 4
        %v6485 = vor.u32 %v6484, %v6480
        %v6486 = vrot.slane %v6485, 4
        %v6488 = vshll.u32 %v6452, 16
        %v6490 = vrot.slane %v6488, 5
        %v6491 = vsel %vm1189, %v6486, %v6490
        %v6493 = vshrl.u32 %v6422, 16
        %v6495 = vrot.slane %v6493, 4
        %v6496 = vshll.u32 %v6422, 16
        %v6498 = vrot.slane %v6496, 5
        %v6499 = vor.u32 %v6495, %v6498
        %v6500 = vrot.slane %v6499, 4
        %v6502 = vshll.u32 %v6423, 16
        %v6504 = vrot.slane %v6502, 5
        %v6505 = vsel %vm1189, %v6500, %v6504
        %v6506 = vshrl.u32 %v6423, 16
        %v6508 = vrot.slane %v6506, 4
        %v6509 = vor.u32 %v6508, %v6504
        %v6510 = vrot.slane %v6509, 4
        %v6512 = vshll.u32 %v6453, 16
        %v6514 = vrot.slane %v6512, 5
        %v6515 = vsel %vm1189, %v6510, %v6514
        %v6517 = vshrl.u32 %v6424, 16
        %v6519 = vrot.slane %v6517, 4
        %v6520 = vshll.u32 %v6424, 16
        %v6522 = vrot.slane %v6520, 5
        %v6523 = vor.u32 %v6519, %v6522
        %v6524 = vrot.slane %v6523, 4
        %v6526 = vshll.u32 %v6425, 16
        %v6528 = vrot.slane %v6526, 5
        %v6529 = vsel %vm1189, %v6524, %v6528
        %v6530 = vshrl.u32 %v6425, 16
        %v6532 = vrot.slane %v6530, 4
        %v6533 = vor.u32 %v6532, %v6528
        %v6534 = vrot.slane %v6533, 4
        %v6536 = vshll.u32 %v6454, 16
        %v6538 = vrot.slane %v6536, 5
        %v6539 = vsel %vm1189, %v6534, %v6538
        %v6541 = vshrl.u32 %v6426, 16
        %v6543 = vrot.slane %v6541, 4
        %v6544 = vshll.u32 %v6426, 16
        %v6546 = vrot.slane %v6544, 5
        %v6547 = vor.u32 %v6543, %v6546
        %v6548 = vrot.slane %v6547, 4
        %v6550 = vshll.u32 %v6427, 16
        %v6552 = vrot.slane %v6550, 5
        %v6553 = vsel %vm1189, %v6548, %v6552
        %v6554 = vshrl.u32 %v6427, 16
        %v6556 = vrot.slane %v6554, 4
        %v6557 = vor.u32 %v6556, %v6552
        %v6558 = vrot.slane %v6557, 4
        %v6560 = vshll.u32 %v6455, 16
        %v6562 = vrot.slane %v6560, 5
        %v6563 = vsel %vm1189, %v6558, %v6562
        %v6565 = vshrl.u32 %v6428, 16
        %v6567 = vrot.slane %v6565, 4
        %v6568 = vshll.u32 %v6428, 16
        %v6570 = vrot.slane %v6568, 5
        %v6571 = vor.u32 %v6567, %v6570
        %v6572 = vrot.slane %v6571, 4
        %v6574 = vshll.u32 %v6429, 16
        %v6576 = vrot.slane %v6574, 5
        %v6577 = vsel %vm1189, %v6572, %v6576
        %v6578 = vshrl.u32 %v6429, 16
        %v6580 = vrot.slane %v6578, 4
        %v6581 = vor.u32 %v6580, %v6576
        %v6582 = vrot.slane %v6581, 4
        %v6584 = vshll.u32 %v6456, 16
        %v6586 = vrot.slane %v6584, 5
        %v6587 = vsel %vm1189, %v6582, %v6586
        %v6589 = vshrl.u32 %v6430, 16
        %v6591 = vrot.slane %v6589, 4
        %v6592 = vshll.u32 %v6430, 16
        %v6594 = vrot.slane %v6592, 5
        %v6595 = vor.u32 %v6591, %v6594
        %v6596 = vrot.slane %v6595, 4
        %v6598 = vshll.u32 %v6431, 16
        %v6600 = vrot.slane %v6598, 5
        %v6601 = vsel %vm1189, %v6596, %v6600
        %v6602 = vshrl.u32 %v6431, 16
        %v6604 = vrot.slane %v6602, 4
        %v6605 = vor.u32 %v6604, %v6600
        %v6606 = vrot.slane %v6605, 4
        %v6608 = vshll.u32 %v6457, 16
        %v6610 = vrot.slane %v6608, 5
        %v6611 = vsel %vm1189, %v6606, %v6610
        %v6613 = vshrl.u32 %v6432, 16
        %v6615 = vrot.slane %v6613, 4
        %v6616 = vshll.u32 %v6432, 16
        %v6618 = vrot.slane %v6616, 5
        %v6619 = vor.u32 %v6615, %v6618
        %v6620 = vrot.slane %v6619, 4
        %v6622 = vshll.u32 %v6433, 16
        %v6624 = vrot.slane %v6622, 5
        %v6625 = vsel %vm1189, %v6620, %v6624
        %v6626 = vshrl.u32 %v6433, 16
        %v6628 = vrot.slane %v6626, 4
        %v6629 = vor.u32 %v6628, %v6624
        %v6630 = vrot.slane %v6629, 4
        %v6632 = vshll.u32 %v6458, 16
        %v6634 = vrot.slane %v6632, 5
        %v6635 = vsel %vm1189, %v6630, %v6634
        %v6637 = vshrl.u32 %v6434, 16
        %v6639 = vrot.slane %v6637, 4
        %v6640 = vshll.u32 %v6434, 16
        %v6642 = vrot.slane %v6640, 5
        %v6643 = vor.u32 %v6639, %v6642
        %v6644 = vrot.slane %v6643, 4
        %v6646 = vshll.u32 %v6435, 16
        %v6648 = vrot.slane %v6646, 5
        %v6649 = vsel %vm1189, %v6644, %v6648
        %v6650 = vshrl.u32 %v6435, 16
        %v6652 = vrot.slane %v6650, 4
        %v6653 = vor.u32 %v6652, %v6648
        %v6654 = vrot.slane %v6653, 4
        %v6656 = vshll.u32 %v6459, 16
        %v6658 = vrot.slane %v6656, 5
        %v6659 = vsel %vm1189, %v6654, %v6658
        %v6661 = vshrl.u32 %v6436, 16
        %v6663 = vrot.slane %v6661, 4
        %v6664 = vshll.u32 %v6436, 16
        %v6666 = vrot.slane %v6664, 5
        %v6667 = vor.u32 %v6663, %v6666
        %v6668 = vrot.slane %v6667, 4
        %v6670 = vshll.u32 %v6437, 16
        %v6672 = vrot.slane %v6670, 5
        %v6673 = vsel %vm1189, %v6668, %v6672
        %v6674 = vshrl.u32 %v6437, 16
        %v6676 = vrot.slane %v6674, 4
        %v6677 = vor.u32 %v6676, %v6672
        %v6678 = vrot.slane %v6677, 4
        %v6680 = vshll.u32 %v6460, 16
        %v6682 = vrot.slane %v6680, 5
        %v6683 = vsel %vm1189, %v6678, %v6682
        %v6685 = vshrl.u32 %v6438, 16
        %v6687 = vrot.slane %v6685, 4
        %v6688 = vshll.u32 %v6438, 16
        %v6690 = vrot.slane %v6688, 5
        %v6691 = vor.u32 %v6687, %v6690
        %v6692 = vrot.slane %v6691, 4
        %v6694 = vshll.u32 %v6439, 16
        %v6696 = vrot.slane %v6694, 5
        %v6697 = vsel %vm1189, %v6692, %v6696
        %v6698 = vshrl.u32 %v6439, 16
        %v6700 = vrot.slane %v6698, 4
        %v6701 = vor.u32 %v6700, %v6696
        %v6702 = vrot.slane %v6701, 4
        %v6704 = vshll.u32 %v6461, 16
        %v6706 = vrot.slane %v6704, 5
        %v6707 = vsel %vm1189, %v6702, %v6706
        %v6709 = vshrl.u32 %v6440, 16
        %v6711 = vrot.slane %v6709, 4
        %v6712 = vshll.u32 %v6440, 16
        %v6714 = vrot.slane %v6712, 5
        %v6715 = vor.u32 %v6711, %v6714
        %v6716 = vrot.slane %v6715, 4
        %v6718 = vshll.u32 %v6441, 16
        %v6720 = vrot.slane %v6718, 5
        %v6721 = vsel %vm1189, %v6716, %v6720
        %v6722 = vshrl.u32 %v6441, 16
        %v6724 = vrot.slane %v6722, 4
        %v6725 = vor.u32 %v6724, %v6720
        %v6726 = vrot.slane %v6725, 4
        %v6728 = vshll.u32 %v6462, 16
        %v6730 = vrot.slane %v6728, 5
        %v6731 = vsel %vm1189, %v6726, %v6730
        %v6733 = vshrl.u32 %v6442, 16
        %v6735 = vrot.slane %v6733, 4
        %v6736 = vshll.u32 %v6442, 16
        %v6738 = vrot.slane %v6736, 5
        %v6739 = vor.u32 %v6735, %v6738
        %v6740 = vrot.slane %v6739, 4
        %v6742 = vshll.u32 %v6443, 16
        %v6744 = vrot.slane %v6742, 5
        %v6745 = vsel %vm1189, %v6740, %v6744
        %v6746 = vshrl.u32 %v6443, 16
        %v6748 = vrot.slane %v6746, 4
        %v6749 = vor.u32 %v6748, %v6744
        %v6750 = vrot.slane %v6749, 4
        %v6752 = vshll.u32 %v6463, 16
        %v6754 = vrot.slane %v6752, 5
        %v6755 = vsel %vm1189, %v6750, %v6754
        %v6757 = vshrl.u32 %v6444, 16
        %v6759 = vrot.slane %v6757, 4
        %v6760 = vshll.u32 %v6444, 16
        %v6762 = vrot.slane %v6760, 5
        %v6763 = vor.u32 %v6759, %v6762
        %v6764 = vrot.slane %v6763, 4
        %v6766 = vshll.u32 %v6445, 16
        %v6768 = vrot.slane %v6766, 5
        %v6769 = vsel %vm1189, %v6764, %v6768
        %v6770 = vshrl.u32 %v6445, 16
        %v6772 = vrot.slane %v6770, 4
        %v6773 = vor.u32 %v6772, %v6768
        %v6774 = vrot.slane %v6773, 4
        %v6776 = vshll.u32 %v6464, 16
        %v6778 = vrot.slane %v6776, 5
        %v6779 = vsel %vm1189, %v6774, %v6778
        %v6781 = vshrl.u32 %v6446, 16
        %v6783 = vrot.slane %v6781, 4
        %v6784 = vshll.u32 %v6446, 16
        %v6786 = vrot.slane %v6784, 5
        %v6787 = vor.u32 %v6783, %v6786
        %v6788 = vrot.slane %v6787, 4
        %v6790 = vshll.u32 %v6447, 16
        %v6792 = vrot.slane %v6790, 5
        %v6793 = vsel %vm1189, %v6788, %v6792
        %v6794 = vshrl.u32 %v6447, 16
        %v6796 = vrot.slane %v6794, 4
        %v6797 = vor.u32 %v6796, %v6792
        %v6798 = vrot.slane %v6797, 4
        %v6800 = vshll.u32 %v6465, 16
        %v6802 = vrot.slane %v6800, 5
        %v6803 = vsel %vm1189, %v6798, %v6802
        %v6805 = vshrl.u32 %v6448, 16
        %v6807 = vrot.slane %v6805, 4
        %v6808 = vshll.u32 %v6448, 16
        %v6810 = vrot.slane %v6808, 5
        %v6811 = vor.u32 %v6807, %v6810
        %v6812 = vrot.slane %v6811, 4
        %v6814 = vshll.u32 %v6449, 16
        %v6816 = vrot.slane %v6814, 5
        %v6817 = vsel %vm1189, %v6812, %v6816
        %v6818 = vshrl.u32 %v6449, 16
        %v6820 = vrot.slane %v6818, 4
        %v6821 = vor.u32 %v6820, %v6816
        %v6822 = vrot.slane %v6821, 4
        %v6824 = vshll.u32 %v6466, 16
        %v6826 = vrot.slane %v6824, 5
        %v6827 = vsel %vm1189, %v6822, %v6826
        %v6829 = vshrl.u32 %v6450, 16
        %v6831 = vrot.slane %v6829, 4
        %v6832 = vshll.u32 %v6450, 16
        %v6834 = vrot.slane %v6832, 5
        %v6835 = vor.u32 %v6831, %v6834
        %v6836 = vrot.slane %v6835, 4
        %v6838 = vshll.u32 %v6451, 16
        %v6840 = vrot.slane %v6838, 5
        %v6841 = vsel %vm1189, %v6836, %v6840
        %v6842 = vshrl.u32 %v6451, 16
        %v6844 = vrot.slane %v6842, 4
        %v6845 = vor.u32 %v6844, %v6840
        %v6846 = vrot.slane %v6845, 4
        %v6848 = vshll.u32 %v6467, 16
        %v6850 = vrot.slane %v6848, 5
        %v6851 = vsel %vm1189, %v6846, %v6850
        %v6852 = vld [vmem:[%s6419] sm:$0xe]
        %v6853 = vld [vmem:[%s6419 + $0xc] sm:$0xe]
        %v6854 = vld [vmem:[%s6419 + $0x18] sm:$0xe]
        %v6855 = vld [vmem:[%s6419 + $0x24] sm:$0xe]
        %v6856 = vld [vmem:[%s6419 + $0x30] sm:$0xe]
        %v6857 = vld [vmem:[%s6419 + $0x3c] sm:$0xe]
        %v6858 = vld [vmem:[%s6419 + $0x48] sm:$0xe]
        %v6859 = vld [vmem:[%s6419 + $0x54] sm:$0xe]
        %v6860 = vld [vmem:[%s6419 + $0x60] sm:$0xe]
        %v6861 = vld [vmem:[%s6419 + $0x6c] sm:$0xe]
        %v6862 = vld [vmem:[%s6419 + $0x78] sm:$0xe]
        %v6863 = vld [vmem:[%s6419 + $0x84] sm:$0xe]
        %v6864 = vld [vmem:[%s6419 + $0x90] sm:$0xe]
        %v6865 = vld [vmem:[%s6419 + $0x9c] sm:$0xe]
        %v6866 = vld [vmem:[%s6419 + $0xa8] sm:$0xe]
        %v6867 = vld [vmem:[%s6419 + $0xb4] sm:$0xe]
        %v6916 = vrot.slane %v6852, 5
        %v6917 = vrot.slane %v6916, 4
        %v6918 = vrot.slane %v6421, 5
        %v6919 = vsel %vm1640, %v6917, %v6918
        %v6920 = vrot.slane %v6918, 4
        %v6921 = vrot.slane %v6452, 5
        %v6922 = vsel %vm1640, %v6920, %v6921
        %v6923 = vrot.slane %v6853, 5
        %v6924 = vrot.slane %v6923, 4
        %v6925 = vrot.slane %v6423, 5
        %v6926 = vsel %vm1640, %v6924, %v6925
        %v6927 = vrot.slane %v6925, 4
        %v6928 = vrot.slane %v6453, 5
        %v6929 = vsel %vm1640, %v6927, %v6928
        %v6930 = vrot.slane %v6854, 5
        %v6931 = vrot.slane %v6930, 4
        %v6932 = vrot.slane %v6425, 5
        %v6933 = vsel %vm1640, %v6931, %v6932
        %v6934 = vrot.slane %v6932, 4
        %v6935 = vrot.slane %v6454, 5
        %v6936 = vsel %vm1640, %v6934, %v6935
        %v6937 = vrot.slane %v6855, 5
        %v6938 = vrot.slane %v6937, 4
        %v6939 = vrot.slane %v6427, 5
        %v6940 = vsel %vm1640, %v6938, %v6939
        %v6941 = vrot.slane %v6939, 4
        %v6942 = vrot.slane %v6455, 5
        %v6943 = vsel %vm1640, %v6941, %v6942
        %v6944 = vrot.slane %v6856, 5
        %v6945 = vrot.slane %v6944, 4
        %v6946 = vrot.slane %v6429, 5
        %v6947 = vsel %vm1640, %v6945, %v6946
        %v6948 = vrot.slane %v6946, 4
        %v6949 = vrot.slane %v6456, 5
        %v6950 = vsel %vm1640, %v6948, %v6949
        %v6951 = vrot.slane %v6857, 5
        %v6952 = vrot.slane %v6951, 4
        %v6953 = vrot.slane %v6431, 5
        %v6954 = vsel %vm1640, %v6952, %v6953
        %v6955 = vrot.slane %v6953, 4
        %v6956 = vrot.slane %v6457, 5
        %v6957 = vsel %vm1640, %v6955, %v6956
        %v6958 = vrot.slane %v6858, 5
        %v6959 = vrot.slane %v6958, 4
        %v6960 = vrot.slane %v6433, 5
        %v6961 = vsel %vm1640, %v6959, %v6960
        %v6962 = vrot.slane %v6960, 4
        %v6963 = vrot.slane %v6458, 5
        %v6964 = vsel %vm1640, %v6962, %v6963
        %v6965 = vrot.slane %v6859, 5
        %v6966 = vrot.slane %v6965, 4
        %v6967 = vrot.slane %v6435, 5
        %v6968 = vsel %vm1640, %v6966, %v6967
        %v6969 = vrot.slane %v6967, 4
        %v6970 = vrot.slane %v6459, 5
        %v6971 = vsel %vm1640, %v6969, %v6970
        %v6972 = vrot.slane %v6860, 5
        %v6973 = vrot.slane %v6972, 4
        %v6974 = vrot.slane %v6437, 5
        %v6975 = vsel %vm1640, %v6973, %v6974
        %v6976 = vrot.slane %v6974, 4
        %v6977 = vrot.slane %v6460, 5
        %v6978 = vsel %vm1640, %v6976, %v6977
        %v6979 = vrot.slane %v6861, 5
        %v6980 = vrot.slane %v6979, 4
        %v6981 = vrot.slane %v6439, 5
        %v6982 = vsel %vm1640, %v6980, %v6981
        %v6983 = vrot.slane %v6981, 4
        %v6984 = vrot.slane %v6461, 5
        %v6985 = vsel %vm1640, %v6983, %v6984
        %v6986 = vrot.slane %v6862, 5
        %v6987 = vrot.slane %v6986, 4
        %v6988 = vrot.slane %v6441, 5
        %v6989 = vsel %vm1640, %v6987, %v6988
        %v6990 = vrot.slane %v6988, 4
        %v6991 = vrot.slane %v6462, 5
        %v6992 = vsel %vm1640, %v6990, %v6991
        %v6993 = vrot.slane %v6863, 5
        %v6994 = vrot.slane %v6993, 4
        %v6995 = vrot.slane %v6443, 5
        %v6996 = vsel %vm1640, %v6994, %v6995
        %v6997 = vrot.slane %v6995, 4
        %v6998 = vrot.slane %v6463, 5
        %v6999 = vsel %vm1640, %v6997, %v6998
        %v7000 = vrot.slane %v6864, 5
        %v7001 = vrot.slane %v7000, 4
        %v7002 = vrot.slane %v6445, 5
        %v7003 = vsel %vm1640, %v7001, %v7002
        %v7004 = vrot.slane %v7002, 4
        %v7005 = vrot.slane %v6464, 5
        %v7006 = vsel %vm1640, %v7004, %v7005
        %v7007 = vrot.slane %v6865, 5
        %v7008 = vrot.slane %v7007, 4
        %v7009 = vrot.slane %v6447, 5
        %v7010 = vsel %vm1640, %v7008, %v7009
        %v7011 = vrot.slane %v7009, 4
        %v7012 = vrot.slane %v6465, 5
        %v7013 = vsel %vm1640, %v7011, %v7012
        %v7014 = vrot.slane %v6866, 5
        %v7015 = vrot.slane %v7014, 4
        %v7016 = vrot.slane %v6449, 5
        %v7017 = vsel %vm1640, %v7015, %v7016
        %v7018 = vrot.slane %v7016, 4
        %v7019 = vrot.slane %v6466, 5
        %v7020 = vsel %vm1640, %v7018, %v7019
        %v7021 = vrot.slane %v6867, 5
        %v7022 = vrot.slane %v7021, 4
        %v7023 = vrot.slane %v6451, 5
        %v7024 = vsel %vm1640, %v7022, %v7023
        %v7025 = vrot.slane %v7023, 4
        %v7026 = vrot.slane %v6467, 5
        %v7027 = vsel %vm1640, %v7025, %v7026
        %v7044 = vunpack.c.l.b16 %v5203
        %v7045 = vunpack.c.l.b16 %v5204
        %v7046 = vunpack.c.l.b16 %v5205
        %v7047 = vunpack.c.l.b16 %v5206
        %v7048 = vunpack.c.l.b16 %v5207
        %v7049 = vunpack.c.l.b16 %v5208
        %v7050 = vunpack.c.l.b16 %v5209
        %v7051 = vunpack.c.l.b16 %v5210
        %v7052 = vunpack.c.l.b16 %v5211
        %v7053 = vunpack.c.l.b16 %v5212
        %v7054 = vunpack.c.l.b16 %v5213
        %v7055 = vunpack.c.l.b16 %v5214
        %v7056 = vunpack.c.l.b16 %v5215
        %v7057 = vunpack.c.l.b16 %v5216
        %v7058 = vunpack.c.l.b16 %v5217
        %v7059 = vunpack.c.l.b16 %v5218
        %v7060 = vunpack.c.l.b16 %v5219
        %v7061 = vunpack.c.l.b16 %v5220
        %v7062 = vunpack.c.l.b16 %v5221
        %v7063 = vunpack.c.l.b16 %v5222
        %v7064 = vunpack.c.l.b16 %v5223
        %v7065 = vunpack.c.l.b16 %v5224
        %v7066 = vunpack.c.l.b16 %v5225
        %v7067 = vunpack.c.l.b16 %v5226
        %v7068 = vunpack.c.l.b16 %v5227
        %v7069 = vunpack.c.l.b16 %v5228
        %v7070 = vunpack.c.l.b16 %v5229
        %v7071 = vunpack.c.l.b16 %v5230
        %v7072 = vunpack.c.l.b16 %v5231
        %v7073 = vunpack.c.l.b16 %v5232
        %v7074 = vunpack.c.l.b16 %v5233
        %v7075 = vunpack.c.l.b16 %v5234
        %v7076 = vpack.c.b16 %v7045, %v7044
        %v7077 = vpack.c.b16 %v7047, %v7046
        %v7078 = vpack.c.b16 %v7049, %v7048
        %v7079 = vpack.c.b16 %v7051, %v7050
        %v7080 = vpack.c.b16 %v7053, %v7052
        %v7081 = vpack.c.b16 %v7055, %v7054
        %v7082 = vpack.c.b16 %v7057, %v7056
        %v7083 = vpack.c.b16 %v7059, %v7058
        %v7084 = vpack.c.b16 %v7061, %v7060
        %v7085 = vpack.c.b16 %v7063, %v7062
        %v7086 = vpack.c.b16 %v7065, %v7064
        %v7087 = vpack.c.b16 %v7067, %v7066
        %v7088 = vpack.c.b16 %v7069, %v7068
        %v7089 = vpack.c.b16 %v7071, %v7070
        %v7090 = vpack.c.b16 %v7073, %v7072
        %v7091 = vpack.c.b16 %v7075, %v7074
        %v7092 = vunpack.c.l.b16 %v5264
        %v7093 = vunpack.c.l.b16 %v5274
        %v7094 = vunpack.c.l.b16 %v5288
        %v7095 = vunpack.c.l.b16 %v5298
        %v7096 = vunpack.c.l.b16 %v5312
        %v7097 = vunpack.c.l.b16 %v5322
        %v7098 = vunpack.c.l.b16 %v5336
        %v7099 = vunpack.c.l.b16 %v5346
        %v7100 = vunpack.c.l.b16 %v5360
        %v7101 = vunpack.c.l.b16 %v5370
        %v7102 = vunpack.c.l.b16 %v5384
        %v7103 = vunpack.c.l.b16 %v5394
        %v7104 = vunpack.c.l.b16 %v5408
        %v7105 = vunpack.c.l.b16 %v5418
        %v7106 = vunpack.c.l.b16 %v5432
        %v7107 = vunpack.c.l.b16 %v5442
        %v7108 = vunpack.c.l.b16 %v5456
        %v7109 = vunpack.c.l.b16 %v5466
        %v7110 = vunpack.c.l.b16 %v5480
        %v7111 = vunpack.c.l.b16 %v5490
        %v7112 = vunpack.c.l.b16 %v5504
        %v7113 = vunpack.c.l.b16 %v5514
        %v7114 = vunpack.c.l.b16 %v5528
        %v7115 = vunpack.c.l.b16 %v5538
        %v7116 = vunpack.c.l.b16 %v5552
        %v7117 = vunpack.c.l.b16 %v5562
        %v7118 = vunpack.c.l.b16 %v5576
        %v7119 = vunpack.c.l.b16 %v5586
        %v7120 = vunpack.c.l.b16 %v5600
        %v7121 = vunpack.c.l.b16 %v5610
        %v7122 = vunpack.c.l.b16 %v5624
        %v7123 = vunpack.c.l.b16 %v5634
        %v7124 = vpack.c.b16 %v7093, %v7092
        %v7125 = vpack.c.b16 %v7095, %v7094
        %v7126 = vpack.c.b16 %v7097, %v7096
        %v7127 = vpack.c.b16 %v7099, %v7098
        %v7128 = vpack.c.b16 %v7101, %v7100
        %v7129 = vpack.c.b16 %v7103, %v7102
        %v7130 = vpack.c.b16 %v7105, %v7104
        %v7131 = vpack.c.b16 %v7107, %v7106
        %v7132 = vpack.c.b16 %v7109, %v7108
        %v7133 = vpack.c.b16 %v7111, %v7110
        %v7134 = vpack.c.b16 %v7113, %v7112
        %v7135 = vpack.c.b16 %v7115, %v7114
        %v7136 = vpack.c.b16 %v7117, %v7116
        %v7137 = vpack.c.b16 %v7119, %v7118
        %v7138 = vpack.c.b16 %v7121, %v7120
        %v7139 = vpack.c.b16 %v7123, %v7122
        %7140 = vrot.lane.b32.xlu0 %v7124, 8
        %v7141 = vpop.permute.xlu0 %7140
        %7142 = vrot.lane.b32.xlu0 %v7125, 8
        %v7143 = vpop.permute.xlu0 %7142
        %7144 = vrot.lane.b32.xlu0 %v7126, 8
        %v7145 = vpop.permute.xlu0 %7144
        %7146 = vrot.lane.b32.xlu0 %v7127, 8
        %v7147 = vpop.permute.xlu0 %7146
        %7148 = vrot.lane.b32.xlu0 %v7128, 8
        %v7149 = vpop.permute.xlu0 %7148
        %7150 = vrot.lane.b32.xlu0 %v7129, 8
        %v7151 = vpop.permute.xlu0 %7150
        %7152 = vrot.lane.b32.xlu0 %v7130, 8
        %v7153 = vpop.permute.xlu0 %7152
        %7154 = vrot.lane.b32.xlu0 %v7131, 8
        %v7155 = vpop.permute.xlu0 %7154
        %7156 = vrot.lane.b32.xlu0 %v7132, 8
        %v7157 = vpop.permute.xlu0 %7156
        %7158 = vrot.lane.b32.xlu0 %v7133, 8
        %v7159 = vpop.permute.xlu0 %7158
        %7160 = vrot.lane.b32.xlu0 %v7134, 8
        %v7161 = vpop.permute.xlu0 %7160
        %7162 = vrot.lane.b32.xlu0 %v7135, 8
        %v7163 = vpop.permute.xlu0 %7162
        %7164 = vrot.lane.b32.xlu0 %v7136, 8
        %v7165 = vpop.permute.xlu0 %7164
        %7166 = vrot.lane.b32.xlu0 %v7137, 8
        %v7167 = vpop.permute.xlu0 %7166
        %7168 = vrot.lane.b32.xlu0 %v7138, 8
        %v7169 = vpop.permute.xlu0 %7168
        %7170 = vrot.lane.b32.xlu0 %v7139, 8
        %v7171 = vpop.permute.xlu0 %7170
        %v7172 = vunpack.c.l.b16 %v5702
        %v7173 = vunpack.c.l.b16 %v5705
        %v7174 = vunpack.c.l.b16 %v5709
        %v7175 = vunpack.c.l.b16 %v5712
        %v7176 = vunpack.c.l.b16 %v5716
        %v7177 = vunpack.c.l.b16 %v5719
        %v7178 = vunpack.c.l.b16 %v5723
        %v7179 = vunpack.c.l.b16 %v5726
        %v7180 = vunpack.c.l.b16 %v5730
        %v7181 = vunpack.c.l.b16 %v5733
        %v7182 = vunpack.c.l.b16 %v5737
        %v7183 = vunpack.c.l.b16 %v5740
        %v7184 = vunpack.c.l.b16 %v5744
        %v7185 = vunpack.c.l.b16 %v5747
        %v7186 = vunpack.c.l.b16 %v5751
        %v7187 = vunpack.c.l.b16 %v5754
        %v7188 = vunpack.c.l.b16 %v5758
        %v7189 = vunpack.c.l.b16 %v5761
        %v7190 = vunpack.c.l.b16 %v5765
        %v7191 = vunpack.c.l.b16 %v5768
        %v7192 = vunpack.c.l.b16 %v5772
        %v7193 = vunpack.c.l.b16 %v5775
        %v7194 = vunpack.c.l.b16 %v5779
        %v7195 = vunpack.c.l.b16 %v5782
        %v7196 = vunpack.c.l.b16 %v5786
        %v7197 = vunpack.c.l.b16 %v5789
        %v7198 = vunpack.c.l.b16 %v5793
        %v7199 = vunpack.c.l.b16 %v5796
        %v7200 = vunpack.c.l.b16 %v5800
        %v7201 = vunpack.c.l.b16 %v5803
        %v7202 = vunpack.c.l.b16 %v5807
        %v7203 = vunpack.c.l.b16 %v5810
        %v7204 = vpack.c.b16 %v7173, %v7172
        %v7205 = vpack.c.b16 %v7175, %v7174
        %v7206 = vpack.c.b16 %v7177, %v7176
        %v7207 = vpack.c.b16 %v7179, %v7178
        %v7208 = vpack.c.b16 %v7181, %v7180
        %v7209 = vpack.c.b16 %v7183, %v7182
        %v7210 = vpack.c.b16 %v7185, %v7184
        %v7211 = vpack.c.b16 %v7187, %v7186
        %v7212 = vpack.c.b16 %v7189, %v7188
        %v7213 = vpack.c.b16 %v7191, %v7190
        %v7214 = vpack.c.b16 %v7193, %v7192
        %v7215 = vpack.c.b16 %v7195, %v7194
        %v7216 = vpack.c.b16 %v7197, %v7196
        %v7217 = vpack.c.b16 %v7199, %v7198
        %v7218 = vpack.c.b16 %v7201, %v7200
        %v7219 = vpack.c.b16 %v7203, %v7202
        %7220 = vrot.lane.b32.xlu0 %v7204, 16
        %v7221 = vpop.permute.xlu0 %7220
        %7222 = vrot.lane.b32.xlu0 %v7205, 16
        %v7223 = vpop.permute.xlu0 %7222
        %7224 = vrot.lane.b32.xlu0 %v7206, 16
        %v7225 = vpop.permute.xlu0 %7224
        %7226 = vrot.lane.b32.xlu0 %v7207, 16
        %v7227 = vpop.permute.xlu0 %7226
        %7228 = vrot.lane.b32.xlu0 %v7208, 16
        %v7229 = vpop.permute.xlu0 %7228
        %7230 = vrot.lane.b32.xlu0 %v7209, 16
        %v7231 = vpop.permute.xlu0 %7230
        %7232 = vrot.lane.b32.xlu0 %v7210, 16
        %v7233 = vpop.permute.xlu0 %7232
        %7234 = vrot.lane.b32.xlu0 %v7211, 16
        %v7235 = vpop.permute.xlu0 %7234
        %7236 = vrot.lane.b32.xlu0 %v7212, 16
        %v7237 = vpop.permute.xlu0 %7236
        %7238 = vrot.lane.b32.xlu0 %v7213, 16
        %v7239 = vpop.permute.xlu0 %7238
        %7240 = vrot.lane.b32.xlu0 %v7214, 16
        %v7241 = vpop.permute.xlu0 %7240
        %7242 = vrot.lane.b32.xlu0 %v7215, 16
        %v7243 = vpop.permute.xlu0 %7242
        %7244 = vrot.lane.b32.xlu0 %v7216, 16
        %v7245 = vpop.permute.xlu0 %7244
        %7246 = vrot.lane.b32.xlu0 %v7217, 16
        %v7247 = vpop.permute.xlu0 %7246
        %7248 = vrot.lane.b32.xlu0 %v7218, 16
        %v7249 = vpop.permute.xlu0 %7248
        %7250 = vrot.lane.b32.xlu0 %v7219, 16
        %v7251 = vpop.permute.xlu0 %7250
        %v7268 = vunpack.c.l.b16 %v5811
        %v7269 = vunpack.c.l.b16 %v5812
        %v7270 = vunpack.c.l.b16 %v5813
        %v7271 = vunpack.c.l.b16 %v5814
        %v7272 = vunpack.c.l.b16 %v5815
        %v7273 = vunpack.c.l.b16 %v5816
        %v7274 = vunpack.c.l.b16 %v5817
        %v7275 = vunpack.c.l.b16 %v5818
        %v7276 = vunpack.c.l.b16 %v5819
        %v7277 = vunpack.c.l.b16 %v5820
        %v7278 = vunpack.c.l.b16 %v5821
        %v7279 = vunpack.c.l.b16 %v5822
        %v7280 = vunpack.c.l.b16 %v5823
        %v7281 = vunpack.c.l.b16 %v5824
        %v7282 = vunpack.c.l.b16 %v5825
        %v7283 = vunpack.c.l.b16 %v5826
        %v7284 = vunpack.c.l.b16 %v5827
        %v7285 = vunpack.c.l.b16 %v5828
        %v7286 = vunpack.c.l.b16 %v5829
        %v7287 = vunpack.c.l.b16 %v5830
        %v7288 = vunpack.c.l.b16 %v5831
        %v7289 = vunpack.c.l.b16 %v5832
        %v7290 = vunpack.c.l.b16 %v5833
        %v7291 = vunpack.c.l.b16 %v5834
        %v7292 = vunpack.c.l.b16 %v5835
        %v7293 = vunpack.c.l.b16 %v5836
        %v7294 = vunpack.c.l.b16 %v5837
        %v7295 = vunpack.c.l.b16 %v5838
        %v7296 = vunpack.c.l.b16 %v5839
        %v7297 = vunpack.c.l.b16 %v5840
        %v7298 = vunpack.c.l.b16 %v5841
        %v7299 = vunpack.c.l.b16 %v5842
        %v7300 = vpack.c.b16 %v7269, %v7268
        %v7301 = vpack.c.b16 %v7271, %v7270
        %v7302 = vpack.c.b16 %v7273, %v7272
        %v7303 = vpack.c.b16 %v7275, %v7274
        %v7304 = vpack.c.b16 %v7277, %v7276
        %v7305 = vpack.c.b16 %v7279, %v7278
        %v7306 = vpack.c.b16 %v7281, %v7280
        %v7307 = vpack.c.b16 %v7283, %v7282
        %v7308 = vpack.c.b16 %v7285, %v7284
        %v7309 = vpack.c.b16 %v7287, %v7286
        %v7310 = vpack.c.b16 %v7289, %v7288
        %v7311 = vpack.c.b16 %v7291, %v7290
        %v7312 = vpack.c.b16 %v7293, %v7292
        %v7313 = vpack.c.b16 %v7295, %v7294
        %v7314 = vpack.c.b16 %v7297, %v7296
        %v7315 = vpack.c.b16 %v7299, %v7298
        %7316 = vrot.lane.b32.xlu0 %v7300, 24
        %v7317 = vpop.permute.xlu0 %7316
        %7318 = vrot.lane.b32.xlu0 %v7301, 24
        %v7319 = vpop.permute.xlu0 %7318
        %7320 = vrot.lane.b32.xlu0 %v7302, 24
        %v7321 = vpop.permute.xlu0 %7320
        %7322 = vrot.lane.b32.xlu0 %v7303, 24
        %v7323 = vpop.permute.xlu0 %7322
        %7324 = vrot.lane.b32.xlu0 %v7304, 24
        %v7325 = vpop.permute.xlu0 %7324
        %7326 = vrot.lane.b32.xlu0 %v7305, 24
        %v7327 = vpop.permute.xlu0 %7326
        %7328 = vrot.lane.b32.xlu0 %v7306, 24
        %v7329 = vpop.permute.xlu0 %7328
        %7330 = vrot.lane.b32.xlu0 %v7307, 24
        %v7331 = vpop.permute.xlu0 %7330
        %7332 = vrot.lane.b32.xlu0 %v7308, 24
        %v7333 = vpop.permute.xlu0 %7332
        %7334 = vrot.lane.b32.xlu0 %v7309, 24
        %v7335 = vpop.permute.xlu0 %7334
        %7336 = vrot.lane.b32.xlu0 %v7310, 24
        %v7337 = vpop.permute.xlu0 %7336
        %7338 = vrot.lane.b32.xlu0 %v7311, 24
        %v7339 = vpop.permute.xlu0 %7338
        %7340 = vrot.lane.b32.xlu0 %v7312, 24
        %v7341 = vpop.permute.xlu0 %7340
        %7342 = vrot.lane.b32.xlu0 %v7313, 24
        %v7343 = vpop.permute.xlu0 %7342
        %7344 = vrot.lane.b32.xlu0 %v7314, 24
        %v7345 = vpop.permute.xlu0 %7344
        %7346 = vrot.lane.b32.xlu0 %v7315, 24
        %v7347 = vpop.permute.xlu0 %7346
        %v7348 = vunpack.c.l.b16 %v5872
        %v7349 = vunpack.c.l.b16 %v5882
        %v7350 = vunpack.c.l.b16 %v5896
        %v7351 = vunpack.c.l.b16 %v5906
        %v7352 = vunpack.c.l.b16 %v5920
        %v7353 = vunpack.c.l.b16 %v5930
        %v7354 = vunpack.c.l.b16 %v5944
        %v7355 = vunpack.c.l.b16 %v5954
        %v7356 = vunpack.c.l.b16 %v5968
        %v7357 = vunpack.c.l.b16 %v5978
        %v7358 = vunpack.c.l.b16 %v5992
        %v7359 = vunpack.c.l.b16 %v6002
        %v7360 = vunpack.c.l.b16 %v6016
        %v7361 = vunpack.c.l.b16 %v6026
        %v7362 = vunpack.c.l.b16 %v6040
        %v7363 = vunpack.c.l.b16 %v6050
        %v7364 = vunpack.c.l.b16 %v6064
        %v7365 = vunpack.c.l.b16 %v6074
        %v7366 = vunpack.c.l.b16 %v6088
        %v7367 = vunpack.c.l.b16 %v6098
        %v7368 = vunpack.c.l.b16 %v6112
        %v7369 = vunpack.c.l.b16 %v6122
        %v7370 = vunpack.c.l.b16 %v6136
        %v7371 = vunpack.c.l.b16 %v6146
        %v7372 = vunpack.c.l.b16 %v6160
        %v7373 = vunpack.c.l.b16 %v6170
        %v7374 = vunpack.c.l.b16 %v6184
        %v7375 = vunpack.c.l.b16 %v6194
        %v7376 = vunpack.c.l.b16 %v6208
        %v7377 = vunpack.c.l.b16 %v6218
        %v7378 = vunpack.c.l.b16 %v6232
        %v7379 = vunpack.c.l.b16 %v6242
        %v7380 = vpack.c.b16 %v7349, %v7348
        %v7381 = vpack.c.b16 %v7351, %v7350
        %v7382 = vpack.c.b16 %v7353, %v7352
        %v7383 = vpack.c.b16 %v7355, %v7354
        %v7384 = vpack.c.b16 %v7357, %v7356
        %v7385 = vpack.c.b16 %v7359, %v7358
        %v7386 = vpack.c.b16 %v7361, %v7360
        %v7387 = vpack.c.b16 %v7363, %v7362
        %v7388 = vpack.c.b16 %v7365, %v7364
        %v7389 = vpack.c.b16 %v7367, %v7366
        %v7390 = vpack.c.b16 %v7369, %v7368
        %v7391 = vpack.c.b16 %v7371, %v7370
        %v7392 = vpack.c.b16 %v7373, %v7372
        %v7393 = vpack.c.b16 %v7375, %v7374
        %v7394 = vpack.c.b16 %v7377, %v7376
        %v7395 = vpack.c.b16 %v7379, %v7378
        %7396 = vrot.lane.b32.xlu0 %v7380, 32
        %v7397 = vpop.permute.xlu0 %7396
        %7398 = vrot.lane.b32.xlu0 %v7381, 32
        %v7399 = vpop.permute.xlu0 %7398
        %7400 = vrot.lane.b32.xlu0 %v7382, 32
        %v7401 = vpop.permute.xlu0 %7400
        %7402 = vrot.lane.b32.xlu0 %v7383, 32
        %v7403 = vpop.permute.xlu0 %7402
        %7404 = vrot.lane.b32.xlu0 %v7384, 32
        %v7405 = vpop.permute.xlu0 %7404
        %7406 = vrot.lane.b32.xlu0 %v7385, 32
        %v7407 = vpop.permute.xlu0 %7406
        %7408 = vrot.lane.b32.xlu0 %v7386, 32
        %v7409 = vpop.permute.xlu0 %7408
        %7410 = vrot.lane.b32.xlu0 %v7387, 32
        %v7411 = vpop.permute.xlu0 %7410
        %7412 = vrot.lane.b32.xlu0 %v7388, 32
        %v7413 = vpop.permute.xlu0 %7412
        %7414 = vrot.lane.b32.xlu0 %v7389, 32
        %v7415 = vpop.permute.xlu0 %7414
        %7416 = vrot.lane.b32.xlu0 %v7390, 32
        %v7417 = vpop.permute.xlu0 %7416
        %7418 = vrot.lane.b32.xlu0 %v7391, 32
        %v7419 = vpop.permute.xlu0 %7418
        %7420 = vrot.lane.b32.xlu0 %v7392, 32
        %v7421 = vpop.permute.xlu0 %7420
        %7422 = vrot.lane.b32.xlu0 %v7393, 32
        %v7423 = vpop.permute.xlu0 %7422
        %7424 = vrot.lane.b32.xlu0 %v7394, 32
        %v7425 = vpop.permute.xlu0 %7424
        %7426 = vrot.lane.b32.xlu0 %v7395, 32
        %v7427 = vpop.permute.xlu0 %7426
        %v7428 = vunpack.c.l.b16 %v6310
        %v7429 = vunpack.c.l.b16 %v6313
        %v7430 = vunpack.c.l.b16 %v6317
        %v7431 = vunpack.c.l.b16 %v6320
        %v7432 = vunpack.c.l.b16 %v6324
        %v7433 = vunpack.c.l.b16 %v6327
        %v7434 = vunpack.c.l.b16 %v6331
        %v7435 = vunpack.c.l.b16 %v6334
        %v7436 = vunpack.c.l.b16 %v6338
        %v7437 = vunpack.c.l.b16 %v6341
        %v7438 = vunpack.c.l.b16 %v6345
        %v7439 = vunpack.c.l.b16 %v6348
        %v7440 = vunpack.c.l.b16 %v6352
        %v7441 = vunpack.c.l.b16 %v6355
        %v7442 = vunpack.c.l.b16 %v6359
        %v7443 = vunpack.c.l.b16 %v6362
        %v7444 = vunpack.c.l.b16 %v6366
        %v7445 = vunpack.c.l.b16 %v6369
        %v7446 = vunpack.c.l.b16 %v6373
        %v7447 = vunpack.c.l.b16 %v6376
        %v7448 = vunpack.c.l.b16 %v6380
        %v7449 = vunpack.c.l.b16 %v6383
        %v7450 = vunpack.c.l.b16 %v6387
        %v7451 = vunpack.c.l.b16 %v6390
        %v7452 = vunpack.c.l.b16 %v6394
        %v7453 = vunpack.c.l.b16 %v6397
        %v7454 = vunpack.c.l.b16 %v6401
        %v7455 = vunpack.c.l.b16 %v6404
        %v7456 = vunpack.c.l.b16 %v6408
        %v7457 = vunpack.c.l.b16 %v6411
        %v7458 = vunpack.c.l.b16 %v6415
        %v7459 = vunpack.c.l.b16 %v6418
        %v7460 = vpack.c.b16 %v7429, %v7428
        %v7461 = vpack.c.b16 %v7431, %v7430
        %v7462 = vpack.c.b16 %v7433, %v7432
        %v7463 = vpack.c.b16 %v7435, %v7434
        %v7464 = vpack.c.b16 %v7437, %v7436
        %v7465 = vpack.c.b16 %v7439, %v7438
        %v7466 = vpack.c.b16 %v7441, %v7440
        %v7467 = vpack.c.b16 %v7443, %v7442
        %v7468 = vpack.c.b16 %v7445, %v7444
        %v7469 = vpack.c.b16 %v7447, %v7446
        %v7470 = vpack.c.b16 %v7449, %v7448
        %v7471 = vpack.c.b16 %v7451, %v7450
        %v7472 = vpack.c.b16 %v7453, %v7452
        %v7473 = vpack.c.b16 %v7455, %v7454
        %v7474 = vpack.c.b16 %v7457, %v7456
        %v7475 = vpack.c.b16 %v7459, %v7458
        %7476 = vrot.lane.b32.xlu0 %v7460, 40
        %v7477 = vpop.permute.xlu0 %7476
        %7478 = vrot.lane.b32.xlu0 %v7461, 40
        %v7479 = vpop.permute.xlu0 %7478
        %7480 = vrot.lane.b32.xlu0 %v7462, 40
        %v7481 = vpop.permute.xlu0 %7480
        %7482 = vrot.lane.b32.xlu0 %v7463, 40
        %v7483 = vpop.permute.xlu0 %7482
        %7484 = vrot.lane.b32.xlu0 %v7464, 40
        %v7485 = vpop.permute.xlu0 %7484
        %7486 = vrot.lane.b32.xlu0 %v7465, 40
        %v7487 = vpop.permute.xlu0 %7486
        %7488 = vrot.lane.b32.xlu0 %v7466, 40
        %v7489 = vpop.permute.xlu0 %7488
        %7490 = vrot.lane.b32.xlu0 %v7467, 40
        %v7491 = vpop.permute.xlu0 %7490
        %7492 = vrot.lane.b32.xlu0 %v7468, 40
        %v7493 = vpop.permute.xlu0 %7492
        %7494 = vrot.lane.b32.xlu0 %v7469, 40
        %v7495 = vpop.permute.xlu0 %7494
        %7496 = vrot.lane.b32.xlu0 %v7470, 40
        %v7497 = vpop.permute.xlu0 %7496
        %7498 = vrot.lane.b32.xlu0 %v7471, 40
        %v7499 = vpop.permute.xlu0 %7498
        %7500 = vrot.lane.b32.xlu0 %v7472, 40
        %v7501 = vpop.permute.xlu0 %7500
        %7502 = vrot.lane.b32.xlu0 %v7473, 40
        %v7503 = vpop.permute.xlu0 %7502
        %7504 = vrot.lane.b32.xlu0 %v7474, 40
        %v7505 = vpop.permute.xlu0 %7504
        %7506 = vrot.lane.b32.xlu0 %v7475, 40
        %v7507 = vpop.permute.xlu0 %7506
        %v7524 = vunpack.c.l.b16 %v6420
        %v7525 = vunpack.c.l.b16 %v6421
        %v7526 = vunpack.c.l.b16 %v6422
        %v7527 = vunpack.c.l.b16 %v6423
        %v7528 = vunpack.c.l.b16 %v6424
        %v7529 = vunpack.c.l.b16 %v6425
        %v7530 = vunpack.c.l.b16 %v6426
        %v7531 = vunpack.c.l.b16 %v6427
        %v7532 = vunpack.c.l.b16 %v6428
        %v7533 = vunpack.c.l.b16 %v6429
        %v7534 = vunpack.c.l.b16 %v6430
        %v7535 = vunpack.c.l.b16 %v6431
        %v7536 = vunpack.c.l.b16 %v6432
        %v7537 = vunpack.c.l.b16 %v6433
        %v7538 = vunpack.c.l.b16 %v6434
        %v7539 = vunpack.c.l.b16 %v6435
        %v7540 = vunpack.c.l.b16 %v6436
        %v7541 = vunpack.c.l.b16 %v6437
        %v7542 = vunpack.c.l.b16 %v6438
        %v7543 = vunpack.c.l.b16 %v6439
        %v7544 = vunpack.c.l.b16 %v6440
        %v7545 = vunpack.c.l.b16 %v6441
        %v7546 = vunpack.c.l.b16 %v6442
        %v7547 = vunpack.c.l.b16 %v6443
        %v7548 = vunpack.c.l.b16 %v6444
        %v7549 = vunpack.c.l.b16 %v6445
        %v7550 = vunpack.c.l.b16 %v6446
        %v7551 = vunpack.c.l.b16 %v6447
        %v7552 = vunpack.c.l.b16 %v6448
        %v7553 = vunpack.c.l.b16 %v6449
        %v7554 = vunpack.c.l.b16 %v6450
        %v7555 = vunpack.c.l.b16 %v6451
        %v7556 = vpack.c.b16 %v7525, %v7524
        %v7557 = vpack.c.b16 %v7527, %v7526
        %v7558 = vpack.c.b16 %v7529, %v7528
        %v7559 = vpack.c.b16 %v7531, %v7530
        %v7560 = vpack.c.b16 %v7533, %v7532
        %v7561 = vpack.c.b16 %v7535, %v7534
        %v7562 = vpack.c.b16 %v7537, %v7536
        %v7563 = vpack.c.b16 %v7539, %v7538
        %v7564 = vpack.c.b16 %v7541, %v7540
        %v7565 = vpack.c.b16 %v7543, %v7542
        %v7566 = vpack.c.b16 %v7545, %v7544
        %v7567 = vpack.c.b16 %v7547, %v7546
        %v7568 = vpack.c.b16 %v7549, %v7548
        %v7569 = vpack.c.b16 %v7551, %v7550
        %v7570 = vpack.c.b16 %v7553, %v7552
        %v7571 = vpack.c.b16 %v7555, %v7554
        %7572 = vrot.lane.b32.xlu0 %v7556, 48
        %v7573 = vpop.permute.xlu0 %7572
        %7574 = vrot.lane.b32.xlu0 %v7557, 48
        %v7575 = vpop.permute.xlu0 %7574
        %7576 = vrot.lane.b32.xlu0 %v7558, 48
        %v7577 = vpop.permute.xlu0 %7576
        %7578 = vrot.lane.b32.xlu0 %v7559, 48
        %v7579 = vpop.permute.xlu0 %7578
        %7580 = vrot.lane.b32.xlu0 %v7560, 48
        %v7581 = vpop.permute.xlu0 %7580
        %7582 = vrot.lane.b32.xlu0 %v7561, 48
        %v7583 = vpop.permute.xlu0 %7582
        %7584 = vrot.lane.b32.xlu0 %v7562, 48
        %v7585 = vpop.permute.xlu0 %7584
        %7586 = vrot.lane.b32.xlu0 %v7563, 48
        %v7587 = vpop.permute.xlu0 %7586
        %7588 = vrot.lane.b32.xlu0 %v7564, 48
        %v7589 = vpop.permute.xlu0 %7588
        %7590 = vrot.lane.b32.xlu0 %v7565, 48
        %v7591 = vpop.permute.xlu0 %7590
        %7592 = vrot.lane.b32.xlu0 %v7566, 48
        %v7593 = vpop.permute.xlu0 %7592
        %7594 = vrot.lane.b32.xlu0 %v7567, 48
        %v7595 = vpop.permute.xlu0 %7594
        %7596 = vrot.lane.b32.xlu0 %v7568, 48
        %v7597 = vpop.permute.xlu0 %7596
        %7598 = vrot.lane.b32.xlu0 %v7569, 48
        %v7599 = vpop.permute.xlu0 %7598
        %7600 = vrot.lane.b32.xlu0 %v7570, 48
        %v7601 = vpop.permute.xlu0 %7600
        %7602 = vrot.lane.b32.xlu0 %v7571, 48
        %v7603 = vpop.permute.xlu0 %7602
        %v7604 = vunpack.c.l.b16 %v6481
        %v7605 = vunpack.c.l.b16 %v6491
        %v7606 = vunpack.c.l.b16 %v6505
        %v7607 = vunpack.c.l.b16 %v6515
        %v7608 = vunpack.c.l.b16 %v6529
        %v7609 = vunpack.c.l.b16 %v6539
        %v7610 = vunpack.c.l.b16 %v6553
        %v7611 = vunpack.c.l.b16 %v6563
        %v7612 = vunpack.c.l.b16 %v6577
        %v7613 = vunpack.c.l.b16 %v6587
        %v7614 = vunpack.c.l.b16 %v6601
        %v7615 = vunpack.c.l.b16 %v6611
        %v7616 = vunpack.c.l.b16 %v6625
        %v7617 = vunpack.c.l.b16 %v6635
        %v7618 = vunpack.c.l.b16 %v6649
        %v7619 = vunpack.c.l.b16 %v6659
        %v7620 = vunpack.c.l.b16 %v6673
        %v7621 = vunpack.c.l.b16 %v6683
        %v7622 = vunpack.c.l.b16 %v6697
        %v7623 = vunpack.c.l.b16 %v6707
        %v7624 = vunpack.c.l.b16 %v6721
        %v7625 = vunpack.c.l.b16 %v6731
        %v7626 = vunpack.c.l.b16 %v6745
        %v7627 = vunpack.c.l.b16 %v6755
        %v7628 = vunpack.c.l.b16 %v6769
        %v7629 = vunpack.c.l.b16 %v6779
        %v7630 = vunpack.c.l.b16 %v6793
        %v7631 = vunpack.c.l.b16 %v6803
        %v7632 = vunpack.c.l.b16 %v6817
        %v7633 = vunpack.c.l.b16 %v6827
        %v7634 = vunpack.c.l.b16 %v6841
        %v7635 = vunpack.c.l.b16 %v6851
        %v7636 = vpack.c.b16 %v7605, %v7604
        %v7637 = vpack.c.b16 %v7607, %v7606
        %v7638 = vpack.c.b16 %v7609, %v7608
        %v7639 = vpack.c.b16 %v7611, %v7610
        %v7640 = vpack.c.b16 %v7613, %v7612
        %v7641 = vpack.c.b16 %v7615, %v7614
        %v7642 = vpack.c.b16 %v7617, %v7616
        %v7643 = vpack.c.b16 %v7619, %v7618
        %v7644 = vpack.c.b16 %v7621, %v7620
        %v7645 = vpack.c.b16 %v7623, %v7622
        %v7646 = vpack.c.b16 %v7625, %v7624
        %v7647 = vpack.c.b16 %v7627, %v7626
        %v7648 = vpack.c.b16 %v7629, %v7628
        %v7649 = vpack.c.b16 %v7631, %v7630
        %v7650 = vpack.c.b16 %v7633, %v7632
        %v7651 = vpack.c.b16 %v7635, %v7634
        %7652 = vrot.lane.b32.xlu0 %v7636, 56
        %v7653 = vpop.permute.xlu0 %7652
        %7654 = vrot.lane.b32.xlu0 %v7637, 56
        %v7655 = vpop.permute.xlu0 %7654
        %7656 = vrot.lane.b32.xlu0 %v7638, 56
        %v7657 = vpop.permute.xlu0 %7656
        %7658 = vrot.lane.b32.xlu0 %v7639, 56
        %v7659 = vpop.permute.xlu0 %7658
        %7660 = vrot.lane.b32.xlu0 %v7640, 56
        %v7661 = vpop.permute.xlu0 %7660
        %7662 = vrot.lane.b32.xlu0 %v7641, 56
        %v7663 = vpop.permute.xlu0 %7662
        %7664 = vrot.lane.b32.xlu0 %v7642, 56
        %v7665 = vpop.permute.xlu0 %7664
        %7666 = vrot.lane.b32.xlu0 %v7643, 56
        %v7667 = vpop.permute.xlu0 %7666
        %7668 = vrot.lane.b32.xlu0 %v7644, 56
        %v7669 = vpop.permute.xlu0 %7668
        %7670 = vrot.lane.b32.xlu0 %v7645, 56
        %v7671 = vpop.permute.xlu0 %7670
        %7672 = vrot.lane.b32.xlu0 %v7646, 56
        %v7673 = vpop.permute.xlu0 %7672
        %7674 = vrot.lane.b32.xlu0 %v7647, 56
        %v7675 = vpop.permute.xlu0 %7674
        %7676 = vrot.lane.b32.xlu0 %v7648, 56
        %v7677 = vpop.permute.xlu0 %7676
        %7678 = vrot.lane.b32.xlu0 %v7649, 56
        %v7679 = vpop.permute.xlu0 %7678
        %7680 = vrot.lane.b32.xlu0 %v7650, 56
        %v7681 = vpop.permute.xlu0 %7680
        %7682 = vrot.lane.b32.xlu0 %v7651, 56
        %v7683 = vpop.permute.xlu0 %7682
        %v7684 = vunpack.c.l.b16 %v6919
        %v7685 = vunpack.c.l.b16 %v6922
        %v7686 = vunpack.c.l.b16 %v6926
        %v7687 = vunpack.c.l.b16 %v6929
        %v7688 = vunpack.c.l.b16 %v6933
        %v7689 = vunpack.c.l.b16 %v6936
        %v7690 = vunpack.c.l.b16 %v6940
        %v7691 = vunpack.c.l.b16 %v6943
        %v7692 = vunpack.c.l.b16 %v6947
        %v7693 = vunpack.c.l.b16 %v6950
        %v7694 = vunpack.c.l.b16 %v6954
        %v7695 = vunpack.c.l.b16 %v6957
        %v7696 = vunpack.c.l.b16 %v6961
        %v7697 = vunpack.c.l.b16 %v6964
        %v7698 = vunpack.c.l.b16 %v6968
        %v7699 = vunpack.c.l.b16 %v6971
        %v7700 = vunpack.c.l.b16 %v6975
        %v7701 = vunpack.c.l.b16 %v6978
        %v7702 = vunpack.c.l.b16 %v6982
        %v7703 = vunpack.c.l.b16 %v6985
        %v7704 = vunpack.c.l.b16 %v6989
        %v7705 = vunpack.c.l.b16 %v6992
        %v7706 = vunpack.c.l.b16 %v6996
        %v7707 = vunpack.c.l.b16 %v6999
        %v7708 = vunpack.c.l.b16 %v7003
        %v7709 = vunpack.c.l.b16 %v7006
        %v7710 = vunpack.c.l.b16 %v7010
        %v7711 = vunpack.c.l.b16 %v7013
        %v7712 = vunpack.c.l.b16 %v7017
        %v7713 = vunpack.c.l.b16 %v7020
        %v7714 = vunpack.c.l.b16 %v7024
        %v7715 = vunpack.c.l.b16 %v7027
        %v7716 = vpack.c.b16 %v7685, %v7684
        %v7717 = vpack.c.b16 %v7687, %v7686
        %v7718 = vpack.c.b16 %v7689, %v7688
        %v7719 = vpack.c.b16 %v7691, %v7690
        %v7720 = vpack.c.b16 %v7693, %v7692
        %v7721 = vpack.c.b16 %v7695, %v7694
        %v7722 = vpack.c.b16 %v7697, %v7696
        %v7723 = vpack.c.b16 %v7699, %v7698
        %v7724 = vpack.c.b16 %v7701, %v7700
        %v7725 = vpack.c.b16 %v7703, %v7702
        %v7726 = vpack.c.b16 %v7705, %v7704
        %v7727 = vpack.c.b16 %v7707, %v7706
        %v7728 = vpack.c.b16 %v7709, %v7708
        %v7729 = vpack.c.b16 %v7711, %v7710
        %v7730 = vpack.c.b16 %v7713, %v7712
        %v7731 = vpack.c.b16 %v7715, %v7714
        %7732 = vrot.lane.b32.xlu0 %v7716, 64
        %v7733 = vpop.permute.xlu0 %7732
        %7734 = vrot.lane.b32.xlu0 %v7717, 64
        %v7735 = vpop.permute.xlu0 %7734
        %7736 = vrot.lane.b32.xlu0 %v7718, 64
        %v7737 = vpop.permute.xlu0 %7736
        %7738 = vrot.lane.b32.xlu0 %v7719, 64
        %v7739 = vpop.permute.xlu0 %7738
        %7740 = vrot.lane.b32.xlu0 %v7720, 64
        %v7741 = vpop.permute.xlu0 %7740
        %7742 = vrot.lane.b32.xlu0 %v7721, 64
        %v7743 = vpop.permute.xlu0 %7742
        %7744 = vrot.lane.b32.xlu0 %v7722, 64
        %v7745 = vpop.permute.xlu0 %7744
        %7746 = vrot.lane.b32.xlu0 %v7723, 64
        %v7747 = vpop.permute.xlu0 %7746
        %7748 = vrot.lane.b32.xlu0 %v7724, 64
        %v7749 = vpop.permute.xlu0 %7748
        %7750 = vrot.lane.b32.xlu0 %v7725, 64
        %v7751 = vpop.permute.xlu0 %7750
        %7752 = vrot.lane.b32.xlu0 %v7726, 64
        %v7753 = vpop.permute.xlu0 %7752
        %7754 = vrot.lane.b32.xlu0 %v7727, 64
        %v7755 = vpop.permute.xlu0 %7754
        %7756 = vrot.lane.b32.xlu0 %v7728, 64
        %v7757 = vpop.permute.xlu0 %7756
        %7758 = vrot.lane.b32.xlu0 %v7729, 64
        %v7759 = vpop.permute.xlu0 %7758
        %7760 = vrot.lane.b32.xlu0 %v7730, 64
        %v7761 = vpop.permute.xlu0 %7760
        %7762 = vrot.lane.b32.xlu0 %v7731, 64
        %v7763 = vpop.permute.xlu0 %7762
        %v7766 = vsel %vm3755, %v7076, %v7141
        %v7769 = vsel %vm3755, %v7077, %v7143
        %v7772 = vsel %vm3755, %v7078, %v7145
        %v7775 = vsel %vm3755, %v7079, %v7147
        %v7778 = vsel %vm3755, %v7080, %v7149
        %v7781 = vsel %vm3755, %v7081, %v7151
        %v7784 = vsel %vm3755, %v7082, %v7153
        %v7787 = vsel %vm3755, %v7083, %v7155
        %v7790 = vsel %vm3755, %v7084, %v7157
        %v7793 = vsel %vm3755, %v7085, %v7159
        %v7796 = vsel %vm3755, %v7086, %v7161
        %v7799 = vsel %vm3755, %v7087, %v7163
        %v7802 = vsel %vm3755, %v7088, %v7165
        %v7805 = vsel %vm3755, %v7089, %v7167
        %v7808 = vsel %vm3755, %v7090, %v7169
        %v7811 = vsel %vm3755, %v7091, %v7171
        %v7813 = vsel %vm3821, %v7766, %v7221
        %v7815 = vsel %vm3821, %v7769, %v7223
        %v7817 = vsel %vm3821, %v7772, %v7225
        %v7819 = vsel %vm3821, %v7775, %v7227
        %v7821 = vsel %vm3821, %v7778, %v7229
        %v7823 = vsel %vm3821, %v7781, %v7231
        %v7825 = vsel %vm3821, %v7784, %v7233
        %v7827 = vsel %vm3821, %v7787, %v7235
        %v7829 = vsel %vm3821, %v7790, %v7237
        %v7831 = vsel %vm3821, %v7793, %v7239
        %v7833 = vsel %vm3821, %v7796, %v7241
        %v7835 = vsel %vm3821, %v7799, %v7243
        %v7837 = vsel %vm3821, %v7802, %v7245
        %v7839 = vsel %vm3821, %v7805, %v7247
        %v7841 = vsel %vm3821, %v7808, %v7249
        %v7843 = vsel %vm3821, %v7811, %v7251
        %v7845 = vsel %vm3887, %v7813, %v7317
        %v7847 = vsel %vm3887, %v7815, %v7319
        %v7849 = vsel %vm3887, %v7817, %v7321
        %v7851 = vsel %vm3887, %v7819, %v7323
        %v7853 = vsel %vm3887, %v7821, %v7325
        %v7855 = vsel %vm3887, %v7823, %v7327
        %v7857 = vsel %vm3887, %v7825, %v7329
        %v7859 = vsel %vm3887, %v7827, %v7331
        %v7861 = vsel %vm3887, %v7829, %v7333
        %v7863 = vsel %vm3887, %v7831, %v7335
        %v7865 = vsel %vm3887, %v7833, %v7337
        %v7867 = vsel %vm3887, %v7835, %v7339
        %v7869 = vsel %vm3887, %v7837, %v7341
        %v7871 = vsel %vm3887, %v7839, %v7343
        %v7873 = vsel %vm3887, %v7841, %v7345
        %v7875 = vsel %vm3887, %v7843, %v7347
        %v7877 = vsel %vm3953, %v7845, %v7397
        %v7879 = vsel %vm3953, %v7847, %v7399
        %v7881 = vsel %vm3953, %v7849, %v7401
        %v7883 = vsel %vm3953, %v7851, %v7403
        %v7885 = vsel %vm3953, %v7853, %v7405
        %v7887 = vsel %vm3953, %v7855, %v7407
        %v7889 = vsel %vm3953, %v7857, %v7409
        %v7891 = vsel %vm3953, %v7859, %v7411
        %v7893 = vsel %vm3953, %v7861, %v7413
        %v7895 = vsel %vm3953, %v7863, %v7415
        %v7897 = vsel %vm3953, %v7865, %v7417
        %v7899 = vsel %vm3953, %v7867, %v7419
        %v7901 = vsel %vm3953, %v7869, %v7421
        %v7903 = vsel %vm3953, %v7871, %v7423
        %v7905 = vsel %vm3953, %v7873, %v7425
        %v7907 = vsel %vm3953, %v7875, %v7427
        %vm7908 = vcmask 326656
        %v7910 = vsel %vm7908, %v7877, %v7477
        %v7912 = vsel %vm7908, %v7879, %v7479
        %v7914 = vsel %vm7908, %v7881, %v7481
        %v7916 = vsel %vm7908, %v7883, %v7483
        %v7918 = vsel %vm7908, %v7885, %v7485
        %v7920 = vsel %vm7908, %v7887, %v7487
        %v7922 = vsel %vm7908, %v7889, %v7489
        %v7924 = vsel %vm7908, %v7891, %v7491
        %v7926 = vsel %vm7908, %v7893, %v7493
        %v7928 = vsel %vm7908, %v7895, %v7495
        %v7930 = vsel %vm7908, %v7897, %v7497
        %v7932 = vsel %vm7908, %v7899, %v7499
        %v7934 = vsel %vm7908, %v7901, %v7501
        %v7936 = vsel %vm7908, %v7903, %v7503
        %v7938 = vsel %vm7908, %v7905, %v7505
        %v7940 = vsel %vm7908, %v7907, %v7507
        %vm7941 = vcmask 392192
        %v7943 = vsel %vm7941, %v7910, %v7573
        %v7945 = vsel %vm7941, %v7912, %v7575
        %v7947 = vsel %vm7941, %v7914, %v7577
        %v7949 = vsel %vm7941, %v7916, %v7579
        %v7951 = vsel %vm7941, %v7918, %v7581
        %v7953 = vsel %vm7941, %v7920, %v7583
        %v7955 = vsel %vm7941, %v7922, %v7585
        %v7957 = vsel %vm7941, %v7924, %v7587
        %v7959 = vsel %vm7941, %v7926, %v7589
        %v7961 = vsel %vm7941, %v7928, %v7591
        %v7963 = vsel %vm7941, %v7930, %v7593
        %v7965 = vsel %vm7941, %v7932, %v7595
        %v7967 = vsel %vm7941, %v7934, %v7597
        %v7969 = vsel %vm7941, %v7936, %v7599
        %v7971 = vsel %vm7941, %v7938, %v7601
        %v7973 = vsel %vm7941, %v7940, %v7603
        %vm7974 = vcmask 457728
        %v7976 = vsel %vm7974, %v7943, %v7653
        %v7978 = vsel %vm7974, %v7945, %v7655
        %v7980 = vsel %vm7974, %v7947, %v7657
        %v7982 = vsel %vm7974, %v7949, %v7659
        %v7984 = vsel %vm7974, %v7951, %v7661
        %v7986 = vsel %vm7974, %v7953, %v7663
        %v7988 = vsel %vm7974, %v7955, %v7665
        %v7990 = vsel %vm7974, %v7957, %v7667
        %v7992 = vsel %vm7974, %v7959, %v7669
        %v7994 = vsel %vm7974, %v7961, %v7671
        %v7996 = vsel %vm7974, %v7963, %v7673
        %v7998 = vsel %vm7974, %v7965, %v7675
        %v8000 = vsel %vm7974, %v7967, %v7677
        %v8002 = vsel %vm7974, %v7969, %v7679
        %v8004 = vsel %vm7974, %v7971, %v7681
        %v8006 = vsel %vm7974, %v7973, %v7683
        %vm8007 = vcmask 523264
        %v8009 = vsel %vm8007, %v7976, %v7733
        %v8011 = vsel %vm8007, %v7978, %v7735
        %v8013 = vsel %vm8007, %v7980, %v7737
        %v8015 = vsel %vm8007, %v7982, %v7739
        %v8017 = vsel %vm8007, %v7984, %v7741
        %v8019 = vsel %vm8007, %v7986, %v7743
        %v8021 = vsel %vm8007, %v7988, %v7745
        %v8023 = vsel %vm8007, %v7990, %v7747
        %v8025 = vsel %vm8007, %v7992, %v7749
        %v8027 = vsel %vm8007, %v7994, %v7751
        %v8029 = vsel %vm8007, %v7996, %v7753
        %v8031 = vsel %vm8007, %v7998, %v7755
        %v8033 = vsel %vm8007, %v8000, %v7757
        %v8035 = vsel %vm8007, %v8002, %v7759
        %v8037 = vsel %vm8007, %v8004, %v7761
        %v8039 = vsel %vm8007, %v8006, %v7763
        %v8040 = vld [vmem:[%s5] sm:$0xf]
        %vm8041 = vcmask 588800
        %v8043 = vsel %vm8041, %v8040, 0
        %v8045 = vsel %vm8041, %v8009, 0
        %v8047 = vsel %vm8041, %v8011, 0
        %v8049 = vsel %vm8041, %v8013, 0
        %v8051 = vsel %vm8041, %v8015, 0
        %v8053 = vsel %vm8041, %v8017, 0
        %v8055 = vsel %vm8041, %v8019, 0
        %v8057 = vsel %vm8041, %v8021, 0
        %v8059 = vsel %vm8041, %v8023, 0
        %v8061 = vsel %vm8041, %v8025, 0
        %v8063 = vsel %vm8041, %v8027, 0
        %v8065 = vsel %vm8041, %v8029, 0
        %v8067 = vsel %vm8041, %v8031, 0
        %v8069 = vsel %vm8041, %v8033, 0
        %v8071 = vsel %vm8041, %v8035, 0
        %v8073 = vsel %vm8041, %v8037, 0
        %v8075 = vsel %vm8041, %v8039, 0
        %8077 = vmatprep.subr.bf16.mxu0 0
        %8078 = vmatpush1.bf16.xpose.msra.mxu0 %v8059
        %8079 = vmatprep.subr.bf16.mxu0 0
        %8080 = vmatpush1.bf16.xpose.msra.mxu0 %v8057
        %8081 = vmatprep.subr.bf16.mxu0 0
        %8082 = vmatpush1.bf16.xpose.msra.mxu0 %v8055
        %8083 = vmatprep.subr.bf16.mxu0 0
        %8084 = vmatpush1.bf16.xpose.msra.mxu0 %v8053
        %8085 = vmatprep.subr.bf16.mxu0 0
        %8086 = vmatpush1.bf16.xpose.msra.mxu0 %v8051
        %8087 = vmatprep.subr.bf16.mxu0 0
        %8088 = vmatpush1.bf16.xpose.msra.mxu0 %v8049
        %8089 = vmatprep.subr.bf16.mxu0 0
        %8090 = vmatpush1.bf16.xpose.msra.mxu0 %v8047
        %8091 = vmatprep.subr.bf16.mxu0 0
        %8092 = vmatpush1.bf16.xpose.msra.mxu0 %v8045
        %8093 = vmatprep.subr.bf16.mxu0 0
        %8094 = vmatpush2.bf16.xpose.msra.mxu0 %v8075
        %8095 = vmatprep.subr.bf16.mxu0 0
        %8096 = vmatpush2.bf16.xpose.msra.mxu0 %v8073
        %8097 = vmatprep.subr.bf16.mxu0 0
        %8098 = vmatpush2.bf16.xpose.msra.mxu0 %v8071
        %8099 = vmatprep.subr.bf16.mxu0 0
        %8100 = vmatpush2.bf16.xpose.msra.mxu0 %v8069
        %8101 = vmatprep.subr.bf16.mxu0 0
        %8102 = vmatpush2.bf16.xpose.msra.mxu0 %v8067
        %8103 = vmatprep.subr.bf16.mxu0 0
        %8104 = vmatpush2.bf16.xpose.msra.mxu0 %v8065
        %8105 = vmatprep.subr.bf16.mxu0 0
        %8106 = vmatpush2.bf16.xpose.msra.mxu0 %v8063
        %8107 = vmatprep.subr.bf16.mxu0 0
        %8108 = vmatpush2.bf16.xpose.msra.mxu0 %v8061
        %8109 = vmatprep.mubr.bf16.mxu0 0
        %8110 = vmatmul.mubr.bf16.gmra.mxu0 %v8043
        %v8111 = vpop.f32.mrf.mxu0
        %v8112 = vadd.f32 0.0, %v8111
        %v8113 = vpop.f32.mrf.mxu0
        %v8114 = vadd.f32 0.0, %v8113
        %v8115 = vpop.f32.mrf.mxu0
        %v8116 = vpop.f32.mrf.mxu0
        %8117 = vdwg.mxu0
        %v8118 = vld [vmem:[%s6] sm:$0xff]
        %v8119 = vld [vmem:[%s7] sm:$0xff]
        %v8120 = vld [vmem:[%s8] sm:$0xff]
        %v8121 = vadd.f32 %v8112, %v8114
        %8122 = vadd.xlane.f32.xlu0 %v8121
        %v8123 = vpop.xlane.xlu0 %8122
        %v8124 = vmul.f32 %v8112, %v8112
        %v8125 = vmul.f32 %v8114, %v8114
        %v8126 = vadd.f32 %v8124, %v8125
        %8127 = vadd.xlane.f32.xlu0 %v8126
        %v8128 = vpop.xlane.xlu0 %8127
        %v8130 = vsel %vm3755, %v8120, 0
        %8132 = vmatprep.subr.mxu0 0.0
        %8133 = vmatpush1.msra.mxu0 0.0
        %8134 = vmatprep.subr.mxu0 0.0
        %8135 = vmatpush1.msra.mxu0 0.0
        %8136 = vmatprep.subr.mxu0 0.0
        %8137 = vmatpush1.msra.mxu0 0.0
        %8138 = vmatprep.subr.mxu0 0.0
        %8139 = vmatpush1.msra.mxu0 0.0
        %8140 = vmatprep.subr.mxu0 0.0
        %8141 = vmatpush1.msra.mxu0 0.0
        %8142 = vmatprep.subr.mxu0 0.0
        %8143 = vmatpush1.msra.mxu0 0.0
        %8144 = vmatprep.subr.mxu0 0.0
        %8145 = vmatpush1.msra.mxu0 0.0
        %8146 = vmatprep.subr.mxu0 0.0
        %8147 = vmatpush1.msra.mxu0 0.0
        %8148 = vmatprep.subr.mxu0 0.0
        %8149 = vmatpush1.msra.mxu0 0.0
        %8150 = vmatprep.subr.mxu0 0.0
        %8151 = vmatpush1.msra.mxu0 0.0
        %8152 = vmatprep.subr.mxu0 0.0
        %8153 = vmatpush1.msra.mxu0 0.0
        %8154 = vmatprep.subr.mxu0 0.0
        %8155 = vmatpush1.msra.mxu0 0.0
        %8156 = vmatprep.subr.mxu0 0.0
        %8157 = vmatpush1.msra.mxu0 0.0
        %8158 = vmatprep.subr.mxu0 0.0
        %8159 = vmatpush1.msra.mxu0 0.0
        %8160 = vmatprep.subr.mxu0 0.0
        %8161 = vmatpush1.msra.mxu0 0.0
        %8162 = vmatprep.subr.mxu0 0.0
        %8163 = vmatpush1.msra.mxu0 %v8123
        %8164 = vmatprep.subr.mxu0 0.0
        %8165 = vmatpush2.msra.mxu0 0.0
        %8166 = vmatprep.subr.mxu0 0.0
        %8167 = vmatpush2.msra.mxu0 0.0
        %8168 = vmatprep.subr.mxu0 0.0
        %8169 = vmatpush2.msra.mxu0 0.0
        %8170 = vmatprep.subr.mxu0 0.0
        %8171 = vmatpush2.msra.mxu0 0.0
        %8172 = vmatprep.subr.mxu0 0.0
        %8173 = vmatpush2.msra.mxu0 0.0
        %8174 = vmatprep.subr.mxu0 0.0
        %8175 = vmatpush2.msra.mxu0 0.0
        %8176 = vmatprep.subr.mxu0 0.0
        %8177 = vmatpush2.msra.mxu0 0.0
        %8178 = vmatprep.subr.mxu0 0.0
        %8179 = vmatpush2.msra.mxu0 0.0
        %8180 = vmatprep.subr.mxu0 0.0
        %8181 = vmatpush2.msra.mxu0 0.0
        %8182 = vmatprep.subr.mxu0 0.0
        %8183 = vmatpush2.msra.mxu0 0.0
        %8184 = vmatprep.subr.mxu0 0.0
        %8185 = vmatpush2.msra.mxu0 0.0
        %8186 = vmatprep.subr.mxu0 0.0
        %8187 = vmatpush2.msra.mxu0 0.0
        %8188 = vmatprep.subr.mxu0 0.0
        %8189 = vmatpush2.msra.mxu0 0.0
        %8190 = vmatprep.subr.mxu0 0.0
        %8191 = vmatpush2.msra.mxu0 0.0
        %8192 = vmatprep.subr.mxu0 0.0
        %8193 = vmatpush2.msra.mxu0 0.0
        %8194 = vmatprep.subr.mxu0 0.0
        %8195 = vmatpush2.msra.mxu0 0.0
        %8196 = vmatprep.mubr.f32.mxu0 0.0
        %8197 = vmatmul.mubr.f32.gmra.mxu0 %v8130
        %v8198 = vpop.f32.mrf.mxu0
        %v8199 = vadd.f32 0.0, %v8198
        %v8200 = vpop.f32.mrf.mxu0
        %8201 = vdwg.mxu0
        %8202 = vmatprep.subr.mxu0 0.0
        %8203 = vmatpush1.msra.mxu0 0.0
        %8204 = vmatprep.subr.mxu0 0.0
        %8205 = vmatpush1.msra.mxu0 0.0
        %8206 = vmatprep.subr.mxu0 0.0
        %8207 = vmatpush1.msra.mxu0 0.0
        %8208 = vmatprep.subr.mxu0 0.0
        %8209 = vmatpush1.msra.mxu0 0.0
        %8210 = vmatprep.subr.mxu0 0.0
        %8211 = vmatpush1.msra.mxu0 0.0
        %8212 = vmatprep.subr.mxu0 0.0
        %8213 = vmatpush1.msra.mxu0 0.0
        %8214 = vmatprep.subr.mxu0 0.0
        %8215 = vmatpush1.msra.mxu0 0.0
        %8216 = vmatprep.subr.mxu0 0.0
        %8217 = vmatpush1.msra.mxu0 0.0
        %8218 = vmatprep.subr.mxu0 0.0
        %8219 = vmatpush1.msra.mxu0 0.0
        %8220 = vmatprep.subr.mxu0 0.0
        %8221 = vmatpush1.msra.mxu0 0.0
        %8222 = vmatprep.subr.mxu0 0.0
        %8223 = vmatpush1.msra.mxu0 0.0
        %8224 = vmatprep.subr.mxu0 0.0
        %8225 = vmatpush1.msra.mxu0 0.0
        %8226 = vmatprep.subr.mxu0 0.0
        %8227 = vmatpush1.msra.mxu0 0.0
        %8228 = vmatprep.subr.mxu0 0.0
        %8229 = vmatpush1.msra.mxu0 0.0
        %8230 = vmatprep.subr.mxu0 0.0
        %8231 = vmatpush1.msra.mxu0 0.0
        %8232 = vmatprep.subr.mxu0 0.0
        %8233 = vmatpush1.msra.mxu0 %v8128
        %8234 = vmatprep.subr.mxu0 0.0
        %8235 = vmatpush2.msra.mxu0 0.0
        %8236 = vmatprep.subr.mxu0 0.0
        %8237 = vmatpush2.msra.mxu0 0.0
        %8238 = vmatprep.subr.mxu0 0.0
        %8239 = vmatpush2.msra.mxu0 0.0
        %8240 = vmatprep.subr.mxu0 0.0
        %8241 = vmatpush2.msra.mxu0 0.0
        %8242 = vmatprep.subr.mxu0 0.0
        %8243 = vmatpush2.msra.mxu0 0.0
        %8244 = vmatprep.subr.mxu0 0.0
        %8245 = vmatpush2.msra.mxu0 0.0
        %8246 = vmatprep.subr.mxu0 0.0
        %8247 = vmatpush2.msra.mxu0 0.0
        %8248 = vmatprep.subr.mxu0 0.0
        %8249 = vmatpush2.msra.mxu0 0.0
        %8250 = vmatprep.subr.mxu0 0.0
        %8251 = vmatpush2.msra.mxu0 0.0
        %8252 = vmatprep.subr.mxu0 0.0
        %8253 = vmatpush2.msra.mxu0 0.0
        %8254 = vmatprep.subr.mxu0 0.0
        %8255 = vmatpush2.msra.mxu0 0.0
        %8256 = vmatprep.subr.mxu0 0.0
        %8257 = vmatpush2.msra.mxu0 0.0
        %8258 = vmatprep.subr.mxu0 0.0
        %8259 = vmatpush2.msra.mxu0 0.0
        %8260 = vmatprep.subr.mxu0 0.0
        %8261 = vmatpush2.msra.mxu0 0.0
        %8262 = vmatprep.subr.mxu0 0.0
        %8263 = vmatpush2.msra.mxu0 0.0
        %8264 = vmatprep.subr.mxu0 0.0
        %8265 = vmatpush2.msra.mxu0 0.0
        %8266 = vmatprep.mubr.f32.mxu0 0.0
        %8267 = vmatmul.mubr.f32.gmra.mxu0 %v8130
        %v8268 = vpop.f32.mrf.mxu0
        %v8269 = vadd.f32 0.0, %v8268
        %v8270 = vpop.f32.mrf.mxu0
        %8271 = vdwg.mxu0
        %v8272 = vmul.f32 %v8199, 0.0009765625
        %v8273 = vmul.f32 %v8269, 0.0009765625
        %v8274 = vmul.f32 %v8272, %v8272
        %v8275 = vsub.f32 %v8273, %v8274
        %v8276 = vadd.f32 %v8275, 1e-05
        %v8277 = vrsqrt.pop %v8276
        %8279 = vset.pattern.permute.xlu0 0
        %8280 = vperm.xlu0 %8279, %v8272
        %v8281 = vpop.permute.xlu0 %8280
        %v8283 = vsub.f32 %v8112, %v8281
        %v8284 = vsub.f32 %v8114, %v8281
        %v8285 = vmul.f32 %v8277, %v8118
        %8287 = vset.pattern.permute.xlu0 0
        %8288 = vperm.xlu0 %8287, %v8285
        %v8289 = vpop.permute.xlu0 %8288
        %v8291 = vmul.f32 %v8283, %v8289
        %v8292 = vmul.f32 %v8284, %v8289
        %8294 = vset.pattern.permute.xlu0 0
        %8295 = vperm.xlu0 %8294, %v8119
        %v8296 = vpop.permute.xlu0 %8295
        %v8298 = vadd.f32 %v8291, %v8296
        %v8299 = vadd.f32 %v8292, %v8296
        %v8300 = vmax.f32 %v8298, 0.0
        %v8301 = vmax.f32 %v8299, 0.0
        %8302 = vst [vmem:[%s325] sm:$0xff] %v8300
        %8303 = vst [vmem:[%s325 + $0x8] sm:$0xff] %v8301
        %s8304 = sand.u32 %s225, 1
        %s8305 = scalar_lea.sflag [#allocation5], %s8304
        %s8306 = sand.u32 %s225, 1
        %s8307 = smul.addr %s8306, 16
        %s8308 = scalar_lea.vmem [#allocation4], %s8307
        // Predicated region
        $region57: #{tpu_custom_call.1} parent=55 // pred_check
          %p8309 = pneg %p235
        $region58: #{tpu_custom_call.1} parent=55 // pred_check_branch
          %8311 = sbr.rel (%p8309) target = $region60
        $region59: #{tpu_custom_call.1} parent=55 // pred_region
          %s8313 = ssub.s32 256, 256
          %8314 = vsyncadd %s8305, %s8313
          %s8315 = smul.addr %s23, 2
          %s8316 = smul.addr %s8315, 128
          %s8317 = scalar_lea.hbm %s9, %s8316
          %s8319 = sshll.u32 %s8308, 4
          %s8320 = int_to_ptr.vmem [resolvable:$true] %s8319
          %8322 = dma.vmem_to_hbm [thread:$0]  %s8320, 256, %s8317, %s8305
        $region60: #{tpu_custom_call.1} parent=55 // pred_fallthru
          _
      $region56: #{tpu_custom_call.1} parent=5 // pred_fallthru
        _
      %p8323 = scmp.le.s32.totalorder 2, %s18
      // Predicated region
      $region61: #{tpu_custom_call.1} parent=5 // pred_check
        %p8324 = pneg %p8323
      $region62: #{tpu_custom_call.1} parent=5 // pred_check_branch
        %8326 = sbr.rel (%p8324) target = $region64
      $region63: #{tpu_custom_call.1} parent=5 // pred_region
        %s8327 = ssub.s32 %s18, 2
        // Predicated region
        $region65: #{tpu_custom_call.1} parent=63 // pred_check
          %p8328 = pneg %p241
        $region66: #{tpu_custom_call.1} parent=63 // pred_check_branch
          %8330 = sbr.rel (%p8328) target = $region68
        $region67: #{tpu_custom_call.1} parent=63 // pred_region
          %s8331 = sand.u32 %s226, 1
          %s8332 = scalar_lea.sflag [#allocation5], %s8331
          %s8333 = sand.u32 %s226, 1
          %s8334 = smul.addr %s8333, 16
          %s8335 = scalar_lea.vmem [#allocation4], %s8334
          %8336 = dma.done %s8332, 256
        $region68: #{tpu_custom_call.1} parent=63 // pred_fallthru
          _
      $region64: #{tpu_custom_call.1} parent=5 // pred_fallthru
        _
    $region6: #{tpu_custom_call.1} parent=1 // loop_footer
      %s22 = sadd.s32 1, %s18
    $region7: #{tpu_custom_call.1} parent=1 // loop_footer_branch
      %17 = sbr.rel target = $region3
    $region8: #{tpu_custom_call.1} parent=1 // loop_exit
      _
    %8337 = vsyncpa [#allocation5], 1
    %s8338 = scalar_lea.sflag [#allocation5], 1
    %8339 = vsyncpa %s8338, 1

</llo_original>
